<compile_context>
chip_gen: v7x
topology: tpu7x:2x2x1
jax: 0.10.0
libtpu: 0.0.40
codegen_flags: <defaults>
</compile_context>

<pallas_src>
import functools

import jax
import jax.numpy as jnp
from jax.experimental import pallas as pl
from jax.experimental.pallas import tpu as pltpu

_LN_EPS = 1e-5
_INV_SQRT2 = 0.7071067811865476
_NEG_INF = -1e30   # exp(_NEG_INF - max) underflows to exactly 0.0 in f32


# ---------------------------------------------------------------------------
# In-kernel helpers (operate on values held in vregs/VMEM)
# ---------------------------------------------------------------------------
def _layernorm(x, gamma, beta):
    # x: (R, D), gamma/beta: (1, D); biased variance, eps=1e-5 (torch semantics)
    mean = jnp.mean(x, axis=-1, keepdims=True)
    var = jnp.mean((x - mean) ** 2, axis=-1, keepdims=True)
    return (x - mean) * jax.lax.rsqrt(var + _LN_EPS) * gamma + beta


def _gelu_exact(x):
    return 0.5 * x * (1.0 + jax.lax.erf(x * _INV_SQRT2))


def _masked_mha(x, bias, ln_g, ln_b, w_qkv, w_out, b_out, *, heads, dim_head):
    """Pre-LN multi-head self-attention over the full (R, d) slab.

    `bias` is an additive (R, R) mask (0 inside a sequence, -1e30 outside) that
    restricts attention to rows of the same frame (spatial) or token (temporal).
    The attention scale is pre-folded into the q columns of w_qkv.
    Returns attention output + residual.
    """
    rows, d = x.shape
    inner = heads * dim_head

    xn = _layernorm(x, ln_g, ln_b)
    qkv = jnp.dot(xn, w_qkv, preferred_element_type=jnp.float32)      # (R, 3*inner)
    q = qkv[:, 0 * inner:1 * inner]
    k = qkv[:, 1 * inner:2 * inner]
    v = qkv[:, 2 * inner:3 * inner]

    proj = jnp.zeros((rows, d), jnp.float32)
    for h in range(heads):                       # small static unroll over heads
        sl = slice(h * dim_head, (h + 1) * dim_head)
        qh, kh, vh = q[:, sl], k[:, sl], v[:, sl]                     # (R, dh)
        dots = jnp.dot(qh, kh.T, preferred_element_type=jnp.float32) + bias   # (R, R)
        m = jnp.max(dots, axis=-1, keepdims=True)
        p = jnp.exp(dots - m)                    # masked entries underflow to 0 exactly
        attn = p * pl.reciprocal(jnp.sum(p, axis=-1, keepdims=True), approx=True)
        ov = jnp.dot(attn, vh, preferred_element_type=jnp.float32)    # (R, dh)
        # Fold this head straight into the output projection (no concatenate).
        proj = proj + jnp.dot(ov, w_out[sl, :], preferred_element_type=jnp.float32)
    return proj + b_out + x                                            # bias + residual


def _ff(x, ln_g, ln_b, w1, b1, w2, b2):
    xn = _layernorm(x, ln_g, ln_b)
    h = jnp.dot(xn, w1, preferred_element_type=jnp.float32) + b1
    h = _gelu_exact(h)
    return jnp.dot(h, w2, preferred_element_type=jnp.float32) + b2 + x


# ---------------------------------------------------------------------------
# Fused kernel: one grid step == one batch element's full forward pass
# ---------------------------------------------------------------------------
def _fused_kernel(x_ref, bias_s_ref, bias_t_ref,
                  s_lng, s_lnb, s_wqkv, s_wout, s_bout,
                  t_lng, t_lnb, t_wqkv, t_wout, t_bout,
                  f_lng, f_lnb, f_w1, f_b1, f_w2, f_b2,
                  n_g, n_b,
                  o_ref, *, heads, dim_head, depth):
    x = x_ref[0]                       # (R, d), spatial row order r = frame*n + token
    bias_spatial = bias_s_ref[...]     # (R, R) same-frame mask bias
    bias_temporal = bias_t_ref[...]    # (R, R) same-token mask bias

    for l in range(depth):             # static unroll over layers; weights indexed statically
        x = _masked_mha(x, bias_spatial, s_lng[l], s_lnb[l], s_wqkv[l], s_wout[l],
                        s_bout[l], heads=heads, dim_head=dim_head)
        x = _masked_mha(x, bias_temporal, t_lng[l], t_lnb[l], t_wqkv[l], t_wout[l],
                        t_bout[l], heads=heads, dim_head=dim_head)
        x = _ff(x, f_lng[l], f_lnb[l], f_w1[l], f_b1[l], f_w2[l], f_b2[l])

    x = _layernorm(x, n_g[...], n_b[...])          # final LayerNorm, fused in
    o_ref[0] = x.astype(o_ref.dtype)


_PARAM_ORDER = ("s_ln_g", "s_ln_b", "s_w_qkv", "s_w_out", "s_b_out",
                "t_ln_g", "t_ln_b", "t_w_qkv", "t_w_out", "t_b_out",
                "ff_ln_g", "ff_ln_b", "ff_w1", "ff_b1", "ff_w2", "ff_b2",
                "norm_g", "norm_b")


# ---------------------------------------------------------------------------
# Wrapper: single pallas_call for the whole module forward
# ---------------------------------------------------------------------------
def factorized_transformer(x, params, *, heads, dim_head):
    """x: (b, f, n, dim) float32 -> (b, f, n, dim) float32."""
    b, f, n, d = x.shape
    depth = params["s_w_qkv"].shape[0]
    rows = f * n
    x2 = x.reshape(b, rows, d)

    # Sequence-membership mask biases (constant-folded by XLA under jit):
    #   spatial  : rows attend within the same frame  (row // n == col // n)
    #   temporal : rows attend within the same token  (row %  n == col %  n)
    row = jnp.arange(rows, dtype=jnp.int32)[:, None]
    col = jnp.arange(rows, dtype=jnp.int32)[None, :]
    bias_spatial = jnp.where((row // n) == (col // n), 0.0, _NEG_INF).astype(jnp.float32)
    bias_temporal = jnp.where((row % n) == (col % n), 0.0, _NEG_INF).astype(jnp.float32)

    kernel = functools.partial(_fused_kernel, heads=heads, dim_head=dim_head, depth=depth)

    def _full_spec(arr):
        nd = arr.ndim
        return pl.BlockSpec(arr.shape, lambda i, _nd=nd: (0,) * _nd)

    weights = [params[name] for name in _PARAM_ORDER]
    in_specs = ([pl.BlockSpec((1, rows, d), lambda i: (i, 0, 0)),
                 _full_spec(bias_spatial),
                 _full_spec(bias_temporal)]
                + [_full_spec(w) for w in weights])

    out = pl.pallas_call(
        kernel,
        out_shape=jax.ShapeDtypeStruct((b, rows, d), x.dtype),
        grid=(b,),
        in_specs=in_specs,
        out_specs=pl.BlockSpec((1, rows, d), lambda i: (i, 0, 0)),
        compiler_params=pltpu.CompilerParams(dimension_semantics=("parallel",)),
    )(x2, bias_spatial, bias_temporal, *weights)
    return out.reshape(b, f, n, d)


# ---------------------------------------------------------------------------
# Deterministic parameter construction (weights stacked along a depth axis)
# ---------------------------------------------------------------------------
def init_params(key, *, dim, depth, heads, dim_head, mlp_dim):
    inner = heads * dim_head

    def nrm(k, shape, scale=0.02):
        return (scale * jax.random.normal(k, shape)).astype(jnp.float32)

    k1, k2, k3, k4, k5, k6 = jax.random.split(key, 6)

    # Fold the attention scale 1/sqrt(dim_head) into the q columns of w_qkv.
    qscale = jnp.concatenate([
        jnp.full((inner,), dim_head ** (-0.5), jnp.float32),
        jnp.ones((2 * inner,), jnp.float32)])[None, None, :]

    ones_d = jnp.ones((depth, 1, dim), jnp.float32)
    zeros_d = jnp.zeros((depth, 1, dim), jnp.float32)

    return {
        "s_ln_g": ones_d, "s_ln_b": zeros_d,
        "s_w_qkv": nrm(k1, (depth, dim, 3 * inner)) * qscale,
        "s_w_out": nrm(k2, (depth, inner, dim)),
        "s_b_out": zeros_d,
        "t_ln_g": ones_d, "t_ln_b": zeros_d,
        "t_w_qkv": nrm(k3, (depth, dim, 3 * inner)) * qscale,
        "t_w_out": nrm(k4, (depth, inner, dim)),
        "t_b_out": zeros_d,
        "ff_ln_g": ones_d, "ff_ln_b": zeros_d,
        "ff_w1": nrm(k5, (depth, dim, mlp_dim)),
        "ff_b1": jnp.zeros((depth, 1, mlp_dim), jnp.float32),
        "ff_w2": nrm(k6, (depth, mlp_dim, dim)),
        "ff_b2": zeros_d,
        "norm_g": jnp.ones((1, dim), jnp.float32),
        "norm_b": jnp.zeros((1, dim), jnp.float32),
    }


# ---------------------------------------------------------------------------
if __name__ == "__main__":
    # Small config consistent with the module: dim=32, depth=2, heads=4,
    # dim_head=8 (inner_dim=32), mlp_dim=64; video tokens (b=2, f=4, n=8).
    dim, depth, heads, dim_head, mlp_dim = 32, 2, 4, 8, 64
    b, f, n = 2, 4, 8

    key = jax.random.PRNGKey(0)
    key, kx, kp = jax.random.split(key, 3)
    x = jax.random.normal(kx, (b, f, n, dim), dtype=jnp.float32)
    params = init_params(kp, dim=dim, depth=depth, heads=heads,
                         dim_head=dim_head, mlp_dim=mlp_dim)

    fwd = jax.jit(functools.partial(factorized_transformer,
                                    heads=heads, dim_head=dim_head))
    out = fwd(x, params)
    jax.block_until_ready(out)
    assert out.shape == (b, f, n, dim)
    assert jnp.all(jnp.isfinite(out))
    print("KERNEL_OK")
</pallas_src>

<mosaic_0001>
module attributes {stable_mosaic.version = 11 : i64} {
  func.func @_fused_kernel(%arg0: i32, %arg1: memref<1x32x32xf32, #tpu.memory_space<vmem>>, %arg2: memref<32x32xf32, #tpu.memory_space<vmem>>, %arg3: memref<32x32xf32, #tpu.memory_space<vmem>>, %arg4: memref<2x1x32xf32, #tpu.memory_space<vmem>>, %arg5: memref<2x1x32xf32, #tpu.memory_space<vmem>>, %arg6: memref<2x32x96xf32, #tpu.memory_space<vmem>>, %arg7: memref<2x32x32xf32, #tpu.memory_space<vmem>>, %arg8: memref<2x1x32xf32, #tpu.memory_space<vmem>>, %arg9: memref<2x1x32xf32, #tpu.memory_space<vmem>>, %arg10: memref<2x1x32xf32, #tpu.memory_space<vmem>>, %arg11: memref<2x32x96xf32, #tpu.memory_space<vmem>>, %arg12: memref<2x32x32xf32, #tpu.memory_space<vmem>>, %arg13: memref<2x1x32xf32, #tpu.memory_space<vmem>>, %arg14: memref<2x1x32xf32, #tpu.memory_space<vmem>>, %arg15: memref<2x1x32xf32, #tpu.memory_space<vmem>>, %arg16: memref<2x32x64xf32, #tpu.memory_space<vmem>>, %arg17: memref<2x1x64xf32, #tpu.memory_space<vmem>>, %arg18: memref<2x64x32xf32, #tpu.memory_space<vmem>>, %arg19: memref<2x1x32xf32, #tpu.memory_space<vmem>>, %arg20: memref<1x32xf32, #tpu.memory_space<vmem>>, %arg21: memref<1x32xf32, #tpu.memory_space<vmem>>, %arg22: memref<1x32x32xf32, #tpu.memory_space<vmem>>) attributes {dimension_semantics = [#tpu.dimension_semantics<parallel>], iteration_bounds = array<i64: 2>, scalar_prefetch = 0 : i64, scratch_operands = 0 : i64, tpu.core_type = #tpu.core_type<tc>, window_params = [{transform_indices = @transform_0, window_bounds = array<i64: 1, 32, 32>}, {pipeline_mode = #tpu.pipeline_mode<synchronous>, transform_indices = @transform_1, window_bounds = array<i64: 32, 32>}, {pipeline_mode = #tpu.pipeline_mode<synchronous>, transform_indices = @transform_2, window_bounds = array<i64: 32, 32>}, {pipeline_mode = #tpu.pipeline_mode<synchronous>, transform_indices = @transform_3, window_bounds = array<i64: 2, 1, 32>}, {pipeline_mode = #tpu.pipeline_mode<synchronous>, transform_indices = @transform_4, window_bounds = array<i64: 2, 1, 32>}, {pipeline_mode = #tpu.pipeline_mode<synchronous>, transform_indices = @transform_5, window_bounds = array<i64: 2, 32, 96>}, {pipeline_mode = #tpu.pipeline_mode<synchronous>, transform_indices = @transform_6, window_bounds = array<i64: 2, 32, 32>}, {pipeline_mode = #tpu.pipeline_mode<synchronous>, transform_indices = @transform_7, window_bounds = array<i64: 2, 1, 32>}, {pipeline_mode = #tpu.pipeline_mode<synchronous>, transform_indices = @transform_8, window_bounds = array<i64: 2, 1, 32>}, {pipeline_mode = #tpu.pipeline_mode<synchronous>, transform_indices = @transform_9, window_bounds = array<i64: 2, 1, 32>}, {pipeline_mode = #tpu.pipeline_mode<synchronous>, transform_indices = @transform_10, window_bounds = array<i64: 2, 32, 96>}, {pipeline_mode = #tpu.pipeline_mode<synchronous>, transform_indices = @transform_11, window_bounds = array<i64: 2, 32, 32>}, {pipeline_mode = #tpu.pipeline_mode<synchronous>, transform_indices = @transform_12, window_bounds = array<i64: 2, 1, 32>}, {pipeline_mode = #tpu.pipeline_mode<synchronous>, transform_indices = @transform_13, window_bounds = array<i64: 2, 1, 32>}, {pipeline_mode = #tpu.pipeline_mode<synchronous>, transform_indices = @transform_14, window_bounds = array<i64: 2, 1, 32>}, {pipeline_mode = #tpu.pipeline_mode<synchronous>, transform_indices = @transform_15, window_bounds = array<i64: 2, 32, 64>}, {pipeline_mode = #tpu.pipeline_mode<synchronous>, transform_indices = @transform_16, window_bounds = array<i64: 2, 1, 64>}, {pipeline_mode = #tpu.pipeline_mode<synchronous>, transform_indices = @transform_17, window_bounds = array<i64: 2, 64, 32>}, {pipeline_mode = #tpu.pipeline_mode<synchronous>, transform_indices = @transform_18, window_bounds = array<i64: 2, 1, 32>}, {pipeline_mode = #tpu.pipeline_mode<synchronous>, transform_indices = @transform_19, window_bounds = array<i64: 1, 32>}, {pipeline_mode = #tpu.pipeline_mode<synchronous>, transform_indices = @transform_20, window_bounds = array<i64: 1, 32>}, {transform_indices = @transform_21, window_bounds = array<i64: 1, 32, 32>}]} {
    %c0 = arith.constant 0 : index
    %c0_0 = arith.constant 0 : index
    %c0_1 = arith.constant 0 : index
    %0 = vector.load %arg1[%c0, %c0_0, %c0_1] : memref<1x32x32xf32, #tpu.memory_space<vmem>>, vector<1x32x32xf32>
    %1 = vector.shape_cast %0 : vector<1x32x32xf32> to vector<32x32xf32>
    %c0_2 = arith.constant 0 : index
    %c0_3 = arith.constant 0 : index
    %2 = vector.load %arg2[%c0_2, %c0_3] : memref<32x32xf32, #tpu.memory_space<vmem>>, vector<32x32xf32>
    %c0_4 = arith.constant 0 : index
    %c0_5 = arith.constant 0 : index
    %3 = vector.load %arg3[%c0_4, %c0_5] : memref<32x32xf32, #tpu.memory_space<vmem>>, vector<32x32xf32>
    %c0_6 = arith.constant 0 : index
    %c0_7 = arith.constant 0 : index
    %c0_8 = arith.constant 0 : index
    %4 = vector.load %arg4[%c0_6, %c0_7, %c0_8] : memref<2x1x32xf32, #tpu.memory_space<vmem>>, vector<1x1x32xf32>
    %5 = vector.shape_cast %4 : vector<1x1x32xf32> to vector<1x32xf32>
    %c0_9 = arith.constant 0 : index
    %c0_10 = arith.constant 0 : index
    %c0_11 = arith.constant 0 : index
    %6 = vector.load %arg5[%c0_9, %c0_10, %c0_11] : memref<2x1x32xf32, #tpu.memory_space<vmem>>, vector<1x1x32xf32>
    %7 = vector.shape_cast %6 : vector<1x1x32xf32> to vector<1x32xf32>
    %c0_12 = arith.constant 0 : index
    %c0_13 = arith.constant 0 : index
    %c0_14 = arith.constant 0 : index
    %8 = vector.load %arg6[%c0_12, %c0_13, %c0_14] : memref<2x32x96xf32, #tpu.memory_space<vmem>>, vector<1x32x96xf32>
    %9 = vector.shape_cast %8 : vector<1x32x96xf32> to vector<32x96xf32>
    %c0_15 = arith.constant 0 : index
    %c0_16 = arith.constant 0 : index
    %c0_17 = arith.constant 0 : index
    %10 = vector.load %arg7[%c0_15, %c0_16, %c0_17] : memref<2x32x32xf32, #tpu.memory_space<vmem>>, vector<1x32x32xf32>
    %11 = vector.shape_cast %10 : vector<1x32x32xf32> to vector<32x32xf32>
    %c0_18 = arith.constant 0 : index
    %c0_19 = arith.constant 0 : index
    %c0_20 = arith.constant 0 : index
    %12 = vector.load %arg8[%c0_18, %c0_19, %c0_20] : memref<2x1x32xf32, #tpu.memory_space<vmem>>, vector<1x1x32xf32>
    %13 = vector.shape_cast %12 : vector<1x1x32xf32> to vector<1x32xf32>
    %cst = arith.constant dense<0.000000e+00> : vector<32xf32>
    %14 = vector.multi_reduction <add>, %1, %cst [1] : vector<32x32xf32> to vector<32xf32>
    %15 = vector.shape_cast %14 : vector<32xf32> to vector<32x1xf32>
    %cst_21 = arith.constant 3.200000e+01 : f32
    %16 = vector.broadcast %cst_21 : f32 to vector<32x1xf32>
    %17 = arith.divf %15, %16 : vector<32x1xf32>
    %18 = vector.broadcast %17 : vector<32x1xf32> to vector<32x32xf32>
    %19 = arith.subf %1, %18 : vector<32x32xf32>
    %20 = arith.mulf %19, %19 : vector<32x32xf32>
    %cst_22 = arith.constant dense<0.000000e+00> : vector<32xf32>
    %21 = vector.multi_reduction <add>, %20, %cst_22 [1] : vector<32x32xf32> to vector<32xf32>
    %22 = vector.shape_cast %21 : vector<32xf32> to vector<32x1xf32>
    %cst_23 = arith.constant 3.200000e+01 : f32
    %23 = vector.broadcast %cst_23 : f32 to vector<32x1xf32>
    %24 = arith.divf %22, %23 : vector<32x1xf32>
    %25 = vector.broadcast %17 : vector<32x1xf32> to vector<32x32xf32>
    %26 = arith.subf %1, %25 : vector<32x32xf32>
    %cst_24 = arith.constant 9.99999974E-6 : f32
    %27 = vector.broadcast %cst_24 : f32 to vector<32x1xf32>
    %28 = arith.addf %24, %27 : vector<32x1xf32>
    %29 = math.rsqrt %28 : vector<32x1xf32>
    %30 = vector.broadcast %29 : vector<32x1xf32> to vector<32x32xf32>
    %31 = arith.mulf %26, %30 : vector<32x32xf32>
    %32 = vector.broadcast %5 : vector<1x32xf32> to vector<32x32xf32>
    %33 = arith.mulf %31, %32 : vector<32x32xf32>
    %34 = vector.broadcast %7 : vector<1x32xf32> to vector<32x32xf32>
    %35 = arith.addf %33, %34 : vector<32x32xf32>
    %cst_25 = arith.constant dense<0.000000e+00> : vector<32x96xf32>
    %36 = tpu.matmul %35, %9, %cst_25 {dimension_numbers = #tpu.dot_dimension_numbers<[1], [0], [0], [1], [0, 0, 1, 1], [], []>} : vector<32x32xf32>, vector<32x96xf32>, vector<32x96xf32> -> vector<32x96xf32>
    %37 = vector.extract_strided_slice %36 {offsets = [0, 0], sizes = [32, 32], strides = [1, 1]} : vector<32x96xf32> to vector<32x32xf32>
    %38 = vector.extract_strided_slice %36 {offsets = [0, 32], sizes = [32, 32], strides = [1, 1]} : vector<32x96xf32> to vector<32x32xf32>
    %39 = vector.extract_strided_slice %36 {offsets = [0, 64], sizes = [32, 32], strides = [1, 1]} : vector<32x96xf32> to vector<32x32xf32>
    %cst_26 = arith.constant 0.000000e+00 : f32
    %40 = vector.broadcast %cst_26 : f32 to vector<32x32xf32>
    %41 = vector.extract_strided_slice %37 {offsets = [0, 0], sizes = [32, 8], strides = [1, 1]} : vector<32x32xf32> to vector<32x8xf32>
    %42 = vector.extract_strided_slice %38 {offsets = [0, 0], sizes = [32, 8], strides = [1, 1]} : vector<32x32xf32> to vector<32x8xf32>
    %43 = vector.extract_strided_slice %39 {offsets = [0, 0], sizes = [32, 8], strides = [1, 1]} : vector<32x32xf32> to vector<32x8xf32>
    %44 = tpu.transpose %42, [1, 0] : vector<32x8xf32> -> vector<8x32xf32>
    %cst_27 = arith.constant dense<0.000000e+00> : vector<32x32xf32>
    %45 = tpu.matmul %41, %44, %cst_27 {dimension_numbers = #tpu.dot_dimension_numbers<[1], [0], [0], [1], [0, 0, 1, 1], [], []>} : vector<32x8xf32>, vector<8x32xf32>, vector<32x32xf32> -> vector<32x32xf32>
    %46 = arith.addf %45, %2 : vector<32x32xf32>
    %cst_28 = arith.constant dense<0xFF800000> : vector<32xf32>
    %47 = vector.multi_reduction <maximumf>, %46, %cst_28 [1] : vector<32x32xf32> to vector<32xf32>
    %48 = vector.shape_cast %47 : vector<32xf32> to vector<32x1xf32>
    %49 = vector.broadcast %48 : vector<32x1xf32> to vector<32x32xf32>
    %50 = arith.subf %46, %49 : vector<32x32xf32>
    %51 = math.exp %50 : vector<32x32xf32>
    %cst_29 = arith.constant dense<0.000000e+00> : vector<32xf32>
    %52 = vector.multi_reduction <add>, %51, %cst_29 [1] : vector<32x32xf32> to vector<32xf32>
    %53 = vector.shape_cast %52 : vector<32xf32> to vector<32x1xf32>
    %54 = tpu.reciprocal %53 {approx = true} : vector<32x1xf32> -> vector<32x1xf32>
    %55 = vector.broadcast %54 : vector<32x1xf32> to vector<32x32xf32>
    %56 = arith.mulf %51, %55 : vector<32x32xf32>
    %cst_30 = arith.constant dense<0.000000e+00> : vector<32x8xf32>
    %57 = tpu.matmul %56, %43, %cst_30 {dimension_numbers = #tpu.dot_dimension_numbers<[1], [0], [0], [1], [0, 0, 1, 1], [], []>} : vector<32x32xf32>, vector<32x8xf32>, vector<32x8xf32> -> vector<32x8xf32>
    %58 = vector.extract_strided_slice %11 {offsets = [0, 0], sizes = [8, 32], strides = [1, 1]} : vector<32x32xf32> to vector<8x32xf32>
    %cst_31 = arith.constant dense<0.000000e+00> : vector<32x32xf32>
    %59 = tpu.matmul %57, %58, %cst_31 {dimension_numbers = #tpu.dot_dimension_numbers<[1], [0], [0], [1], [0, 0, 1, 1], [], []>} : vector<32x8xf32>, vector<8x32xf32>, vector<32x32xf32> -> vector<32x32xf32>
    %60 = arith.addf %40, %59 : vector<32x32xf32>
    %61 = vector.extract_strided_slice %37 {offsets = [0, 8], sizes = [32, 8], strides = [1, 1]} : vector<32x32xf32> to vector<32x8xf32>
    %62 = vector.extract_strided_slice %38 {offsets = [0, 8], sizes = [32, 8], strides = [1, 1]} : vector<32x32xf32> to vector<32x8xf32>
    %63 = vector.extract_strided_slice %39 {offsets = [0, 8], sizes = [32, 8], strides = [1, 1]} : vector<32x32xf32> to vector<32x8xf32>
    %64 = tpu.transpose %62, [1, 0] : vector<32x8xf32> -> vector<8x32xf32>
    %cst_32 = arith.constant dense<0.000000e+00> : vector<32x32xf32>
    %65 = tpu.matmul %61, %64, %cst_32 {dimension_numbers = #tpu.dot_dimension_numbers<[1], [0], [0], [1], [0, 0, 1, 1], [], []>} : vector<32x8xf32>, vector<8x32xf32>, vector<32x32xf32> -> vector<32x32xf32>
    %66 = arith.addf %65, %2 : vector<32x32xf32>
    %cst_33 = arith.constant dense<0xFF800000> : vector<32xf32>
    %67 = vector.multi_reduction <maximumf>, %66, %cst_33 [1] : vector<32x32xf32> to vector<32xf32>
    %68 = vector.shape_cast %67 : vector<32xf32> to vector<32x1xf32>
    %69 = vector.broadcast %68 : vector<32x1xf32> to vector<32x32xf32>
    %70 = arith.subf %66, %69 : vector<32x32xf32>
    %71 = math.exp %70 : vector<32x32xf32>
    %cst_34 = arith.constant dense<0.000000e+00> : vector<32xf32>
    %72 = vector.multi_reduction <add>, %71, %cst_34 [1] : vector<32x32xf32> to vector<32xf32>
    %73 = vector.shape_cast %72 : vector<32xf32> to vector<32x1xf32>
    %74 = tpu.reciprocal %73 {approx = true} : vector<32x1xf32> -> vector<32x1xf32>
    %75 = vector.broadcast %74 : vector<32x1xf32> to vector<32x32xf32>
    %76 = arith.mulf %71, %75 : vector<32x32xf32>
    %cst_35 = arith.constant dense<0.000000e+00> : vector<32x8xf32>
    %77 = tpu.matmul %76, %63, %cst_35 {dimension_numbers = #tpu.dot_dimension_numbers<[1], [0], [0], [1], [0, 0, 1, 1], [], []>} : vector<32x32xf32>, vector<32x8xf32>, vector<32x8xf32> -> vector<32x8xf32>
    %78 = vector.extract_strided_slice %11 {offsets = [8, 0], sizes = [8, 32], strides = [1, 1]} : vector<32x32xf32> to vector<8x32xf32>
    %cst_36 = arith.constant dense<0.000000e+00> : vector<32x32xf32>
    %79 = tpu.matmul %77, %78, %cst_36 {dimension_numbers = #tpu.dot_dimension_numbers<[1], [0], [0], [1], [0, 0, 1, 1], [], []>} : vector<32x8xf32>, vector<8x32xf32>, vector<32x32xf32> -> vector<32x32xf32>
    %80 = arith.addf %60, %79 : vector<32x32xf32>
    %81 = vector.extract_strided_slice %37 {offsets = [0, 16], sizes = [32, 8], strides = [1, 1]} : vector<32x32xf32> to vector<32x8xf32>
    %82 = vector.extract_strided_slice %38 {offsets = [0, 16], sizes = [32, 8], strides = [1, 1]} : vector<32x32xf32> to vector<32x8xf32>
    %83 = vector.extract_strided_slice %39 {offsets = [0, 16], sizes = [32, 8], strides = [1, 1]} : vector<32x32xf32> to vector<32x8xf32>
    %84 = tpu.transpose %82, [1, 0] : vector<32x8xf32> -> vector<8x32xf32>
    %cst_37 = arith.constant dense<0.000000e+00> : vector<32x32xf32>
    %85 = tpu.matmul %81, %84, %cst_37 {dimension_numbers = #tpu.dot_dimension_numbers<[1], [0], [0], [1], [0, 0, 1, 1], [], []>} : vector<32x8xf32>, vector<8x32xf32>, vector<32x32xf32> -> vector<32x32xf32>
    %86 = arith.addf %85, %2 : vector<32x32xf32>
    %cst_38 = arith.constant dense<0xFF800000> : vector<32xf32>
    %87 = vector.multi_reduction <maximumf>, %86, %cst_38 [1] : vector<32x32xf32> to vector<32xf32>
    %88 = vector.shape_cast %87 : vector<32xf32> to vector<32x1xf32>
    %89 = vector.broadcast %88 : vector<32x1xf32> to vector<32x32xf32>
    %90 = arith.subf %86, %89 : vector<32x32xf32>
    %91 = math.exp %90 : vector<32x32xf32>
    %cst_39 = arith.constant dense<0.000000e+00> : vector<32xf32>
    %92 = vector.multi_reduction <add>, %91, %cst_39 [1] : vector<32x32xf32> to vector<32xf32>
    %93 = vector.shape_cast %92 : vector<32xf32> to vector<32x1xf32>
    %94 = tpu.reciprocal %93 {approx = true} : vector<32x1xf32> -> vector<32x1xf32>
    %95 = vector.broadcast %94 : vector<32x1xf32> to vector<32x32xf32>
    %96 = arith.mulf %91, %95 : vector<32x32xf32>
    %cst_40 = arith.constant dense<0.000000e+00> : vector<32x8xf32>
    %97 = tpu.matmul %96, %83, %cst_40 {dimension_numbers = #tpu.dot_dimension_numbers<[1], [0], [0], [1], [0, 0, 1, 1], [], []>} : vector<32x32xf32>, vector<32x8xf32>, vector<32x8xf32> -> vector<32x8xf32>
    %98 = vector.extract_strided_slice %11 {offsets = [16, 0], sizes = [8, 32], strides = [1, 1]} : vector<32x32xf32> to vector<8x32xf32>
    %cst_41 = arith.constant dense<0.000000e+00> : vector<32x32xf32>
    %99 = tpu.matmul %97, %98, %cst_41 {dimension_numbers = #tpu.dot_dimension_numbers<[1], [0], [0], [1], [0, 0, 1, 1], [], []>} : vector<32x8xf32>, vector<8x32xf32>, vector<32x32xf32> -> vector<32x32xf32>
    %100 = arith.addf %80, %99 : vector<32x32xf32>
    %101 = vector.extract_strided_slice %37 {offsets = [0, 24], sizes = [32, 8], strides = [1, 1]} : vector<32x32xf32> to vector<32x8xf32>
    %102 = vector.extract_strided_slice %38 {offsets = [0, 24], sizes = [32, 8], strides = [1, 1]} : vector<32x32xf32> to vector<32x8xf32>
    %103 = vector.extract_strided_slice %39 {offsets = [0, 24], sizes = [32, 8], strides = [1, 1]} : vector<32x32xf32> to vector<32x8xf32>
    %104 = tpu.transpose %102, [1, 0] : vector<32x8xf32> -> vector<8x32xf32>
    %cst_42 = arith.constant dense<0.000000e+00> : vector<32x32xf32>
    %105 = tpu.matmul %101, %104, %cst_42 {dimension_numbers = #tpu.dot_dimension_numbers<[1], [0], [0], [1], [0, 0, 1, 1], [], []>} : vector<32x8xf32>, vector<8x32xf32>, vector<32x32xf32> -> vector<32x32xf32>
    %106 = arith.addf %105, %2 : vector<32x32xf32>
    %cst_43 = arith.constant dense<0xFF800000> : vector<32xf32>
    %107 = vector.multi_reduction <maximumf>, %106, %cst_43 [1] : vector<32x32xf32> to vector<32xf32>
    %108 = vector.shape_cast %107 : vector<32xf32> to vector<32x1xf32>
    %109 = vector.broadcast %108 : vector<32x1xf32> to vector<32x32xf32>
    %110 = arith.subf %106, %109 : vector<32x32xf32>
    %111 = math.exp %110 : vector<32x32xf32>
    %cst_44 = arith.constant dense<0.000000e+00> : vector<32xf32>
    %112 = vector.multi_reduction <add>, %111, %cst_44 [1] : vector<32x32xf32> to vector<32xf32>
    %113 = vector.shape_cast %112 : vector<32xf32> to vector<32x1xf32>
    %114 = tpu.reciprocal %113 {approx = true} : vector<32x1xf32> -> vector<32x1xf32>
    %115 = vector.broadcast %114 : vector<32x1xf32> to vector<32x32xf32>
    %116 = arith.mulf %111, %115 : vector<32x32xf32>
    %cst_45 = arith.constant dense<0.000000e+00> : vector<32x8xf32>
    %117 = tpu.matmul %116, %103, %cst_45 {dimension_numbers = #tpu.dot_dimension_numbers<[1], [0], [0], [1], [0, 0, 1, 1], [], []>} : vector<32x32xf32>, vector<32x8xf32>, vector<32x8xf32> -> vector<32x8xf32>
    %118 = vector.extract_strided_slice %11 {offsets = [24, 0], sizes = [8, 32], strides = [1, 1]} : vector<32x32xf32> to vector<8x32xf32>
    %cst_46 = arith.constant dense<0.000000e+00> : vector<32x32xf32>
    %119 = tpu.matmul %117, %118, %cst_46 {dimension_numbers = #tpu.dot_dimension_numbers<[1], [0], [0], [1], [0, 0, 1, 1], [], []>} : vector<32x8xf32>, vector<8x32xf32>, vector<32x32xf32> -> vector<32x32xf32>
    %120 = arith.addf %100, %119 : vector<32x32xf32>
    %121 = vector.broadcast %13 : vector<1x32xf32> to vector<32x32xf32>
    %122 = arith.addf %120, %121 : vector<32x32xf32>
    %123 = arith.addf %122, %1 : vector<32x32xf32>
    %c0_47 = arith.constant 0 : index
    %c0_48 = arith.constant 0 : index
    %c0_49 = arith.constant 0 : index
    %124 = vector.load %arg9[%c0_47, %c0_48, %c0_49] : memref<2x1x32xf32, #tpu.memory_space<vmem>>, vector<1x1x32xf32>
    %125 = vector.shape_cast %124 : vector<1x1x32xf32> to vector<1x32xf32>
    %c0_50 = arith.constant 0 : index
    %c0_51 = arith.constant 0 : index
    %c0_52 = arith.constant 0 : index
    %126 = vector.load %arg10[%c0_50, %c0_51, %c0_52] : memref<2x1x32xf32, #tpu.memory_space<vmem>>, vector<1x1x32xf32>
    %127 = vector.shape_cast %126 : vector<1x1x32xf32> to vector<1x32xf32>
    %c0_53 = arith.constant 0 : index
    %c0_54 = arith.constant 0 : index
    %c0_55 = arith.constant 0 : index
    %128 = vector.load %arg11[%c0_53, %c0_54, %c0_55] : memref<2x32x96xf32, #tpu.memory_space<vmem>>, vector<1x32x96xf32>
    %129 = vector.shape_cast %128 : vector<1x32x96xf32> to vector<32x96xf32>
    %c0_56 = arith.constant 0 : index
    %c0_57 = arith.constant 0 : index
    %c0_58 = arith.constant 0 : index
    %130 = vector.load %arg12[%c0_56, %c0_57, %c0_58] : memref<2x32x32xf32, #tpu.memory_space<vmem>>, vector<1x32x32xf32>
    %131 = vector.shape_cast %130 : vector<1x32x32xf32> to vector<32x32xf32>
    %c0_59 = arith.constant 0 : index
    %c0_60 = arith.constant 0 : index
    %c0_61 = arith.constant 0 : index
    %132 = vector.load %arg13[%c0_59, %c0_60, %c0_61] : memref<2x1x32xf32, #tpu.memory_space<vmem>>, vector<1x1x32xf32>
    %133 = vector.shape_cast %132 : vector<1x1x32xf32> to vector<1x32xf32>
    %cst_62 = arith.constant dense<0.000000e+00> : vector<32xf32>
    %134 = vector.multi_reduction <add>, %123, %cst_62 [1] : vector<32x32xf32> to vector<32xf32>
    %135 = vector.shape_cast %134 : vector<32xf32> to vector<32x1xf32>
    %cst_63 = arith.constant 3.200000e+01 : f32
    %136 = vector.broadcast %cst_63 : f32 to vector<32x1xf32>
    %137 = arith.divf %135, %136 : vector<32x1xf32>
    %138 = vector.broadcast %137 : vector<32x1xf32> to vector<32x32xf32>
    %139 = arith.subf %123, %138 : vector<32x32xf32>
    %140 = arith.mulf %139, %139 : vector<32x32xf32>
    %cst_64 = arith.constant dense<0.000000e+00> : vector<32xf32>
    %141 = vector.multi_reduction <add>, %140, %cst_64 [1] : vector<32x32xf32> to vector<32xf32>
    %142 = vector.shape_cast %141 : vector<32xf32> to vector<32x1xf32>
    %cst_65 = arith.constant 3.200000e+01 : f32
    %143 = vector.broadcast %cst_65 : f32 to vector<32x1xf32>
    %144 = arith.divf %142, %143 : vector<32x1xf32>
    %145 = vector.broadcast %137 : vector<32x1xf32> to vector<32x32xf32>
    %146 = arith.subf %123, %145 : vector<32x32xf32>
    %cst_66 = arith.constant 9.99999974E-6 : f32
    %147 = vector.broadcast %cst_66 : f32 to vector<32x1xf32>
    %148 = arith.addf %144, %147 : vector<32x1xf32>
    %149 = math.rsqrt %148 : vector<32x1xf32>
    %150 = vector.broadcast %149 : vector<32x1xf32> to vector<32x32xf32>
    %151 = arith.mulf %146, %150 : vector<32x32xf32>
    %152 = vector.broadcast %125 : vector<1x32xf32> to vector<32x32xf32>
    %153 = arith.mulf %151, %152 : vector<32x32xf32>
    %154 = vector.broadcast %127 : vector<1x32xf32> to vector<32x32xf32>
    %155 = arith.addf %153, %154 : vector<32x32xf32>
    %cst_67 = arith.constant dense<0.000000e+00> : vector<32x96xf32>
    %156 = tpu.matmul %155, %129, %cst_67 {dimension_numbers = #tpu.dot_dimension_numbers<[1], [0], [0], [1], [0, 0, 1, 1], [], []>} : vector<32x32xf32>, vector<32x96xf32>, vector<32x96xf32> -> vector<32x96xf32>
    %157 = vector.extract_strided_slice %156 {offsets = [0, 0], sizes = [32, 32], strides = [1, 1]} : vector<32x96xf32> to vector<32x32xf32>
    %158 = vector.extract_strided_slice %156 {offsets = [0, 32], sizes = [32, 32], strides = [1, 1]} : vector<32x96xf32> to vector<32x32xf32>
    %159 = vector.extract_strided_slice %156 {offsets = [0, 64], sizes = [32, 32], strides = [1, 1]} : vector<32x96xf32> to vector<32x32xf32>
    %cst_68 = arith.constant 0.000000e+00 : f32
    %160 = vector.broadcast %cst_68 : f32 to vector<32x32xf32>
    %161 = vector.extract_strided_slice %157 {offsets = [0, 0], sizes = [32, 8], strides = [1, 1]} : vector<32x32xf32> to vector<32x8xf32>
    %162 = vector.extract_strided_slice %158 {offsets = [0, 0], sizes = [32, 8], strides = [1, 1]} : vector<32x32xf32> to vector<32x8xf32>
    %163 = vector.extract_strided_slice %159 {offsets = [0, 0], sizes = [32, 8], strides = [1, 1]} : vector<32x32xf32> to vector<32x8xf32>
    %164 = tpu.transpose %162, [1, 0] : vector<32x8xf32> -> vector<8x32xf32>
    %cst_69 = arith.constant dense<0.000000e+00> : vector<32x32xf32>
    %165 = tpu.matmul %161, %164, %cst_69 {dimension_numbers = #tpu.dot_dimension_numbers<[1], [0], [0], [1], [0, 0, 1, 1], [], []>} : vector<32x8xf32>, vector<8x32xf32>, vector<32x32xf32> -> vector<32x32xf32>
    %166 = arith.addf %165, %3 : vector<32x32xf32>
    %cst_70 = arith.constant dense<0xFF800000> : vector<32xf32>
    %167 = vector.multi_reduction <maximumf>, %166, %cst_70 [1] : vector<32x32xf32> to vector<32xf32>
    %168 = vector.shape_cast %167 : vector<32xf32> to vector<32x1xf32>
    %169 = vector.broadcast %168 : vector<32x1xf32> to vector<32x32xf32>
    %170 = arith.subf %166, %169 : vector<32x32xf32>
    %171 = math.exp %170 : vector<32x32xf32>
    %cst_71 = arith.constant dense<0.000000e+00> : vector<32xf32>
    %172 = vector.multi_reduction <add>, %171, %cst_71 [1] : vector<32x32xf32> to vector<32xf32>
    %173 = vector.shape_cast %172 : vector<32xf32> to vector<32x1xf32>
    %174 = tpu.reciprocal %173 {approx = true} : vector<32x1xf32> -> vector<32x1xf32>
    %175 = vector.broadcast %174 : vector<32x1xf32> to vector<32x32xf32>
    %176 = arith.mulf %171, %175 : vector<32x32xf32>
    %cst_72 = arith.constant dense<0.000000e+00> : vector<32x8xf32>
    %177 = tpu.matmul %176, %163, %cst_72 {dimension_numbers = #tpu.dot_dimension_numbers<[1], [0], [0], [1], [0, 0, 1, 1], [], []>} : vector<32x32xf32>, vector<32x8xf32>, vector<32x8xf32> -> vector<32x8xf32>
    %178 = vector.extract_strided_slice %131 {offsets = [0, 0], sizes = [8, 32], strides = [1, 1]} : vector<32x32xf32> to vector<8x32xf32>
    %cst_73 = arith.constant dense<0.000000e+00> : vector<32x32xf32>
    %179 = tpu.matmul %177, %178, %cst_73 {dimension_numbers = #tpu.dot_dimension_numbers<[1], [0], [0], [1], [0, 0, 1, 1], [], []>} : vector<32x8xf32>, vector<8x32xf32>, vector<32x32xf32> -> vector<32x32xf32>
    %180 = arith.addf %160, %179 : vector<32x32xf32>
    %181 = vector.extract_strided_slice %157 {offsets = [0, 8], sizes = [32, 8], strides = [1, 1]} : vector<32x32xf32> to vector<32x8xf32>
    %182 = vector.extract_strided_slice %158 {offsets = [0, 8], sizes = [32, 8], strides = [1, 1]} : vector<32x32xf32> to vector<32x8xf32>
    %183 = vector.extract_strided_slice %159 {offsets = [0, 8], sizes = [32, 8], strides = [1, 1]} : vector<32x32xf32> to vector<32x8xf32>
    %184 = tpu.transpose %182, [1, 0] : vector<32x8xf32> -> vector<8x32xf32>
    %cst_74 = arith.constant dense<0.000000e+00> : vector<32x32xf32>
    %185 = tpu.matmul %181, %184, %cst_74 {dimension_numbers = #tpu.dot_dimension_numbers<[1], [0], [0], [1], [0, 0, 1, 1], [], []>} : vector<32x8xf32>, vector<8x32xf32>, vector<32x32xf32> -> vector<32x32xf32>
    %186 = arith.addf %185, %3 : vector<32x32xf32>
    %cst_75 = arith.constant dense<0xFF800000> : vector<32xf32>
    %187 = vector.multi_reduction <maximumf>, %186, %cst_75 [1] : vector<32x32xf32> to vector<32xf32>
    %188 = vector.shape_cast %187 : vector<32xf32> to vector<32x1xf32>
    %189 = vector.broadcast %188 : vector<32x1xf32> to vector<32x32xf32>
    %190 = arith.subf %186, %189 : vector<32x32xf32>
    %191 = math.exp %190 : vector<32x32xf32>
    %cst_76 = arith.constant dense<0.000000e+00> : vector<32xf32>
    %192 = vector.multi_reduction <add>, %191, %cst_76 [1] : vector<32x32xf32> to vector<32xf32>
    %193 = vector.shape_cast %192 : vector<32xf32> to vector<32x1xf32>
    %194 = tpu.reciprocal %193 {approx = true} : vector<32x1xf32> -> vector<32x1xf32>
    %195 = vector.broadcast %194 : vector<32x1xf32> to vector<32x32xf32>
    %196 = arith.mulf %191, %195 : vector<32x32xf32>
    %cst_77 = arith.constant dense<0.000000e+00> : vector<32x8xf32>
    %197 = tpu.matmul %196, %183, %cst_77 {dimension_numbers = #tpu.dot_dimension_numbers<[1], [0], [0], [1], [0, 0, 1, 1], [], []>} : vector<32x32xf32>, vector<32x8xf32>, vector<32x8xf32> -> vector<32x8xf32>
    %198 = vector.extract_strided_slice %131 {offsets = [8, 0], sizes = [8, 32], strides = [1, 1]} : vector<32x32xf32> to vector<8x32xf32>
    %cst_78 = arith.constant dense<0.000000e+00> : vector<32x32xf32>
    %199 = tpu.matmul %197, %198, %cst_78 {dimension_numbers = #tpu.dot_dimension_numbers<[1], [0], [0], [1], [0, 0, 1, 1], [], []>} : vector<32x8xf32>, vector<8x32xf32>, vector<32x32xf32> -> vector<32x32xf32>
    %200 = arith.addf %180, %199 : vector<32x32xf32>
    %201 = vector.extract_strided_slice %157 {offsets = [0, 16], sizes = [32, 8], strides = [1, 1]} : vector<32x32xf32> to vector<32x8xf32>
    %202 = vector.extract_strided_slice %158 {offsets = [0, 16], sizes = [32, 8], strides = [1, 1]} : vector<32x32xf32> to vector<32x8xf32>
    %203 = vector.extract_strided_slice %159 {offsets = [0, 16], sizes = [32, 8], strides = [1, 1]} : vector<32x32xf32> to vector<32x8xf32>
    %204 = tpu.transpose %202, [1, 0] : vector<32x8xf32> -> vector<8x32xf32>
    %cst_79 = arith.constant dense<0.000000e+00> : vector<32x32xf32>
    %205 = tpu.matmul %201, %204, %cst_79 {dimension_numbers = #tpu.dot_dimension_numbers<[1], [0], [0], [1], [0, 0, 1, 1], [], []>} : vector<32x8xf32>, vector<8x32xf32>, vector<32x32xf32> -> vector<32x32xf32>
    %206 = arith.addf %205, %3 : vector<32x32xf32>
    %cst_80 = arith.constant dense<0xFF800000> : vector<32xf32>
    %207 = vector.multi_reduction <maximumf>, %206, %cst_80 [1] : vector<32x32xf32> to vector<32xf32>
    %208 = vector.shape_cast %207 : vector<32xf32> to vector<32x1xf32>
    %209 = vector.broadcast %208 : vector<32x1xf32> to vector<32x32xf32>
    %210 = arith.subf %206, %209 : vector<32x32xf32>
    %211 = math.exp %210 : vector<32x32xf32>
    %cst_81 = arith.constant dense<0.000000e+00> : vector<32xf32>
    %212 = vector.multi_reduction <add>, %211, %cst_81 [1] : vector<32x32xf32> to vector<32xf32>
    %213 = vector.shape_cast %212 : vector<32xf32> to vector<32x1xf32>
    %214 = tpu.reciprocal %213 {approx = true} : vector<32x1xf32> -> vector<32x1xf32>
    %215 = vector.broadcast %214 : vector<32x1xf32> to vector<32x32xf32>
    %216 = arith.mulf %211, %215 : vector<32x32xf32>
    %cst_82 = arith.constant dense<0.000000e+00> : vector<32x8xf32>
    %217 = tpu.matmul %216, %203, %cst_82 {dimension_numbers = #tpu.dot_dimension_numbers<[1], [0], [0], [1], [0, 0, 1, 1], [], []>} : vector<32x32xf32>, vector<32x8xf32>, vector<32x8xf32> -> vector<32x8xf32>
    %218 = vector.extract_strided_slice %131 {offsets = [16, 0], sizes = [8, 32], strides = [1, 1]} : vector<32x32xf32> to vector<8x32xf32>
    %cst_83 = arith.constant dense<0.000000e+00> : vector<32x32xf32>
    %219 = tpu.matmul %217, %218, %cst_83 {dimension_numbers = #tpu.dot_dimension_numbers<[1], [0], [0], [1], [0, 0, 1, 1], [], []>} : vector<32x8xf32>, vector<8x32xf32>, vector<32x32xf32> -> vector<32x32xf32>
    %220 = arith.addf %200, %219 : vector<32x32xf32>
    %221 = vector.extract_strided_slice %157 {offsets = [0, 24], sizes = [32, 8], strides = [1, 1]} : vector<32x32xf32> to vector<32x8xf32>
    %222 = vector.extract_strided_slice %158 {offsets = [0, 24], sizes = [32, 8], strides = [1, 1]} : vector<32x32xf32> to vector<32x8xf32>
    %223 = vector.extract_strided_slice %159 {offsets = [0, 24], sizes = [32, 8], strides = [1, 1]} : vector<32x32xf32> to vector<32x8xf32>
    %224 = tpu.transpose %222, [1, 0] : vector<32x8xf32> -> vector<8x32xf32>
    %cst_84 = arith.constant dense<0.000000e+00> : vector<32x32xf32>
    %225 = tpu.matmul %221, %224, %cst_84 {dimension_numbers = #tpu.dot_dimension_numbers<[1], [0], [0], [1], [0, 0, 1, 1], [], []>} : vector<32x8xf32>, vector<8x32xf32>, vector<32x32xf32> -> vector<32x32xf32>
    %226 = arith.addf %225, %3 : vector<32x32xf32>
    %cst_85 = arith.constant dense<0xFF800000> : vector<32xf32>
    %227 = vector.multi_reduction <maximumf>, %226, %cst_85 [1] : vector<32x32xf32> to vector<32xf32>
    %228 = vector.shape_cast %227 : vector<32xf32> to vector<32x1xf32>
    %229 = vector.broadcast %228 : vector<32x1xf32> to vector<32x32xf32>
    %230 = arith.subf %226, %229 : vector<32x32xf32>
    %231 = math.exp %230 : vector<32x32xf32>
    %cst_86 = arith.constant dense<0.000000e+00> : vector<32xf32>
    %232 = vector.multi_reduction <add>, %231, %cst_86 [1] : vector<32x32xf32> to vector<32xf32>
    %233 = vector.shape_cast %232 : vector<32xf32> to vector<32x1xf32>
    %234 = tpu.reciprocal %233 {approx = true} : vector<32x1xf32> -> vector<32x1xf32>
    %235 = vector.broadcast %234 : vector<32x1xf32> to vector<32x32xf32>
    %236 = arith.mulf %231, %235 : vector<32x32xf32>
    %cst_87 = arith.constant dense<0.000000e+00> : vector<32x8xf32>
    %237 = tpu.matmul %236, %223, %cst_87 {dimension_numbers = #tpu.dot_dimension_numbers<[1], [0], [0], [1], [0, 0, 1, 1], [], []>} : vector<32x32xf32>, vector<32x8xf32>, vector<32x8xf32> -> vector<32x8xf32>
    %238 = vector.extract_strided_slice %131 {offsets = [24, 0], sizes = [8, 32], strides = [1, 1]} : vector<32x32xf32> to vector<8x32xf32>
    %cst_88 = arith.constant dense<0.000000e+00> : vector<32x32xf32>
    %239 = tpu.matmul %237, %238, %cst_88 {dimension_numbers = #tpu.dot_dimension_numbers<[1], [0], [0], [1], [0, 0, 1, 1], [], []>} : vector<32x8xf32>, vector<8x32xf32>, vector<32x32xf32> -> vector<32x32xf32>
    %240 = arith.addf %220, %239 : vector<32x32xf32>
    %241 = vector.broadcast %133 : vector<1x32xf32> to vector<32x32xf32>
    %242 = arith.addf %240, %241 : vector<32x32xf32>
    %243 = arith.addf %242, %123 : vector<32x32xf32>
    %c0_89 = arith.constant 0 : index
    %c0_90 = arith.constant 0 : index
    %c0_91 = arith.constant 0 : index
    %244 = vector.load %arg14[%c0_89, %c0_90, %c0_91] : memref<2x1x32xf32, #tpu.memory_space<vmem>>, vector<1x1x32xf32>
    %245 = vector.shape_cast %244 : vector<1x1x32xf32> to vector<1x32xf32>
    %c0_92 = arith.constant 0 : index
    %c0_93 = arith.constant 0 : index
    %c0_94 = arith.constant 0 : index
    %246 = vector.load %arg15[%c0_92, %c0_93, %c0_94] : memref<2x1x32xf32, #tpu.memory_space<vmem>>, vector<1x1x32xf32>
    %247 = vector.shape_cast %246 : vector<1x1x32xf32> to vector<1x32xf32>
    %c0_95 = arith.constant 0 : index
    %c0_96 = arith.constant 0 : index
    %c0_97 = arith.constant 0 : index
    %248 = vector.load %arg16[%c0_95, %c0_96, %c0_97] : memref<2x32x64xf32, #tpu.memory_space<vmem>>, vector<1x32x64xf32>
    %249 = vector.shape_cast %248 : vector<1x32x64xf32> to vector<32x64xf32>
    %c0_98 = arith.constant 0 : index
    %c0_99 = arith.constant 0 : index
    %c0_100 = arith.constant 0 : index
    %250 = vector.load %arg17[%c0_98, %c0_99, %c0_100] : memref<2x1x64xf32, #tpu.memory_space<vmem>>, vector<1x1x64xf32>
    %251 = vector.shape_cast %250 : vector<1x1x64xf32> to vector<1x64xf32>
    %c0_101 = arith.constant 0 : index
    %c0_102 = arith.constant 0 : index
    %c0_103 = arith.constant 0 : index
    %252 = vector.load %arg18[%c0_101, %c0_102, %c0_103] : memref<2x64x32xf32, #tpu.memory_space<vmem>>, vector<1x64x32xf32>
    %253 = vector.shape_cast %252 : vector<1x64x32xf32> to vector<64x32xf32>
    %c0_104 = arith.constant 0 : index
    %c0_105 = arith.constant 0 : index
    %c0_106 = arith.constant 0 : index
    %254 = vector.load %arg19[%c0_104, %c0_105, %c0_106] : memref<2x1x32xf32, #tpu.memory_space<vmem>>, vector<1x1x32xf32>
    %255 = vector.shape_cast %254 : vector<1x1x32xf32> to vector<1x32xf32>
    %cst_107 = arith.constant dense<0.000000e+00> : vector<32xf32>
    %256 = vector.multi_reduction <add>, %243, %cst_107 [1] : vector<32x32xf32> to vector<32xf32>
    %257 = vector.shape_cast %256 : vector<32xf32> to vector<32x1xf32>
    %cst_108 = arith.constant 3.200000e+01 : f32
    %258 = vector.broadcast %cst_108 : f32 to vector<32x1xf32>
    %259 = arith.divf %257, %258 : vector<32x1xf32>
    %260 = vector.broadcast %259 : vector<32x1xf32> to vector<32x32xf32>
    %261 = arith.subf %243, %260 : vector<32x32xf32>
    %262 = arith.mulf %261, %261 : vector<32x32xf32>
    %cst_109 = arith.constant dense<0.000000e+00> : vector<32xf32>
    %263 = vector.multi_reduction <add>, %262, %cst_109 [1] : vector<32x32xf32> to vector<32xf32>
    %264 = vector.shape_cast %263 : vector<32xf32> to vector<32x1xf32>
    %cst_110 = arith.constant 3.200000e+01 : f32
    %265 = vector.broadcast %cst_110 : f32 to vector<32x1xf32>
    %266 = arith.divf %264, %265 : vector<32x1xf32>
    %267 = vector.broadcast %259 : vector<32x1xf32> to vector<32x32xf32>
    %268 = arith.subf %243, %267 : vector<32x32xf32>
    %cst_111 = arith.constant 9.99999974E-6 : f32
    %269 = vector.broadcast %cst_111 : f32 to vector<32x1xf32>
    %270 = arith.addf %266, %269 : vector<32x1xf32>
    %271 = math.rsqrt %270 : vector<32x1xf32>
    %272 = vector.broadcast %271 : vector<32x1xf32> to vector<32x32xf32>
    %273 = arith.mulf %268, %272 : vector<32x32xf32>
    %274 = vector.broadcast %245 : vector<1x32xf32> to vector<32x32xf32>
    %275 = arith.mulf %273, %274 : vector<32x32xf32>
    %276 = vector.broadcast %247 : vector<1x32xf32> to vector<32x32xf32>
    %277 = arith.addf %275, %276 : vector<32x32xf32>
    %cst_112 = arith.constant dense<0.000000e+00> : vector<32x64xf32>
    %278 = tpu.matmul %277, %249, %cst_112 {dimension_numbers = #tpu.dot_dimension_numbers<[1], [0], [0], [1], [0, 0, 1, 1], [], []>} : vector<32x32xf32>, vector<32x64xf32>, vector<32x64xf32> -> vector<32x64xf32>
    %279 = vector.broadcast %251 : vector<1x64xf32> to vector<32x64xf32>
    %280 = arith.addf %278, %279 : vector<32x64xf32>
    %cst_113 = arith.constant 5.000000e-01 : f32
    %281 = vector.broadcast %cst_113 : f32 to vector<32x64xf32>
    %282 = arith.mulf %281, %280 : vector<32x64xf32>
    %cst_114 = arith.constant 0.707106769 : f32
    %283 = vector.broadcast %cst_114 : f32 to vector<32x64xf32>
    %284 = arith.mulf %280, %283 : vector<32x64xf32>
    %285 = math.erf %284 : vector<32x64xf32>
    %cst_115 = arith.constant 1.000000e+00 : f32
    %286 = vector.broadcast %cst_115 : f32 to vector<32x64xf32>
    %287 = arith.addf %286, %285 : vector<32x64xf32>
    %288 = arith.mulf %282, %287 : vector<32x64xf32>
    %cst_116 = arith.constant dense<0.000000e+00> : vector<32x32xf32>
    %289 = tpu.matmul %288, %253, %cst_116 {dimension_numbers = #tpu.dot_dimension_numbers<[1], [0], [0], [1], [0, 0, 1, 1], [], []>} : vector<32x64xf32>, vector<64x32xf32>, vector<32x32xf32> -> vector<32x32xf32>
    %290 = vector.broadcast %255 : vector<1x32xf32> to vector<32x32xf32>
    %291 = arith.addf %289, %290 : vector<32x32xf32>
    %292 = arith.addf %291, %243 : vector<32x32xf32>
    %c1 = arith.constant 1 : index
    %c0_117 = arith.constant 0 : index
    %c0_118 = arith.constant 0 : index
    %293 = vector.load %arg4[%c1, %c0_117, %c0_118] : memref<2x1x32xf32, #tpu.memory_space<vmem>>, vector<1x1x32xf32>
    %294 = vector.shape_cast %293 : vector<1x1x32xf32> to vector<1x32xf32>
    %c1_119 = arith.constant 1 : index
    %c0_120 = arith.constant 0 : index
    %c0_121 = arith.constant 0 : index
    %295 = vector.load %arg5[%c1_119, %c0_120, %c0_121] : memref<2x1x32xf32, #tpu.memory_space<vmem>>, vector<1x1x32xf32>
    %296 = vector.shape_cast %295 : vector<1x1x32xf32> to vector<1x32xf32>
    %c1_122 = arith.constant 1 : index
    %c0_123 = arith.constant 0 : index
    %c0_124 = arith.constant 0 : index
    %297 = vector.load %arg6[%c1_122, %c0_123, %c0_124] : memref<2x32x96xf32, #tpu.memory_space<vmem>>, vector<1x32x96xf32>
    %298 = vector.shape_cast %297 : vector<1x32x96xf32> to vector<32x96xf32>
    %c1_125 = arith.constant 1 : index
    %c0_126 = arith.constant 0 : index
    %c0_127 = arith.constant 0 : index
    %299 = vector.load %arg7[%c1_125, %c0_126, %c0_127] : memref<2x32x32xf32, #tpu.memory_space<vmem>>, vector<1x32x32xf32>
    %300 = vector.shape_cast %299 : vector<1x32x32xf32> to vector<32x32xf32>
    %c1_128 = arith.constant 1 : index
    %c0_129 = arith.constant 0 : index
    %c0_130 = arith.constant 0 : index
    %301 = vector.load %arg8[%c1_128, %c0_129, %c0_130] : memref<2x1x32xf32, #tpu.memory_space<vmem>>, vector<1x1x32xf32>
    %302 = vector.shape_cast %301 : vector<1x1x32xf32> to vector<1x32xf32>
    %cst_131 = arith.constant dense<0.000000e+00> : vector<32xf32>
    %303 = vector.multi_reduction <add>, %292, %cst_131 [1] : vector<32x32xf32> to vector<32xf32>
    %304 = vector.shape_cast %303 : vector<32xf32> to vector<32x1xf32>
    %cst_132 = arith.constant 3.200000e+01 : f32
    %305 = vector.broadcast %cst_132 : f32 to vector<32x1xf32>
    %306 = arith.divf %304, %305 : vector<32x1xf32>
    %307 = vector.broadcast %306 : vector<32x1xf32> to vector<32x32xf32>
    %308 = arith.subf %292, %307 : vector<32x32xf32>
    %309 = arith.mulf %308, %308 : vector<32x32xf32>
    %cst_133 = arith.constant dense<0.000000e+00> : vector<32xf32>
    %310 = vector.multi_reduction <add>, %309, %cst_133 [1] : vector<32x32xf32> to vector<32xf32>
    %311 = vector.shape_cast %310 : vector<32xf32> to vector<32x1xf32>
    %cst_134 = arith.constant 3.200000e+01 : f32
    %312 = vector.broadcast %cst_134 : f32 to vector<32x1xf32>
    %313 = arith.divf %311, %312 : vector<32x1xf32>
    %314 = vector.broadcast %306 : vector<32x1xf32> to vector<32x32xf32>
    %315 = arith.subf %292, %314 : vector<32x32xf32>
    %cst_135 = arith.constant 9.99999974E-6 : f32
    %316 = vector.broadcast %cst_135 : f32 to vector<32x1xf32>
    %317 = arith.addf %313, %316 : vector<32x1xf32>
    %318 = math.rsqrt %317 : vector<32x1xf32>
    %319 = vector.broadcast %318 : vector<32x1xf32> to vector<32x32xf32>
    %320 = arith.mulf %315, %319 : vector<32x32xf32>
    %321 = vector.broadcast %294 : vector<1x32xf32> to vector<32x32xf32>
    %322 = arith.mulf %320, %321 : vector<32x32xf32>
    %323 = vector.broadcast %296 : vector<1x32xf32> to vector<32x32xf32>
    %324 = arith.addf %322, %323 : vector<32x32xf32>
    %cst_136 = arith.constant dense<0.000000e+00> : vector<32x96xf32>
    %325 = tpu.matmul %324, %298, %cst_136 {dimension_numbers = #tpu.dot_dimension_numbers<[1], [0], [0], [1], [0, 0, 1, 1], [], []>} : vector<32x32xf32>, vector<32x96xf32>, vector<32x96xf32> -> vector<32x96xf32>
    %326 = vector.extract_strided_slice %325 {offsets = [0, 0], sizes = [32, 32], strides = [1, 1]} : vector<32x96xf32> to vector<32x32xf32>
    %327 = vector.extract_strided_slice %325 {offsets = [0, 32], sizes = [32, 32], strides = [1, 1]} : vector<32x96xf32> to vector<32x32xf32>
    %328 = vector.extract_strided_slice %325 {offsets = [0, 64], sizes = [32, 32], strides = [1, 1]} : vector<32x96xf32> to vector<32x32xf32>
    %cst_137 = arith.constant 0.000000e+00 : f32
    %329 = vector.broadcast %cst_137 : f32 to vector<32x32xf32>
    %330 = vector.extract_strided_slice %326 {offsets = [0, 0], sizes = [32, 8], strides = [1, 1]} : vector<32x32xf32> to vector<32x8xf32>
    %331 = vector.extract_strided_slice %327 {offsets = [0, 0], sizes = [32, 8], strides = [1, 1]} : vector<32x32xf32> to vector<32x8xf32>
    %332 = vector.extract_strided_slice %328 {offsets = [0, 0], sizes = [32, 8], strides = [1, 1]} : vector<32x32xf32> to vector<32x8xf32>
    %333 = tpu.transpose %331, [1, 0] : vector<32x8xf32> -> vector<8x32xf32>
    %cst_138 = arith.constant dense<0.000000e+00> : vector<32x32xf32>
    %334 = tpu.matmul %330, %333, %cst_138 {dimension_numbers = #tpu.dot_dimension_numbers<[1], [0], [0], [1], [0, 0, 1, 1], [], []>} : vector<32x8xf32>, vector<8x32xf32>, vector<32x32xf32> -> vector<32x32xf32>
    %335 = arith.addf %334, %2 : vector<32x32xf32>
    %cst_139 = arith.constant dense<0xFF800000> : vector<32xf32>
    %336 = vector.multi_reduction <maximumf>, %335, %cst_139 [1] : vector<32x32xf32> to vector<32xf32>
    %337 = vector.shape_cast %336 : vector<32xf32> to vector<32x1xf32>
    %338 = vector.broadcast %337 : vector<32x1xf32> to vector<32x32xf32>
    %339 = arith.subf %335, %338 : vector<32x32xf32>
    %340 = math.exp %339 : vector<32x32xf32>
    %cst_140 = arith.constant dense<0.000000e+00> : vector<32xf32>
    %341 = vector.multi_reduction <add>, %340, %cst_140 [1] : vector<32x32xf32> to vector<32xf32>
    %342 = vector.shape_cast %341 : vector<32xf32> to vector<32x1xf32>
    %343 = tpu.reciprocal %342 {approx = true} : vector<32x1xf32> -> vector<32x1xf32>
    %344 = vector.broadcast %343 : vector<32x1xf32> to vector<32x32xf32>
    %345 = arith.mulf %340, %344 : vector<32x32xf32>
    %cst_141 = arith.constant dense<0.000000e+00> : vector<32x8xf32>
    %346 = tpu.matmul %345, %332, %cst_141 {dimension_numbers = #tpu.dot_dimension_numbers<[1], [0], [0], [1], [0, 0, 1, 1], [], []>} : vector<32x32xf32>, vector<32x8xf32>, vector<32x8xf32> -> vector<32x8xf32>
    %347 = vector.extract_strided_slice %300 {offsets = [0, 0], sizes = [8, 32], strides = [1, 1]} : vector<32x32xf32> to vector<8x32xf32>
    %cst_142 = arith.constant dense<0.000000e+00> : vector<32x32xf32>
    %348 = tpu.matmul %346, %347, %cst_142 {dimension_numbers = #tpu.dot_dimension_numbers<[1], [0], [0], [1], [0, 0, 1, 1], [], []>} : vector<32x8xf32>, vector<8x32xf32>, vector<32x32xf32> -> vector<32x32xf32>
    %349 = arith.addf %329, %348 : vector<32x32xf32>
    %350 = vector.extract_strided_slice %326 {offsets = [0, 8], sizes = [32, 8], strides = [1, 1]} : vector<32x32xf32> to vector<32x8xf32>
    %351 = vector.extract_strided_slice %327 {offsets = [0, 8], sizes = [32, 8], strides = [1, 1]} : vector<32x32xf32> to vector<32x8xf32>
    %352 = vector.extract_strided_slice %328 {offsets = [0, 8], sizes = [32, 8], strides = [1, 1]} : vector<32x32xf32> to vector<32x8xf32>
    %353 = tpu.transpose %351, [1, 0] : vector<32x8xf32> -> vector<8x32xf32>
    %cst_143 = arith.constant dense<0.000000e+00> : vector<32x32xf32>
    %354 = tpu.matmul %350, %353, %cst_143 {dimension_numbers = #tpu.dot_dimension_numbers<[1], [0], [0], [1], [0, 0, 1, 1], [], []>} : vector<32x8xf32>, vector<8x32xf32>, vector<32x32xf32> -> vector<32x32xf32>
    %355 = arith.addf %354, %2 : vector<32x32xf32>
    %cst_144 = arith.constant dense<0xFF800000> : vector<32xf32>
    %356 = vector.multi_reduction <maximumf>, %355, %cst_144 [1] : vector<32x32xf32> to vector<32xf32>
    %357 = vector.shape_cast %356 : vector<32xf32> to vector<32x1xf32>
    %358 = vector.broadcast %357 : vector<32x1xf32> to vector<32x32xf32>
    %359 = arith.subf %355, %358 : vector<32x32xf32>
    %360 = math.exp %359 : vector<32x32xf32>
    %cst_145 = arith.constant dense<0.000000e+00> : vector<32xf32>
    %361 = vector.multi_reduction <add>, %360, %cst_145 [1] : vector<32x32xf32> to vector<32xf32>
    %362 = vector.shape_cast %361 : vector<32xf32> to vector<32x1xf32>
    %363 = tpu.reciprocal %362 {approx = true} : vector<32x1xf32> -> vector<32x1xf32>
    %364 = vector.broadcast %363 : vector<32x1xf32> to vector<32x32xf32>
    %365 = arith.mulf %360, %364 : vector<32x32xf32>
    %cst_146 = arith.constant dense<0.000000e+00> : vector<32x8xf32>
    %366 = tpu.matmul %365, %352, %cst_146 {dimension_numbers = #tpu.dot_dimension_numbers<[1], [0], [0], [1], [0, 0, 1, 1], [], []>} : vector<32x32xf32>, vector<32x8xf32>, vector<32x8xf32> -> vector<32x8xf32>
    %367 = vector.extract_strided_slice %300 {offsets = [8, 0], sizes = [8, 32], strides = [1, 1]} : vector<32x32xf32> to vector<8x32xf32>
    %cst_147 = arith.constant dense<0.000000e+00> : vector<32x32xf32>
    %368 = tpu.matmul %366, %367, %cst_147 {dimension_numbers = #tpu.dot_dimension_numbers<[1], [0], [0], [1], [0, 0, 1, 1], [], []>} : vector<32x8xf32>, vector<8x32xf32>, vector<32x32xf32> -> vector<32x32xf32>
    %369 = arith.addf %349, %368 : vector<32x32xf32>
    %370 = vector.extract_strided_slice %326 {offsets = [0, 16], sizes = [32, 8], strides = [1, 1]} : vector<32x32xf32> to vector<32x8xf32>
    %371 = vector.extract_strided_slice %327 {offsets = [0, 16], sizes = [32, 8], strides = [1, 1]} : vector<32x32xf32> to vector<32x8xf32>
    %372 = vector.extract_strided_slice %328 {offsets = [0, 16], sizes = [32, 8], strides = [1, 1]} : vector<32x32xf32> to vector<32x8xf32>
    %373 = tpu.transpose %371, [1, 0] : vector<32x8xf32> -> vector<8x32xf32>
    %cst_148 = arith.constant dense<0.000000e+00> : vector<32x32xf32>
    %374 = tpu.matmul %370, %373, %cst_148 {dimension_numbers = #tpu.dot_dimension_numbers<[1], [0], [0], [1], [0, 0, 1, 1], [], []>} : vector<32x8xf32>, vector<8x32xf32>, vector<32x32xf32> -> vector<32x32xf32>
    %375 = arith.addf %374, %2 : vector<32x32xf32>
    %cst_149 = arith.constant dense<0xFF800000> : vector<32xf32>
    %376 = vector.multi_reduction <maximumf>, %375, %cst_149 [1] : vector<32x32xf32> to vector<32xf32>
    %377 = vector.shape_cast %376 : vector<32xf32> to vector<32x1xf32>
    %378 = vector.broadcast %377 : vector<32x1xf32> to vector<32x32xf32>
    %379 = arith.subf %375, %378 : vector<32x32xf32>
    %380 = math.exp %379 : vector<32x32xf32>
    %cst_150 = arith.constant dense<0.000000e+00> : vector<32xf32>
    %381 = vector.multi_reduction <add>, %380, %cst_150 [1] : vector<32x32xf32> to vector<32xf32>
    %382 = vector.shape_cast %381 : vector<32xf32> to vector<32x1xf32>
    %383 = tpu.reciprocal %382 {approx = true} : vector<32x1xf32> -> vector<32x1xf32>
    %384 = vector.broadcast %383 : vector<32x1xf32> to vector<32x32xf32>
    %385 = arith.mulf %380, %384 : vector<32x32xf32>
    %cst_151 = arith.constant dense<0.000000e+00> : vector<32x8xf32>
    %386 = tpu.matmul %385, %372, %cst_151 {dimension_numbers = #tpu.dot_dimension_numbers<[1], [0], [0], [1], [0, 0, 1, 1], [], []>} : vector<32x32xf32>, vector<32x8xf32>, vector<32x8xf32> -> vector<32x8xf32>
    %387 = vector.extract_strided_slice %300 {offsets = [16, 0], sizes = [8, 32], strides = [1, 1]} : vector<32x32xf32> to vector<8x32xf32>
    %cst_152 = arith.constant dense<0.000000e+00> : vector<32x32xf32>
    %388 = tpu.matmul %386, %387, %cst_152 {dimension_numbers = #tpu.dot_dimension_numbers<[1], [0], [0], [1], [0, 0, 1, 1], [], []>} : vector<32x8xf32>, vector<8x32xf32>, vector<32x32xf32> -> vector<32x32xf32>
    %389 = arith.addf %369, %388 : vector<32x32xf32>
    %390 = vector.extract_strided_slice %326 {offsets = [0, 24], sizes = [32, 8], strides = [1, 1]} : vector<32x32xf32> to vector<32x8xf32>
    %391 = vector.extract_strided_slice %327 {offsets = [0, 24], sizes = [32, 8], strides = [1, 1]} : vector<32x32xf32> to vector<32x8xf32>
    %392 = vector.extract_strided_slice %328 {offsets = [0, 24], sizes = [32, 8], strides = [1, 1]} : vector<32x32xf32> to vector<32x8xf32>
    %393 = tpu.transpose %391, [1, 0] : vector<32x8xf32> -> vector<8x32xf32>
    %cst_153 = arith.constant dense<0.000000e+00> : vector<32x32xf32>
    %394 = tpu.matmul %390, %393, %cst_153 {dimension_numbers = #tpu.dot_dimension_numbers<[1], [0], [0], [1], [0, 0, 1, 1], [], []>} : vector<32x8xf32>, vector<8x32xf32>, vector<32x32xf32> -> vector<32x32xf32>
    %395 = arith.addf %394, %2 : vector<32x32xf32>
    %cst_154 = arith.constant dense<0xFF800000> : vector<32xf32>
    %396 = vector.multi_reduction <maximumf>, %395, %cst_154 [1] : vector<32x32xf32> to vector<32xf32>
    %397 = vector.shape_cast %396 : vector<32xf32> to vector<32x1xf32>
    %398 = vector.broadcast %397 : vector<32x1xf32> to vector<32x32xf32>
    %399 = arith.subf %395, %398 : vector<32x32xf32>
    %400 = math.exp %399 : vector<32x32xf32>
    %cst_155 = arith.constant dense<0.000000e+00> : vector<32xf32>
    %401 = vector.multi_reduction <add>, %400, %cst_155 [1] : vector<32x32xf32> to vector<32xf32>
    %402 = vector.shape_cast %401 : vector<32xf32> to vector<32x1xf32>
    %403 = tpu.reciprocal %402 {approx = true} : vector<32x1xf32> -> vector<32x1xf32>
    %404 = vector.broadcast %403 : vector<32x1xf32> to vector<32x32xf32>
    %405 = arith.mulf %400, %404 : vector<32x32xf32>
    %cst_156 = arith.constant dense<0.000000e+00> : vector<32x8xf32>
    %406 = tpu.matmul %405, %392, %cst_156 {dimension_numbers = #tpu.dot_dimension_numbers<[1], [0], [0], [1], [0, 0, 1, 1], [], []>} : vector<32x32xf32>, vector<32x8xf32>, vector<32x8xf32> -> vector<32x8xf32>
    %407 = vector.extract_strided_slice %300 {offsets = [24, 0], sizes = [8, 32], strides = [1, 1]} : vector<32x32xf32> to vector<8x32xf32>
    %cst_157 = arith.constant dense<0.000000e+00> : vector<32x32xf32>
    %408 = tpu.matmul %406, %407, %cst_157 {dimension_numbers = #tpu.dot_dimension_numbers<[1], [0], [0], [1], [0, 0, 1, 1], [], []>} : vector<32x8xf32>, vector<8x32xf32>, vector<32x32xf32> -> vector<32x32xf32>
    %409 = arith.addf %389, %408 : vector<32x32xf32>
    %410 = vector.broadcast %302 : vector<1x32xf32> to vector<32x32xf32>
    %411 = arith.addf %409, %410 : vector<32x32xf32>
    %412 = arith.addf %411, %292 : vector<32x32xf32>
    %c1_158 = arith.constant 1 : index
    %c0_159 = arith.constant 0 : index
    %c0_160 = arith.constant 0 : index
    %413 = vector.load %arg9[%c1_158, %c0_159, %c0_160] : memref<2x1x32xf32, #tpu.memory_space<vmem>>, vector<1x1x32xf32>
    %414 = vector.shape_cast %413 : vector<1x1x32xf32> to vector<1x32xf32>
    %c1_161 = arith.constant 1 : index
    %c0_162 = arith.constant 0 : index
    %c0_163 = arith.constant 0 : index
    %415 = vector.load %arg10[%c1_161, %c0_162, %c0_163] : memref<2x1x32xf32, #tpu.memory_space<vmem>>, vector<1x1x32xf32>
    %416 = vector.shape_cast %415 : vector<1x1x32xf32> to vector<1x32xf32>
    %c1_164 = arith.constant 1 : index
    %c0_165 = arith.constant 0 : index
    %c0_166 = arith.constant 0 : index
    %417 = vector.load %arg11[%c1_164, %c0_165, %c0_166] : memref<2x32x96xf32, #tpu.memory_space<vmem>>, vector<1x32x96xf32>
    %418 = vector.shape_cast %417 : vector<1x32x96xf32> to vector<32x96xf32>
    %c1_167 = arith.constant 1 : index
    %c0_168 = arith.constant 0 : index
    %c0_169 = arith.constant 0 : index
    %419 = vector.load %arg12[%c1_167, %c0_168, %c0_169] : memref<2x32x32xf32, #tpu.memory_space<vmem>>, vector<1x32x32xf32>
    %420 = vector.shape_cast %419 : vector<1x32x32xf32> to vector<32x32xf32>
    %c1_170 = arith.constant 1 : index
    %c0_171 = arith.constant 0 : index
    %c0_172 = arith.constant 0 : index
    %421 = vector.load %arg13[%c1_170, %c0_171, %c0_172] : memref<2x1x32xf32, #tpu.memory_space<vmem>>, vector<1x1x32xf32>
    %422 = vector.shape_cast %421 : vector<1x1x32xf32> to vector<1x32xf32>
    %cst_173 = arith.constant dense<0.000000e+00> : vector<32xf32>
    %423 = vector.multi_reduction <add>, %412, %cst_173 [1] : vector<32x32xf32> to vector<32xf32>
    %424 = vector.shape_cast %423 : vector<32xf32> to vector<32x1xf32>
    %cst_174 = arith.constant 3.200000e+01 : f32
    %425 = vector.broadcast %cst_174 : f32 to vector<32x1xf32>
    %426 = arith.divf %424, %425 : vector<32x1xf32>
    %427 = vector.broadcast %426 : vector<32x1xf32> to vector<32x32xf32>
    %428 = arith.subf %412, %427 : vector<32x32xf32>
    %429 = arith.mulf %428, %428 : vector<32x32xf32>
    %cst_175 = arith.constant dense<0.000000e+00> : vector<32xf32>
    %430 = vector.multi_reduction <add>, %429, %cst_175 [1] : vector<32x32xf32> to vector<32xf32>
    %431 = vector.shape_cast %430 : vector<32xf32> to vector<32x1xf32>
    %cst_176 = arith.constant 3.200000e+01 : f32
    %432 = vector.broadcast %cst_176 : f32 to vector<32x1xf32>
    %433 = arith.divf %431, %432 : vector<32x1xf32>
    %434 = vector.broadcast %426 : vector<32x1xf32> to vector<32x32xf32>
    %435 = arith.subf %412, %434 : vector<32x32xf32>
    %cst_177 = arith.constant 9.99999974E-6 : f32
    %436 = vector.broadcast %cst_177 : f32 to vector<32x1xf32>
    %437 = arith.addf %433, %436 : vector<32x1xf32>
    %438 = math.rsqrt %437 : vector<32x1xf32>
    %439 = vector.broadcast %438 : vector<32x1xf32> to vector<32x32xf32>
    %440 = arith.mulf %435, %439 : vector<32x32xf32>
    %441 = vector.broadcast %414 : vector<1x32xf32> to vector<32x32xf32>
    %442 = arith.mulf %440, %441 : vector<32x32xf32>
    %443 = vector.broadcast %416 : vector<1x32xf32> to vector<32x32xf32>
    %444 = arith.addf %442, %443 : vector<32x32xf32>
    %cst_178 = arith.constant dense<0.000000e+00> : vector<32x96xf32>
    %445 = tpu.matmul %444, %418, %cst_178 {dimension_numbers = #tpu.dot_dimension_numbers<[1], [0], [0], [1], [0, 0, 1, 1], [], []>} : vector<32x32xf32>, vector<32x96xf32>, vector<32x96xf32> -> vector<32x96xf32>
    %446 = vector.extract_strided_slice %445 {offsets = [0, 0], sizes = [32, 32], strides = [1, 1]} : vector<32x96xf32> to vector<32x32xf32>
    %447 = vector.extract_strided_slice %445 {offsets = [0, 32], sizes = [32, 32], strides = [1, 1]} : vector<32x96xf32> to vector<32x32xf32>
    %448 = vector.extract_strided_slice %445 {offsets = [0, 64], sizes = [32, 32], strides = [1, 1]} : vector<32x96xf32> to vector<32x32xf32>
    %cst_179 = arith.constant 0.000000e+00 : f32
    %449 = vector.broadcast %cst_179 : f32 to vector<32x32xf32>
    %450 = vector.extract_strided_slice %446 {offsets = [0, 0], sizes = [32, 8], strides = [1, 1]} : vector<32x32xf32> to vector<32x8xf32>
    %451 = vector.extract_strided_slice %447 {offsets = [0, 0], sizes = [32, 8], strides = [1, 1]} : vector<32x32xf32> to vector<32x8xf32>
    %452 = vector.extract_strided_slice %448 {offsets = [0, 0], sizes = [32, 8], strides = [1, 1]} : vector<32x32xf32> to vector<32x8xf32>
    %453 = tpu.transpose %451, [1, 0] : vector<32x8xf32> -> vector<8x32xf32>
    %cst_180 = arith.constant dense<0.000000e+00> : vector<32x32xf32>
    %454 = tpu.matmul %450, %453, %cst_180 {dimension_numbers = #tpu.dot_dimension_numbers<[1], [0], [0], [1], [0, 0, 1, 1], [], []>} : vector<32x8xf32>, vector<8x32xf32>, vector<32x32xf32> -> vector<32x32xf32>
    %455 = arith.addf %454, %3 : vector<32x32xf32>
    %cst_181 = arith.constant dense<0xFF800000> : vector<32xf32>
    %456 = vector.multi_reduction <maximumf>, %455, %cst_181 [1] : vector<32x32xf32> to vector<32xf32>
    %457 = vector.shape_cast %456 : vector<32xf32> to vector<32x1xf32>
    %458 = vector.broadcast %457 : vector<32x1xf32> to vector<32x32xf32>
    %459 = arith.subf %455, %458 : vector<32x32xf32>
    %460 = math.exp %459 : vector<32x32xf32>
    %cst_182 = arith.constant dense<0.000000e+00> : vector<32xf32>
    %461 = vector.multi_reduction <add>, %460, %cst_182 [1] : vector<32x32xf32> to vector<32xf32>
    %462 = vector.shape_cast %461 : vector<32xf32> to vector<32x1xf32>
    %463 = tpu.reciprocal %462 {approx = true} : vector<32x1xf32> -> vector<32x1xf32>
    %464 = vector.broadcast %463 : vector<32x1xf32> to vector<32x32xf32>
    %465 = arith.mulf %460, %464 : vector<32x32xf32>
    %cst_183 = arith.constant dense<0.000000e+00> : vector<32x8xf32>
    %466 = tpu.matmul %465, %452, %cst_183 {dimension_numbers = #tpu.dot_dimension_numbers<[1], [0], [0], [1], [0, 0, 1, 1], [], []>} : vector<32x32xf32>, vector<32x8xf32>, vector<32x8xf32> -> vector<32x8xf32>
    %467 = vector.extract_strided_slice %420 {offsets = [0, 0], sizes = [8, 32], strides = [1, 1]} : vector<32x32xf32> to vector<8x32xf32>
    %cst_184 = arith.constant dense<0.000000e+00> : vector<32x32xf32>
    %468 = tpu.matmul %466, %467, %cst_184 {dimension_numbers = #tpu.dot_dimension_numbers<[1], [0], [0], [1], [0, 0, 1, 1], [], []>} : vector<32x8xf32>, vector<8x32xf32>, vector<32x32xf32> -> vector<32x32xf32>
    %469 = arith.addf %449, %468 : vector<32x32xf32>
    %470 = vector.extract_strided_slice %446 {offsets = [0, 8], sizes = [32, 8], strides = [1, 1]} : vector<32x32xf32> to vector<32x8xf32>
    %471 = vector.extract_strided_slice %447 {offsets = [0, 8], sizes = [32, 8], strides = [1, 1]} : vector<32x32xf32> to vector<32x8xf32>
    %472 = vector.extract_strided_slice %448 {offsets = [0, 8], sizes = [32, 8], strides = [1, 1]} : vector<32x32xf32> to vector<32x8xf32>
    %473 = tpu.transpose %471, [1, 0] : vector<32x8xf32> -> vector<8x32xf32>
    %cst_185 = arith.constant dense<0.000000e+00> : vector<32x32xf32>
    %474 = tpu.matmul %470, %473, %cst_185 {dimension_numbers = #tpu.dot_dimension_numbers<[1], [0], [0], [1], [0, 0, 1, 1], [], []>} : vector<32x8xf32>, vector<8x32xf32>, vector<32x32xf32> -> vector<32x32xf32>
    %475 = arith.addf %474, %3 : vector<32x32xf32>
    %cst_186 = arith.constant dense<0xFF800000> : vector<32xf32>
    %476 = vector.multi_reduction <maximumf>, %475, %cst_186 [1] : vector<32x32xf32> to vector<32xf32>
    %477 = vector.shape_cast %476 : vector<32xf32> to vector<32x1xf32>
    %478 = vector.broadcast %477 : vector<32x1xf32> to vector<32x32xf32>
    %479 = arith.subf %475, %478 : vector<32x32xf32>
    %480 = math.exp %479 : vector<32x32xf32>
    %cst_187 = arith.constant dense<0.000000e+00> : vector<32xf32>
    %481 = vector.multi_reduction <add>, %480, %cst_187 [1] : vector<32x32xf32> to vector<32xf32>
    %482 = vector.shape_cast %481 : vector<32xf32> to vector<32x1xf32>
    %483 = tpu.reciprocal %482 {approx = true} : vector<32x1xf32> -> vector<32x1xf32>
    %484 = vector.broadcast %483 : vector<32x1xf32> to vector<32x32xf32>
    %485 = arith.mulf %480, %484 : vector<32x32xf32>
    %cst_188 = arith.constant dense<0.000000e+00> : vector<32x8xf32>
    %486 = tpu.matmul %485, %472, %cst_188 {dimension_numbers = #tpu.dot_dimension_numbers<[1], [0], [0], [1], [0, 0, 1, 1], [], []>} : vector<32x32xf32>, vector<32x8xf32>, vector<32x8xf32> -> vector<32x8xf32>
    %487 = vector.extract_strided_slice %420 {offsets = [8, 0], sizes = [8, 32], strides = [1, 1]} : vector<32x32xf32> to vector<8x32xf32>
    %cst_189 = arith.constant dense<0.000000e+00> : vector<32x32xf32>
    %488 = tpu.matmul %486, %487, %cst_189 {dimension_numbers = #tpu.dot_dimension_numbers<[1], [0], [0], [1], [0, 0, 1, 1], [], []>} : vector<32x8xf32>, vector<8x32xf32>, vector<32x32xf32> -> vector<32x32xf32>
    %489 = arith.addf %469, %488 : vector<32x32xf32>
    %490 = vector.extract_strided_slice %446 {offsets = [0, 16], sizes = [32, 8], strides = [1, 1]} : vector<32x32xf32> to vector<32x8xf32>
    %491 = vector.extract_strided_slice %447 {offsets = [0, 16], sizes = [32, 8], strides = [1, 1]} : vector<32x32xf32> to vector<32x8xf32>
    %492 = vector.extract_strided_slice %448 {offsets = [0, 16], sizes = [32, 8], strides = [1, 1]} : vector<32x32xf32> to vector<32x8xf32>
    %493 = tpu.transpose %491, [1, 0] : vector<32x8xf32> -> vector<8x32xf32>
    %cst_190 = arith.constant dense<0.000000e+00> : vector<32x32xf32>
    %494 = tpu.matmul %490, %493, %cst_190 {dimension_numbers = #tpu.dot_dimension_numbers<[1], [0], [0], [1], [0, 0, 1, 1], [], []>} : vector<32x8xf32>, vector<8x32xf32>, vector<32x32xf32> -> vector<32x32xf32>
    %495 = arith.addf %494, %3 : vector<32x32xf32>
    %cst_191 = arith.constant dense<0xFF800000> : vector<32xf32>
    %496 = vector.multi_reduction <maximumf>, %495, %cst_191 [1] : vector<32x32xf32> to vector<32xf32>
    %497 = vector.shape_cast %496 : vector<32xf32> to vector<32x1xf32>
    %498 = vector.broadcast %497 : vector<32x1xf32> to vector<32x32xf32>
    %499 = arith.subf %495, %498 : vector<32x32xf32>
    %500 = math.exp %499 : vector<32x32xf32>
    %cst_192 = arith.constant dense<0.000000e+00> : vector<32xf32>
    %501 = vector.multi_reduction <add>, %500, %cst_192 [1] : vector<32x32xf32> to vector<32xf32>
    %502 = vector.shape_cast %501 : vector<32xf32> to vector<32x1xf32>
    %503 = tpu.reciprocal %502 {approx = true} : vector<32x1xf32> -> vector<32x1xf32>
    %504 = vector.broadcast %503 : vector<32x1xf32> to vector<32x32xf32>
    %505 = arith.mulf %500, %504 : vector<32x32xf32>
    %cst_193 = arith.constant dense<0.000000e+00> : vector<32x8xf32>
    %506 = tpu.matmul %505, %492, %cst_193 {dimension_numbers = #tpu.dot_dimension_numbers<[1], [0], [0], [1], [0, 0, 1, 1], [], []>} : vector<32x32xf32>, vector<32x8xf32>, vector<32x8xf32> -> vector<32x8xf32>
    %507 = vector.extract_strided_slice %420 {offsets = [16, 0], sizes = [8, 32], strides = [1, 1]} : vector<32x32xf32> to vector<8x32xf32>
    %cst_194 = arith.constant dense<0.000000e+00> : vector<32x32xf32>
    %508 = tpu.matmul %506, %507, %cst_194 {dimension_numbers = #tpu.dot_dimension_numbers<[1], [0], [0], [1], [0, 0, 1, 1], [], []>} : vector<32x8xf32>, vector<8x32xf32>, vector<32x32xf32> -> vector<32x32xf32>
    %509 = arith.addf %489, %508 : vector<32x32xf32>
    %510 = vector.extract_strided_slice %446 {offsets = [0, 24], sizes = [32, 8], strides = [1, 1]} : vector<32x32xf32> to vector<32x8xf32>
    %511 = vector.extract_strided_slice %447 {offsets = [0, 24], sizes = [32, 8], strides = [1, 1]} : vector<32x32xf32> to vector<32x8xf32>
    %512 = vector.extract_strided_slice %448 {offsets = [0, 24], sizes = [32, 8], strides = [1, 1]} : vector<32x32xf32> to vector<32x8xf32>
    %513 = tpu.transpose %511, [1, 0] : vector<32x8xf32> -> vector<8x32xf32>
    %cst_195 = arith.constant dense<0.000000e+00> : vector<32x32xf32>
    %514 = tpu.matmul %510, %513, %cst_195 {dimension_numbers = #tpu.dot_dimension_numbers<[1], [0], [0], [1], [0, 0, 1, 1], [], []>} : vector<32x8xf32>, vector<8x32xf32>, vector<32x32xf32> -> vector<32x32xf32>
    %515 = arith.addf %514, %3 : vector<32x32xf32>
    %cst_196 = arith.constant dense<0xFF800000> : vector<32xf32>
    %516 = vector.multi_reduction <maximumf>, %515, %cst_196 [1] : vector<32x32xf32> to vector<32xf32>
    %517 = vector.shape_cast %516 : vector<32xf32> to vector<32x1xf32>
    %518 = vector.broadcast %517 : vector<32x1xf32> to vector<32x32xf32>
    %519 = arith.subf %515, %518 : vector<32x32xf32>
    %520 = math.exp %519 : vector<32x32xf32>
    %cst_197 = arith.constant dense<0.000000e+00> : vector<32xf32>
    %521 = vector.multi_reduction <add>, %520, %cst_197 [1] : vector<32x32xf32> to vector<32xf32>
    %522 = vector.shape_cast %521 : vector<32xf32> to vector<32x1xf32>
    %523 = tpu.reciprocal %522 {approx = true} : vector<32x1xf32> -> vector<32x1xf32>
    %524 = vector.broadcast %523 : vector<32x1xf32> to vector<32x32xf32>
    %525 = arith.mulf %520, %524 : vector<32x32xf32>
    %cst_198 = arith.constant dense<0.000000e+00> : vector<32x8xf32>
    %526 = tpu.matmul %525, %512, %cst_198 {dimension_numbers = #tpu.dot_dimension_numbers<[1], [0], [0], [1], [0, 0, 1, 1], [], []>} : vector<32x32xf32>, vector<32x8xf32>, vector<32x8xf32> -> vector<32x8xf32>
    %527 = vector.extract_strided_slice %420 {offsets = [24, 0], sizes = [8, 32], strides = [1, 1]} : vector<32x32xf32> to vector<8x32xf32>
    %cst_199 = arith.constant dense<0.000000e+00> : vector<32x32xf32>
    %528 = tpu.matmul %526, %527, %cst_199 {dimension_numbers = #tpu.dot_dimension_numbers<[1], [0], [0], [1], [0, 0, 1, 1], [], []>} : vector<32x8xf32>, vector<8x32xf32>, vector<32x32xf32> -> vector<32x32xf32>
    %529 = arith.addf %509, %528 : vector<32x32xf32>
    %530 = vector.broadcast %422 : vector<1x32xf32> to vector<32x32xf32>
    %531 = arith.addf %529, %530 : vector<32x32xf32>
    %532 = arith.addf %531, %412 : vector<32x32xf32>
    %c1_200 = arith.constant 1 : index
    %c0_201 = arith.constant 0 : index
    %c0_202 = arith.constant 0 : index
    %533 = vector.load %arg14[%c1_200, %c0_201, %c0_202] : memref<2x1x32xf32, #tpu.memory_space<vmem>>, vector<1x1x32xf32>
    %534 = vector.shape_cast %533 : vector<1x1x32xf32> to vector<1x32xf32>
    %c1_203 = arith.constant 1 : index
    %c0_204 = arith.constant 0 : index
    %c0_205 = arith.constant 0 : index
    %535 = vector.load %arg15[%c1_203, %c0_204, %c0_205] : memref<2x1x32xf32, #tpu.memory_space<vmem>>, vector<1x1x32xf32>
    %536 = vector.shape_cast %535 : vector<1x1x32xf32> to vector<1x32xf32>
    %c1_206 = arith.constant 1 : index
    %c0_207 = arith.constant 0 : index
    %c0_208 = arith.constant 0 : index
    %537 = vector.load %arg16[%c1_206, %c0_207, %c0_208] : memref<2x32x64xf32, #tpu.memory_space<vmem>>, vector<1x32x64xf32>
    %538 = vector.shape_cast %537 : vector<1x32x64xf32> to vector<32x64xf32>
    %c1_209 = arith.constant 1 : index
    %c0_210 = arith.constant 0 : index
    %c0_211 = arith.constant 0 : index
    %539 = vector.load %arg17[%c1_209, %c0_210, %c0_211] : memref<2x1x64xf32, #tpu.memory_space<vmem>>, vector<1x1x64xf32>
    %540 = vector.shape_cast %539 : vector<1x1x64xf32> to vector<1x64xf32>
    %c1_212 = arith.constant 1 : index
    %c0_213 = arith.constant 0 : index
    %c0_214 = arith.constant 0 : index
    %541 = vector.load %arg18[%c1_212, %c0_213, %c0_214] : memref<2x64x32xf32, #tpu.memory_space<vmem>>, vector<1x64x32xf32>
    %542 = vector.shape_cast %541 : vector<1x64x32xf32> to vector<64x32xf32>
    %c1_215 = arith.constant 1 : index
    %c0_216 = arith.constant 0 : index
    %c0_217 = arith.constant 0 : index
    %543 = vector.load %arg19[%c1_215, %c0_216, %c0_217] : memref<2x1x32xf32, #tpu.memory_space<vmem>>, vector<1x1x32xf32>
    %544 = vector.shape_cast %543 : vector<1x1x32xf32> to vector<1x32xf32>
    %cst_218 = arith.constant dense<0.000000e+00> : vector<32xf32>
    %545 = vector.multi_reduction <add>, %532, %cst_218 [1] : vector<32x32xf32> to vector<32xf32>
    %546 = vector.shape_cast %545 : vector<32xf32> to vector<32x1xf32>
    %cst_219 = arith.constant 3.200000e+01 : f32
    %547 = vector.broadcast %cst_219 : f32 to vector<32x1xf32>
    %548 = arith.divf %546, %547 : vector<32x1xf32>
    %549 = vector.broadcast %548 : vector<32x1xf32> to vector<32x32xf32>
    %550 = arith.subf %532, %549 : vector<32x32xf32>
    %551 = arith.mulf %550, %550 : vector<32x32xf32>
    %cst_220 = arith.constant dense<0.000000e+00> : vector<32xf32>
    %552 = vector.multi_reduction <add>, %551, %cst_220 [1] : vector<32x32xf32> to vector<32xf32>
    %553 = vector.shape_cast %552 : vector<32xf32> to vector<32x1xf32>
    %cst_221 = arith.constant 3.200000e+01 : f32
    %554 = vector.broadcast %cst_221 : f32 to vector<32x1xf32>
    %555 = arith.divf %553, %554 : vector<32x1xf32>
    %556 = vector.broadcast %548 : vector<32x1xf32> to vector<32x32xf32>
    %557 = arith.subf %532, %556 : vector<32x32xf32>
    %cst_222 = arith.constant 9.99999974E-6 : f32
    %558 = vector.broadcast %cst_222 : f32 to vector<32x1xf32>
    %559 = arith.addf %555, %558 : vector<32x1xf32>
    %560 = math.rsqrt %559 : vector<32x1xf32>
    %561 = vector.broadcast %560 : vector<32x1xf32> to vector<32x32xf32>
    %562 = arith.mulf %557, %561 : vector<32x32xf32>
    %563 = vector.broadcast %534 : vector<1x32xf32> to vector<32x32xf32>
    %564 = arith.mulf %562, %563 : vector<32x32xf32>
    %565 = vector.broadcast %536 : vector<1x32xf32> to vector<32x32xf32>
    %566 = arith.addf %564, %565 : vector<32x32xf32>
    %cst_223 = arith.constant dense<0.000000e+00> : vector<32x64xf32>
    %567 = tpu.matmul %566, %538, %cst_223 {dimension_numbers = #tpu.dot_dimension_numbers<[1], [0], [0], [1], [0, 0, 1, 1], [], []>} : vector<32x32xf32>, vector<32x64xf32>, vector<32x64xf32> -> vector<32x64xf32>
    %568 = vector.broadcast %540 : vector<1x64xf32> to vector<32x64xf32>
    %569 = arith.addf %567, %568 : vector<32x64xf32>
    %cst_224 = arith.constant 5.000000e-01 : f32
    %570 = vector.broadcast %cst_224 : f32 to vector<32x64xf32>
    %571 = arith.mulf %570, %569 : vector<32x64xf32>
    %cst_225 = arith.constant 0.707106769 : f32
    %572 = vector.broadcast %cst_225 : f32 to vector<32x64xf32>
    %573 = arith.mulf %569, %572 : vector<32x64xf32>
    %574 = math.erf %573 : vector<32x64xf32>
    %cst_226 = arith.constant 1.000000e+00 : f32
    %575 = vector.broadcast %cst_226 : f32 to vector<32x64xf32>
    %576 = arith.addf %575, %574 : vector<32x64xf32>
    %577 = arith.mulf %571, %576 : vector<32x64xf32>
    %cst_227 = arith.constant dense<0.000000e+00> : vector<32x32xf32>
    %578 = tpu.matmul %577, %542, %cst_227 {dimension_numbers = #tpu.dot_dimension_numbers<[1], [0], [0], [1], [0, 0, 1, 1], [], []>} : vector<32x64xf32>, vector<64x32xf32>, vector<32x32xf32> -> vector<32x32xf32>
    %579 = vector.broadcast %544 : vector<1x32xf32> to vector<32x32xf32>
    %580 = arith.addf %578, %579 : vector<32x32xf32>
    %581 = arith.addf %580, %532 : vector<32x32xf32>
    %c0_228 = arith.constant 0 : index
    %c0_229 = arith.constant 0 : index
    %582 = vector.load %arg20[%c0_228, %c0_229] : memref<1x32xf32, #tpu.memory_space<vmem>>, vector<1x32xf32>
    %c0_230 = arith.constant 0 : index
    %c0_231 = arith.constant 0 : index
    %583 = vector.load %arg21[%c0_230, %c0_231] : memref<1x32xf32, #tpu.memory_space<vmem>>, vector<1x32xf32>
    %cst_232 = arith.constant dense<0.000000e+00> : vector<32xf32>
    %584 = vector.multi_reduction <add>, %581, %cst_232 [1] : vector<32x32xf32> to vector<32xf32>
    %585 = vector.shape_cast %584 : vector<32xf32> to vector<32x1xf32>
    %cst_233 = arith.constant 3.200000e+01 : f32
    %586 = vector.broadcast %cst_233 : f32 to vector<32x1xf32>
    %587 = arith.divf %585, %586 : vector<32x1xf32>
    %588 = vector.broadcast %587 : vector<32x1xf32> to vector<32x32xf32>
    %589 = arith.subf %581, %588 : vector<32x32xf32>
    %590 = arith.mulf %589, %589 : vector<32x32xf32>
    %cst_234 = arith.constant dense<0.000000e+00> : vector<32xf32>
    %591 = vector.multi_reduction <add>, %590, %cst_234 [1] : vector<32x32xf32> to vector<32xf32>
    %592 = vector.shape_cast %591 : vector<32xf32> to vector<32x1xf32>
    %cst_235 = arith.constant 3.200000e+01 : f32
    %593 = vector.broadcast %cst_235 : f32 to vector<32x1xf32>
    %594 = arith.divf %592, %593 : vector<32x1xf32>
    %595 = vector.broadcast %587 : vector<32x1xf32> to vector<32x32xf32>
    %596 = arith.subf %581, %595 : vector<32x32xf32>
    %cst_236 = arith.constant 9.99999974E-6 : f32
    %597 = vector.broadcast %cst_236 : f32 to vector<32x1xf32>
    %598 = arith.addf %594, %597 : vector<32x1xf32>
    %599 = math.rsqrt %598 : vector<32x1xf32>
    %600 = vector.broadcast %599 : vector<32x1xf32> to vector<32x32xf32>
    %601 = arith.mulf %596, %600 : vector<32x32xf32>
    %602 = vector.broadcast %582 : vector<1x32xf32> to vector<32x32xf32>
    %603 = arith.mulf %601, %602 : vector<32x32xf32>
    %604 = vector.broadcast %583 : vector<1x32xf32> to vector<32x32xf32>
    %605 = arith.addf %603, %604 : vector<32x32xf32>
    %c0_237 = arith.constant 0 : index
    %c0_238 = arith.constant 0 : index
    %c0_239 = arith.constant 0 : index
    %606 = vector.load %arg22[%c0_237, %c0_238, %c0_239] : memref<1x32x32xf32, #tpu.memory_space<vmem>>, vector<1x32x32xf32>
    %607 = vector.shape_cast %606 : vector<1x32x32xf32> to vector<32x32xf32>
    %608 = vector.shape_cast %605 : vector<32x32xf32> to vector<1x32x32xf32>
    tpu.vector_store %arg22[%c0_237, %c0_238, %c0_239], %608 {strides = array<i32>} : memref<1x32x32xf32, #tpu.memory_space<vmem>>, vector<1x32x32xf32>,
    return
  }
  func.func @transform_0(%arg0: i32) -> (i32, i32, i32) {
    %c0_i32 = arith.constant 0 : i32
    %c0_i32_0 = arith.constant 0 : i32
    %c0_i32_1 = arith.constant 0 : i32
    return %arg0, %c0_i32, %c0_i32_0 : i32, i32, i32
  }
  func.func @transform_1(%arg0: i32) -> (i32, i32) {
    %c0_i32 = arith.constant 0 : i32
    %c0_i32_0 = arith.constant 0 : i32
    %c0_i32_1 = arith.constant 0 : i32
    return %c0_i32, %c0_i32_0 : i32, i32
  }
  func.func @transform_2(%arg0: i32) -> (i32, i32) {
    %c0_i32 = arith.constant 0 : i32
    %c0_i32_0 = arith.constant 0 : i32
    %c0_i32_1 = arith.constant 0 : i32
    return %c0_i32, %c0_i32_0 : i32, i32
  }
  func.func @transform_3(%arg0: i32) -> (i32, i32, i32) {
    %c0_i32 = arith.constant 0 : i32
    %c0_i32_0 = arith.constant 0 : i32
    %c0_i32_1 = arith.constant 0 : i32
    %c0_i32_2 = arith.constant 0 : i32
    return %c0_i32, %c0_i32_0, %c0_i32_1 : i32, i32, i32
  }
  func.func @transform_4(%arg0: i32) -> (i32, i32, i32) {
    %c0_i32 = arith.constant 0 : i32
    %c0_i32_0 = arith.constant 0 : i32
    %c0_i32_1 = arith.constant 0 : i32
    %c0_i32_2 = arith.constant 0 : i32
    return %c0_i32, %c0_i32_0, %c0_i32_1 : i32, i32, i32
  }
  func.func @transform_5(%arg0: i32) -> (i32, i32, i32) {
    %c0_i32 = arith.constant 0 : i32
    %c0_i32_0 = arith.constant 0 : i32
    %c0_i32_1 = arith.constant 0 : i32
    %c0_i32_2 = arith.constant 0 : i32
    return %c0_i32, %c0_i32_0, %c0_i32_1 : i32, i32, i32
  }
  func.func @transform_6(%arg0: i32) -> (i32, i32, i32) {
    %c0_i32 = arith.constant 0 : i32
    %c0_i32_0 = arith.constant 0 : i32
    %c0_i32_1 = arith.constant 0 : i32
    %c0_i32_2 = arith.constant 0 : i32
    return %c0_i32, %c0_i32_0, %c0_i32_1 : i32, i32, i32
  }
  func.func @transform_7(%arg0: i32) -> (i32, i32, i32) {
    %c0_i32 = arith.constant 0 : i32
    %c0_i32_0 = arith.constant 0 : i32
    %c0_i32_1 = arith.constant 0 : i32
    %c0_i32_2 = arith.constant 0 : i32
    return %c0_i32, %c0_i32_0, %c0_i32_1 : i32, i32, i32
  }
  func.func @transform_8(%arg0: i32) -> (i32, i32, i32) {
    %c0_i32 = arith.constant 0 : i32
    %c0_i32_0 = arith.constant 0 : i32
    %c0_i32_1 = arith.constant 0 : i32
    %c0_i32_2 = arith.constant 0 : i32
    return %c0_i32, %c0_i32_0, %c0_i32_1 : i32, i32, i32
  }
  func.func @transform_9(%arg0: i32) -> (i32, i32, i32) {
    %c0_i32 = arith.constant 0 : i32
    %c0_i32_0 = arith.constant 0 : i32
    %c0_i32_1 = arith.constant 0 : i32
    %c0_i32_2 = arith.constant 0 : i32
    return %c0_i32, %c0_i32_0, %c0_i32_1 : i32, i32, i32
  }
  func.func @transform_10(%arg0: i32) -> (i32, i32, i32) {
    %c0_i32 = arith.constant 0 : i32
    %c0_i32_0 = arith.constant 0 : i32
    %c0_i32_1 = arith.constant 0 : i32
    %c0_i32_2 = arith.constant 0 : i32
    return %c0_i32, %c0_i32_0, %c0_i32_1 : i32, i32, i32
  }
  func.func @transform_11(%arg0: i32) -> (i32, i32, i32) {
    %c0_i32 = arith.constant 0 : i32
    %c0_i32_0 = arith.constant 0 : i32
    %c0_i32_1 = arith.constant 0 : i32
    %c0_i32_2 = arith.constant 0 : i32
    return %c0_i32, %c0_i32_0, %c0_i32_1 : i32, i32, i32
  }
  func.func @transform_12(%arg0: i32) -> (i32, i32, i32) {
    %c0_i32 = arith.constant 0 : i32
    %c0_i32_0 = arith.constant 0 : i32
    %c0_i32_1 = arith.constant 0 : i32
    %c0_i32_2 = arith.constant 0 : i32
    return %c0_i32, %c0_i32_0, %c0_i32_1 : i32, i32, i32
  }
  func.func @transform_13(%arg0: i32) -> (i32, i32, i32) {
    %c0_i32 = arith.constant 0 : i32
    %c0_i32_0 = arith.constant 0 : i32
    %c0_i32_1 = arith.constant 0 : i32
    %c0_i32_2 = arith.constant 0 : i32
    return %c0_i32, %c0_i32_0, %c0_i32_1 : i32, i32, i32
  }
  func.func @transform_14(%arg0: i32) -> (i32, i32, i32) {
    %c0_i32 = arith.constant 0 : i32
    %c0_i32_0 = arith.constant 0 : i32
    %c0_i32_1 = arith.constant 0 : i32
    %c0_i32_2 = arith.constant 0 : i32
    return %c0_i32, %c0_i32_0, %c0_i32_1 : i32, i32, i32
  }
  func.func @transform_15(%arg0: i32) -> (i32, i32, i32) {
    %c0_i32 = arith.constant 0 : i32
    %c0_i32_0 = arith.constant 0 : i32
    %c0_i32_1 = arith.constant 0 : i32
    %c0_i32_2 = arith.constant 0 : i32
    return %c0_i32, %c0_i32_0, %c0_i32_1 : i32, i32, i32
  }
  func.func @transform_16(%arg0: i32) -> (i32, i32, i32) {
    %c0_i32 = arith.constant 0 : i32
    %c0_i32_0 = arith.constant 0 : i32
    %c0_i32_1 = arith.constant 0 : i32
    %c0_i32_2 = arith.constant 0 : i32
    return %c0_i32, %c0_i32_0, %c0_i32_1 : i32, i32, i32
  }
  func.func @transform_17(%arg0: i32) -> (i32, i32, i32) {
    %c0_i32 = arith.constant 0 : i32
    %c0_i32_0 = arith.constant 0 : i32
    %c0_i32_1 = arith.constant 0 : i32
    %c0_i32_2 = arith.constant 0 : i32
    return %c0_i32, %c0_i32_0, %c0_i32_1 : i32, i32, i32
  }
  func.func @transform_18(%arg0: i32) -> (i32, i32, i32) {
    %c0_i32 = arith.constant 0 : i32
    %c0_i32_0 = arith.constant 0 : i32
    %c0_i32_1 = arith.constant 0 : i32
    %c0_i32_2 = arith.constant 0 : i32
    return %c0_i32, %c0_i32_0, %c0_i32_1 : i32, i32, i32
  }
  func.func @transform_19(%arg0: i32) -> (i32, i32) {
    %c0_i32 = arith.constant 0 : i32
    %c0_i32_0 = arith.constant 0 : i32
    %c0_i32_1 = arith.constant 0 : i32
    return %c0_i32, %c0_i32_0 : i32, i32
  }
  func.func @transform_20(%arg0: i32) -> (i32, i32) {
    %c0_i32 = arith.constant 0 : i32
    %c0_i32_0 = arith.constant 0 : i32
    %c0_i32_1 = arith.constant 0 : i32
    return %c0_i32, %c0_i32_0 : i32, i32
  }
  func.func @transform_21(%arg0: i32) -> (i32, i32, i32) {
    %c0_i32 = arith.constant 0 : i32
    %c0_i32_0 = arith.constant 0 : i32
    %c0_i32_1 = arith.constant 0 : i32
    return %arg0, %c0_i32, %c0_i32_0 : i32, i32, i32
  }
}

</mosaic_0001>

<llo_original>
// kernel: factorized_transformer.1
$region0: #{factorized_transformer.1}
  #allocation0 [shape = 'u32[]', space=smem, size = 0x4, offset = 0x4, fixed_abs, tag = 'smem constant byte address 0x4 - core index']
  #allocation1 [shape = 'u32[144,128]{1,0:T(1,128)}', space=vmem, size = 0x12000, scoped, tag = 'internal scratch']
  %s0 = inlined_call_operand.vmem [shape: f32[2,32,32], index: 0, kind: input, shape index: {}]
  %s1 = inlined_call_operand.vmem [shape: f32[32,32], index: 1, kind: input, shape index: {}]
  %s2 = inlined_call_operand.vmem [shape: f32[32,32], index: 2, kind: input, shape index: {}]
  %s3 = inlined_call_operand.hbm [shape: f32[2,1,32], index: 3, kind: input, shape index: {}]
  %s4 = inlined_call_operand.hbm [shape: f32[2,1,32], index: 4, kind: input, shape index: {}]
  %s5 = inlined_call_operand.vmem [shape: f32[2,32,96], index: 5, kind: input, shape index: {}]
  %s6 = inlined_call_operand.vmem [shape: f32[2,32,32], index: 6, kind: input, shape index: {}]
  %s7 = inlined_call_operand.hbm [shape: f32[2,1,32], index: 7, kind: input, shape index: {}]
  %s8 = inlined_call_operand.vmem [shape: f32[2,1,32], index: 8, kind: input, shape index: {}]
  %s9 = inlined_call_operand.vmem [shape: f32[2,1,32], index: 9, kind: input, shape index: {}]
  %s10 = inlined_call_operand.vmem [shape: f32[2,32,96], index: 10, kind: input, shape index: {}]
  %s11 = inlined_call_operand.hbm [shape: f32[2,32,32], index: 11, kind: input, shape index: {}]
  %s12 = inlined_call_operand.vmem [shape: f32[2,1,32], index: 12, kind: input, shape index: {}]
  %s13 = inlined_call_operand.hbm [shape: f32[2,1,32], index: 13, kind: input, shape index: {}]
  %s14 = inlined_call_operand.hbm [shape: f32[2,1,32], index: 14, kind: input, shape index: {}]
  %s15 = inlined_call_operand.hbm [shape: f32[2,32,64], index: 15, kind: input, shape index: {}]
  %s16 = inlined_call_operand.hbm [shape: f32[2,1,64], index: 16, kind: input, shape index: {}]
  %s17 = inlined_call_operand.vmem [shape: f32[2,64,32], index: 17, kind: input, shape index: {}]
  %s18 = inlined_call_operand.hbm [shape: f32[2,1,32], index: 18, kind: input, shape index: {}]
  %s19 = inlined_call_operand.hbm [shape: f32[1,32], index: 19, kind: input, shape index: {}]
  %s20 = inlined_call_operand.hbm [shape: f32[1,32], index: 20, kind: input, shape index: {}]
  %s21 = inlined_call_operand.hbm [shape: f32[2,32,32], index: 21, kind: output, shape index: {}]
  %s22 = sld [smem:[#allocation0]]
  $region161: #{factorized_transformer.1} parent=0
    _
  %s24 = ssub.s32 1, %s22
  %s25 = scalar_select 0, %s24, %s22
  $region1: #{factorized_transformer.1} parent=0
    #allocation2 [shape = 'u8[1024]{0}', space=vmem, size = 0x400, scoped, tag = 'input window, operand 3, single buffered']
    #allocation3 [shape = 's32[2]{0}', space=sflag, size = 0x8, scoped, tag = 'scoped memory for factorized_transformer.1']
    #allocation4 [shape = 's32[2]{0}', space=sflag, size = 0x8, scoped, tag = 'scoped memory for factorized_transformer.1']
    #allocation5 [shape = 'u8[1024]{0}', space=vmem, size = 0x400, scoped, tag = 'input window, operand 4, single buffered']
    #allocation6 [shape = 's32[1]{0}', space=sflag, size = 0x4, scoped, tag = 'scoped memory for factorized_transformer.1']
    #allocation7 [shape = 'u8[1024]{0}', space=vmem, size = 0x400, scoped, tag = 'input window, operand 7, single buffered']
    #allocation8 [shape = 'u8[32768]{0}', space=vmem, size = 0x8000, scoped, tag = 'input window, operand 11, single buffered']
    #allocation9 [shape = 's32[1]{0}', space=sflag, size = 0x4, scoped, tag = 'scoped memory for factorized_transformer.1']
    #allocation10 [shape = 'u8[1024]{0}', space=vmem, size = 0x400, scoped, tag = 'input window, operand 13, single buffered']
    #allocation11 [shape = 'u8[1024]{0}', space=vmem, size = 0x400, scoped, tag = 'input window, operand 14, single buffered']
    #allocation12 [shape = 's32[1]{0}', space=sflag, size = 0x4, scoped, tag = 'scoped memory for factorized_transformer.1']
    #allocation13 [shape = 'u8[32768]{0}', space=vmem, size = 0x8000, scoped, tag = 'input window, operand 15, single buffered']
    #allocation14 [shape = 'u8[1024]{0}', space=vmem, size = 0x400, scoped, tag = 'input window, operand 16, single buffered']
    #allocation15 [shape = 's32[1]{0}', space=sflag, size = 0x4, scoped, tag = 'scoped memory for factorized_transformer.1']
    #allocation16 [shape = 'u8[1024]{0}', space=vmem, size = 0x400, scoped, tag = 'input window, operand 18, single buffered']
    #allocation17 [shape = 'u8[512]{0}', space=vmem, size = 0x400, scoped, tag = 'input window, operand 19, single buffered']
    #allocation18 [shape = 's32[1]{0}', space=sflag, size = 0x4, scoped, tag = 'scoped memory for factorized_transformer.1']
    #allocation19 [shape = 'u8[512]{0}', space=vmem, size = 0x400, scoped, tag = 'input window, operand 20, single buffered']
    #allocation20 [shape = 'u8[32768]{0}', space=vmem, size = 0x8000, scoped, tag = 'output window, operand 0']
    %26 = vsyncpa [#allocation3], 0
    %27 = vsyncpa [#allocation6], 0
    %28 = vsyncpa [#allocation9], 0
    %29 = vsyncpa [#allocation12], 0
    %30 = vsyncpa [#allocation15], 0
    %31 = vsyncpa [#allocation18], 0
    %32 = vsyncpa [#allocation4], 0
    %s33 = scalar_lea.sflag [#allocation4], 1
    %34 = vsyncpa %s33, 0
    loop: start=0, step=1, limit=4
    $region2: #{factorized_transformer.1} parent=1 // loop_pre_header
      _
    $region3: #{factorized_transformer.1} parent=1 // loop_header
      %s36 = sphi 0, %s40
      %p37 = scmp.ge.s32.totalorder %s36, 4
      %s46 = sphi 0, %s48
      %s49 = sphi 0, %s46
      %s50 = sphi 0, %s49
      %s66 = sphi 0, %s50
      %s70 = sphi 0, %s70
      %s72 = sphi 0, %s70
      %s73 = sphi 0, %s72
      %s87 = sphi 0, %s73
      %s91 = sphi 0, %s91
      %s93 = sphi 0, %s91
      %s94 = sphi 0, %s93
      %s108 = sphi 0, %s94
      %s112 = sphi 0, %s112
      %s114 = sphi 0, %s112
      %s115 = sphi 0, %s114
      %s129 = sphi 0, %s115
      %s133 = sphi 0, %s133
      %s135 = sphi 0, %s133
      %s136 = sphi 0, %s135
      %s150 = sphi 0, %s136
      %s154 = sphi 0, %s154
      %s156 = sphi 0, %s154
      %s157 = sphi 0, %s156
      %s171 = sphi 0, %s157
      %s175 = sphi 0, %s175
      %s177 = sphi 0, %s175
      %s178 = sphi 0, %s177
      %s192 = sphi 0, %s178
      %s196 = sphi 0, %s196
      %s198 = sphi 0, %s196
      %s199 = sphi 0, %s198
      %s213 = sphi 0, %s199
      %s217 = sphi 0, %s217
      %s219 = sphi 0, %s217
      %s220 = sphi 0, %s219
      %s234 = sphi 0, %s220
      %s238 = sphi 0, %s238
      %s240 = sphi 0, %s238
      %s241 = sphi 0, %s240
      %s255 = sphi 0, %s241
      %s259 = sphi 0, %s259
      %s261 = sphi 0, %s259
      %s262 = sphi 0, %s261
      %s276 = sphi 0, %s262
      %s280 = sphi 0, %s280
      %s282 = sphi 0, %s280
      %s283 = sphi 0, %s282
      %s297 = sphi 0, %s283
      %s301 = sphi 0, %s301
      %s303 = sphi 0, %s301
      %s304 = sphi 0, %s303
      %s318 = sphi 0, %s304
      %s322 = sphi 0, %s322
      %s324 = sphi 0, %s322
      %s325 = sphi 0, %s324
      %s339 = sphi 0, %s325
      %s343 = sphi 0, %s343
      %s345 = sphi 0, %s343
      %s346 = sphi 0, %s345
      %s360 = sphi 0, %s346
      %s364 = sphi 0, %s364
      %s366 = sphi 0, %s364
      %s367 = sphi 0, %s366
      %s381 = sphi 0, %s367
      %s385 = sphi 0, %s385
      %s387 = sphi 0, %s385
      %s388 = sphi 0, %s387
      %s402 = sphi 0, %s388
      %s406 = sphi 0, %s406
      %s408 = sphi 0, %s406
      %s409 = sphi 0, %s408
      %s423 = sphi 0, %s409
      %s427 = sphi 0, %s427
      %s429 = sphi 0, %s427
      %s430 = sphi 0, %s429
      %s444 = sphi 0, %s430
      %s448 = sphi 0, %s448
      %s450 = sphi 0, %s448
      %s451 = sphi 0, %s450
      %s465 = sphi 0, %s451
      %s469 = sphi 0, %s469
      %s471 = sphi 0, %s469
      %s472 = sphi 0, %s471
      %s486 = sphi 0, %s472
      %s492 = sphi 0, %s494
      %s495 = sphi 0, %s492
      %s496 = sphi 0, %s495
      %s512 = sphi 0, %s496
    $region4: #{factorized_transformer.1} parent=1 // loop_header_branch
      %39 = sbr.rel (%p37) target = $region8
    $region5: #{factorized_transformer.1} parent=1 // loop_body
      %s41 = ssub.s32 %s36, 1
      %s42 = ssub.s32 %s36, 2
      %s43 = sadd.s32 %s36, 1
      %s44 = ssub.s32 %s36, %s43
      %p45 = scmp.eq.s32.totalorder %s44, 0
      %s47 = sadd.s32 %s46, 1
      %s48 = scalar_select %p45, %s46, %s47
      %p51 = pneg %p45
      %p52 = scmp.eq.s32.totalorder %s36, 1
      %p53 = por %p51, %p52
      %p54 = scmp.ne.s32.totalorder %s46, %s49
      %p55 = scmp.eq.s32.totalorder %s36, 0
      %p56 = por %p54, %p55
      %p57 = scmp.ne.s32.totalorder %s46, %s49
      %p58 = scmp.eq.s32.totalorder %s41, 1
      %p59 = por %p57, %p58
      %p60 = scmp.ne.s32.totalorder %s49, %s50
      %p61 = scmp.eq.s32.totalorder %s41, 0
      %p62 = por %p60, %p61
      %p63 = scmp.ne.s32.totalorder %s49, %s50
      %p64 = scmp.eq.s32.totalorder %s42, 1
      %p65 = por %p63, %p64
      %p67 = scmp.ne.s32.totalorder %s50, %s66
      %p68 = scmp.eq.s32.totalorder %s42, 0
      %p69 = por %p67, %p68
      %s71 = sadd.s32 %s70, 1
      %p74 = scmp.eq.s32.totalorder %s36, 1
      %p75 = scmp.ne.s32.totalorder %s70, %s72
      %p76 = scmp.eq.s32.totalorder %s36, 0
      %p77 = por %p75, %p76
      %p78 = scmp.ne.s32.totalorder %s70, %s72
      %p79 = scmp.eq.s32.totalorder %s41, 1
      %p80 = por %p78, %p79
      %p81 = scmp.ne.s32.totalorder %s72, %s73
      %p82 = scmp.eq.s32.totalorder %s41, 0
      %p83 = por %p81, %p82
      %p84 = scmp.ne.s32.totalorder %s72, %s73
      %p85 = scmp.eq.s32.totalorder %s42, 1
      %p86 = por %p84, %p85
      %p88 = scmp.ne.s32.totalorder %s73, %s87
      %p89 = scmp.eq.s32.totalorder %s42, 0
      %p90 = por %p88, %p89
      %s92 = sadd.s32 %s91, 1
      %p95 = scmp.eq.s32.totalorder %s36, 1
      %p96 = scmp.ne.s32.totalorder %s91, %s93
      %p97 = scmp.eq.s32.totalorder %s36, 0
      %p98 = por %p96, %p97
      %p99 = scmp.ne.s32.totalorder %s91, %s93
      %p100 = scmp.eq.s32.totalorder %s41, 1
      %p101 = por %p99, %p100
      %p102 = scmp.ne.s32.totalorder %s93, %s94
      %p103 = scmp.eq.s32.totalorder %s41, 0
      %p104 = por %p102, %p103
      %p105 = scmp.ne.s32.totalorder %s93, %s94
      %p106 = scmp.eq.s32.totalorder %s42, 1
      %p107 = por %p105, %p106
      %p109 = scmp.ne.s32.totalorder %s94, %s108
      %p110 = scmp.eq.s32.totalorder %s42, 0
      %p111 = por %p109, %p110
      %s113 = sadd.s32 %s112, 1
      %p116 = scmp.eq.s32.totalorder %s36, 1
      %p117 = scmp.ne.s32.totalorder %s112, %s114
      %p118 = scmp.eq.s32.totalorder %s36, 0
      %p119 = por %p117, %p118
      %p120 = scmp.ne.s32.totalorder %s112, %s114
      %p121 = scmp.eq.s32.totalorder %s41, 1
      %p122 = por %p120, %p121
      %p123 = scmp.ne.s32.totalorder %s114, %s115
      %p124 = scmp.eq.s32.totalorder %s41, 0
      %p125 = por %p123, %p124
      %p126 = scmp.ne.s32.totalorder %s114, %s115
      %p127 = scmp.eq.s32.totalorder %s42, 1
      %p128 = por %p126, %p127
      %p130 = scmp.ne.s32.totalorder %s115, %s129
      %p131 = scmp.eq.s32.totalorder %s42, 0
      %p132 = por %p130, %p131
      %s134 = sadd.s32 %s133, 1
      %p137 = scmp.eq.s32.totalorder %s36, 1
      %p138 = scmp.ne.s32.totalorder %s133, %s135
      %p139 = scmp.eq.s32.totalorder %s36, 0
      %p140 = por %p138, %p139
      %p141 = scmp.ne.s32.totalorder %s133, %s135
      %p142 = scmp.eq.s32.totalorder %s41, 1
      %p143 = por %p141, %p142
      %p144 = scmp.ne.s32.totalorder %s135, %s136
      %p145 = scmp.eq.s32.totalorder %s41, 0
      %p146 = por %p144, %p145
      %p147 = scmp.ne.s32.totalorder %s135, %s136
      %p148 = scmp.eq.s32.totalorder %s42, 1
      %p149 = por %p147, %p148
      %p151 = scmp.ne.s32.totalorder %s136, %s150
      %p152 = scmp.eq.s32.totalorder %s42, 0
      %p153 = por %p151, %p152
      %s155 = sadd.s32 %s154, 1
      %p158 = scmp.eq.s32.totalorder %s36, 1
      %p159 = scmp.ne.s32.totalorder %s154, %s156
      %p160 = scmp.eq.s32.totalorder %s36, 0
      %p161 = por %p159, %p160
      %p162 = scmp.ne.s32.totalorder %s154, %s156
      %p163 = scmp.eq.s32.totalorder %s41, 1
      %p164 = por %p162, %p163
      %p165 = scmp.ne.s32.totalorder %s156, %s157
      %p166 = scmp.eq.s32.totalorder %s41, 0
      %p167 = por %p165, %p166
      %p168 = scmp.ne.s32.totalorder %s156, %s157
      %p169 = scmp.eq.s32.totalorder %s42, 1
      %p170 = por %p168, %p169
      %p172 = scmp.ne.s32.totalorder %s157, %s171
      %p173 = scmp.eq.s32.totalorder %s42, 0
      %p174 = por %p172, %p173
      %s176 = sadd.s32 %s175, 1
      %p179 = scmp.eq.s32.totalorder %s36, 1
      %p180 = scmp.ne.s32.totalorder %s175, %s177
      %p181 = scmp.eq.s32.totalorder %s36, 0
      %p182 = por %p180, %p181
      %p183 = scmp.ne.s32.totalorder %s175, %s177
      %p184 = scmp.eq.s32.totalorder %s41, 1
      %p185 = por %p183, %p184
      %p186 = scmp.ne.s32.totalorder %s177, %s178
      %p187 = scmp.eq.s32.totalorder %s41, 0
      %p188 = por %p186, %p187
      %p189 = scmp.ne.s32.totalorder %s177, %s178
      %p190 = scmp.eq.s32.totalorder %s42, 1
      %p191 = por %p189, %p190
      %p193 = scmp.ne.s32.totalorder %s178, %s192
      %p194 = scmp.eq.s32.totalorder %s42, 0
      %p195 = por %p193, %p194
      %s197 = sadd.s32 %s196, 1
      %p200 = scmp.eq.s32.totalorder %s36, 1
      %p201 = scmp.ne.s32.totalorder %s196, %s198
      %p202 = scmp.eq.s32.totalorder %s36, 0
      %p203 = por %p201, %p202
      %p204 = scmp.ne.s32.totalorder %s196, %s198
      %p205 = scmp.eq.s32.totalorder %s41, 1
      %p206 = por %p204, %p205
      %p207 = scmp.ne.s32.totalorder %s198, %s199
      %p208 = scmp.eq.s32.totalorder %s41, 0
      %p209 = por %p207, %p208
      %p210 = scmp.ne.s32.totalorder %s198, %s199
      %p211 = scmp.eq.s32.totalorder %s42, 1
      %p212 = por %p210, %p211
      %p214 = scmp.ne.s32.totalorder %s199, %s213
      %p215 = scmp.eq.s32.totalorder %s42, 0
      %p216 = por %p214, %p215
      %s218 = sadd.s32 %s217, 1
      %p221 = scmp.eq.s32.totalorder %s36, 1
      %p222 = scmp.ne.s32.totalorder %s217, %s219
      %p223 = scmp.eq.s32.totalorder %s36, 0
      %p224 = por %p222, %p223
      %p225 = scmp.ne.s32.totalorder %s217, %s219
      %p226 = scmp.eq.s32.totalorder %s41, 1
      %p227 = por %p225, %p226
      %p228 = scmp.ne.s32.totalorder %s219, %s220
      %p229 = scmp.eq.s32.totalorder %s41, 0
      %p230 = por %p228, %p229
      %p231 = scmp.ne.s32.totalorder %s219, %s220
      %p232 = scmp.eq.s32.totalorder %s42, 1
      %p233 = por %p231, %p232
      %p235 = scmp.ne.s32.totalorder %s220, %s234
      %p236 = scmp.eq.s32.totalorder %s42, 0
      %p237 = por %p235, %p236
      %s239 = sadd.s32 %s238, 1
      %p242 = scmp.eq.s32.totalorder %s36, 1
      %p243 = scmp.ne.s32.totalorder %s238, %s240
      %p244 = scmp.eq.s32.totalorder %s36, 0
      %p245 = por %p243, %p244
      %p246 = scmp.ne.s32.totalorder %s238, %s240
      %p247 = scmp.eq.s32.totalorder %s41, 1
      %p248 = por %p246, %p247
      %p249 = scmp.ne.s32.totalorder %s240, %s241
      %p250 = scmp.eq.s32.totalorder %s41, 0
      %p251 = por %p249, %p250
      %p252 = scmp.ne.s32.totalorder %s240, %s241
      %p253 = scmp.eq.s32.totalorder %s42, 1
      %p254 = por %p252, %p253
      %p256 = scmp.ne.s32.totalorder %s241, %s255
      %p257 = scmp.eq.s32.totalorder %s42, 0
      %p258 = por %p256, %p257
      %s260 = sadd.s32 %s259, 1
      %p263 = scmp.eq.s32.totalorder %s36, 1
      %p264 = scmp.ne.s32.totalorder %s259, %s261
      %p265 = scmp.eq.s32.totalorder %s36, 0
      %p266 = por %p264, %p265
      %p267 = scmp.ne.s32.totalorder %s259, %s261
      %p268 = scmp.eq.s32.totalorder %s41, 1
      %p269 = por %p267, %p268
      %p270 = scmp.ne.s32.totalorder %s261, %s262
      %p271 = scmp.eq.s32.totalorder %s41, 0
      %p272 = por %p270, %p271
      %p273 = scmp.ne.s32.totalorder %s261, %s262
      %p274 = scmp.eq.s32.totalorder %s42, 1
      %p275 = por %p273, %p274
      %p277 = scmp.ne.s32.totalorder %s262, %s276
      %p278 = scmp.eq.s32.totalorder %s42, 0
      %p279 = por %p277, %p278
      %s281 = sadd.s32 %s280, 1
      %p284 = scmp.eq.s32.totalorder %s36, 1
      %p285 = scmp.ne.s32.totalorder %s280, %s282
      %p286 = scmp.eq.s32.totalorder %s36, 0
      %p287 = por %p285, %p286
      %p288 = scmp.ne.s32.totalorder %s280, %s282
      %p289 = scmp.eq.s32.totalorder %s41, 1
      %p290 = por %p288, %p289
      %p291 = scmp.ne.s32.totalorder %s282, %s283
      %p292 = scmp.eq.s32.totalorder %s41, 0
      %p293 = por %p291, %p292
      %p294 = scmp.ne.s32.totalorder %s282, %s283
      %p295 = scmp.eq.s32.totalorder %s42, 1
      %p296 = por %p294, %p295
      %p298 = scmp.ne.s32.totalorder %s283, %s297
      %p299 = scmp.eq.s32.totalorder %s42, 0
      %p300 = por %p298, %p299
      %s302 = sadd.s32 %s301, 1
      %p305 = scmp.eq.s32.totalorder %s36, 1
      %p306 = scmp.ne.s32.totalorder %s301, %s303
      %p307 = scmp.eq.s32.totalorder %s36, 0
      %p308 = por %p306, %p307
      %p309 = scmp.ne.s32.totalorder %s301, %s303
      %p310 = scmp.eq.s32.totalorder %s41, 1
      %p311 = por %p309, %p310
      %p312 = scmp.ne.s32.totalorder %s303, %s304
      %p313 = scmp.eq.s32.totalorder %s41, 0
      %p314 = por %p312, %p313
      %p315 = scmp.ne.s32.totalorder %s303, %s304
      %p316 = scmp.eq.s32.totalorder %s42, 1
      %p317 = por %p315, %p316
      %p319 = scmp.ne.s32.totalorder %s304, %s318
      %p320 = scmp.eq.s32.totalorder %s42, 0
      %p321 = por %p319, %p320
      %s323 = sadd.s32 %s322, 1
      %p326 = scmp.eq.s32.totalorder %s36, 1
      %p327 = scmp.ne.s32.totalorder %s322, %s324
      %p328 = scmp.eq.s32.totalorder %s36, 0
      %p329 = por %p327, %p328
      %p330 = scmp.ne.s32.totalorder %s322, %s324
      %p331 = scmp.eq.s32.totalorder %s41, 1
      %p332 = por %p330, %p331
      %p333 = scmp.ne.s32.totalorder %s324, %s325
      %p334 = scmp.eq.s32.totalorder %s41, 0
      %p335 = por %p333, %p334
      %p336 = scmp.ne.s32.totalorder %s324, %s325
      %p337 = scmp.eq.s32.totalorder %s42, 1
      %p338 = por %p336, %p337
      %p340 = scmp.ne.s32.totalorder %s325, %s339
      %p341 = scmp.eq.s32.totalorder %s42, 0
      %p342 = por %p340, %p341
      %s344 = sadd.s32 %s343, 1
      %p347 = scmp.eq.s32.totalorder %s36, 1
      %p348 = scmp.ne.s32.totalorder %s343, %s345
      %p349 = scmp.eq.s32.totalorder %s36, 0
      %p350 = por %p348, %p349
      %p351 = scmp.ne.s32.totalorder %s343, %s345
      %p352 = scmp.eq.s32.totalorder %s41, 1
      %p353 = por %p351, %p352
      %p354 = scmp.ne.s32.totalorder %s345, %s346
      %p355 = scmp.eq.s32.totalorder %s41, 0
      %p356 = por %p354, %p355
      %p357 = scmp.ne.s32.totalorder %s345, %s346
      %p358 = scmp.eq.s32.totalorder %s42, 1
      %p359 = por %p357, %p358
      %p361 = scmp.ne.s32.totalorder %s346, %s360
      %p362 = scmp.eq.s32.totalorder %s42, 0
      %p363 = por %p361, %p362
      %s365 = sadd.s32 %s364, 1
      %p368 = scmp.eq.s32.totalorder %s36, 1
      %p369 = scmp.ne.s32.totalorder %s364, %s366
      %p370 = scmp.eq.s32.totalorder %s36, 0
      %p371 = por %p369, %p370
      %p372 = scmp.ne.s32.totalorder %s364, %s366
      %p373 = scmp.eq.s32.totalorder %s41, 1
      %p374 = por %p372, %p373
      %p375 = scmp.ne.s32.totalorder %s366, %s367
      %p376 = scmp.eq.s32.totalorder %s41, 0
      %p377 = por %p375, %p376
      %p378 = scmp.ne.s32.totalorder %s366, %s367
      %p379 = scmp.eq.s32.totalorder %s42, 1
      %p380 = por %p378, %p379
      %p382 = scmp.ne.s32.totalorder %s367, %s381
      %p383 = scmp.eq.s32.totalorder %s42, 0
      %p384 = por %p382, %p383
      %s386 = sadd.s32 %s385, 1
      %p389 = scmp.eq.s32.totalorder %s36, 1
      %p390 = scmp.ne.s32.totalorder %s385, %s387
      %p391 = scmp.eq.s32.totalorder %s36, 0
      %p392 = por %p390, %p391
      %p393 = scmp.ne.s32.totalorder %s385, %s387
      %p394 = scmp.eq.s32.totalorder %s41, 1
      %p395 = por %p393, %p394
      %p396 = scmp.ne.s32.totalorder %s387, %s388
      %p397 = scmp.eq.s32.totalorder %s41, 0
      %p398 = por %p396, %p397
      %p399 = scmp.ne.s32.totalorder %s387, %s388
      %p400 = scmp.eq.s32.totalorder %s42, 1
      %p401 = por %p399, %p400
      %p403 = scmp.ne.s32.totalorder %s388, %s402
      %p404 = scmp.eq.s32.totalorder %s42, 0
      %p405 = por %p403, %p404
      %s407 = sadd.s32 %s406, 1
      %p410 = scmp.eq.s32.totalorder %s36, 1
      %p411 = scmp.ne.s32.totalorder %s406, %s408
      %p412 = scmp.eq.s32.totalorder %s36, 0
      %p413 = por %p411, %p412
      %p414 = scmp.ne.s32.totalorder %s406, %s408
      %p415 = scmp.eq.s32.totalorder %s41, 1
      %p416 = por %p414, %p415
      %p417 = scmp.ne.s32.totalorder %s408, %s409
      %p418 = scmp.eq.s32.totalorder %s41, 0
      %p419 = por %p417, %p418
      %p420 = scmp.ne.s32.totalorder %s408, %s409
      %p421 = scmp.eq.s32.totalorder %s42, 1
      %p422 = por %p420, %p421
      %p424 = scmp.ne.s32.totalorder %s409, %s423
      %p425 = scmp.eq.s32.totalorder %s42, 0
      %p426 = por %p424, %p425
      %s428 = sadd.s32 %s427, 1
      %p431 = scmp.eq.s32.totalorder %s36, 1
      %p432 = scmp.ne.s32.totalorder %s427, %s429
      %p433 = scmp.eq.s32.totalorder %s36, 0
      %p434 = por %p432, %p433
      %p435 = scmp.ne.s32.totalorder %s427, %s429
      %p436 = scmp.eq.s32.totalorder %s41, 1
      %p437 = por %p435, %p436
      %p438 = scmp.ne.s32.totalorder %s429, %s430
      %p439 = scmp.eq.s32.totalorder %s41, 0
      %p440 = por %p438, %p439
      %p441 = scmp.ne.s32.totalorder %s429, %s430
      %p442 = scmp.eq.s32.totalorder %s42, 1
      %p443 = por %p441, %p442
      %p445 = scmp.ne.s32.totalorder %s430, %s444
      %p446 = scmp.eq.s32.totalorder %s42, 0
      %p447 = por %p445, %p446
      %s449 = sadd.s32 %s448, 1
      %p452 = scmp.eq.s32.totalorder %s36, 1
      %p453 = scmp.ne.s32.totalorder %s448, %s450
      %p454 = scmp.eq.s32.totalorder %s36, 0
      %p455 = por %p453, %p454
      %p456 = scmp.ne.s32.totalorder %s448, %s450
      %p457 = scmp.eq.s32.totalorder %s41, 1
      %p458 = por %p456, %p457
      %p459 = scmp.ne.s32.totalorder %s450, %s451
      %p460 = scmp.eq.s32.totalorder %s41, 0
      %p461 = por %p459, %p460
      %p462 = scmp.ne.s32.totalorder %s450, %s451
      %p463 = scmp.eq.s32.totalorder %s42, 1
      %p464 = por %p462, %p463
      %p466 = scmp.ne.s32.totalorder %s451, %s465
      %p467 = scmp.eq.s32.totalorder %s42, 0
      %p468 = por %p466, %p467
      %s470 = sadd.s32 %s469, 1
      %p473 = scmp.eq.s32.totalorder %s36, 1
      %p474 = scmp.ne.s32.totalorder %s469, %s471
      %p475 = scmp.eq.s32.totalorder %s36, 0
      %p476 = por %p474, %p475
      %p477 = scmp.ne.s32.totalorder %s469, %s471
      %p478 = scmp.eq.s32.totalorder %s41, 1
      %p479 = por %p477, %p478
      %p480 = scmp.ne.s32.totalorder %s471, %s472
      %p481 = scmp.eq.s32.totalorder %s41, 0
      %p482 = por %p480, %p481
      %p483 = scmp.ne.s32.totalorder %s471, %s472
      %p484 = scmp.eq.s32.totalorder %s42, 1
      %p485 = por %p483, %p484
      %p487 = scmp.ne.s32.totalorder %s472, %s486
      %p488 = scmp.eq.s32.totalorder %s42, 0
      %p489 = por %p487, %p488
      %s490 = ssub.s32 %s36, %s43
      %p491 = scmp.eq.s32.totalorder %s490, 0
      %s493 = sadd.s32 %s492, 1
      %s494 = scalar_select %p491, %s492, %s493
      %p497 = pneg %p491
      %p498 = scmp.eq.s32.totalorder %s36, 1
      %p499 = por %p497, %p498
      %p500 = scmp.ne.s32.totalorder %s492, %s495
      %p501 = scmp.eq.s32.totalorder %s36, 0
      %p502 = por %p500, %p501
      %p503 = scmp.ne.s32.totalorder %s492, %s495
      %p504 = scmp.eq.s32.totalorder %s41, 1
      %p505 = por %p503, %p504
      %p506 = scmp.ne.s32.totalorder %s495, %s496
      %p507 = scmp.eq.s32.totalorder %s41, 0
      %p508 = por %p506, %p507
      %p509 = scmp.ne.s32.totalorder %s495, %s496
      %p510 = scmp.eq.s32.totalorder %s42, 1
      %p511 = por %p509, %p510
      %p513 = scmp.ne.s32.totalorder %s496, %s512
      %p514 = scmp.eq.s32.totalorder %s42, 0
      %p515 = por %p513, %p514
      %p516 = scmp.le.s32.totalorder 1, %s36
      %p517 = scmp.lt.s32.totalorder %s36, 3
      %p518 = pnand %p516, %p517
      %p519 = pneg %p518
      // Predicated region
      $region9: #{factorized_transformer.1} parent=5 // pred_check
        _
      $region10: #{factorized_transformer.1} parent=5 // pred_check_branch
        %521 = sbr.rel (%p518) target = $region12
      $region11: #{factorized_transformer.1} parent=5 // pred_region
        %s522 = ssub.s32 %s36, 1
        // Predicated region
        $region13: #{factorized_transformer.1} parent=11 // pred_check
          %p523 = pneg %p83
        $region14: #{factorized_transformer.1} parent=11 // pred_check_branch
          %525 = sbr.rel (%p523) target = $region16
        $region15: #{factorized_transformer.1} parent=11 // pred_region
          _
        $region16: #{factorized_transformer.1} parent=11 // pred_fallthru
          _
        // Predicated region
        $region17: #{factorized_transformer.1} parent=11 // pred_check
          %p526 = pneg %p104
        $region18: #{factorized_transformer.1} parent=11 // pred_check_branch
          %528 = sbr.rel (%p526) target = $region20
        $region19: #{factorized_transformer.1} parent=11 // pred_region
          _
        $region20: #{factorized_transformer.1} parent=11 // pred_fallthru
          _
        // Predicated region
        $region21: #{factorized_transformer.1} parent=11 // pred_check
          %p529 = pneg %p125
        $region22: #{factorized_transformer.1} parent=11 // pred_check_branch
          %531 = sbr.rel (%p529) target = $region24
        $region23: #{factorized_transformer.1} parent=11 // pred_region
          %s533 = ssub.s32 32, 32
          %534 = vsyncadd [#allocation3], %s533
          %s535 = sshll.u32 [#allocation2], 4
          %s536 = int_to_ptr.vmem [resolvable:$true] %s535
          %541 = dma.hbm_to_vmem [thread:$0]  %s3, 32, %s536, [#allocation3], 16, 16, 1
        $region24: #{factorized_transformer.1} parent=11 // pred_fallthru
          _
        // Predicated region
        $region25: #{factorized_transformer.1} parent=11 // pred_check
          %p542 = pneg %p146
        $region26: #{factorized_transformer.1} parent=11 // pred_check_branch
          %544 = sbr.rel (%p542) target = $region28
        $region27: #{factorized_transformer.1} parent=11 // pred_region
          %s546 = ssub.s32 32, 32
          %547 = vsyncadd [#allocation6], %s546
          %s548 = sshll.u32 [#allocation5], 4
          %s549 = int_to_ptr.vmem [resolvable:$true] %s548
          %554 = dma.hbm_to_vmem [thread:$0]  %s4, 32, %s549, [#allocation6], 16, 16, 1
        $region28: #{factorized_transformer.1} parent=11 // pred_fallthru
          _
        // Predicated region
        $region29: #{factorized_transformer.1} parent=11 // pred_check
          %p555 = pneg %p167
        $region30: #{factorized_transformer.1} parent=11 // pred_check_branch
          %557 = sbr.rel (%p555) target = $region32
        $region31: #{factorized_transformer.1} parent=11 // pred_region
          _
        $region32: #{factorized_transformer.1} parent=11 // pred_fallthru
          _
        // Predicated region
        $region33: #{factorized_transformer.1} parent=11 // pred_check
          %p558 = pneg %p188
        $region34: #{factorized_transformer.1} parent=11 // pred_check_branch
          %560 = sbr.rel (%p558) target = $region36
        $region35: #{factorized_transformer.1} parent=11 // pred_region
          _
        $region36: #{factorized_transformer.1} parent=11 // pred_fallthru
          _
        // Predicated region
        $region37: #{factorized_transformer.1} parent=11 // pred_check
          %p561 = pneg %p209
        $region38: #{factorized_transformer.1} parent=11 // pred_check_branch
          %563 = sbr.rel (%p561) target = $region40
        $region39: #{factorized_transformer.1} parent=11 // pred_region
          %s565 = ssub.s32 32, 32
          %566 = vsyncadd [#allocation6], %s565
          %s567 = sshll.u32 [#allocation7], 4
          %s568 = int_to_ptr.vmem [resolvable:$true] %s567
          %573 = dma.hbm_to_vmem [thread:$0]  %s7, 32, %s568, [#allocation6], 16, 16, 1
        $region40: #{factorized_transformer.1} parent=11 // pred_fallthru
          _
        // Predicated region
        $region41: #{factorized_transformer.1} parent=11 // pred_check
          %p574 = pneg %p230
        $region42: #{factorized_transformer.1} parent=11 // pred_check_branch
          %576 = sbr.rel (%p574) target = $region44
        $region43: #{factorized_transformer.1} parent=11 // pred_region
          _
        $region44: #{factorized_transformer.1} parent=11 // pred_fallthru
          _
        // Predicated region
        $region45: #{factorized_transformer.1} parent=11 // pred_check
          %p577 = pneg %p251
        $region46: #{factorized_transformer.1} parent=11 // pred_check_branch
          %579 = sbr.rel (%p577) target = $region48
        $region47: #{factorized_transformer.1} parent=11 // pred_region
          _
        $region48: #{factorized_transformer.1} parent=11 // pred_fallthru
          _
        // Predicated region
        $region49: #{factorized_transformer.1} parent=11 // pred_check
          %p580 = pneg %p272
        $region50: #{factorized_transformer.1} parent=11 // pred_check_branch
          %582 = sbr.rel (%p580) target = $region52
        $region51: #{factorized_transformer.1} parent=11 // pred_region
          _
        $region52: #{factorized_transformer.1} parent=11 // pred_fallthru
          _
        // Predicated region
        $region53: #{factorized_transformer.1} parent=11 // pred_check
          %p583 = pneg %p293
        $region54: #{factorized_transformer.1} parent=11 // pred_check_branch
          %585 = sbr.rel (%p583) target = $region56
        $region55: #{factorized_transformer.1} parent=11 // pred_region
          %s587 = ssub.s32 1024, 1024
          %588 = vsyncadd [#allocation9], %s587
          %s589 = sshll.u32 [#allocation8], 4
          %s590 = int_to_ptr.vmem [resolvable:$true] %s589
          %595 = dma.hbm_to_vmem [thread:$0]  %s11, 1024, %s590, [#allocation9], 128, 128, 8
        $region56: #{factorized_transformer.1} parent=11 // pred_fallthru
          _
        // Predicated region
        $region57: #{factorized_transformer.1} parent=11 // pred_check
          %p596 = pneg %p314
        $region58: #{factorized_transformer.1} parent=11 // pred_check_branch
          %598 = sbr.rel (%p596) target = $region60
        $region59: #{factorized_transformer.1} parent=11 // pred_region
          _
        $region60: #{factorized_transformer.1} parent=11 // pred_fallthru
          _
        // Predicated region
        $region61: #{factorized_transformer.1} parent=11 // pred_check
          %p599 = pneg %p335
        $region62: #{factorized_transformer.1} parent=11 // pred_check_branch
          %601 = sbr.rel (%p599) target = $region64
        $region63: #{factorized_transformer.1} parent=11 // pred_region
          %s603 = ssub.s32 32, 32
          %604 = vsyncadd [#allocation9], %s603
          %s605 = sshll.u32 [#allocation10], 4
          %s606 = int_to_ptr.vmem [resolvable:$true] %s605
          %611 = dma.hbm_to_vmem [thread:$0]  %s13, 32, %s606, [#allocation9], 16, 16, 1
        $region64: #{factorized_transformer.1} parent=11 // pred_fallthru
          _
        // Predicated region
        $region65: #{factorized_transformer.1} parent=11 // pred_check
          %p612 = pneg %p356
        $region66: #{factorized_transformer.1} parent=11 // pred_check_branch
          %614 = sbr.rel (%p612) target = $region68
        $region67: #{factorized_transformer.1} parent=11 // pred_region
          %s616 = ssub.s32 32, 32
          %617 = vsyncadd [#allocation12], %s616
          %s618 = sshll.u32 [#allocation11], 4
          %s619 = int_to_ptr.vmem [resolvable:$true] %s618
          %624 = dma.hbm_to_vmem [thread:$0]  %s14, 32, %s619, [#allocation12], 16, 16, 1
        $region68: #{factorized_transformer.1} parent=11 // pred_fallthru
          _
        // Predicated region
        $region69: #{factorized_transformer.1} parent=11 // pred_check
          %p625 = pneg %p377
        $region70: #{factorized_transformer.1} parent=11 // pred_check_branch
          %627 = sbr.rel (%p625) target = $region72
        $region71: #{factorized_transformer.1} parent=11 // pred_region
          %s629 = ssub.s32 1024, 1024
          %630 = vsyncadd [#allocation12], %s629
          %s631 = sshll.u32 [#allocation13], 4
          %s632 = int_to_ptr.vmem [resolvable:$true] %s631
          %637 = dma.hbm_to_vmem [thread:$0]  %s15, 1024, %s632, [#allocation12], 128, 128, 8
        $region72: #{factorized_transformer.1} parent=11 // pred_fallthru
          _
        // Predicated region
        $region73: #{factorized_transformer.1} parent=11 // pred_check
          %p638 = pneg %p398
        $region74: #{factorized_transformer.1} parent=11 // pred_check_branch
          %640 = sbr.rel (%p638) target = $region76
        $region75: #{factorized_transformer.1} parent=11 // pred_region
          %s642 = ssub.s32 32, 32
          %643 = vsyncadd [#allocation15], %s642
          %s644 = sshll.u32 [#allocation14], 4
          %s645 = int_to_ptr.vmem [resolvable:$true] %s644
          %650 = dma.hbm_to_vmem [thread:$0]  %s16, 32, %s645, [#allocation15], 16, 16, 1
        $region76: #{factorized_transformer.1} parent=11 // pred_fallthru
          _
        // Predicated region
        $region77: #{factorized_transformer.1} parent=11 // pred_check
          %p651 = pneg %p419
        $region78: #{factorized_transformer.1} parent=11 // pred_check_branch
          %653 = sbr.rel (%p651) target = $region80
        $region79: #{factorized_transformer.1} parent=11 // pred_region
          _
        $region80: #{factorized_transformer.1} parent=11 // pred_fallthru
          _
        // Predicated region
        $region81: #{factorized_transformer.1} parent=11 // pred_check
          %p654 = pneg %p440
        $region82: #{factorized_transformer.1} parent=11 // pred_check_branch
          %656 = sbr.rel (%p654) target = $region84
        $region83: #{factorized_transformer.1} parent=11 // pred_region
          %s658 = ssub.s32 32, 32
          %659 = vsyncadd [#allocation15], %s658
          %s660 = sshll.u32 [#allocation16], 4
          %s661 = int_to_ptr.vmem [resolvable:$true] %s660
          %666 = dma.hbm_to_vmem [thread:$0]  %s18, 32, %s661, [#allocation15], 16, 16, 1
        $region84: #{factorized_transformer.1} parent=11 // pred_fallthru
          _
        // Predicated region
        $region85: #{factorized_transformer.1} parent=11 // pred_check
          %p667 = pneg %p461
        $region86: #{factorized_transformer.1} parent=11 // pred_check_branch
          %669 = sbr.rel (%p667) target = $region88
        $region87: #{factorized_transformer.1} parent=11 // pred_region
          %s671 = ssub.s32 16, 16
          %672 = vsyncadd [#allocation18], %s671
          %s674 = sshll.u32 [#allocation17], 4
          %s675 = int_to_ptr.vmem [resolvable:$true] %s674
          %677 = dma.hbm_to_vmem [thread:$0]  %s19, 16, %s675, [#allocation18]
        $region88: #{factorized_transformer.1} parent=11 // pred_fallthru
          _
        // Predicated region
        $region89: #{factorized_transformer.1} parent=11 // pred_check
          %p678 = pneg %p482
        $region90: #{factorized_transformer.1} parent=11 // pred_check_branch
          %680 = sbr.rel (%p678) target = $region92
        $region91: #{factorized_transformer.1} parent=11 // pred_region
          %s682 = ssub.s32 16, 16
          %683 = vsyncadd [#allocation18], %s682
          %s685 = sshll.u32 [#allocation19], 4
          %s686 = int_to_ptr.vmem [resolvable:$true] %s685
          %688 = dma.hbm_to_vmem [thread:$0]  %s20, 16, %s686, [#allocation18]
        $region92: #{factorized_transformer.1} parent=11 // pred_fallthru
          _
      $region12: #{factorized_transformer.1} parent=5 // pred_fallthru
        _
      %p689 = scmp.lt.s32.totalorder %s36, 2
      // Predicated region
      $region93: #{factorized_transformer.1} parent=5 // pred_check
        %p690 = pneg %p689
      $region94: #{factorized_transformer.1} parent=5 // pred_check_branch
        %692 = sbr.rel (%p690) target = $region96
      $region95: #{factorized_transformer.1} parent=5 // pred_region
        // Predicated region
        $region97: #{factorized_transformer.1} parent=95 // pred_check
          %p693 = pneg %p56
        $region98: #{factorized_transformer.1} parent=95 // pred_check_branch
          %695 = sbr.rel (%p693) target = $region100
        $region99: #{factorized_transformer.1} parent=95 // pred_region
          %p696 = scmp.lt.s32.totalorder %s36, 1
          %s697 = scalar_select %p696, %s36, 1
          %s698 = smul.addr %s697, 4
          %s699 = smul.addr %s698, 8
          %s700 = scalar_lea.vmem %s0, %s699
        $region100: #{factorized_transformer.1} parent=95 // pred_fallthru
          _
      $region96: #{factorized_transformer.1} parent=5 // pred_fallthru
        _
      %p701 = scmp.le.s32.totalorder 1, %s36
      %p702 = scmp.lt.s32.totalorder %s36, 3
      %p703 = pnand %p701, %p702
      %p704 = pneg %p703
      // Predicated region
      $region101: #{factorized_transformer.1} parent=5 // pred_check
        _
      $region102: #{factorized_transformer.1} parent=5 // pred_check_branch
        %706 = sbr.rel (%p703) target = $region104
      $region103: #{factorized_transformer.1} parent=5 // pred_region
        %s707 = ssub.s32 %s36, 1
        // Predicated region
        $region105: #{factorized_transformer.1} parent=103 // pred_check
          %p708 = pneg %p125
        $region106: #{factorized_transformer.1} parent=103 // pred_check_branch
          %710 = sbr.rel (%p708) target = $region108
        $region107: #{factorized_transformer.1} parent=103 // pred_region
          %711 = dma.done [#allocation3], 32
        $region108: #{factorized_transformer.1} parent=103 // pred_fallthru
          _
        // Predicated region
        $region109: #{factorized_transformer.1} parent=103 // pred_check
          %p712 = pneg %p146
        $region110: #{factorized_transformer.1} parent=103 // pred_check_branch
          %714 = sbr.rel (%p712) target = $region112
        $region111: #{factorized_transformer.1} parent=103 // pred_region
          %715 = dma.done [#allocation6], 32
        $region112: #{factorized_transformer.1} parent=103 // pred_fallthru
          _
        // Predicated region
        $region113: #{factorized_transformer.1} parent=103 // pred_check
          %p716 = pneg %p209
        $region114: #{factorized_transformer.1} parent=103 // pred_check_branch
          %718 = sbr.rel (%p716) target = $region116
        $region115: #{factorized_transformer.1} parent=103 // pred_region
          %719 = dma.done [#allocation6], 32
        $region116: #{factorized_transformer.1} parent=103 // pred_fallthru
          _
        // Predicated region
        $region117: #{factorized_transformer.1} parent=103 // pred_check
          %p720 = pneg %p293
        $region118: #{factorized_transformer.1} parent=103 // pred_check_branch
          %722 = sbr.rel (%p720) target = $region120
        $region119: #{factorized_transformer.1} parent=103 // pred_region
          %723 = dma.done [#allocation9], 1024
        $region120: #{factorized_transformer.1} parent=103 // pred_fallthru
          _
        // Predicated region
        $region121: #{factorized_transformer.1} parent=103 // pred_check
          %p724 = pneg %p335
        $region122: #{factorized_transformer.1} parent=103 // pred_check_branch
          %726 = sbr.rel (%p724) target = $region124
        $region123: #{factorized_transformer.1} parent=103 // pred_region
          %727 = dma.done [#allocation9], 32
        $region124: #{factorized_transformer.1} parent=103 // pred_fallthru
          _
        // Predicated region
        $region125: #{factorized_transformer.1} parent=103 // pred_check
          %p728 = pneg %p356
        $region126: #{factorized_transformer.1} parent=103 // pred_check_branch
          %730 = sbr.rel (%p728) target = $region128
        $region127: #{factorized_transformer.1} parent=103 // pred_region
          %731 = dma.done [#allocation12], 32
        $region128: #{factorized_transformer.1} parent=103 // pred_fallthru
          _
        // Predicated region
        $region129: #{factorized_transformer.1} parent=103 // pred_check
          %p732 = pneg %p377
        $region130: #{factorized_transformer.1} parent=103 // pred_check_branch
          %734 = sbr.rel (%p732) target = $region132
        $region131: #{factorized_transformer.1} parent=103 // pred_region
          %735 = dma.done [#allocation12], 1024
        $region132: #{factorized_transformer.1} parent=103 // pred_fallthru
          _
        // Predicated region
        $region133: #{factorized_transformer.1} parent=103 // pred_check
          %p736 = pneg %p398
        $region134: #{factorized_transformer.1} parent=103 // pred_check_branch
          %738 = sbr.rel (%p736) target = $region136
        $region135: #{factorized_transformer.1} parent=103 // pred_region
          %739 = dma.done [#allocation15], 32
        $region136: #{factorized_transformer.1} parent=103 // pred_fallthru
          _
        // Predicated region
        $region137: #{factorized_transformer.1} parent=103 // pred_check
          %p740 = pneg %p440
        $region138: #{factorized_transformer.1} parent=103 // pred_check_branch
          %742 = sbr.rel (%p740) target = $region140
        $region139: #{factorized_transformer.1} parent=103 // pred_region
          %743 = dma.done [#allocation15], 32
        $region140: #{factorized_transformer.1} parent=103 // pred_fallthru
          _
        // Predicated region
        $region141: #{factorized_transformer.1} parent=103 // pred_check
          %p744 = pneg %p461
        $region142: #{factorized_transformer.1} parent=103 // pred_check_branch
          %746 = sbr.rel (%p744) target = $region144
        $region143: #{factorized_transformer.1} parent=103 // pred_region
          %747 = dma.done [#allocation18], 16
        $region144: #{factorized_transformer.1} parent=103 // pred_fallthru
          _
        // Predicated region
        $region145: #{factorized_transformer.1} parent=103 // pred_check
          %p748 = pneg %p482
        $region146: #{factorized_transformer.1} parent=103 // pred_check_branch
          %750 = sbr.rel (%p748) target = $region148
        $region147: #{factorized_transformer.1} parent=103 // pred_region
          %751 = dma.done [#allocation18], 16
        $region148: #{factorized_transformer.1} parent=103 // pred_fallthru
          _
        %p752 = scmp.lt.s32.totalorder %s41, 1
        %s753 = scalar_select %p752, %s41, 1
        %s754 = smul.addr %s753, 4
        %s755 = smul.addr %s754, 8
        %s756 = scalar_lea.vmem %s0, %s755
        %p757 = pneg %p62
        %p758 = pneg %p59
        %p759 = pneg %p83
        %p760 = pneg %p80
        %p761 = pneg %p104
        %p762 = pneg %p101
        %p763 = pneg %p125
        %p764 = pneg %p122
        %p765 = pneg %p146
        %p766 = pneg %p143
        %p767 = pneg %p167
        %p768 = pneg %p164
        %p769 = pneg %p188
        %p770 = pneg %p185
        %p771 = pneg %p209
        %p772 = pneg %p206
        %p773 = pneg %p230
        %p774 = pneg %p227
        %p775 = pneg %p251
        %p776 = pneg %p248
        %p777 = pneg %p272
        %p778 = pneg %p269
        %p779 = pneg %p293
        %p780 = pneg %p290
        %p781 = pneg %p314
        %p782 = pneg %p311
        %p783 = pneg %p335
        %p784 = pneg %p332
        %p785 = pneg %p356
        %p786 = pneg %p353
        %p787 = pneg %p377
        %p788 = pneg %p374
        %p789 = pneg %p398
        %p790 = pneg %p395
        %p791 = pneg %p419
        %p792 = pneg %p416
        %p793 = pneg %p440
        %p794 = pneg %p437
        %p795 = pneg %p461
        %p796 = pneg %p458
        %p797 = pneg %p482
        %p798 = pneg %p479
        %p799 = pneg %p508
        %p800 = pneg %p505
        %s801 = sand.u32 %s495, 1
        %s802 = scalar_lea.sflag [#allocation4], %s801
        %s803 = sand.u32 %s495, 1
        %s804 = smul.addr %s803, 32
        %s805 = scalar_lea.vmem [#allocation20], %s804
        %p806 = scmp.lt.s32.totalorder %s41, 1
        %s807 = scalar_select %p806, %s41, 1
        %s808 = smul.addr %s807, 4
        %s809 = smul.addr %s808, 8
        %s810 = scalar_lea.vmem %s0, %s809
        %v811 = vld [vmem:[%s810] sm:$0xff]
        %v812 = vld [vmem:[%s810 + $0x8] sm:$0xff]
        %v813 = vld [vmem:[%s810 + $0x10] sm:$0xff]
        %v814 = vld [vmem:[%s810 + $0x18] sm:$0xff]
        %v815 = vld [vmem:[%s1] sm:$0xff]
        %v816 = vld [vmem:[%s1 + $0x8] sm:$0xff]
        %v817 = vld [vmem:[%s1 + $0x10] sm:$0xff]
        %v818 = vld [vmem:[%s1 + $0x18] sm:$0xff]
        %v819 = vld [vmem:[%s2] sm:$0xff]
        %v820 = vld [vmem:[%s2 + $0x8] sm:$0xff]
        %v821 = vld [vmem:[%s2 + $0x10] sm:$0xff]
        %v822 = vld [vmem:[%s2 + $0x18] sm:$0xff]
        %v823 = vld [vmem:[#allocation2] sm:$0x1]
        %v824 = vld [vmem:[#allocation5] sm:$0x1]
        %v825 = vld [vmem:[%s5] sm:$0xff]
        %v826 = vld [vmem:[%s5 + $0x8] sm:$0xff]
        %v827 = vld [vmem:[%s5 + $0x10] sm:$0xff]
        %v828 = vld [vmem:[%s5 + $0x18] sm:$0xff]
        %v829 = vld [vmem:[%s6] sm:$0xff]
        %v830 = vld [vmem:[%s6 + $0x8] sm:$0xff]
        %v831 = vld [vmem:[%s6 + $0x10] sm:$0xff]
        %v832 = vld [vmem:[%s6 + $0x18] sm:$0xff]
        %v833 = vld [vmem:[#allocation7] sm:$0x1]
        %vm834 = vcmask 261120
        %v835 = vsel %vm834, %v811, 0.0
        %836 = vadd.xlane.f32.xlu0 %v835
        %v837 = vpop.xlane.xlu0 %836
        %v838 = vsel %vm834, %v812, 0.0
        %839 = vadd.xlane.f32.xlu0 %v838
        %v840 = vpop.xlane.xlu0 %839
        %v841 = vsel %vm834, %v813, 0.0
        %842 = vadd.xlane.f32.xlu0 %v841
        %v843 = vpop.xlane.xlu0 %842
        %v844 = vsel %vm834, %v814, 0.0
        %845 = vadd.xlane.f32.xlu0 %v844
        %v846 = vpop.xlane.xlu0 %845
        %v847 = vrcp.pop 32.0
        %v848 = vmul.f32 %v837, %v847
        %v849 = vmul.f32 %v840, %v847
        %v850 = vmul.f32 %v843, %v847
        %v851 = vmul.f32 %v846, %v847
        %v852 = vsub.f32 %v811, %v848
        %v853 = vsub.f32 %v812, %v849
        %v854 = vsub.f32 %v813, %v850
        %v855 = vsub.f32 %v814, %v851
        %v856 = vmul.f32 %v852, %v852
        %v857 = vmul.f32 %v853, %v853
        %v858 = vmul.f32 %v854, %v854
        %v859 = vmul.f32 %v855, %v855
        %v860 = vsel %vm834, %v856, 0.0
        %861 = vadd.xlane.f32.xlu0 %v860
        %v862 = vpop.xlane.xlu0 %861
        %v863 = vsel %vm834, %v857, 0.0
        %864 = vadd.xlane.f32.xlu0 %v863
        %v865 = vpop.xlane.xlu0 %864
        %v866 = vsel %vm834, %v858, 0.0
        %867 = vadd.xlane.f32.xlu0 %v866
        %v868 = vpop.xlane.xlu0 %867
        %v869 = vsel %vm834, %v859, 0.0
        %870 = vadd.xlane.f32.xlu0 %v869
        %v871 = vpop.xlane.xlu0 %870
        %v872 = vmul.f32 %v862, %v847
        %v873 = vmul.f32 %v865, %v847
        %v874 = vmul.f32 %v868, %v847
        %v875 = vmul.f32 %v871, %v847
        %v876 = vadd.f32 %v872, 1e-05
        %v877 = vadd.f32 %v873, 1e-05
        %v878 = vadd.f32 %v874, 1e-05
        %v879 = vadd.f32 %v875, 1e-05
        %v880 = vrsqrt.pop %v876
        %v881 = vrsqrt.pop %v877
        %v882 = vrsqrt.pop %v878
        %v883 = vrsqrt.pop %v879
        %v884 = vmul.f32 %v852, %v880
        %v885 = vmul.f32 %v853, %v881
        %v886 = vmul.f32 %v854, %v882
        %v887 = vmul.f32 %v855, %v883
        %v889 = vlaneseq
        %v890 = vshrl.u32 %v889, 7
        %v891 = vsub.s32 0, %v890
        %v892 = vrot.slane %v823, %v891
        %v894 = vmul.f32 %v884, %v892
        %v895 = vmul.f32 %v885, %v892
        %v896 = vmul.f32 %v886, %v892
        %v897 = vmul.f32 %v887, %v892
        %v899 = vlaneseq
        %v900 = vshrl.u32 %v899, 7
        %v901 = vsub.s32 0, %v900
        %v902 = vrot.slane %v824, %v901
        %v904 = vadd.f32 %v894, %v902
        %v905 = vadd.f32 %v895, %v902
        %v906 = vadd.f32 %v896, %v902
        %v907 = vadd.f32 %v897, %v902
        %v909 = vsel %vm834, %v904, 0
        %v912 = vsel %vm834, %v905, 0
        %v915 = vsel %vm834, %v906, 0
        %v918 = vsel %vm834, %v907, 0
        %920 = vmatprep.subr.mxu0 0.0
        %921 = vmatpush1.msra.mxu0 %v825
        %922 = vmatprep.subr.mxu0 0.0
        %923 = vmatpush1.msra.mxu0 %v826
        %924 = vmatprep.subr.mxu0 0.0
        %925 = vmatpush1.msra.mxu0 %v827
        %926 = vmatprep.subr.mxu0 0.0
        %927 = vmatpush1.msra.mxu0 %v828
        %928 = vmatprep.subr.mxu0 0.0
        %929 = vmatpush1.msra.mxu0 0.0
        %930 = vmatprep.subr.mxu0 0.0
        %931 = vmatpush1.msra.mxu0 0.0
        %932 = vmatprep.subr.mxu0 0.0
        %933 = vmatpush1.msra.mxu0 0.0
        %934 = vmatprep.subr.mxu0 0.0
        %935 = vmatpush1.msra.mxu0 0.0
        %936 = vmatprep.subr.mxu0 0.0
        %937 = vmatpush1.msra.mxu0 0.0
        %938 = vmatprep.subr.mxu0 0.0
        %939 = vmatpush1.msra.mxu0 0.0
        %940 = vmatprep.subr.mxu0 0.0
        %941 = vmatpush1.msra.mxu0 0.0
        %942 = vmatprep.subr.mxu0 0.0
        %943 = vmatpush1.msra.mxu0 0.0
        %944 = vmatprep.subr.mxu0 0.0
        %945 = vmatpush1.msra.mxu0 0.0
        %946 = vmatprep.subr.mxu0 0.0
        %947 = vmatpush1.msra.mxu0 0.0
        %948 = vmatprep.subr.mxu0 0.0
        %949 = vmatpush1.msra.mxu0 0.0
        %950 = vmatprep.subr.mxu0 0.0
        %951 = vmatpush1.msra.mxu0 0.0
        %952 = vmatprep.subr.mxu0 0.0
        %953 = vmatpush1.msra.mxu0 0.0
        %954 = vmatprep.subr.mxu0 0.0
        %955 = vmatpush1.msra.mxu0 0.0
        %956 = vmatprep.subr.mxu0 0.0
        %957 = vmatpush1.msra.mxu0 0.0
        %958 = vmatprep.subr.mxu0 0.0
        %959 = vmatpush1.msra.mxu0 0.0
        %960 = vmatprep.subr.mxu0 0.0
        %961 = vmatpush1.msra.mxu0 0.0
        %962 = vmatprep.subr.mxu0 0.0
        %963 = vmatpush1.msra.mxu0 0.0
        %964 = vmatprep.subr.mxu0 0.0
        %965 = vmatpush1.msra.mxu0 0.0
        %966 = vmatprep.subr.mxu0 0.0
        %967 = vmatpush1.msra.mxu0 0.0
        %968 = vmatprep.subr.mxu0 0.0
        %969 = vmatpush1.msra.mxu0 0.0
        %970 = vmatprep.subr.mxu0 0.0
        %971 = vmatpush1.msra.mxu0 0.0
        %972 = vmatprep.subr.mxu0 0.0
        %973 = vmatpush1.msra.mxu0 0.0
        %974 = vmatprep.subr.mxu0 0.0
        %975 = vmatpush1.msra.mxu0 0.0
        %976 = vmatprep.subr.mxu0 0.0
        %977 = vmatpush1.msra.mxu0 0.0
        %978 = vmatprep.subr.mxu0 0.0
        %979 = vmatpush1.msra.mxu0 0.0
        %980 = vmatprep.subr.mxu0 0.0
        %981 = vmatpush1.msra.mxu0 0.0
        %982 = vmatprep.subr.mxu0 0.0
        %983 = vmatpush1.msra.mxu0 0.0
        %984 = vmatprep.mubr.f32.mxu0 0.0
        %985 = vmatmul.mubr.f32.gmra.mrb[0].mxu0 %v909
        %v986 = vpop.f32.mrb[0].mxu0
        %v987 = vadd.f32 0.0, %v986
        %v988 = vpop.f32.mrb[0].mxu0
        %989 = vmatprep.mubr.f32.mxu0 0.0
        %990 = vmatmul.mubr.f32.gmra.mrb[0].mxu0 %v912
        %v991 = vpop.f32.mrb[0].mxu0
        %v992 = vadd.f32 0.0, %v991
        %v993 = vpop.f32.mrb[0].mxu0
        %994 = vmatprep.mubr.f32.mxu0 0.0
        %995 = vmatmul.mubr.f32.gmra.mrb[0].mxu0 %v915
        %v996 = vpop.f32.mrb[0].mxu0
        %v997 = vadd.f32 0.0, %v996
        %v998 = vpop.f32.mrb[0].mxu0
        %999 = vmatprep.mubr.f32.mxu0 0.0
        %1000 = vmatmul.mubr.f32.gmra.mrb[0].mxu0 %v918
        %v1001 = vpop.f32.mrb[0].mxu0
        %v1002 = vadd.f32 0.0, %v1001
        %v1003 = vpop.f32.mrb[0].mxu0
        %1004 = vdwg.mxu0
        %1009 = vrot.lane.b32.xlu0 %v987, 96
        %v1010 = vpop.permute.xlu0 %1009
        %1011 = vrot.lane.b32.xlu0 %v992, 96
        %v1012 = vpop.permute.xlu0 %1011
        %1013 = vrot.lane.b32.xlu0 %v997, 96
        %v1014 = vpop.permute.xlu0 %1013
        %1015 = vrot.lane.b32.xlu0 %v1002, 96
        %v1016 = vpop.permute.xlu0 %1015
        %vm1017 = vcmask 64512
        %v1018 = vsel %vm1017, %v987, 0
        %v1020 = vsel %vm1017, %v992, 0
        %v1022 = vsel %vm1017, %v997, 0
        %v1024 = vsel %vm1017, %v1002, 0
        %v1026 = vsel %vm1017, %v1010, 0
        %v1028 = vsel %vm1017, %v1012, 0
        %v1030 = vsel %vm1017, %v1014, 0
        %v1032 = vsel %vm1017, %v1016, 0
        %1034 = vmatprep.subr.mxu0 0.0
        %1035 = vmatpush1.xpose.msra.mxu0 %v1026
        %1036 = vmatprep.subr.mxu0 0.0
        %1037 = vmatpush1.xpose.msra.mxu0 %v1028
        %1038 = vmatprep.subr.mxu0 0.0
        %1039 = vmatpush1.xpose.msra.mxu0 %v1030
        %1040 = vmatprep.subr.mxu0 0.0
        %1041 = vmatpush1.xpose.msra.mxu0 %v1032
        %1042 = vmatprep.subr.mxu0 0.0
        %1043 = vmatpush1.xpose.msra.mxu0 0.0
        %1044 = vmatprep.subr.mxu0 0.0
        %1045 = vmatpush1.xpose.msra.mxu0 0.0
        %1046 = vmatprep.subr.mxu0 0.0
        %1047 = vmatpush1.xpose.msra.mxu0 0.0
        %1048 = vmatprep.subr.mxu0 0.0
        %1049 = vmatpush1.xpose.msra.mxu0 0.0
        %1050 = vmatprep.subr.mxu0 0.0
        %1051 = vmatpush1.xpose.msra.mxu0 0.0
        %1052 = vmatprep.subr.mxu0 0.0
        %1053 = vmatpush1.xpose.msra.mxu0 0.0
        %1054 = vmatprep.subr.mxu0 0.0
        %1055 = vmatpush1.xpose.msra.mxu0 0.0
        %1056 = vmatprep.subr.mxu0 0.0
        %1057 = vmatpush1.xpose.msra.mxu0 0.0
        %1058 = vmatprep.subr.mxu0 0.0
        %1059 = vmatpush1.xpose.msra.mxu0 0.0
        %1060 = vmatprep.subr.mxu0 0.0
        %1061 = vmatpush1.xpose.msra.mxu0 0.0
        %1062 = vmatprep.subr.mxu0 0.0
        %1063 = vmatpush1.xpose.msra.mxu0 0.0
        %1064 = vmatprep.subr.mxu0 0.0
        %1065 = vmatpush1.xpose.msra.mxu0 0.0
        %1066 = vmatprep.subr.mxu0 0.0
        %1067 = vmatpush1.xpose.msra.mxu0 0.0
        %1068 = vmatprep.subr.mxu0 0.0
        %1069 = vmatpush1.xpose.msra.mxu0 0.0
        %1070 = vmatprep.subr.mxu0 0.0
        %1071 = vmatpush1.xpose.msra.mxu0 0.0
        %1072 = vmatprep.subr.mxu0 0.0
        %1073 = vmatpush1.xpose.msra.mxu0 0.0
        %1074 = vmatprep.subr.mxu0 0.0
        %1075 = vmatpush1.xpose.msra.mxu0 0.0
        %1076 = vmatprep.subr.mxu0 0.0
        %1077 = vmatpush1.xpose.msra.mxu0 0.0
        %1078 = vmatprep.subr.mxu0 0.0
        %1079 = vmatpush1.xpose.msra.mxu0 0.0
        %1080 = vmatprep.subr.mxu0 0.0
        %1081 = vmatpush1.xpose.msra.mxu0 0.0
        %1082 = vmatprep.subr.mxu0 0.0
        %1083 = vmatpush1.xpose.msra.mxu0 0.0
        %1084 = vmatprep.subr.mxu0 0.0
        %1085 = vmatpush1.xpose.msra.mxu0 0.0
        %1086 = vmatprep.subr.mxu0 0.0
        %1087 = vmatpush1.xpose.msra.mxu0 0.0
        %1088 = vmatprep.subr.mxu0 0.0
        %1089 = vmatpush1.xpose.msra.mxu0 0.0
        %1090 = vmatprep.subr.mxu0 0.0
        %1091 = vmatpush1.xpose.msra.mxu0 0.0
        %1092 = vmatprep.subr.mxu0 0.0
        %1093 = vmatpush1.xpose.msra.mxu0 0.0
        %1094 = vmatprep.subr.mxu0 0.0
        %1095 = vmatpush1.xpose.msra.mxu0 0.0
        %1096 = vmatprep.subr.mxu0 0.0
        %1097 = vmatpush1.xpose.msra.mxu0 0.0
        %1098 = vmatprep.mubr.f32.mxu0 0.0
        %1099 = vmatmul.mubr.f32.gmra.mrb[0].mxu0 %v1018
        %v1100 = vpop.f32.mrb[0].mxu0
        %v1101 = vadd.f32 %v815, %v1100
        %v1102 = vpop.f32.mrb[0].mxu0
        %1103 = vmatprep.mubr.f32.mxu0 0.0
        %1104 = vmatmul.mubr.f32.gmra.mrb[0].mxu0 %v1020
        %v1105 = vpop.f32.mrb[0].mxu0
        %v1106 = vadd.f32 %v816, %v1105
        %v1107 = vpop.f32.mrb[0].mxu0
        %1108 = vmatprep.mubr.f32.mxu0 0.0
        %1109 = vmatmul.mubr.f32.gmra.mrb[0].mxu0 %v1022
        %v1110 = vpop.f32.mrb[0].mxu0
        %v1111 = vadd.f32 %v817, %v1110
        %v1112 = vpop.f32.mrb[0].mxu0
        %1113 = vmatprep.mubr.f32.mxu0 0.0
        %1114 = vmatmul.mubr.f32.gmra.mrb[0].mxu0 %v1024
        %v1115 = vpop.f32.mrb[0].mxu0
        %v1116 = vadd.f32 %v818, %v1115
        %v1117 = vpop.f32.mrb[0].mxu0
        %1118 = vdwg.mxu0
        %v1119 = vsel %vm834, %v1101, -inf
        %1120 = vmax.xlane.f32.xlu0 %v1119
        %v1121 = vpop.xlane.xlu0 %1120
        %v1122 = vsel %vm834, %v1106, -inf
        %1123 = vmax.xlane.f32.xlu0 %v1122
        %v1124 = vpop.xlane.xlu0 %1123
        %v1125 = vsel %vm834, %v1111, -inf
        %1126 = vmax.xlane.f32.xlu0 %v1125
        %v1127 = vpop.xlane.xlu0 %1126
        %v1128 = vsel %vm834, %v1116, -inf
        %1129 = vmax.xlane.f32.xlu0 %v1128
        %v1130 = vpop.xlane.xlu0 %1129
        %v1131 = vsub.f32 %v1101, %v1121
        %v1132 = vsub.f32 %v1106, %v1124
        %v1133 = vsub.f32 %v1111, %v1127
        %v1134 = vsub.f32 %v1116, %v1130
        %v1135 = vmul.f32 %v1131, 1.442695
        %v1136 = vpow.pop %v1135
        %v1137 = vmul.f32 %v1132, 1.442695
        %v1138 = vpow.pop %v1137
        %v1139 = vmul.f32 %v1133, 1.442695
        %v1140 = vpow.pop %v1139
        %v1141 = vmul.f32 %v1134, 1.442695
        %v1142 = vpow.pop %v1141
        %v1143 = vsel %vm834, %v1136, 0.0
        %1144 = vadd.xlane.f32.xlu0 %v1143
        %v1145 = vpop.xlane.xlu0 %1144
        %v1146 = vsel %vm834, %v1138, 0.0
        %1147 = vadd.xlane.f32.xlu0 %v1146
        %v1148 = vpop.xlane.xlu0 %1147
        %v1149 = vsel %vm834, %v1140, 0.0
        %1150 = vadd.xlane.f32.xlu0 %v1149
        %v1151 = vpop.xlane.xlu0 %1150
        %v1152 = vsel %vm834, %v1142, 0.0
        %1153 = vadd.xlane.f32.xlu0 %v1152
        %v1154 = vpop.xlane.xlu0 %1153
        %v1155 = vrcp.pop %v1145
        %v1156 = vrcp.pop %v1148
        %v1157 = vrcp.pop %v1151
        %v1158 = vrcp.pop %v1154
        %v1159 = vmul.f32 %v1136, %v1155
        %v1160 = vmul.f32 %v1138, %v1156
        %v1161 = vmul.f32 %v1140, %v1157
        %v1162 = vmul.f32 %v1142, %v1158
        %1163 = vrot.lane.b32.xlu0 %v987, 64
        %v1164 = vpop.permute.xlu0 %1163
        %1165 = vrot.lane.b32.xlu0 %v992, 64
        %v1166 = vpop.permute.xlu0 %1165
        %1167 = vrot.lane.b32.xlu0 %v997, 64
        %v1168 = vpop.permute.xlu0 %1167
        %1169 = vrot.lane.b32.xlu0 %v1002, 64
        %v1170 = vpop.permute.xlu0 %1169
        %v1176 = vsel %vm834, %v1159, 0
        %v1179 = vsel %vm834, %v1160, 0
        %v1182 = vsel %vm834, %v1161, 0
        %v1185 = vsel %vm834, %v1162, 0
        %1187 = vmatprep.subr.mxu0 0.0
        %1188 = vmatpush1.msra.mxu0 %v1164
        %1189 = vmatprep.subr.mxu0 0.0
        %1190 = vmatpush1.msra.mxu0 %v1166
        %1191 = vmatprep.subr.mxu0 0.0
        %1192 = vmatpush1.msra.mxu0 %v1168
        %1193 = vmatprep.subr.mxu0 0.0
        %1194 = vmatpush1.msra.mxu0 %v1170
        %1195 = vmatprep.subr.mxu0 0.0
        %1196 = vmatpush1.msra.mxu0 0.0
        %1197 = vmatprep.subr.mxu0 0.0
        %1198 = vmatpush1.msra.mxu0 0.0
        %1199 = vmatprep.subr.mxu0 0.0
        %1200 = vmatpush1.msra.mxu0 0.0
        %1201 = vmatprep.subr.mxu0 0.0
        %1202 = vmatpush1.msra.mxu0 0.0
        %1203 = vmatprep.subr.mxu0 0.0
        %1204 = vmatpush1.msra.mxu0 0.0
        %1205 = vmatprep.subr.mxu0 0.0
        %1206 = vmatpush1.msra.mxu0 0.0
        %1207 = vmatprep.subr.mxu0 0.0
        %1208 = vmatpush1.msra.mxu0 0.0
        %1209 = vmatprep.subr.mxu0 0.0
        %1210 = vmatpush1.msra.mxu0 0.0
        %1211 = vmatprep.subr.mxu0 0.0
        %1212 = vmatpush1.msra.mxu0 0.0
        %1213 = vmatprep.subr.mxu0 0.0
        %1214 = vmatpush1.msra.mxu0 0.0
        %1215 = vmatprep.subr.mxu0 0.0
        %1216 = vmatpush1.msra.mxu0 0.0
        %1217 = vmatprep.subr.mxu0 0.0
        %1218 = vmatpush1.msra.mxu0 0.0
        %1219 = vmatprep.subr.mxu0 0.0
        %1220 = vmatpush1.msra.mxu0 0.0
        %1221 = vmatprep.subr.mxu0 0.0
        %1222 = vmatpush1.msra.mxu0 0.0
        %1223 = vmatprep.subr.mxu0 0.0
        %1224 = vmatpush1.msra.mxu0 0.0
        %1225 = vmatprep.subr.mxu0 0.0
        %1226 = vmatpush1.msra.mxu0 0.0
        %1227 = vmatprep.subr.mxu0 0.0
        %1228 = vmatpush1.msra.mxu0 0.0
        %1229 = vmatprep.subr.mxu0 0.0
        %1230 = vmatpush1.msra.mxu0 0.0
        %1231 = vmatprep.subr.mxu0 0.0
        %1232 = vmatpush1.msra.mxu0 0.0
        %1233 = vmatprep.subr.mxu0 0.0
        %1234 = vmatpush1.msra.mxu0 0.0
        %1235 = vmatprep.subr.mxu0 0.0
        %1236 = vmatpush1.msra.mxu0 0.0
        %1237 = vmatprep.subr.mxu0 0.0
        %1238 = vmatpush1.msra.mxu0 0.0
        %1239 = vmatprep.subr.mxu0 0.0
        %1240 = vmatpush1.msra.mxu0 0.0
        %1241 = vmatprep.subr.mxu0 0.0
        %1242 = vmatpush1.msra.mxu0 0.0
        %1243 = vmatprep.subr.mxu0 0.0
        %1244 = vmatpush1.msra.mxu0 0.0
        %1245 = vmatprep.subr.mxu0 0.0
        %1246 = vmatpush1.msra.mxu0 0.0
        %1247 = vmatprep.subr.mxu0 0.0
        %1248 = vmatpush1.msra.mxu0 0.0
        %1249 = vmatprep.subr.mxu0 0.0
        %1250 = vmatpush1.msra.mxu0 0.0
        %1251 = vmatprep.mubr.f32.mxu0 0.0
        %1252 = vmatmul.mubr.f32.gmra.mrb[0].mxu0 %v1176
        %v1253 = vpop.f32.mrb[0].mxu0
        %v1254 = vadd.f32 0.0, %v1253
        %v1255 = vpop.f32.mrb[0].mxu0
        %1256 = vmatprep.mubr.f32.mxu0 0.0
        %1257 = vmatmul.mubr.f32.gmra.mrb[0].mxu0 %v1179
        %v1258 = vpop.f32.mrb[0].mxu0
        %v1259 = vadd.f32 0.0, %v1258
        %v1260 = vpop.f32.mrb[0].mxu0
        %1261 = vmatprep.mubr.f32.mxu0 0.0
        %1262 = vmatmul.mubr.f32.gmra.mrb[0].mxu0 %v1182
        %v1263 = vpop.f32.mrb[0].mxu0
        %v1264 = vadd.f32 0.0, %v1263
        %v1265 = vpop.f32.mrb[0].mxu0
        %1266 = vmatprep.mubr.f32.mxu0 0.0
        %1267 = vmatmul.mubr.f32.gmra.mrb[0].mxu0 %v1185
        %v1268 = vpop.f32.mrb[0].mxu0
        %v1269 = vadd.f32 0.0, %v1268
        %v1270 = vpop.f32.mrb[0].mxu0
        %1271 = vdwg.mxu0
        %1272 = vrot.lane.b32.xlu0 %v987, 120
        %v1273 = vpop.permute.xlu0 %1272
        %1274 = vrot.lane.b32.xlu0 %v992, 120
        %v1275 = vpop.permute.xlu0 %1274
        %1276 = vrot.lane.b32.xlu0 %v997, 120
        %v1277 = vpop.permute.xlu0 %1276
        %1278 = vrot.lane.b32.xlu0 %v1002, 120
        %v1279 = vpop.permute.xlu0 %1278
        %1280 = vrot.lane.b32.xlu0 %v987, 88
        %v1281 = vpop.permute.xlu0 %1280
        %1282 = vrot.lane.b32.xlu0 %v992, 88
        %v1283 = vpop.permute.xlu0 %1282
        %1284 = vrot.lane.b32.xlu0 %v997, 88
        %v1285 = vpop.permute.xlu0 %1284
        %1286 = vrot.lane.b32.xlu0 %v1002, 88
        %v1287 = vpop.permute.xlu0 %1286
        %v1288 = vsel %vm1017, %v1273, 0
        %v1290 = vsel %vm1017, %v1275, 0
        %v1292 = vsel %vm1017, %v1277, 0
        %v1294 = vsel %vm1017, %v1279, 0
        %v1296 = vsel %vm1017, %v1281, 0
        %v1298 = vsel %vm1017, %v1283, 0
        %v1300 = vsel %vm1017, %v1285, 0
        %v1302 = vsel %vm1017, %v1287, 0
        %1304 = vmatprep.subr.mxu0 0.0
        %1305 = vmatpush1.xpose.msra.mxu0 %v1296
        %1306 = vmatprep.subr.mxu0 0.0
        %1307 = vmatpush1.xpose.msra.mxu0 %v1298
        %1308 = vmatprep.subr.mxu0 0.0
        %1309 = vmatpush1.xpose.msra.mxu0 %v1300
        %1310 = vmatprep.subr.mxu0 0.0
        %1311 = vmatpush1.xpose.msra.mxu0 %v1302
        %1312 = vmatprep.subr.mxu0 0.0
        %1313 = vmatpush1.xpose.msra.mxu0 0.0
        %1314 = vmatprep.subr.mxu0 0.0
        %1315 = vmatpush1.xpose.msra.mxu0 0.0
        %1316 = vmatprep.subr.mxu0 0.0
        %1317 = vmatpush1.xpose.msra.mxu0 0.0
        %1318 = vmatprep.subr.mxu0 0.0
        %1319 = vmatpush1.xpose.msra.mxu0 0.0
        %1320 = vmatprep.subr.mxu0 0.0
        %1321 = vmatpush1.xpose.msra.mxu0 0.0
        %1322 = vmatprep.subr.mxu0 0.0
        %1323 = vmatpush1.xpose.msra.mxu0 0.0
        %1324 = vmatprep.subr.mxu0 0.0
        %1325 = vmatpush1.xpose.msra.mxu0 0.0
        %1326 = vmatprep.subr.mxu0 0.0
        %1327 = vmatpush1.xpose.msra.mxu0 0.0
        %1328 = vmatprep.subr.mxu0 0.0
        %1329 = vmatpush1.xpose.msra.mxu0 0.0
        %1330 = vmatprep.subr.mxu0 0.0
        %1331 = vmatpush1.xpose.msra.mxu0 0.0
        %1332 = vmatprep.subr.mxu0 0.0
        %1333 = vmatpush1.xpose.msra.mxu0 0.0
        %1334 = vmatprep.subr.mxu0 0.0
        %1335 = vmatpush1.xpose.msra.mxu0 0.0
        %1336 = vmatprep.subr.mxu0 0.0
        %1337 = vmatpush1.xpose.msra.mxu0 0.0
        %1338 = vmatprep.subr.mxu0 0.0
        %1339 = vmatpush1.xpose.msra.mxu0 0.0
        %1340 = vmatprep.subr.mxu0 0.0
        %1341 = vmatpush1.xpose.msra.mxu0 0.0
        %1342 = vmatprep.subr.mxu0 0.0
        %1343 = vmatpush1.xpose.msra.mxu0 0.0
        %1344 = vmatprep.subr.mxu0 0.0
        %1345 = vmatpush1.xpose.msra.mxu0 0.0
        %1346 = vmatprep.subr.mxu0 0.0
        %1347 = vmatpush1.xpose.msra.mxu0 0.0
        %1348 = vmatprep.subr.mxu0 0.0
        %1349 = vmatpush1.xpose.msra.mxu0 0.0
        %1350 = vmatprep.subr.mxu0 0.0
        %1351 = vmatpush1.xpose.msra.mxu0 0.0
        %1352 = vmatprep.subr.mxu0 0.0
        %1353 = vmatpush1.xpose.msra.mxu0 0.0
        %1354 = vmatprep.subr.mxu0 0.0
        %1355 = vmatpush1.xpose.msra.mxu0 0.0
        %1356 = vmatprep.subr.mxu0 0.0
        %1357 = vmatpush1.xpose.msra.mxu0 0.0
        %1358 = vmatprep.subr.mxu0 0.0
        %1359 = vmatpush1.xpose.msra.mxu0 0.0
        %1360 = vmatprep.subr.mxu0 0.0
        %1361 = vmatpush1.xpose.msra.mxu0 0.0
        %1362 = vmatprep.subr.mxu0 0.0
        %1363 = vmatpush1.xpose.msra.mxu0 0.0
        %1364 = vmatprep.subr.mxu0 0.0
        %1365 = vmatpush1.xpose.msra.mxu0 0.0
        %1366 = vmatprep.subr.mxu0 0.0
        %1367 = vmatpush1.xpose.msra.mxu0 0.0
        %1368 = vmatprep.mubr.f32.mxu0 0.0
        %1369 = vmatmul.mubr.f32.gmra.mrb[0].mxu0 %v1288
        %v1370 = vpop.f32.mrb[0].mxu0
        %v1371 = vadd.f32 %v815, %v1370
        %v1372 = vpop.f32.mrb[0].mxu0
        %1373 = vmatprep.mubr.f32.mxu0 0.0
        %1374 = vmatmul.mubr.f32.gmra.mrb[0].mxu0 %v1290
        %v1375 = vpop.f32.mrb[0].mxu0
        %v1376 = vadd.f32 %v816, %v1375
        %v1377 = vpop.f32.mrb[0].mxu0
        %1378 = vmatprep.mubr.f32.mxu0 0.0
        %1379 = vmatmul.mubr.f32.gmra.mrb[0].mxu0 %v1292
        %v1380 = vpop.f32.mrb[0].mxu0
        %v1381 = vadd.f32 %v817, %v1380
        %v1382 = vpop.f32.mrb[0].mxu0
        %1383 = vmatprep.mubr.f32.mxu0 0.0
        %1384 = vmatmul.mubr.f32.gmra.mrb[0].mxu0 %v1294
        %v1385 = vpop.f32.mrb[0].mxu0
        %v1386 = vadd.f32 %v818, %v1385
        %v1387 = vpop.f32.mrb[0].mxu0
        %1388 = vdwg.mxu0
        %v1389 = vsel %vm834, %v1371, -inf
        %1390 = vmax.xlane.f32.xlu0 %v1389
        %v1391 = vpop.xlane.xlu0 %1390
        %v1392 = vsel %vm834, %v1376, -inf
        %1393 = vmax.xlane.f32.xlu0 %v1392
        %v1394 = vpop.xlane.xlu0 %1393
        %v1395 = vsel %vm834, %v1381, -inf
        %1396 = vmax.xlane.f32.xlu0 %v1395
        %v1397 = vpop.xlane.xlu0 %1396
        %v1398 = vsel %vm834, %v1386, -inf
        %1399 = vmax.xlane.f32.xlu0 %v1398
        %v1400 = vpop.xlane.xlu0 %1399
        %v1401 = vsub.f32 %v1371, %v1391
        %v1402 = vsub.f32 %v1376, %v1394
        %v1403 = vsub.f32 %v1381, %v1397
        %v1404 = vsub.f32 %v1386, %v1400
        %v1405 = vmul.f32 %v1401, 1.442695
        %v1406 = vpow.pop %v1405
        %v1407 = vmul.f32 %v1402, 1.442695
        %v1408 = vpow.pop %v1407
        %v1409 = vmul.f32 %v1403, 1.442695
        %v1410 = vpow.pop %v1409
        %v1411 = vmul.f32 %v1404, 1.442695
        %v1412 = vpow.pop %v1411
        %v1413 = vsel %vm834, %v1406, 0.0
        %1414 = vadd.xlane.f32.xlu0 %v1413
        %v1415 = vpop.xlane.xlu0 %1414
        %v1416 = vsel %vm834, %v1408, 0.0
        %1417 = vadd.xlane.f32.xlu0 %v1416
        %v1418 = vpop.xlane.xlu0 %1417
        %v1419 = vsel %vm834, %v1410, 0.0
        %1420 = vadd.xlane.f32.xlu0 %v1419
        %v1421 = vpop.xlane.xlu0 %1420
        %v1422 = vsel %vm834, %v1412, 0.0
        %1423 = vadd.xlane.f32.xlu0 %v1422
        %v1424 = vpop.xlane.xlu0 %1423
        %v1425 = vrcp.pop %v1415
        %v1426 = vrcp.pop %v1418
        %v1427 = vrcp.pop %v1421
        %v1428 = vrcp.pop %v1424
        %v1429 = vmul.f32 %v1406, %v1425
        %v1430 = vmul.f32 %v1408, %v1426
        %v1431 = vmul.f32 %v1410, %v1427
        %v1432 = vmul.f32 %v1412, %v1428
        %1433 = vrot.lane.b32.xlu0 %v987, 56
        %v1434 = vpop.permute.xlu0 %1433
        %1435 = vrot.lane.b32.xlu0 %v992, 56
        %v1436 = vpop.permute.xlu0 %1435
        %1437 = vrot.lane.b32.xlu0 %v997, 56
        %v1438 = vpop.permute.xlu0 %1437
        %1439 = vrot.lane.b32.xlu0 %v1002, 56
        %v1440 = vpop.permute.xlu0 %1439
        %v1446 = vsel %vm834, %v1429, 0
        %v1449 = vsel %vm834, %v1430, 0
        %v1452 = vsel %vm834, %v1431, 0
        %v1455 = vsel %vm834, %v1432, 0
        %1457 = vmatprep.subr.mxu0 0.0
        %1458 = vmatpush1.msra.mxu0 %v1434
        %1459 = vmatprep.subr.mxu0 0.0
        %1460 = vmatpush1.msra.mxu0 %v1436
        %1461 = vmatprep.subr.mxu0 0.0
        %1462 = vmatpush1.msra.mxu0 %v1438
        %1463 = vmatprep.subr.mxu0 0.0
        %1464 = vmatpush1.msra.mxu0 %v1440
        %1465 = vmatprep.subr.mxu0 0.0
        %1466 = vmatpush1.msra.mxu0 0.0
        %1467 = vmatprep.subr.mxu0 0.0
        %1468 = vmatpush1.msra.mxu0 0.0
        %1469 = vmatprep.subr.mxu0 0.0
        %1470 = vmatpush1.msra.mxu0 0.0
        %1471 = vmatprep.subr.mxu0 0.0
        %1472 = vmatpush1.msra.mxu0 0.0
        %1473 = vmatprep.subr.mxu0 0.0
        %1474 = vmatpush1.msra.mxu0 0.0
        %1475 = vmatprep.subr.mxu0 0.0
        %1476 = vmatpush1.msra.mxu0 0.0
        %1477 = vmatprep.subr.mxu0 0.0
        %1478 = vmatpush1.msra.mxu0 0.0
        %1479 = vmatprep.subr.mxu0 0.0
        %1480 = vmatpush1.msra.mxu0 0.0
        %1481 = vmatprep.subr.mxu0 0.0
        %1482 = vmatpush1.msra.mxu0 0.0
        %1483 = vmatprep.subr.mxu0 0.0
        %1484 = vmatpush1.msra.mxu0 0.0
        %1485 = vmatprep.subr.mxu0 0.0
        %1486 = vmatpush1.msra.mxu0 0.0
        %1487 = vmatprep.subr.mxu0 0.0
        %1488 = vmatpush1.msra.mxu0 0.0
        %1489 = vmatprep.subr.mxu0 0.0
        %1490 = vmatpush1.msra.mxu0 0.0
        %1491 = vmatprep.subr.mxu0 0.0
        %1492 = vmatpush1.msra.mxu0 0.0
        %1493 = vmatprep.subr.mxu0 0.0
        %1494 = vmatpush1.msra.mxu0 0.0
        %1495 = vmatprep.subr.mxu0 0.0
        %1496 = vmatpush1.msra.mxu0 0.0
        %1497 = vmatprep.subr.mxu0 0.0
        %1498 = vmatpush1.msra.mxu0 0.0
        %1499 = vmatprep.subr.mxu0 0.0
        %1500 = vmatpush1.msra.mxu0 0.0
        %1501 = vmatprep.subr.mxu0 0.0
        %1502 = vmatpush1.msra.mxu0 0.0
        %1503 = vmatprep.subr.mxu0 0.0
        %1504 = vmatpush1.msra.mxu0 0.0
        %1505 = vmatprep.subr.mxu0 0.0
        %1506 = vmatpush1.msra.mxu0 0.0
        %1507 = vmatprep.subr.mxu0 0.0
        %1508 = vmatpush1.msra.mxu0 0.0
        %1509 = vmatprep.subr.mxu0 0.0
        %1510 = vmatpush1.msra.mxu0 0.0
        %1511 = vmatprep.subr.mxu0 0.0
        %1512 = vmatpush1.msra.mxu0 0.0
        %1513 = vmatprep.subr.mxu0 0.0
        %1514 = vmatpush1.msra.mxu0 0.0
        %1515 = vmatprep.subr.mxu0 0.0
        %1516 = vmatpush1.msra.mxu0 0.0
        %1517 = vmatprep.subr.mxu0 0.0
        %1518 = vmatpush1.msra.mxu0 0.0
        %1519 = vmatprep.subr.mxu0 0.0
        %1520 = vmatpush1.msra.mxu0 0.0
        %1521 = vmatprep.mubr.f32.mxu0 0.0
        %1522 = vmatmul.mubr.f32.gmra.mrb[0].mxu0 %v1446
        %v1523 = vpop.f32.mrb[0].mxu0
        %v1524 = vadd.f32 0.0, %v1523
        %v1525 = vpop.f32.mrb[0].mxu0
        %1526 = vmatprep.mubr.f32.mxu0 0.0
        %1527 = vmatmul.mubr.f32.gmra.mrb[0].mxu0 %v1449
        %v1528 = vpop.f32.mrb[0].mxu0
        %v1529 = vadd.f32 0.0, %v1528
        %v1530 = vpop.f32.mrb[0].mxu0
        %1531 = vmatprep.mubr.f32.mxu0 0.0
        %1532 = vmatmul.mubr.f32.gmra.mrb[0].mxu0 %v1452
        %v1533 = vpop.f32.mrb[0].mxu0
        %v1534 = vadd.f32 0.0, %v1533
        %v1535 = vpop.f32.mrb[0].mxu0
        %1536 = vmatprep.mubr.f32.mxu0 0.0
        %1537 = vmatmul.mubr.f32.gmra.mrb[0].mxu0 %v1455
        %v1538 = vpop.f32.mrb[0].mxu0
        %v1539 = vadd.f32 0.0, %v1538
        %v1540 = vpop.f32.mrb[0].mxu0
        %1541 = vdwg.mxu0
        %v1543 = vsel %vm1017, %v1524, 0
        %v1546 = vsel %vm1017, %v1529, 0
        %v1549 = vsel %vm1017, %v1534, 0
        %v1552 = vsel %vm1017, %v1539, 0
        %1554 = vmatprep.subr.mxu0 0.0
        %1555 = vmatpush1.msra.mxu0 %v830
        %1556 = vmatprep.subr.mxu0 0.0
        %1557 = vmatpush1.msra.mxu0 0.0
        %1558 = vmatprep.subr.mxu0 0.0
        %1559 = vmatpush1.msra.mxu0 0.0
        %1560 = vmatprep.subr.mxu0 0.0
        %1561 = vmatpush1.msra.mxu0 0.0
        %1562 = vmatprep.subr.mxu0 0.0
        %1563 = vmatpush1.msra.mxu0 0.0
        %1564 = vmatprep.subr.mxu0 0.0
        %1565 = vmatpush1.msra.mxu0 0.0
        %1566 = vmatprep.subr.mxu0 0.0
        %1567 = vmatpush1.msra.mxu0 0.0
        %1568 = vmatprep.subr.mxu0 0.0
        %1569 = vmatpush1.msra.mxu0 0.0
        %1570 = vmatprep.subr.mxu0 0.0
        %1571 = vmatpush1.msra.mxu0 0.0
        %1572 = vmatprep.subr.mxu0 0.0
        %1573 = vmatpush1.msra.mxu0 0.0
        %1574 = vmatprep.subr.mxu0 0.0
        %1575 = vmatpush1.msra.mxu0 0.0
        %1576 = vmatprep.subr.mxu0 0.0
        %1577 = vmatpush1.msra.mxu0 0.0
        %1578 = vmatprep.subr.mxu0 0.0
        %1579 = vmatpush1.msra.mxu0 0.0
        %1580 = vmatprep.subr.mxu0 0.0
        %1581 = vmatpush1.msra.mxu0 0.0
        %1582 = vmatprep.subr.mxu0 0.0
        %1583 = vmatpush1.msra.mxu0 0.0
        %1584 = vmatprep.subr.mxu0 0.0
        %1585 = vmatpush1.msra.mxu0 0.0
        %1586 = vmatprep.subr.mxu0 0.0
        %1587 = vmatpush1.msra.mxu0 0.0
        %1588 = vmatprep.subr.mxu0 0.0
        %1589 = vmatpush1.msra.mxu0 0.0
        %1590 = vmatprep.subr.mxu0 0.0
        %1591 = vmatpush1.msra.mxu0 0.0
        %1592 = vmatprep.subr.mxu0 0.0
        %1593 = vmatpush1.msra.mxu0 0.0
        %1594 = vmatprep.subr.mxu0 0.0
        %1595 = vmatpush1.msra.mxu0 0.0
        %1596 = vmatprep.subr.mxu0 0.0
        %1597 = vmatpush1.msra.mxu0 0.0
        %1598 = vmatprep.subr.mxu0 0.0
        %1599 = vmatpush1.msra.mxu0 0.0
        %1600 = vmatprep.subr.mxu0 0.0
        %1601 = vmatpush1.msra.mxu0 0.0
        %1602 = vmatprep.subr.mxu0 0.0
        %1603 = vmatpush1.msra.mxu0 0.0
        %1604 = vmatprep.subr.mxu0 0.0
        %1605 = vmatpush1.msra.mxu0 0.0
        %1606 = vmatprep.subr.mxu0 0.0
        %1607 = vmatpush1.msra.mxu0 0.0
        %1608 = vmatprep.subr.mxu0 0.0
        %1609 = vmatpush1.msra.mxu0 0.0
        %1610 = vmatprep.subr.mxu0 0.0
        %1611 = vmatpush1.msra.mxu0 0.0
        %1612 = vmatprep.subr.mxu0 0.0
        %1613 = vmatpush1.msra.mxu0 0.0
        %1614 = vmatprep.subr.mxu0 0.0
        %1615 = vmatpush1.msra.mxu0 0.0
        %1616 = vmatprep.subr.mxu0 0.0
        %1617 = vmatpush1.msra.mxu0 0.0
        %1618 = vmatprep.mubr.f32.mxu0 0.0
        %1619 = vmatmul.mubr.f32.gmra.mrb[0].mxu0 %v1543
        %v1620 = vpop.f32.mrb[0].mxu0
        %v1621 = vadd.f32 0.0, %v1620
        %v1622 = vpop.f32.mrb[0].mxu0
        %1623 = vmatprep.mubr.f32.mxu0 0.0
        %1624 = vmatmul.mubr.f32.gmra.mrb[0].mxu0 %v1546
        %v1625 = vpop.f32.mrb[0].mxu0
        %v1626 = vadd.f32 0.0, %v1625
        %v1627 = vpop.f32.mrb[0].mxu0
        %1628 = vmatprep.mubr.f32.mxu0 0.0
        %1629 = vmatmul.mubr.f32.gmra.mrb[0].mxu0 %v1549
        %v1630 = vpop.f32.mrb[0].mxu0
        %v1631 = vadd.f32 0.0, %v1630
        %v1632 = vpop.f32.mrb[0].mxu0
        %1633 = vmatprep.mubr.f32.mxu0 0.0
        %1634 = vmatmul.mubr.f32.gmra.mrb[0].mxu0 %v1552
        %v1635 = vpop.f32.mrb[0].mxu0
        %v1636 = vadd.f32 0.0, %v1635
        %v1637 = vpop.f32.mrb[0].mxu0
        %1638 = vdwg.mxu0
        %v1640 = vsel %vm1017, %v1254, 0
        %v1643 = vsel %vm1017, %v1259, 0
        %v1646 = vsel %vm1017, %v1264, 0
        %v1649 = vsel %vm1017, %v1269, 0
        %1651 = vmatprep.subr.mxu0 0.0
        %1652 = vmatpush1.msra.mxu0 %v829
        %1653 = vmatprep.subr.mxu0 0.0
        %1654 = vmatpush1.msra.mxu0 0.0
        %1655 = vmatprep.subr.mxu0 0.0
        %1656 = vmatpush1.msra.mxu0 0.0
        %1657 = vmatprep.subr.mxu0 0.0
        %1658 = vmatpush1.msra.mxu0 0.0
        %1659 = vmatprep.subr.mxu0 0.0
        %1660 = vmatpush1.msra.mxu0 0.0
        %1661 = vmatprep.subr.mxu0 0.0
        %1662 = vmatpush1.msra.mxu0 0.0
        %1663 = vmatprep.subr.mxu0 0.0
        %1664 = vmatpush1.msra.mxu0 0.0
        %1665 = vmatprep.subr.mxu0 0.0
        %1666 = vmatpush1.msra.mxu0 0.0
        %1667 = vmatprep.subr.mxu0 0.0
        %1668 = vmatpush1.msra.mxu0 0.0
        %1669 = vmatprep.subr.mxu0 0.0
        %1670 = vmatpush1.msra.mxu0 0.0
        %1671 = vmatprep.subr.mxu0 0.0
        %1672 = vmatpush1.msra.mxu0 0.0
        %1673 = vmatprep.subr.mxu0 0.0
        %1674 = vmatpush1.msra.mxu0 0.0
        %1675 = vmatprep.subr.mxu0 0.0
        %1676 = vmatpush1.msra.mxu0 0.0
        %1677 = vmatprep.subr.mxu0 0.0
        %1678 = vmatpush1.msra.mxu0 0.0
        %1679 = vmatprep.subr.mxu0 0.0
        %1680 = vmatpush1.msra.mxu0 0.0
        %1681 = vmatprep.subr.mxu0 0.0
        %1682 = vmatpush1.msra.mxu0 0.0
        %1683 = vmatprep.subr.mxu0 0.0
        %1684 = vmatpush1.msra.mxu0 0.0
        %1685 = vmatprep.subr.mxu0 0.0
        %1686 = vmatpush1.msra.mxu0 0.0
        %1687 = vmatprep.subr.mxu0 0.0
        %1688 = vmatpush1.msra.mxu0 0.0
        %1689 = vmatprep.subr.mxu0 0.0
        %1690 = vmatpush1.msra.mxu0 0.0
        %1691 = vmatprep.subr.mxu0 0.0
        %1692 = vmatpush1.msra.mxu0 0.0
        %1693 = vmatprep.subr.mxu0 0.0
        %1694 = vmatpush1.msra.mxu0 0.0
        %1695 = vmatprep.subr.mxu0 0.0
        %1696 = vmatpush1.msra.mxu0 0.0
        %1697 = vmatprep.subr.mxu0 0.0
        %1698 = vmatpush1.msra.mxu0 0.0
        %1699 = vmatprep.subr.mxu0 0.0
        %1700 = vmatpush1.msra.mxu0 0.0
        %1701 = vmatprep.subr.mxu0 0.0
        %1702 = vmatpush1.msra.mxu0 0.0
        %1703 = vmatprep.subr.mxu0 0.0
        %1704 = vmatpush1.msra.mxu0 0.0
        %1705 = vmatprep.subr.mxu0 0.0
        %1706 = vmatpush1.msra.mxu0 0.0
        %1707 = vmatprep.subr.mxu0 0.0
        %1708 = vmatpush1.msra.mxu0 0.0
        %1709 = vmatprep.subr.mxu0 0.0
        %1710 = vmatpush1.msra.mxu0 0.0
        %1711 = vmatprep.subr.mxu0 0.0
        %1712 = vmatpush1.msra.mxu0 0.0
        %1713 = vmatprep.subr.mxu0 0.0
        %1714 = vmatpush1.msra.mxu0 0.0
        %1715 = vmatprep.mubr.f32.mxu0 0.0
        %1716 = vmatmul.mubr.f32.gmra.mrb[0].mxu0 %v1640
        %v1717 = vpop.f32.mrb[0].mxu0
        %v1718 = vadd.f32 %v1621, %v1717
        %v1719 = vpop.f32.mrb[0].mxu0
        %1720 = vmatprep.mubr.f32.mxu0 0.0
        %1721 = vmatmul.mubr.f32.gmra.mrb[0].mxu0 %v1643
        %v1722 = vpop.f32.mrb[0].mxu0
        %v1723 = vadd.f32 %v1626, %v1722
        %v1724 = vpop.f32.mrb[0].mxu0
        %1725 = vmatprep.mubr.f32.mxu0 0.0
        %1726 = vmatmul.mubr.f32.gmra.mrb[0].mxu0 %v1646
        %v1727 = vpop.f32.mrb[0].mxu0
        %v1728 = vadd.f32 %v1631, %v1727
        %v1729 = vpop.f32.mrb[0].mxu0
        %1730 = vmatprep.mubr.f32.mxu0 0.0
        %1731 = vmatmul.mubr.f32.gmra.mrb[0].mxu0 %v1649
        %v1732 = vpop.f32.mrb[0].mxu0
        %v1733 = vadd.f32 %v1636, %v1732
        %v1734 = vpop.f32.mrb[0].mxu0
        %1735 = vdwg.mxu0
        %1736 = vrot.lane.b32.xlu0 %v987, 112
        %v1737 = vpop.permute.xlu0 %1736
        %1738 = vrot.lane.b32.xlu0 %v992, 112
        %v1739 = vpop.permute.xlu0 %1738
        %1740 = vrot.lane.b32.xlu0 %v997, 112
        %v1741 = vpop.permute.xlu0 %1740
        %1742 = vrot.lane.b32.xlu0 %v1002, 112
        %v1743 = vpop.permute.xlu0 %1742
        %1744 = vrot.lane.b32.xlu0 %v987, 80
        %v1745 = vpop.permute.xlu0 %1744
        %1746 = vrot.lane.b32.xlu0 %v992, 80
        %v1747 = vpop.permute.xlu0 %1746
        %1748 = vrot.lane.b32.xlu0 %v997, 80
        %v1749 = vpop.permute.xlu0 %1748
        %1750 = vrot.lane.b32.xlu0 %v1002, 80
        %v1751 = vpop.permute.xlu0 %1750
        %v1752 = vsel %vm1017, %v1737, 0
        %v1754 = vsel %vm1017, %v1739, 0
        %v1756 = vsel %vm1017, %v1741, 0
        %v1758 = vsel %vm1017, %v1743, 0
        %v1760 = vsel %vm1017, %v1745, 0
        %v1762 = vsel %vm1017, %v1747, 0
        %v1764 = vsel %vm1017, %v1749, 0
        %v1766 = vsel %vm1017, %v1751, 0
        %1768 = vmatprep.subr.mxu0 0.0
        %1769 = vmatpush1.xpose.msra.mxu0 %v1760
        %1770 = vmatprep.subr.mxu0 0.0
        %1771 = vmatpush1.xpose.msra.mxu0 %v1762
        %1772 = vmatprep.subr.mxu0 0.0
        %1773 = vmatpush1.xpose.msra.mxu0 %v1764
        %1774 = vmatprep.subr.mxu0 0.0
        %1775 = vmatpush1.xpose.msra.mxu0 %v1766
        %1776 = vmatprep.subr.mxu0 0.0
        %1777 = vmatpush1.xpose.msra.mxu0 0.0
        %1778 = vmatprep.subr.mxu0 0.0
        %1779 = vmatpush1.xpose.msra.mxu0 0.0
        %1780 = vmatprep.subr.mxu0 0.0
        %1781 = vmatpush1.xpose.msra.mxu0 0.0
        %1782 = vmatprep.subr.mxu0 0.0
        %1783 = vmatpush1.xpose.msra.mxu0 0.0
        %1784 = vmatprep.subr.mxu0 0.0
        %1785 = vmatpush1.xpose.msra.mxu0 0.0
        %1786 = vmatprep.subr.mxu0 0.0
        %1787 = vmatpush1.xpose.msra.mxu0 0.0
        %1788 = vmatprep.subr.mxu0 0.0
        %1789 = vmatpush1.xpose.msra.mxu0 0.0
        %1790 = vmatprep.subr.mxu0 0.0
        %1791 = vmatpush1.xpose.msra.mxu0 0.0
        %1792 = vmatprep.subr.mxu0 0.0
        %1793 = vmatpush1.xpose.msra.mxu0 0.0
        %1794 = vmatprep.subr.mxu0 0.0
        %1795 = vmatpush1.xpose.msra.mxu0 0.0
        %1796 = vmatprep.subr.mxu0 0.0
        %1797 = vmatpush1.xpose.msra.mxu0 0.0
        %1798 = vmatprep.subr.mxu0 0.0
        %1799 = vmatpush1.xpose.msra.mxu0 0.0
        %1800 = vmatprep.subr.mxu0 0.0
        %1801 = vmatpush1.xpose.msra.mxu0 0.0
        %1802 = vmatprep.subr.mxu0 0.0
        %1803 = vmatpush1.xpose.msra.mxu0 0.0
        %1804 = vmatprep.subr.mxu0 0.0
        %1805 = vmatpush1.xpose.msra.mxu0 0.0
        %1806 = vmatprep.subr.mxu0 0.0
        %1807 = vmatpush1.xpose.msra.mxu0 0.0
        %1808 = vmatprep.subr.mxu0 0.0
        %1809 = vmatpush1.xpose.msra.mxu0 0.0
        %1810 = vmatprep.subr.mxu0 0.0
        %1811 = vmatpush1.xpose.msra.mxu0 0.0
        %1812 = vmatprep.subr.mxu0 0.0
        %1813 = vmatpush1.xpose.msra.mxu0 0.0
        %1814 = vmatprep.subr.mxu0 0.0
        %1815 = vmatpush1.xpose.msra.mxu0 0.0
        %1816 = vmatprep.subr.mxu0 0.0
        %1817 = vmatpush1.xpose.msra.mxu0 0.0
        %1818 = vmatprep.subr.mxu0 0.0
        %1819 = vmatpush1.xpose.msra.mxu0 0.0
        %1820 = vmatprep.subr.mxu0 0.0
        %1821 = vmatpush1.xpose.msra.mxu0 0.0
        %1822 = vmatprep.subr.mxu0 0.0
        %1823 = vmatpush1.xpose.msra.mxu0 0.0
        %1824 = vmatprep.subr.mxu0 0.0
        %1825 = vmatpush1.xpose.msra.mxu0 0.0
        %1826 = vmatprep.subr.mxu0 0.0
        %1827 = vmatpush1.xpose.msra.mxu0 0.0
        %1828 = vmatprep.subr.mxu0 0.0
        %1829 = vmatpush1.xpose.msra.mxu0 0.0
        %1830 = vmatprep.subr.mxu0 0.0
        %1831 = vmatpush1.xpose.msra.mxu0 0.0
        %1832 = vmatprep.mubr.f32.mxu0 0.0
        %1833 = vmatmul.mubr.f32.gmra.mrb[0].mxu0 %v1752
        %v1834 = vpop.f32.mrb[0].mxu0
        %v1835 = vadd.f32 %v815, %v1834
        %v1836 = vpop.f32.mrb[0].mxu0
        %1837 = vmatprep.mubr.f32.mxu0 0.0
        %1838 = vmatmul.mubr.f32.gmra.mrb[0].mxu0 %v1754
        %v1839 = vpop.f32.mrb[0].mxu0
        %v1840 = vadd.f32 %v816, %v1839
        %v1841 = vpop.f32.mrb[0].mxu0
        %1842 = vmatprep.mubr.f32.mxu0 0.0
        %1843 = vmatmul.mubr.f32.gmra.mrb[0].mxu0 %v1756
        %v1844 = vpop.f32.mrb[0].mxu0
        %v1845 = vadd.f32 %v817, %v1844
        %v1846 = vpop.f32.mrb[0].mxu0
        %1847 = vmatprep.mubr.f32.mxu0 0.0
        %1848 = vmatmul.mubr.f32.gmra.mrb[0].mxu0 %v1758
        %v1849 = vpop.f32.mrb[0].mxu0
        %v1850 = vadd.f32 %v818, %v1849
        %v1851 = vpop.f32.mrb[0].mxu0
        %1852 = vdwg.mxu0
        %v1853 = vsel %vm834, %v1835, -inf
        %1854 = vmax.xlane.f32.xlu0 %v1853
        %v1855 = vpop.xlane.xlu0 %1854
        %v1856 = vsel %vm834, %v1840, -inf
        %1857 = vmax.xlane.f32.xlu0 %v1856
        %v1858 = vpop.xlane.xlu0 %1857
        %v1859 = vsel %vm834, %v1845, -inf
        %1860 = vmax.xlane.f32.xlu0 %v1859
        %v1861 = vpop.xlane.xlu0 %1860
        %v1862 = vsel %vm834, %v1850, -inf
        %1863 = vmax.xlane.f32.xlu0 %v1862
        %v1864 = vpop.xlane.xlu0 %1863
        %v1865 = vsub.f32 %v1835, %v1855
        %v1866 = vsub.f32 %v1840, %v1858
        %v1867 = vsub.f32 %v1845, %v1861
        %v1868 = vsub.f32 %v1850, %v1864
        %v1869 = vmul.f32 %v1865, 1.442695
        %v1870 = vpow.pop %v1869
        %v1871 = vmul.f32 %v1866, 1.442695
        %v1872 = vpow.pop %v1871
        %v1873 = vmul.f32 %v1867, 1.442695
        %v1874 = vpow.pop %v1873
        %v1875 = vmul.f32 %v1868, 1.442695
        %v1876 = vpow.pop %v1875
        %v1877 = vsel %vm834, %v1870, 0.0
        %1878 = vadd.xlane.f32.xlu0 %v1877
        %v1879 = vpop.xlane.xlu0 %1878
        %v1880 = vsel %vm834, %v1872, 0.0
        %1881 = vadd.xlane.f32.xlu0 %v1880
        %v1882 = vpop.xlane.xlu0 %1881
        %v1883 = vsel %vm834, %v1874, 0.0
        %1884 = vadd.xlane.f32.xlu0 %v1883
        %v1885 = vpop.xlane.xlu0 %1884
        %v1886 = vsel %vm834, %v1876, 0.0
        %1887 = vadd.xlane.f32.xlu0 %v1886
        %v1888 = vpop.xlane.xlu0 %1887
        %v1889 = vrcp.pop %v1879
        %v1890 = vrcp.pop %v1882
        %v1891 = vrcp.pop %v1885
        %v1892 = vrcp.pop %v1888
        %v1893 = vmul.f32 %v1870, %v1889
        %v1894 = vmul.f32 %v1872, %v1890
        %v1895 = vmul.f32 %v1874, %v1891
        %v1896 = vmul.f32 %v1876, %v1892
        %1897 = vrot.lane.b32.xlu0 %v987, 48
        %v1898 = vpop.permute.xlu0 %1897
        %1899 = vrot.lane.b32.xlu0 %v992, 48
        %v1900 = vpop.permute.xlu0 %1899
        %1901 = vrot.lane.b32.xlu0 %v997, 48
        %v1902 = vpop.permute.xlu0 %1901
        %1903 = vrot.lane.b32.xlu0 %v1002, 48
        %v1904 = vpop.permute.xlu0 %1903
        %v1910 = vsel %vm834, %v1893, 0
        %v1913 = vsel %vm834, %v1894, 0
        %v1916 = vsel %vm834, %v1895, 0
        %v1919 = vsel %vm834, %v1896, 0
        %1921 = vmatprep.subr.mxu0 0.0
        %1922 = vmatpush1.msra.mxu0 %v1898
        %1923 = vmatprep.subr.mxu0 0.0
        %1924 = vmatpush1.msra.mxu0 %v1900
        %1925 = vmatprep.subr.mxu0 0.0
        %1926 = vmatpush1.msra.mxu0 %v1902
        %1927 = vmatprep.subr.mxu0 0.0
        %1928 = vmatpush1.msra.mxu0 %v1904
        %1929 = vmatprep.subr.mxu0 0.0
        %1930 = vmatpush1.msra.mxu0 0.0
        %1931 = vmatprep.subr.mxu0 0.0
        %1932 = vmatpush1.msra.mxu0 0.0
        %1933 = vmatprep.subr.mxu0 0.0
        %1934 = vmatpush1.msra.mxu0 0.0
        %1935 = vmatprep.subr.mxu0 0.0
        %1936 = vmatpush1.msra.mxu0 0.0
        %1937 = vmatprep.subr.mxu0 0.0
        %1938 = vmatpush1.msra.mxu0 0.0
        %1939 = vmatprep.subr.mxu0 0.0
        %1940 = vmatpush1.msra.mxu0 0.0
        %1941 = vmatprep.subr.mxu0 0.0
        %1942 = vmatpush1.msra.mxu0 0.0
        %1943 = vmatprep.subr.mxu0 0.0
        %1944 = vmatpush1.msra.mxu0 0.0
        %1945 = vmatprep.subr.mxu0 0.0
        %1946 = vmatpush1.msra.mxu0 0.0
        %1947 = vmatprep.subr.mxu0 0.0
        %1948 = vmatpush1.msra.mxu0 0.0
        %1949 = vmatprep.subr.mxu0 0.0
        %1950 = vmatpush1.msra.mxu0 0.0
        %1951 = vmatprep.subr.mxu0 0.0
        %1952 = vmatpush1.msra.mxu0 0.0
        %1953 = vmatprep.subr.mxu0 0.0
        %1954 = vmatpush1.msra.mxu0 0.0
        %1955 = vmatprep.subr.mxu0 0.0
        %1956 = vmatpush1.msra.mxu0 0.0
        %1957 = vmatprep.subr.mxu0 0.0
        %1958 = vmatpush1.msra.mxu0 0.0
        %1959 = vmatprep.subr.mxu0 0.0
        %1960 = vmatpush1.msra.mxu0 0.0
        %1961 = vmatprep.subr.mxu0 0.0
        %1962 = vmatpush1.msra.mxu0 0.0
        %1963 = vmatprep.subr.mxu0 0.0
        %1964 = vmatpush1.msra.mxu0 0.0
        %1965 = vmatprep.subr.mxu0 0.0
        %1966 = vmatpush1.msra.mxu0 0.0
        %1967 = vmatprep.subr.mxu0 0.0
        %1968 = vmatpush1.msra.mxu0 0.0
        %1969 = vmatprep.subr.mxu0 0.0
        %1970 = vmatpush1.msra.mxu0 0.0
        %1971 = vmatprep.subr.mxu0 0.0
        %1972 = vmatpush1.msra.mxu0 0.0
        %1973 = vmatprep.subr.mxu0 0.0
        %1974 = vmatpush1.msra.mxu0 0.0
        %1975 = vmatprep.subr.mxu0 0.0
        %1976 = vmatpush1.msra.mxu0 0.0
        %1977 = vmatprep.subr.mxu0 0.0
        %1978 = vmatpush1.msra.mxu0 0.0
        %1979 = vmatprep.subr.mxu0 0.0
        %1980 = vmatpush1.msra.mxu0 0.0
        %1981 = vmatprep.subr.mxu0 0.0
        %1982 = vmatpush1.msra.mxu0 0.0
        %1983 = vmatprep.subr.mxu0 0.0
        %1984 = vmatpush1.msra.mxu0 0.0
        %1985 = vmatprep.mubr.f32.mxu0 0.0
        %1986 = vmatmul.mubr.f32.gmra.mrb[0].mxu0 %v1910
        %v1987 = vpop.f32.mrb[0].mxu0
        %v1988 = vadd.f32 0.0, %v1987
        %v1989 = vpop.f32.mrb[0].mxu0
        %1990 = vmatprep.mubr.f32.mxu0 0.0
        %1991 = vmatmul.mubr.f32.gmra.mrb[0].mxu0 %v1913
        %v1992 = vpop.f32.mrb[0].mxu0
        %v1993 = vadd.f32 0.0, %v1992
        %v1994 = vpop.f32.mrb[0].mxu0
        %1995 = vmatprep.mubr.f32.mxu0 0.0
        %1996 = vmatmul.mubr.f32.gmra.mrb[0].mxu0 %v1916
        %v1997 = vpop.f32.mrb[0].mxu0
        %v1998 = vadd.f32 0.0, %v1997
        %v1999 = vpop.f32.mrb[0].mxu0
        %2000 = vmatprep.mubr.f32.mxu0 0.0
        %2001 = vmatmul.mubr.f32.gmra.mrb[0].mxu0 %v1919
        %v2002 = vpop.f32.mrb[0].mxu0
        %v2003 = vadd.f32 0.0, %v2002
        %v2004 = vpop.f32.mrb[0].mxu0
        %2005 = vdwg.mxu0
        %v2007 = vsel %vm1017, %v1988, 0
        %v2010 = vsel %vm1017, %v1993, 0
        %v2013 = vsel %vm1017, %v1998, 0
        %v2016 = vsel %vm1017, %v2003, 0
        %2018 = vmatprep.subr.mxu0 0.0
        %2019 = vmatpush1.msra.mxu0 %v831
        %2020 = vmatprep.subr.mxu0 0.0
        %2021 = vmatpush1.msra.mxu0 0.0
        %2022 = vmatprep.subr.mxu0 0.0
        %2023 = vmatpush1.msra.mxu0 0.0
        %2024 = vmatprep.subr.mxu0 0.0
        %2025 = vmatpush1.msra.mxu0 0.0
        %2026 = vmatprep.subr.mxu0 0.0
        %2027 = vmatpush1.msra.mxu0 0.0
        %2028 = vmatprep.subr.mxu0 0.0
        %2029 = vmatpush1.msra.mxu0 0.0
        %2030 = vmatprep.subr.mxu0 0.0
        %2031 = vmatpush1.msra.mxu0 0.0
        %2032 = vmatprep.subr.mxu0 0.0
        %2033 = vmatpush1.msra.mxu0 0.0
        %2034 = vmatprep.subr.mxu0 0.0
        %2035 = vmatpush1.msra.mxu0 0.0
        %2036 = vmatprep.subr.mxu0 0.0
        %2037 = vmatpush1.msra.mxu0 0.0
        %2038 = vmatprep.subr.mxu0 0.0
        %2039 = vmatpush1.msra.mxu0 0.0
        %2040 = vmatprep.subr.mxu0 0.0
        %2041 = vmatpush1.msra.mxu0 0.0
        %2042 = vmatprep.subr.mxu0 0.0
        %2043 = vmatpush1.msra.mxu0 0.0
        %2044 = vmatprep.subr.mxu0 0.0
        %2045 = vmatpush1.msra.mxu0 0.0
        %2046 = vmatprep.subr.mxu0 0.0
        %2047 = vmatpush1.msra.mxu0 0.0
        %2048 = vmatprep.subr.mxu0 0.0
        %2049 = vmatpush1.msra.mxu0 0.0
        %2050 = vmatprep.subr.mxu0 0.0
        %2051 = vmatpush1.msra.mxu0 0.0
        %2052 = vmatprep.subr.mxu0 0.0
        %2053 = vmatpush1.msra.mxu0 0.0
        %2054 = vmatprep.subr.mxu0 0.0
        %2055 = vmatpush1.msra.mxu0 0.0
        %2056 = vmatprep.subr.mxu0 0.0
        %2057 = vmatpush1.msra.mxu0 0.0
        %2058 = vmatprep.subr.mxu0 0.0
        %2059 = vmatpush1.msra.mxu0 0.0
        %2060 = vmatprep.subr.mxu0 0.0
        %2061 = vmatpush1.msra.mxu0 0.0
        %2062 = vmatprep.subr.mxu0 0.0
        %2063 = vmatpush1.msra.mxu0 0.0
        %2064 = vmatprep.subr.mxu0 0.0
        %2065 = vmatpush1.msra.mxu0 0.0
        %2066 = vmatprep.subr.mxu0 0.0
        %2067 = vmatpush1.msra.mxu0 0.0
        %2068 = vmatprep.subr.mxu0 0.0
        %2069 = vmatpush1.msra.mxu0 0.0
        %2070 = vmatprep.subr.mxu0 0.0
        %2071 = vmatpush1.msra.mxu0 0.0
        %2072 = vmatprep.subr.mxu0 0.0
        %2073 = vmatpush1.msra.mxu0 0.0
        %2074 = vmatprep.subr.mxu0 0.0
        %2075 = vmatpush1.msra.mxu0 0.0
        %2076 = vmatprep.subr.mxu0 0.0
        %2077 = vmatpush1.msra.mxu0 0.0
        %2078 = vmatprep.subr.mxu0 0.0
        %2079 = vmatpush1.msra.mxu0 0.0
        %2080 = vmatprep.subr.mxu0 0.0
        %2081 = vmatpush1.msra.mxu0 0.0
        %2082 = vmatprep.mubr.f32.mxu0 0.0
        %2083 = vmatmul.mubr.f32.gmra.mrb[0].mxu0 %v2007
        %v2084 = vpop.f32.mrb[0].mxu0
        %v2085 = vadd.f32 0.0, %v2084
        %v2086 = vpop.f32.mrb[0].mxu0
        %2087 = vmatprep.mubr.f32.mxu0 0.0
        %2088 = vmatmul.mubr.f32.gmra.mrb[0].mxu0 %v2010
        %v2089 = vpop.f32.mrb[0].mxu0
        %v2090 = vadd.f32 0.0, %v2089
        %v2091 = vpop.f32.mrb[0].mxu0
        %2092 = vmatprep.mubr.f32.mxu0 0.0
        %2093 = vmatmul.mubr.f32.gmra.mrb[0].mxu0 %v2013
        %v2094 = vpop.f32.mrb[0].mxu0
        %v2095 = vadd.f32 0.0, %v2094
        %v2096 = vpop.f32.mrb[0].mxu0
        %2097 = vmatprep.mubr.f32.mxu0 0.0
        %2098 = vmatmul.mubr.f32.gmra.mrb[0].mxu0 %v2016
        %v2099 = vpop.f32.mrb[0].mxu0
        %v2100 = vadd.f32 0.0, %v2099
        %v2101 = vpop.f32.mrb[0].mxu0
        %2102 = vdwg.mxu0
        %v2103 = vadd.f32 %v1718, %v2085
        %v2104 = vadd.f32 %v1723, %v2090
        %v2105 = vadd.f32 %v1728, %v2095
        %v2106 = vadd.f32 %v1733, %v2100
        %2107 = vrot.lane.b32.xlu0 %v987, 104
        %v2108 = vpop.permute.xlu0 %2107
        %2109 = vrot.lane.b32.xlu0 %v992, 104
        %v2110 = vpop.permute.xlu0 %2109
        %2111 = vrot.lane.b32.xlu0 %v997, 104
        %v2112 = vpop.permute.xlu0 %2111
        %2113 = vrot.lane.b32.xlu0 %v1002, 104
        %v2114 = vpop.permute.xlu0 %2113
        %2115 = vrot.lane.b32.xlu0 %v987, 72
        %v2116 = vpop.permute.xlu0 %2115
        %2117 = vrot.lane.b32.xlu0 %v992, 72
        %v2118 = vpop.permute.xlu0 %2117
        %2119 = vrot.lane.b32.xlu0 %v997, 72
        %v2120 = vpop.permute.xlu0 %2119
        %2121 = vrot.lane.b32.xlu0 %v1002, 72
        %v2122 = vpop.permute.xlu0 %2121
        %v2123 = vsel %vm1017, %v2108, 0
        %v2125 = vsel %vm1017, %v2110, 0
        %v2127 = vsel %vm1017, %v2112, 0
        %v2129 = vsel %vm1017, %v2114, 0
        %v2131 = vsel %vm1017, %v2116, 0
        %v2133 = vsel %vm1017, %v2118, 0
        %v2135 = vsel %vm1017, %v2120, 0
        %v2137 = vsel %vm1017, %v2122, 0
        %2139 = vmatprep.subr.mxu0 0.0
        %2140 = vmatpush1.xpose.msra.mxu0 %v2131
        %2141 = vmatprep.subr.mxu0 0.0
        %2142 = vmatpush1.xpose.msra.mxu0 %v2133
        %2143 = vmatprep.subr.mxu0 0.0
        %2144 = vmatpush1.xpose.msra.mxu0 %v2135
        %2145 = vmatprep.subr.mxu0 0.0
        %2146 = vmatpush1.xpose.msra.mxu0 %v2137
        %2147 = vmatprep.subr.mxu0 0.0
        %2148 = vmatpush1.xpose.msra.mxu0 0.0
        %2149 = vmatprep.subr.mxu0 0.0
        %2150 = vmatpush1.xpose.msra.mxu0 0.0
        %2151 = vmatprep.subr.mxu0 0.0
        %2152 = vmatpush1.xpose.msra.mxu0 0.0
        %2153 = vmatprep.subr.mxu0 0.0
        %2154 = vmatpush1.xpose.msra.mxu0 0.0
        %2155 = vmatprep.subr.mxu0 0.0
        %2156 = vmatpush1.xpose.msra.mxu0 0.0
        %2157 = vmatprep.subr.mxu0 0.0
        %2158 = vmatpush1.xpose.msra.mxu0 0.0
        %2159 = vmatprep.subr.mxu0 0.0
        %2160 = vmatpush1.xpose.msra.mxu0 0.0
        %2161 = vmatprep.subr.mxu0 0.0
        %2162 = vmatpush1.xpose.msra.mxu0 0.0
        %2163 = vmatprep.subr.mxu0 0.0
        %2164 = vmatpush1.xpose.msra.mxu0 0.0
        %2165 = vmatprep.subr.mxu0 0.0
        %2166 = vmatpush1.xpose.msra.mxu0 0.0
        %2167 = vmatprep.subr.mxu0 0.0
        %2168 = vmatpush1.xpose.msra.mxu0 0.0
        %2169 = vmatprep.subr.mxu0 0.0
        %2170 = vmatpush1.xpose.msra.mxu0 0.0
        %2171 = vmatprep.subr.mxu0 0.0
        %2172 = vmatpush1.xpose.msra.mxu0 0.0
        %2173 = vmatprep.subr.mxu0 0.0
        %2174 = vmatpush1.xpose.msra.mxu0 0.0
        %2175 = vmatprep.subr.mxu0 0.0
        %2176 = vmatpush1.xpose.msra.mxu0 0.0
        %2177 = vmatprep.subr.mxu0 0.0
        %2178 = vmatpush1.xpose.msra.mxu0 0.0
        %2179 = vmatprep.subr.mxu0 0.0
        %2180 = vmatpush1.xpose.msra.mxu0 0.0
        %2181 = vmatprep.subr.mxu0 0.0
        %2182 = vmatpush1.xpose.msra.mxu0 0.0
        %2183 = vmatprep.subr.mxu0 0.0
        %2184 = vmatpush1.xpose.msra.mxu0 0.0
        %2185 = vmatprep.subr.mxu0 0.0
        %2186 = vmatpush1.xpose.msra.mxu0 0.0
        %2187 = vmatprep.subr.mxu0 0.0
        %2188 = vmatpush1.xpose.msra.mxu0 0.0
        %2189 = vmatprep.subr.mxu0 0.0
        %2190 = vmatpush1.xpose.msra.mxu0 0.0
        %2191 = vmatprep.subr.mxu0 0.0
        %2192 = vmatpush1.xpose.msra.mxu0 0.0
        %2193 = vmatprep.subr.mxu0 0.0
        %2194 = vmatpush1.xpose.msra.mxu0 0.0
        %2195 = vmatprep.subr.mxu0 0.0
        %2196 = vmatpush1.xpose.msra.mxu0 0.0
        %2197 = vmatprep.subr.mxu0 0.0
        %2198 = vmatpush1.xpose.msra.mxu0 0.0
        %2199 = vmatprep.subr.mxu0 0.0
        %2200 = vmatpush1.xpose.msra.mxu0 0.0
        %2201 = vmatprep.subr.mxu0 0.0
        %2202 = vmatpush1.xpose.msra.mxu0 0.0
        %2203 = vmatprep.mubr.f32.mxu0 0.0
        %2204 = vmatmul.mubr.f32.gmra.mrb[0].mxu0 %v2123
        %v2205 = vpop.f32.mrb[0].mxu0
        %v2206 = vadd.f32 %v815, %v2205
        %v2207 = vpop.f32.mrb[0].mxu0
        %2208 = vmatprep.mubr.f32.mxu0 0.0
        %2209 = vmatmul.mubr.f32.gmra.mrb[0].mxu0 %v2125
        %v2210 = vpop.f32.mrb[0].mxu0
        %v2211 = vadd.f32 %v816, %v2210
        %v2212 = vpop.f32.mrb[0].mxu0
        %2213 = vmatprep.mubr.f32.mxu0 0.0
        %2214 = vmatmul.mubr.f32.gmra.mrb[0].mxu0 %v2127
        %v2215 = vpop.f32.mrb[0].mxu0
        %v2216 = vadd.f32 %v817, %v2215
        %v2217 = vpop.f32.mrb[0].mxu0
        %2218 = vmatprep.mubr.f32.mxu0 0.0
        %2219 = vmatmul.mubr.f32.gmra.mrb[0].mxu0 %v2129
        %v2220 = vpop.f32.mrb[0].mxu0
        %v2221 = vadd.f32 %v818, %v2220
        %v2222 = vpop.f32.mrb[0].mxu0
        %2223 = vdwg.mxu0
        %v2224 = vsel %vm834, %v2206, -inf
        %2225 = vmax.xlane.f32.xlu0 %v2224
        %v2226 = vpop.xlane.xlu0 %2225
        %v2227 = vsel %vm834, %v2211, -inf
        %2228 = vmax.xlane.f32.xlu0 %v2227
        %v2229 = vpop.xlane.xlu0 %2228
        %v2230 = vsel %vm834, %v2216, -inf
        %2231 = vmax.xlane.f32.xlu0 %v2230
        %v2232 = vpop.xlane.xlu0 %2231
        %v2233 = vsel %vm834, %v2221, -inf
        %2234 = vmax.xlane.f32.xlu0 %v2233
        %v2235 = vpop.xlane.xlu0 %2234
        %v2236 = vsub.f32 %v2206, %v2226
        %v2237 = vsub.f32 %v2211, %v2229
        %v2238 = vsub.f32 %v2216, %v2232
        %v2239 = vsub.f32 %v2221, %v2235
        %v2240 = vmul.f32 %v2236, 1.442695
        %v2241 = vpow.pop %v2240
        %v2242 = vmul.f32 %v2237, 1.442695
        %v2243 = vpow.pop %v2242
        %v2244 = vmul.f32 %v2238, 1.442695
        %v2245 = vpow.pop %v2244
        %v2246 = vmul.f32 %v2239, 1.442695
        %v2247 = vpow.pop %v2246
        %v2248 = vsel %vm834, %v2241, 0.0
        %2249 = vadd.xlane.f32.xlu0 %v2248
        %v2250 = vpop.xlane.xlu0 %2249
        %v2251 = vsel %vm834, %v2243, 0.0
        %2252 = vadd.xlane.f32.xlu0 %v2251
        %v2253 = vpop.xlane.xlu0 %2252
        %v2254 = vsel %vm834, %v2245, 0.0
        %2255 = vadd.xlane.f32.xlu0 %v2254
        %v2256 = vpop.xlane.xlu0 %2255
        %v2257 = vsel %vm834, %v2247, 0.0
        %2258 = vadd.xlane.f32.xlu0 %v2257
        %v2259 = vpop.xlane.xlu0 %2258
        %v2260 = vrcp.pop %v2250
        %v2261 = vrcp.pop %v2253
        %v2262 = vrcp.pop %v2256
        %v2263 = vrcp.pop %v2259
        %v2264 = vmul.f32 %v2241, %v2260
        %v2265 = vmul.f32 %v2243, %v2261
        %v2266 = vmul.f32 %v2245, %v2262
        %v2267 = vmul.f32 %v2247, %v2263
        %2268 = vrot.lane.b32.xlu0 %v987, 40
        %v2269 = vpop.permute.xlu0 %2268
        %2270 = vrot.lane.b32.xlu0 %v992, 40
        %v2271 = vpop.permute.xlu0 %2270
        %2272 = vrot.lane.b32.xlu0 %v997, 40
        %v2273 = vpop.permute.xlu0 %2272
        %2274 = vrot.lane.b32.xlu0 %v1002, 40
        %v2275 = vpop.permute.xlu0 %2274
        %v2281 = vsel %vm834, %v2264, 0
        %v2284 = vsel %vm834, %v2265, 0
        %v2287 = vsel %vm834, %v2266, 0
        %v2290 = vsel %vm834, %v2267, 0
        %2292 = vmatprep.subr.mxu0 0.0
        %2293 = vmatpush1.msra.mxu0 %v2269
        %2294 = vmatprep.subr.mxu0 0.0
        %2295 = vmatpush1.msra.mxu0 %v2271
        %2296 = vmatprep.subr.mxu0 0.0
        %2297 = vmatpush1.msra.mxu0 %v2273
        %2298 = vmatprep.subr.mxu0 0.0
        %2299 = vmatpush1.msra.mxu0 %v2275
        %2300 = vmatprep.subr.mxu0 0.0
        %2301 = vmatpush1.msra.mxu0 0.0
        %2302 = vmatprep.subr.mxu0 0.0
        %2303 = vmatpush1.msra.mxu0 0.0
        %2304 = vmatprep.subr.mxu0 0.0
        %2305 = vmatpush1.msra.mxu0 0.0
        %2306 = vmatprep.subr.mxu0 0.0
        %2307 = vmatpush1.msra.mxu0 0.0
        %2308 = vmatprep.subr.mxu0 0.0
        %2309 = vmatpush1.msra.mxu0 0.0
        %2310 = vmatprep.subr.mxu0 0.0
        %2311 = vmatpush1.msra.mxu0 0.0
        %2312 = vmatprep.subr.mxu0 0.0
        %2313 = vmatpush1.msra.mxu0 0.0
        %2314 = vmatprep.subr.mxu0 0.0
        %2315 = vmatpush1.msra.mxu0 0.0
        %2316 = vmatprep.subr.mxu0 0.0
        %2317 = vmatpush1.msra.mxu0 0.0
        %2318 = vmatprep.subr.mxu0 0.0
        %2319 = vmatpush1.msra.mxu0 0.0
        %2320 = vmatprep.subr.mxu0 0.0
        %2321 = vmatpush1.msra.mxu0 0.0
        %2322 = vmatprep.subr.mxu0 0.0
        %2323 = vmatpush1.msra.mxu0 0.0
        %2324 = vmatprep.subr.mxu0 0.0
        %2325 = vmatpush1.msra.mxu0 0.0
        %2326 = vmatprep.subr.mxu0 0.0
        %2327 = vmatpush1.msra.mxu0 0.0
        %2328 = vmatprep.subr.mxu0 0.0
        %2329 = vmatpush1.msra.mxu0 0.0
        %2330 = vmatprep.subr.mxu0 0.0
        %2331 = vmatpush1.msra.mxu0 0.0
        %2332 = vmatprep.subr.mxu0 0.0
        %2333 = vmatpush1.msra.mxu0 0.0
        %2334 = vmatprep.subr.mxu0 0.0
        %2335 = vmatpush1.msra.mxu0 0.0
        %2336 = vmatprep.subr.mxu0 0.0
        %2337 = vmatpush1.msra.mxu0 0.0
        %2338 = vmatprep.subr.mxu0 0.0
        %2339 = vmatpush1.msra.mxu0 0.0
        %2340 = vmatprep.subr.mxu0 0.0
        %2341 = vmatpush1.msra.mxu0 0.0
        %2342 = vmatprep.subr.mxu0 0.0
        %2343 = vmatpush1.msra.mxu0 0.0
        %2344 = vmatprep.subr.mxu0 0.0
        %2345 = vmatpush1.msra.mxu0 0.0
        %2346 = vmatprep.subr.mxu0 0.0
        %2347 = vmatpush1.msra.mxu0 0.0
        %2348 = vmatprep.subr.mxu0 0.0
        %2349 = vmatpush1.msra.mxu0 0.0
        %2350 = vmatprep.subr.mxu0 0.0
        %2351 = vmatpush1.msra.mxu0 0.0
        %2352 = vmatprep.subr.mxu0 0.0
        %2353 = vmatpush1.msra.mxu0 0.0
        %2354 = vmatprep.subr.mxu0 0.0
        %2355 = vmatpush1.msra.mxu0 0.0
        %2356 = vmatprep.mubr.f32.mxu0 0.0
        %2357 = vmatmul.mubr.f32.gmra.mrb[0].mxu0 %v2281
        %v2358 = vpop.f32.mrb[0].mxu0
        %v2359 = vadd.f32 0.0, %v2358
        %v2360 = vpop.f32.mrb[0].mxu0
        %2361 = vmatprep.mubr.f32.mxu0 0.0
        %2362 = vmatmul.mubr.f32.gmra.mrb[0].mxu0 %v2284
        %v2363 = vpop.f32.mrb[0].mxu0
        %v2364 = vadd.f32 0.0, %v2363
        %v2365 = vpop.f32.mrb[0].mxu0
        %2366 = vmatprep.mubr.f32.mxu0 0.0
        %2367 = vmatmul.mubr.f32.gmra.mrb[0].mxu0 %v2287
        %v2368 = vpop.f32.mrb[0].mxu0
        %v2369 = vadd.f32 0.0, %v2368
        %v2370 = vpop.f32.mrb[0].mxu0
        %2371 = vmatprep.mubr.f32.mxu0 0.0
        %2372 = vmatmul.mubr.f32.gmra.mrb[0].mxu0 %v2290
        %v2373 = vpop.f32.mrb[0].mxu0
        %v2374 = vadd.f32 0.0, %v2373
        %v2375 = vpop.f32.mrb[0].mxu0
        %2376 = vdwg.mxu0
        %v2378 = vsel %vm1017, %v2359, 0
        %v2381 = vsel %vm1017, %v2364, 0
        %v2384 = vsel %vm1017, %v2369, 0
        %v2387 = vsel %vm1017, %v2374, 0
        %2389 = vmatprep.subr.mxu0 0.0
        %2390 = vmatpush1.msra.mxu0 %v832
        %2391 = vmatprep.subr.mxu0 0.0
        %2392 = vmatpush1.msra.mxu0 0.0
        %2393 = vmatprep.subr.mxu0 0.0
        %2394 = vmatpush1.msra.mxu0 0.0
        %2395 = vmatprep.subr.mxu0 0.0
        %2396 = vmatpush1.msra.mxu0 0.0
        %2397 = vmatprep.subr.mxu0 0.0
        %2398 = vmatpush1.msra.mxu0 0.0
        %2399 = vmatprep.subr.mxu0 0.0
        %2400 = vmatpush1.msra.mxu0 0.0
        %2401 = vmatprep.subr.mxu0 0.0
        %2402 = vmatpush1.msra.mxu0 0.0
        %2403 = vmatprep.subr.mxu0 0.0
        %2404 = vmatpush1.msra.mxu0 0.0
        %2405 = vmatprep.subr.mxu0 0.0
        %2406 = vmatpush1.msra.mxu0 0.0
        %2407 = vmatprep.subr.mxu0 0.0
        %2408 = vmatpush1.msra.mxu0 0.0
        %2409 = vmatprep.subr.mxu0 0.0
        %2410 = vmatpush1.msra.mxu0 0.0
        %2411 = vmatprep.subr.mxu0 0.0
        %2412 = vmatpush1.msra.mxu0 0.0
        %2413 = vmatprep.subr.mxu0 0.0
        %2414 = vmatpush1.msra.mxu0 0.0
        %2415 = vmatprep.subr.mxu0 0.0
        %2416 = vmatpush1.msra.mxu0 0.0
        %2417 = vmatprep.subr.mxu0 0.0
        %2418 = vmatpush1.msra.mxu0 0.0
        %2419 = vmatprep.subr.mxu0 0.0
        %2420 = vmatpush1.msra.mxu0 0.0
        %2421 = vmatprep.subr.mxu0 0.0
        %2422 = vmatpush1.msra.mxu0 0.0
        %2423 = vmatprep.subr.mxu0 0.0
        %2424 = vmatpush1.msra.mxu0 0.0
        %2425 = vmatprep.subr.mxu0 0.0
        %2426 = vmatpush1.msra.mxu0 0.0
        %2427 = vmatprep.subr.mxu0 0.0
        %2428 = vmatpush1.msra.mxu0 0.0
        %2429 = vmatprep.subr.mxu0 0.0
        %2430 = vmatpush1.msra.mxu0 0.0
        %2431 = vmatprep.subr.mxu0 0.0
        %2432 = vmatpush1.msra.mxu0 0.0
        %2433 = vmatprep.subr.mxu0 0.0
        %2434 = vmatpush1.msra.mxu0 0.0
        %2435 = vmatprep.subr.mxu0 0.0
        %2436 = vmatpush1.msra.mxu0 0.0
        %2437 = vmatprep.subr.mxu0 0.0
        %2438 = vmatpush1.msra.mxu0 0.0
        %2439 = vmatprep.subr.mxu0 0.0
        %2440 = vmatpush1.msra.mxu0 0.0
        %2441 = vmatprep.subr.mxu0 0.0
        %2442 = vmatpush1.msra.mxu0 0.0
        %2443 = vmatprep.subr.mxu0 0.0
        %2444 = vmatpush1.msra.mxu0 0.0
        %2445 = vmatprep.subr.mxu0 0.0
        %2446 = vmatpush1.msra.mxu0 0.0
        %2447 = vmatprep.subr.mxu0 0.0
        %2448 = vmatpush1.msra.mxu0 0.0
        %2449 = vmatprep.subr.mxu0 0.0
        %2450 = vmatpush1.msra.mxu0 0.0
        %2451 = vmatprep.subr.mxu0 0.0
        %2452 = vmatpush1.msra.mxu0 0.0
        %2453 = vmatprep.mubr.f32.mxu0 0.0
        %2454 = vmatmul.mubr.f32.gmra.mrb[0].mxu0 %v2378
        %v2455 = vpop.f32.mrb[0].mxu0
        %v2456 = vadd.f32 0.0, %v2455
        %v2457 = vpop.f32.mrb[0].mxu0
        %2458 = vmatprep.mubr.f32.mxu0 0.0
        %2459 = vmatmul.mubr.f32.gmra.mrb[0].mxu0 %v2381
        %v2460 = vpop.f32.mrb[0].mxu0
        %v2461 = vadd.f32 0.0, %v2460
        %v2462 = vpop.f32.mrb[0].mxu0
        %2463 = vmatprep.mubr.f32.mxu0 0.0
        %2464 = vmatmul.mubr.f32.gmra.mrb[0].mxu0 %v2384
        %v2465 = vpop.f32.mrb[0].mxu0
        %v2466 = vadd.f32 0.0, %v2465
        %v2467 = vpop.f32.mrb[0].mxu0
        %2468 = vmatprep.mubr.f32.mxu0 0.0
        %2469 = vmatmul.mubr.f32.gmra.mrb[0].mxu0 %v2387
        %v2470 = vpop.f32.mrb[0].mxu0
        %v2471 = vadd.f32 0.0, %v2470
        %v2472 = vpop.f32.mrb[0].mxu0
        %2473 = vdwg.mxu0
        %v2474 = vadd.f32 %v2103, %v2456
        %v2475 = vadd.f32 %v2104, %v2461
        %v2476 = vadd.f32 %v2105, %v2466
        %v2477 = vadd.f32 %v2106, %v2471
        %v2479 = vlaneseq
        %v2480 = vshrl.u32 %v2479, 7
        %v2481 = vsub.s32 0, %v2480
        %v2482 = vrot.slane %v833, %v2481
        %v2484 = vadd.f32 %v2474, %v2482
        %v2485 = vadd.f32 %v2475, %v2482
        %v2486 = vadd.f32 %v2476, %v2482
        %v2487 = vadd.f32 %v2477, %v2482
        %v2488 = vadd.f32 %v2484, %v811
        %v2489 = vadd.f32 %v2485, %v812
        %v2490 = vadd.f32 %v2486, %v813
        %v2491 = vadd.f32 %v2487, %v814
        %v2492 = vld [vmem:[%s8] sm:$0x1]
        %v2493 = vld [vmem:[%s9] sm:$0x1]
        %v2494 = vld [vmem:[%s10] sm:$0xff]
        %v2495 = vld [vmem:[%s10 + $0x8] sm:$0xff]
        %v2496 = vld [vmem:[%s10 + $0x10] sm:$0xff]
        %v2497 = vld [vmem:[%s10 + $0x18] sm:$0xff]
        %v2498 = vld [vmem:[#allocation8] sm:$0xff]
        %v2499 = vld [vmem:[#allocation8 + $0x8] sm:$0xff]
        %v2500 = vld [vmem:[#allocation8 + $0x10] sm:$0xff]
        %v2501 = vld [vmem:[#allocation8 + $0x18] sm:$0xff]
        %v2502 = vld [vmem:[%s12] sm:$0x1]
        %v2503 = vsel %vm834, %v2488, 0.0
        %2504 = vadd.xlane.f32.xlu0 %v2503
        %v2505 = vpop.xlane.xlu0 %2504
        %v2506 = vsel %vm834, %v2489, 0.0
        %2507 = vadd.xlane.f32.xlu0 %v2506
        %v2508 = vpop.xlane.xlu0 %2507
        %v2509 = vsel %vm834, %v2490, 0.0
        %2510 = vadd.xlane.f32.xlu0 %v2509
        %v2511 = vpop.xlane.xlu0 %2510
        %v2512 = vsel %vm834, %v2491, 0.0
        %2513 = vadd.xlane.f32.xlu0 %v2512
        %v2514 = vpop.xlane.xlu0 %2513
        %v2515 = vmul.f32 %v2505, %v847
        %v2516 = vmul.f32 %v2508, %v847
        %v2517 = vmul.f32 %v2511, %v847
        %v2518 = vmul.f32 %v2514, %v847
        %v2519 = vsub.f32 %v2488, %v2515
        %v2520 = vsub.f32 %v2489, %v2516
        %v2521 = vsub.f32 %v2490, %v2517
        %v2522 = vsub.f32 %v2491, %v2518
        %v2523 = vmul.f32 %v2519, %v2519
        %v2524 = vmul.f32 %v2520, %v2520
        %v2525 = vmul.f32 %v2521, %v2521
        %v2526 = vmul.f32 %v2522, %v2522
        %v2527 = vsel %vm834, %v2523, 0.0
        %2528 = vadd.xlane.f32.xlu0 %v2527
        %v2529 = vpop.xlane.xlu0 %2528
        %v2530 = vsel %vm834, %v2524, 0.0
        %2531 = vadd.xlane.f32.xlu0 %v2530
        %v2532 = vpop.xlane.xlu0 %2531
        %v2533 = vsel %vm834, %v2525, 0.0
        %2534 = vadd.xlane.f32.xlu0 %v2533
        %v2535 = vpop.xlane.xlu0 %2534
        %v2536 = vsel %vm834, %v2526, 0.0
        %2537 = vadd.xlane.f32.xlu0 %v2536
        %v2538 = vpop.xlane.xlu0 %2537
        %v2539 = vmul.f32 %v2529, %v847
        %v2540 = vmul.f32 %v2532, %v847
        %v2541 = vmul.f32 %v2535, %v847
        %v2542 = vmul.f32 %v2538, %v847
        %v2543 = vadd.f32 %v2539, 1e-05
        %v2544 = vadd.f32 %v2540, 1e-05
        %v2545 = vadd.f32 %v2541, 1e-05
        %v2546 = vadd.f32 %v2542, 1e-05
        %v2547 = vrsqrt.pop %v2543
        %v2548 = vrsqrt.pop %v2544
        %v2549 = vrsqrt.pop %v2545
        %v2550 = vrsqrt.pop %v2546
        %v2551 = vmul.f32 %v2519, %v2547
        %v2552 = vmul.f32 %v2520, %v2548
        %v2553 = vmul.f32 %v2521, %v2549
        %v2554 = vmul.f32 %v2522, %v2550
        %v2556 = vlaneseq
        %v2557 = vshrl.u32 %v2556, 7
        %v2558 = vsub.s32 0, %v2557
        %v2559 = vrot.slane %v2492, %v2558
        %v2561 = vmul.f32 %v2551, %v2559
        %v2562 = vmul.f32 %v2552, %v2559
        %v2563 = vmul.f32 %v2553, %v2559
        %v2564 = vmul.f32 %v2554, %v2559
        %v2566 = vlaneseq
        %v2567 = vshrl.u32 %v2566, 7
        %v2568 = vsub.s32 0, %v2567
        %v2569 = vrot.slane %v2493, %v2568
        %v2571 = vadd.f32 %v2561, %v2569
        %v2572 = vadd.f32 %v2562, %v2569
        %v2573 = vadd.f32 %v2563, %v2569
        %v2574 = vadd.f32 %v2564, %v2569
        %v2576 = vsel %vm834, %v2571, 0
        %v2579 = vsel %vm834, %v2572, 0
        %v2582 = vsel %vm834, %v2573, 0
        %v2585 = vsel %vm834, %v2574, 0
        %2587 = vmatprep.subr.mxu0 0.0
        %2588 = vmatpush1.msra.mxu0 %v2494
        %2589 = vmatprep.subr.mxu0 0.0
        %2590 = vmatpush1.msra.mxu0 %v2495
        %2591 = vmatprep.subr.mxu0 0.0
        %2592 = vmatpush1.msra.mxu0 %v2496
        %2593 = vmatprep.subr.mxu0 0.0
        %2594 = vmatpush1.msra.mxu0 %v2497
        %2595 = vmatprep.subr.mxu0 0.0
        %2596 = vmatpush1.msra.mxu0 0.0
        %2597 = vmatprep.subr.mxu0 0.0
        %2598 = vmatpush1.msra.mxu0 0.0
        %2599 = vmatprep.subr.mxu0 0.0
        %2600 = vmatpush1.msra.mxu0 0.0
        %2601 = vmatprep.subr.mxu0 0.0
        %2602 = vmatpush1.msra.mxu0 0.0
        %2603 = vmatprep.subr.mxu0 0.0
        %2604 = vmatpush1.msra.mxu0 0.0
        %2605 = vmatprep.subr.mxu0 0.0
        %2606 = vmatpush1.msra.mxu0 0.0
        %2607 = vmatprep.subr.mxu0 0.0
        %2608 = vmatpush1.msra.mxu0 0.0
        %2609 = vmatprep.subr.mxu0 0.0
        %2610 = vmatpush1.msra.mxu0 0.0
        %2611 = vmatprep.subr.mxu0 0.0
        %2612 = vmatpush1.msra.mxu0 0.0
        %2613 = vmatprep.subr.mxu0 0.0
        %2614 = vmatpush1.msra.mxu0 0.0
        %2615 = vmatprep.subr.mxu0 0.0
        %2616 = vmatpush1.msra.mxu0 0.0
        %2617 = vmatprep.subr.mxu0 0.0
        %2618 = vmatpush1.msra.mxu0 0.0
        %2619 = vmatprep.subr.mxu0 0.0
        %2620 = vmatpush1.msra.mxu0 0.0
        %2621 = vmatprep.subr.mxu0 0.0
        %2622 = vmatpush1.msra.mxu0 0.0
        %2623 = vmatprep.subr.mxu0 0.0
        %2624 = vmatpush1.msra.mxu0 0.0
        %2625 = vmatprep.subr.mxu0 0.0
        %2626 = vmatpush1.msra.mxu0 0.0
        %2627 = vmatprep.subr.mxu0 0.0
        %2628 = vmatpush1.msra.mxu0 0.0
        %2629 = vmatprep.subr.mxu0 0.0
        %2630 = vmatpush1.msra.mxu0 0.0
        %2631 = vmatprep.subr.mxu0 0.0
        %2632 = vmatpush1.msra.mxu0 0.0
        %2633 = vmatprep.subr.mxu0 0.0
        %2634 = vmatpush1.msra.mxu0 0.0
        %2635 = vmatprep.subr.mxu0 0.0
        %2636 = vmatpush1.msra.mxu0 0.0
        %2637 = vmatprep.subr.mxu0 0.0
        %2638 = vmatpush1.msra.mxu0 0.0
        %2639 = vmatprep.subr.mxu0 0.0
        %2640 = vmatpush1.msra.mxu0 0.0
        %2641 = vmatprep.subr.mxu0 0.0
        %2642 = vmatpush1.msra.mxu0 0.0
        %2643 = vmatprep.subr.mxu0 0.0
        %2644 = vmatpush1.msra.mxu0 0.0
        %2645 = vmatprep.subr.mxu0 0.0
        %2646 = vmatpush1.msra.mxu0 0.0
        %2647 = vmatprep.subr.mxu0 0.0
        %2648 = vmatpush1.msra.mxu0 0.0
        %2649 = vmatprep.subr.mxu0 0.0
        %2650 = vmatpush1.msra.mxu0 0.0
        %2651 = vmatprep.mubr.f32.mxu0 0.0
        %2652 = vmatmul.mubr.f32.gmra.mrb[0].mxu0 %v2576
        %v2653 = vpop.f32.mrb[0].mxu0
        %v2654 = vadd.f32 0.0, %v2653
        %v2655 = vpop.f32.mrb[0].mxu0
        %2656 = vmatprep.mubr.f32.mxu0 0.0
        %2657 = vmatmul.mubr.f32.gmra.mrb[0].mxu0 %v2579
        %v2658 = vpop.f32.mrb[0].mxu0
        %v2659 = vadd.f32 0.0, %v2658
        %v2660 = vpop.f32.mrb[0].mxu0
        %2661 = vmatprep.mubr.f32.mxu0 0.0
        %2662 = vmatmul.mubr.f32.gmra.mrb[0].mxu0 %v2582
        %v2663 = vpop.f32.mrb[0].mxu0
        %v2664 = vadd.f32 0.0, %v2663
        %v2665 = vpop.f32.mrb[0].mxu0
        %2666 = vmatprep.mubr.f32.mxu0 0.0
        %2667 = vmatmul.mubr.f32.gmra.mrb[0].mxu0 %v2585
        %v2668 = vpop.f32.mrb[0].mxu0
        %v2669 = vadd.f32 0.0, %v2668
        %v2670 = vpop.f32.mrb[0].mxu0
        %2671 = vdwg.mxu0
        %2676 = vrot.lane.b32.xlu0 %v2654, 96
        %v2677 = vpop.permute.xlu0 %2676
        %2678 = vrot.lane.b32.xlu0 %v2659, 96
        %v2679 = vpop.permute.xlu0 %2678
        %2680 = vrot.lane.b32.xlu0 %v2664, 96
        %v2681 = vpop.permute.xlu0 %2680
        %2682 = vrot.lane.b32.xlu0 %v2669, 96
        %v2683 = vpop.permute.xlu0 %2682
        %v2684 = vsel %vm1017, %v2654, 0
        %v2686 = vsel %vm1017, %v2659, 0
        %v2688 = vsel %vm1017, %v2664, 0
        %v2690 = vsel %vm1017, %v2669, 0
        %v2692 = vsel %vm1017, %v2677, 0
        %v2694 = vsel %vm1017, %v2679, 0
        %v2696 = vsel %vm1017, %v2681, 0
        %v2698 = vsel %vm1017, %v2683, 0
        %2700 = vmatprep.subr.mxu0 0.0
        %2701 = vmatpush1.xpose.msra.mxu0 %v2692
        %2702 = vmatprep.subr.mxu0 0.0
        %2703 = vmatpush1.xpose.msra.mxu0 %v2694
        %2704 = vmatprep.subr.mxu0 0.0
        %2705 = vmatpush1.xpose.msra.mxu0 %v2696
        %2706 = vmatprep.subr.mxu0 0.0
        %2707 = vmatpush1.xpose.msra.mxu0 %v2698
        %2708 = vmatprep.subr.mxu0 0.0
        %2709 = vmatpush1.xpose.msra.mxu0 0.0
        %2710 = vmatprep.subr.mxu0 0.0
        %2711 = vmatpush1.xpose.msra.mxu0 0.0
        %2712 = vmatprep.subr.mxu0 0.0
        %2713 = vmatpush1.xpose.msra.mxu0 0.0
        %2714 = vmatprep.subr.mxu0 0.0
        %2715 = vmatpush1.xpose.msra.mxu0 0.0
        %2716 = vmatprep.subr.mxu0 0.0
        %2717 = vmatpush1.xpose.msra.mxu0 0.0
        %2718 = vmatprep.subr.mxu0 0.0
        %2719 = vmatpush1.xpose.msra.mxu0 0.0
        %2720 = vmatprep.subr.mxu0 0.0
        %2721 = vmatpush1.xpose.msra.mxu0 0.0
        %2722 = vmatprep.subr.mxu0 0.0
        %2723 = vmatpush1.xpose.msra.mxu0 0.0
        %2724 = vmatprep.subr.mxu0 0.0
        %2725 = vmatpush1.xpose.msra.mxu0 0.0
        %2726 = vmatprep.subr.mxu0 0.0
        %2727 = vmatpush1.xpose.msra.mxu0 0.0
        %2728 = vmatprep.subr.mxu0 0.0
        %2729 = vmatpush1.xpose.msra.mxu0 0.0
        %2730 = vmatprep.subr.mxu0 0.0
        %2731 = vmatpush1.xpose.msra.mxu0 0.0
        %2732 = vmatprep.subr.mxu0 0.0
        %2733 = vmatpush1.xpose.msra.mxu0 0.0
        %2734 = vmatprep.subr.mxu0 0.0
        %2735 = vmatpush1.xpose.msra.mxu0 0.0
        %2736 = vmatprep.subr.mxu0 0.0
        %2737 = vmatpush1.xpose.msra.mxu0 0.0
        %2738 = vmatprep.subr.mxu0 0.0
        %2739 = vmatpush1.xpose.msra.mxu0 0.0
        %2740 = vmatprep.subr.mxu0 0.0
        %2741 = vmatpush1.xpose.msra.mxu0 0.0
        %2742 = vmatprep.subr.mxu0 0.0
        %2743 = vmatpush1.xpose.msra.mxu0 0.0
        %2744 = vmatprep.subr.mxu0 0.0
        %2745 = vmatpush1.xpose.msra.mxu0 0.0
        %2746 = vmatprep.subr.mxu0 0.0
        %2747 = vmatpush1.xpose.msra.mxu0 0.0
        %2748 = vmatprep.subr.mxu0 0.0
        %2749 = vmatpush1.xpose.msra.mxu0 0.0
        %2750 = vmatprep.subr.mxu0 0.0
        %2751 = vmatpush1.xpose.msra.mxu0 0.0
        %2752 = vmatprep.subr.mxu0 0.0
        %2753 = vmatpush1.xpose.msra.mxu0 0.0
        %2754 = vmatprep.subr.mxu0 0.0
        %2755 = vmatpush1.xpose.msra.mxu0 0.0
        %2756 = vmatprep.subr.mxu0 0.0
        %2757 = vmatpush1.xpose.msra.mxu0 0.0
        %2758 = vmatprep.subr.mxu0 0.0
        %2759 = vmatpush1.xpose.msra.mxu0 0.0
        %2760 = vmatprep.subr.mxu0 0.0
        %2761 = vmatpush1.xpose.msra.mxu0 0.0
        %2762 = vmatprep.subr.mxu0 0.0
        %2763 = vmatpush1.xpose.msra.mxu0 0.0
        %2764 = vmatprep.mubr.f32.mxu0 0.0
        %2765 = vmatmul.mubr.f32.gmra.mrb[0].mxu0 %v2684
        %v2766 = vpop.f32.mrb[0].mxu0
        %v2767 = vadd.f32 %v819, %v2766
        %v2768 = vpop.f32.mrb[0].mxu0
        %2769 = vmatprep.mubr.f32.mxu0 0.0
        %2770 = vmatmul.mubr.f32.gmra.mrb[0].mxu0 %v2686
        %v2771 = vpop.f32.mrb[0].mxu0
        %v2772 = vadd.f32 %v820, %v2771
        %v2773 = vpop.f32.mrb[0].mxu0
        %2774 = vmatprep.mubr.f32.mxu0 0.0
        %2775 = vmatmul.mubr.f32.gmra.mrb[0].mxu0 %v2688
        %v2776 = vpop.f32.mrb[0].mxu0
        %v2777 = vadd.f32 %v821, %v2776
        %v2778 = vpop.f32.mrb[0].mxu0
        %2779 = vmatprep.mubr.f32.mxu0 0.0
        %2780 = vmatmul.mubr.f32.gmra.mrb[0].mxu0 %v2690
        %v2781 = vpop.f32.mrb[0].mxu0
        %v2782 = vadd.f32 %v822, %v2781
        %v2783 = vpop.f32.mrb[0].mxu0
        %2784 = vdwg.mxu0
        %v2785 = vsel %vm834, %v2767, -inf
        %2786 = vmax.xlane.f32.xlu0 %v2785
        %v2787 = vpop.xlane.xlu0 %2786
        %v2788 = vsel %vm834, %v2772, -inf
        %2789 = vmax.xlane.f32.xlu0 %v2788
        %v2790 = vpop.xlane.xlu0 %2789
        %v2791 = vsel %vm834, %v2777, -inf
        %2792 = vmax.xlane.f32.xlu0 %v2791
        %v2793 = vpop.xlane.xlu0 %2792
        %v2794 = vsel %vm834, %v2782, -inf
        %2795 = vmax.xlane.f32.xlu0 %v2794
        %v2796 = vpop.xlane.xlu0 %2795
        %v2797 = vsub.f32 %v2767, %v2787
        %v2798 = vsub.f32 %v2772, %v2790
        %v2799 = vsub.f32 %v2777, %v2793
        %v2800 = vsub.f32 %v2782, %v2796
        %v2801 = vmul.f32 %v2797, 1.442695
        %v2802 = vpow.pop %v2801
        %v2803 = vmul.f32 %v2798, 1.442695
        %v2804 = vpow.pop %v2803
        %v2805 = vmul.f32 %v2799, 1.442695
        %v2806 = vpow.pop %v2805
        %v2807 = vmul.f32 %v2800, 1.442695
        %v2808 = vpow.pop %v2807
        %v2809 = vsel %vm834, %v2802, 0.0
        %2810 = vadd.xlane.f32.xlu0 %v2809
        %v2811 = vpop.xlane.xlu0 %2810
        %v2812 = vsel %vm834, %v2804, 0.0
        %2813 = vadd.xlane.f32.xlu0 %v2812
        %v2814 = vpop.xlane.xlu0 %2813
        %v2815 = vsel %vm834, %v2806, 0.0
        %2816 = vadd.xlane.f32.xlu0 %v2815
        %v2817 = vpop.xlane.xlu0 %2816
        %v2818 = vsel %vm834, %v2808, 0.0
        %2819 = vadd.xlane.f32.xlu0 %v2818
        %v2820 = vpop.xlane.xlu0 %2819
        %v2821 = vrcp.pop %v2811
        %v2822 = vrcp.pop %v2814
        %v2823 = vrcp.pop %v2817
        %v2824 = vrcp.pop %v2820
        %v2825 = vmul.f32 %v2802, %v2821
        %v2826 = vmul.f32 %v2804, %v2822
        %v2827 = vmul.f32 %v2806, %v2823
        %v2828 = vmul.f32 %v2808, %v2824
        %2829 = vrot.lane.b32.xlu0 %v2654, 64
        %v2830 = vpop.permute.xlu0 %2829
        %2831 = vrot.lane.b32.xlu0 %v2659, 64
        %v2832 = vpop.permute.xlu0 %2831
        %2833 = vrot.lane.b32.xlu0 %v2664, 64
        %v2834 = vpop.permute.xlu0 %2833
        %2835 = vrot.lane.b32.xlu0 %v2669, 64
        %v2836 = vpop.permute.xlu0 %2835
        %v2842 = vsel %vm834, %v2825, 0
        %v2845 = vsel %vm834, %v2826, 0
        %v2848 = vsel %vm834, %v2827, 0
        %v2851 = vsel %vm834, %v2828, 0
        %2853 = vmatprep.subr.mxu0 0.0
        %2854 = vmatpush1.msra.mxu0 %v2830
        %2855 = vmatprep.subr.mxu0 0.0
        %2856 = vmatpush1.msra.mxu0 %v2832
        %2857 = vmatprep.subr.mxu0 0.0
        %2858 = vmatpush1.msra.mxu0 %v2834
        %2859 = vmatprep.subr.mxu0 0.0
        %2860 = vmatpush1.msra.mxu0 %v2836
        %2861 = vmatprep.subr.mxu0 0.0
        %2862 = vmatpush1.msra.mxu0 0.0
        %2863 = vmatprep.subr.mxu0 0.0
        %2864 = vmatpush1.msra.mxu0 0.0
        %2865 = vmatprep.subr.mxu0 0.0
        %2866 = vmatpush1.msra.mxu0 0.0
        %2867 = vmatprep.subr.mxu0 0.0
        %2868 = vmatpush1.msra.mxu0 0.0
        %2869 = vmatprep.subr.mxu0 0.0
        %2870 = vmatpush1.msra.mxu0 0.0
        %2871 = vmatprep.subr.mxu0 0.0
        %2872 = vmatpush1.msra.mxu0 0.0
        %2873 = vmatprep.subr.mxu0 0.0
        %2874 = vmatpush1.msra.mxu0 0.0
        %2875 = vmatprep.subr.mxu0 0.0
        %2876 = vmatpush1.msra.mxu0 0.0
        %2877 = vmatprep.subr.mxu0 0.0
        %2878 = vmatpush1.msra.mxu0 0.0
        %2879 = vmatprep.subr.mxu0 0.0
        %2880 = vmatpush1.msra.mxu0 0.0
        %2881 = vmatprep.subr.mxu0 0.0
        %2882 = vmatpush1.msra.mxu0 0.0
        %2883 = vmatprep.subr.mxu0 0.0
        %2884 = vmatpush1.msra.mxu0 0.0
        %2885 = vmatprep.subr.mxu0 0.0
        %2886 = vmatpush1.msra.mxu0 0.0
        %2887 = vmatprep.subr.mxu0 0.0
        %2888 = vmatpush1.msra.mxu0 0.0
        %2889 = vmatprep.subr.mxu0 0.0
        %2890 = vmatpush1.msra.mxu0 0.0
        %2891 = vmatprep.subr.mxu0 0.0
        %2892 = vmatpush1.msra.mxu0 0.0
        %2893 = vmatprep.subr.mxu0 0.0
        %2894 = vmatpush1.msra.mxu0 0.0
        %2895 = vmatprep.subr.mxu0 0.0
        %2896 = vmatpush1.msra.mxu0 0.0
        %2897 = vmatprep.subr.mxu0 0.0
        %2898 = vmatpush1.msra.mxu0 0.0
        %2899 = vmatprep.subr.mxu0 0.0
        %2900 = vmatpush1.msra.mxu0 0.0
        %2901 = vmatprep.subr.mxu0 0.0
        %2902 = vmatpush1.msra.mxu0 0.0
        %2903 = vmatprep.subr.mxu0 0.0
        %2904 = vmatpush1.msra.mxu0 0.0
        %2905 = vmatprep.subr.mxu0 0.0
        %2906 = vmatpush1.msra.mxu0 0.0
        %2907 = vmatprep.subr.mxu0 0.0
        %2908 = vmatpush1.msra.mxu0 0.0
        %2909 = vmatprep.subr.mxu0 0.0
        %2910 = vmatpush1.msra.mxu0 0.0
        %2911 = vmatprep.subr.mxu0 0.0
        %2912 = vmatpush1.msra.mxu0 0.0
        %2913 = vmatprep.subr.mxu0 0.0
        %2914 = vmatpush1.msra.mxu0 0.0
        %2915 = vmatprep.subr.mxu0 0.0
        %2916 = vmatpush1.msra.mxu0 0.0
        %2917 = vmatprep.mubr.f32.mxu0 0.0
        %2918 = vmatmul.mubr.f32.gmra.mrb[0].mxu0 %v2842
        %v2919 = vpop.f32.mrb[0].mxu0
        %v2920 = vadd.f32 0.0, %v2919
        %v2921 = vpop.f32.mrb[0].mxu0
        %2922 = vmatprep.mubr.f32.mxu0 0.0
        %2923 = vmatmul.mubr.f32.gmra.mrb[0].mxu0 %v2845
        %v2924 = vpop.f32.mrb[0].mxu0
        %v2925 = vadd.f32 0.0, %v2924
        %v2926 = vpop.f32.mrb[0].mxu0
        %2927 = vmatprep.mubr.f32.mxu0 0.0
        %2928 = vmatmul.mubr.f32.gmra.mrb[0].mxu0 %v2848
        %v2929 = vpop.f32.mrb[0].mxu0
        %v2930 = vadd.f32 0.0, %v2929
        %v2931 = vpop.f32.mrb[0].mxu0
        %2932 = vmatprep.mubr.f32.mxu0 0.0
        %2933 = vmatmul.mubr.f32.gmra.mrb[0].mxu0 %v2851
        %v2934 = vpop.f32.mrb[0].mxu0
        %v2935 = vadd.f32 0.0, %v2934
        %v2936 = vpop.f32.mrb[0].mxu0
        %2937 = vdwg.mxu0
        %2938 = vrot.lane.b32.xlu0 %v2654, 120
        %v2939 = vpop.permute.xlu0 %2938
        %2940 = vrot.lane.b32.xlu0 %v2659, 120
        %v2941 = vpop.permute.xlu0 %2940
        %2942 = vrot.lane.b32.xlu0 %v2664, 120
        %v2943 = vpop.permute.xlu0 %2942
        %2944 = vrot.lane.b32.xlu0 %v2669, 120
        %v2945 = vpop.permute.xlu0 %2944
        %2946 = vrot.lane.b32.xlu0 %v2654, 88
        %v2947 = vpop.permute.xlu0 %2946
        %2948 = vrot.lane.b32.xlu0 %v2659, 88
        %v2949 = vpop.permute.xlu0 %2948
        %2950 = vrot.lane.b32.xlu0 %v2664, 88
        %v2951 = vpop.permute.xlu0 %2950
        %2952 = vrot.lane.b32.xlu0 %v2669, 88
        %v2953 = vpop.permute.xlu0 %2952
        %v2954 = vsel %vm1017, %v2939, 0
        %v2956 = vsel %vm1017, %v2941, 0
        %v2958 = vsel %vm1017, %v2943, 0
        %v2960 = vsel %vm1017, %v2945, 0
        %v2962 = vsel %vm1017, %v2947, 0
        %v2964 = vsel %vm1017, %v2949, 0
        %v2966 = vsel %vm1017, %v2951, 0
        %v2968 = vsel %vm1017, %v2953, 0
        %2970 = vmatprep.subr.mxu0 0.0
        %2971 = vmatpush1.xpose.msra.mxu0 %v2962
        %2972 = vmatprep.subr.mxu0 0.0
        %2973 = vmatpush1.xpose.msra.mxu0 %v2964
        %2974 = vmatprep.subr.mxu0 0.0
        %2975 = vmatpush1.xpose.msra.mxu0 %v2966
        %2976 = vmatprep.subr.mxu0 0.0
        %2977 = vmatpush1.xpose.msra.mxu0 %v2968
        %2978 = vmatprep.subr.mxu0 0.0
        %2979 = vmatpush1.xpose.msra.mxu0 0.0
        %2980 = vmatprep.subr.mxu0 0.0
        %2981 = vmatpush1.xpose.msra.mxu0 0.0
        %2982 = vmatprep.subr.mxu0 0.0
        %2983 = vmatpush1.xpose.msra.mxu0 0.0
        %2984 = vmatprep.subr.mxu0 0.0
        %2985 = vmatpush1.xpose.msra.mxu0 0.0
        %2986 = vmatprep.subr.mxu0 0.0
        %2987 = vmatpush1.xpose.msra.mxu0 0.0
        %2988 = vmatprep.subr.mxu0 0.0
        %2989 = vmatpush1.xpose.msra.mxu0 0.0
        %2990 = vmatprep.subr.mxu0 0.0
        %2991 = vmatpush1.xpose.msra.mxu0 0.0
        %2992 = vmatprep.subr.mxu0 0.0
        %2993 = vmatpush1.xpose.msra.mxu0 0.0
        %2994 = vmatprep.subr.mxu0 0.0
        %2995 = vmatpush1.xpose.msra.mxu0 0.0
        %2996 = vmatprep.subr.mxu0 0.0
        %2997 = vmatpush1.xpose.msra.mxu0 0.0
        %2998 = vmatprep.subr.mxu0 0.0
        %2999 = vmatpush1.xpose.msra.mxu0 0.0
        %3000 = vmatprep.subr.mxu0 0.0
        %3001 = vmatpush1.xpose.msra.mxu0 0.0
        %3002 = vmatprep.subr.mxu0 0.0
        %3003 = vmatpush1.xpose.msra.mxu0 0.0
        %3004 = vmatprep.subr.mxu0 0.0
        %3005 = vmatpush1.xpose.msra.mxu0 0.0
        %3006 = vmatprep.subr.mxu0 0.0
        %3007 = vmatpush1.xpose.msra.mxu0 0.0
        %3008 = vmatprep.subr.mxu0 0.0
        %3009 = vmatpush1.xpose.msra.mxu0 0.0
        %3010 = vmatprep.subr.mxu0 0.0
        %3011 = vmatpush1.xpose.msra.mxu0 0.0
        %3012 = vmatprep.subr.mxu0 0.0
        %3013 = vmatpush1.xpose.msra.mxu0 0.0
        %3014 = vmatprep.subr.mxu0 0.0
        %3015 = vmatpush1.xpose.msra.mxu0 0.0
        %3016 = vmatprep.subr.mxu0 0.0
        %3017 = vmatpush1.xpose.msra.mxu0 0.0
        %3018 = vmatprep.subr.mxu0 0.0
        %3019 = vmatpush1.xpose.msra.mxu0 0.0
        %3020 = vmatprep.subr.mxu0 0.0
        %3021 = vmatpush1.xpose.msra.mxu0 0.0
        %3022 = vmatprep.subr.mxu0 0.0
        %3023 = vmatpush1.xpose.msra.mxu0 0.0
        %3024 = vmatprep.subr.mxu0 0.0
        %3025 = vmatpush1.xpose.msra.mxu0 0.0
        %3026 = vmatprep.subr.mxu0 0.0
        %3027 = vmatpush1.xpose.msra.mxu0 0.0
        %3028 = vmatprep.subr.mxu0 0.0
        %3029 = vmatpush1.xpose.msra.mxu0 0.0
        %3030 = vmatprep.subr.mxu0 0.0
        %3031 = vmatpush1.xpose.msra.mxu0 0.0
        %3032 = vmatprep.subr.mxu0 0.0
        %3033 = vmatpush1.xpose.msra.mxu0 0.0
        %3034 = vmatprep.mubr.f32.mxu0 0.0
        %3035 = vmatmul.mubr.f32.gmra.mrb[0].mxu0 %v2954
        %v3036 = vpop.f32.mrb[0].mxu0
        %v3037 = vadd.f32 %v819, %v3036
        %v3038 = vpop.f32.mrb[0].mxu0
        %3039 = vmatprep.mubr.f32.mxu0 0.0
        %3040 = vmatmul.mubr.f32.gmra.mrb[0].mxu0 %v2956
        %v3041 = vpop.f32.mrb[0].mxu0
        %v3042 = vadd.f32 %v820, %v3041
        %v3043 = vpop.f32.mrb[0].mxu0
        %3044 = vmatprep.mubr.f32.mxu0 0.0
        %3045 = vmatmul.mubr.f32.gmra.mrb[0].mxu0 %v2958
        %v3046 = vpop.f32.mrb[0].mxu0
        %v3047 = vadd.f32 %v821, %v3046
        %v3048 = vpop.f32.mrb[0].mxu0
        %3049 = vmatprep.mubr.f32.mxu0 0.0
        %3050 = vmatmul.mubr.f32.gmra.mrb[0].mxu0 %v2960
        %v3051 = vpop.f32.mrb[0].mxu0
        %v3052 = vadd.f32 %v822, %v3051
        %v3053 = vpop.f32.mrb[0].mxu0
        %3054 = vdwg.mxu0
        %v3055 = vsel %vm834, %v3037, -inf
        %3056 = vmax.xlane.f32.xlu0 %v3055
        %v3057 = vpop.xlane.xlu0 %3056
        %v3058 = vsel %vm834, %v3042, -inf
        %3059 = vmax.xlane.f32.xlu0 %v3058
        %v3060 = vpop.xlane.xlu0 %3059
        %v3061 = vsel %vm834, %v3047, -inf
        %3062 = vmax.xlane.f32.xlu0 %v3061
        %v3063 = vpop.xlane.xlu0 %3062
        %v3064 = vsel %vm834, %v3052, -inf
        %3065 = vmax.xlane.f32.xlu0 %v3064
        %v3066 = vpop.xlane.xlu0 %3065
        %v3067 = vsub.f32 %v3037, %v3057
        %v3068 = vsub.f32 %v3042, %v3060
        %v3069 = vsub.f32 %v3047, %v3063
        %v3070 = vsub.f32 %v3052, %v3066
        %v3071 = vmul.f32 %v3067, 1.442695
        %v3072 = vpow.pop %v3071
        %v3073 = vmul.f32 %v3068, 1.442695
        %v3074 = vpow.pop %v3073
        %v3075 = vmul.f32 %v3069, 1.442695
        %v3076 = vpow.pop %v3075
        %v3077 = vmul.f32 %v3070, 1.442695
        %v3078 = vpow.pop %v3077
        %v3079 = vsel %vm834, %v3072, 0.0
        %3080 = vadd.xlane.f32.xlu0 %v3079
        %v3081 = vpop.xlane.xlu0 %3080
        %v3082 = vsel %vm834, %v3074, 0.0
        %3083 = vadd.xlane.f32.xlu0 %v3082
        %v3084 = vpop.xlane.xlu0 %3083
        %v3085 = vsel %vm834, %v3076, 0.0
        %3086 = vadd.xlane.f32.xlu0 %v3085
        %v3087 = vpop.xlane.xlu0 %3086
        %v3088 = vsel %vm834, %v3078, 0.0
        %3089 = vadd.xlane.f32.xlu0 %v3088
        %v3090 = vpop.xlane.xlu0 %3089
        %v3091 = vrcp.pop %v3081
        %v3092 = vrcp.pop %v3084
        %v3093 = vrcp.pop %v3087
        %v3094 = vrcp.pop %v3090
        %v3095 = vmul.f32 %v3072, %v3091
        %v3096 = vmul.f32 %v3074, %v3092
        %v3097 = vmul.f32 %v3076, %v3093
        %v3098 = vmul.f32 %v3078, %v3094
        %3099 = vrot.lane.b32.xlu0 %v2654, 56
        %v3100 = vpop.permute.xlu0 %3099
        %3101 = vrot.lane.b32.xlu0 %v2659, 56
        %v3102 = vpop.permute.xlu0 %3101
        %3103 = vrot.lane.b32.xlu0 %v2664, 56
        %v3104 = vpop.permute.xlu0 %3103
        %3105 = vrot.lane.b32.xlu0 %v2669, 56
        %v3106 = vpop.permute.xlu0 %3105
        %v3112 = vsel %vm834, %v3095, 0
        %v3115 = vsel %vm834, %v3096, 0
        %v3118 = vsel %vm834, %v3097, 0
        %v3121 = vsel %vm834, %v3098, 0
        %3123 = vmatprep.subr.mxu0 0.0
        %3124 = vmatpush1.msra.mxu0 %v3100
        %3125 = vmatprep.subr.mxu0 0.0
        %3126 = vmatpush1.msra.mxu0 %v3102
        %3127 = vmatprep.subr.mxu0 0.0
        %3128 = vmatpush1.msra.mxu0 %v3104
        %3129 = vmatprep.subr.mxu0 0.0
        %3130 = vmatpush1.msra.mxu0 %v3106
        %3131 = vmatprep.subr.mxu0 0.0
        %3132 = vmatpush1.msra.mxu0 0.0
        %3133 = vmatprep.subr.mxu0 0.0
        %3134 = vmatpush1.msra.mxu0 0.0
        %3135 = vmatprep.subr.mxu0 0.0
        %3136 = vmatpush1.msra.mxu0 0.0
        %3137 = vmatprep.subr.mxu0 0.0
        %3138 = vmatpush1.msra.mxu0 0.0
        %3139 = vmatprep.subr.mxu0 0.0
        %3140 = vmatpush1.msra.mxu0 0.0
        %3141 = vmatprep.subr.mxu0 0.0
        %3142 = vmatpush1.msra.mxu0 0.0
        %3143 = vmatprep.subr.mxu0 0.0
        %3144 = vmatpush1.msra.mxu0 0.0
        %3145 = vmatprep.subr.mxu0 0.0
        %3146 = vmatpush1.msra.mxu0 0.0
        %3147 = vmatprep.subr.mxu0 0.0
        %3148 = vmatpush1.msra.mxu0 0.0
        %3149 = vmatprep.subr.mxu0 0.0
        %3150 = vmatpush1.msra.mxu0 0.0
        %3151 = vmatprep.subr.mxu0 0.0
        %3152 = vmatpush1.msra.mxu0 0.0
        %3153 = vmatprep.subr.mxu0 0.0
        %3154 = vmatpush1.msra.mxu0 0.0
        %3155 = vmatprep.subr.mxu0 0.0
        %3156 = vmatpush1.msra.mxu0 0.0
        %3157 = vmatprep.subr.mxu0 0.0
        %3158 = vmatpush1.msra.mxu0 0.0
        %3159 = vmatprep.subr.mxu0 0.0
        %3160 = vmatpush1.msra.mxu0 0.0
        %3161 = vmatprep.subr.mxu0 0.0
        %3162 = vmatpush1.msra.mxu0 0.0
        %3163 = vmatprep.subr.mxu0 0.0
        %3164 = vmatpush1.msra.mxu0 0.0
        %3165 = vmatprep.subr.mxu0 0.0
        %3166 = vmatpush1.msra.mxu0 0.0
        %3167 = vmatprep.subr.mxu0 0.0
        %3168 = vmatpush1.msra.mxu0 0.0
        %3169 = vmatprep.subr.mxu0 0.0
        %3170 = vmatpush1.msra.mxu0 0.0
        %3171 = vmatprep.subr.mxu0 0.0
        %3172 = vmatpush1.msra.mxu0 0.0
        %3173 = vmatprep.subr.mxu0 0.0
        %3174 = vmatpush1.msra.mxu0 0.0
        %3175 = vmatprep.subr.mxu0 0.0
        %3176 = vmatpush1.msra.mxu0 0.0
        %3177 = vmatprep.subr.mxu0 0.0
        %3178 = vmatpush1.msra.mxu0 0.0
        %3179 = vmatprep.subr.mxu0 0.0
        %3180 = vmatpush1.msra.mxu0 0.0
        %3181 = vmatprep.subr.mxu0 0.0
        %3182 = vmatpush1.msra.mxu0 0.0
        %3183 = vmatprep.subr.mxu0 0.0
        %3184 = vmatpush1.msra.mxu0 0.0
        %3185 = vmatprep.subr.mxu0 0.0
        %3186 = vmatpush1.msra.mxu0 0.0
        %3187 = vmatprep.mubr.f32.mxu0 0.0
        %3188 = vmatmul.mubr.f32.gmra.mrb[0].mxu0 %v3112
        %v3189 = vpop.f32.mrb[0].mxu0
        %v3190 = vadd.f32 0.0, %v3189
        %v3191 = vpop.f32.mrb[0].mxu0
        %3192 = vmatprep.mubr.f32.mxu0 0.0
        %3193 = vmatmul.mubr.f32.gmra.mrb[0].mxu0 %v3115
        %v3194 = vpop.f32.mrb[0].mxu0
        %v3195 = vadd.f32 0.0, %v3194
        %v3196 = vpop.f32.mrb[0].mxu0
        %3197 = vmatprep.mubr.f32.mxu0 0.0
        %3198 = vmatmul.mubr.f32.gmra.mrb[0].mxu0 %v3118
        %v3199 = vpop.f32.mrb[0].mxu0
        %v3200 = vadd.f32 0.0, %v3199
        %v3201 = vpop.f32.mrb[0].mxu0
        %3202 = vmatprep.mubr.f32.mxu0 0.0
        %3203 = vmatmul.mubr.f32.gmra.mrb[0].mxu0 %v3121
        %v3204 = vpop.f32.mrb[0].mxu0
        %v3205 = vadd.f32 0.0, %v3204
        %v3206 = vpop.f32.mrb[0].mxu0
        %3207 = vdwg.mxu0
        %v3209 = vsel %vm1017, %v3190, 0
        %v3212 = vsel %vm1017, %v3195, 0
        %v3215 = vsel %vm1017, %v3200, 0
        %v3218 = vsel %vm1017, %v3205, 0
        %3220 = vmatprep.subr.mxu0 0.0
        %3221 = vmatpush1.msra.mxu0 %v2499
        %3222 = vmatprep.subr.mxu0 0.0
        %3223 = vmatpush1.msra.mxu0 0.0
        %3224 = vmatprep.subr.mxu0 0.0
        %3225 = vmatpush1.msra.mxu0 0.0
        %3226 = vmatprep.subr.mxu0 0.0
        %3227 = vmatpush1.msra.mxu0 0.0
        %3228 = vmatprep.subr.mxu0 0.0
        %3229 = vmatpush1.msra.mxu0 0.0
        %3230 = vmatprep.subr.mxu0 0.0
        %3231 = vmatpush1.msra.mxu0 0.0
        %3232 = vmatprep.subr.mxu0 0.0
        %3233 = vmatpush1.msra.mxu0 0.0
        %3234 = vmatprep.subr.mxu0 0.0
        %3235 = vmatpush1.msra.mxu0 0.0
        %3236 = vmatprep.subr.mxu0 0.0
        %3237 = vmatpush1.msra.mxu0 0.0
        %3238 = vmatprep.subr.mxu0 0.0
        %3239 = vmatpush1.msra.mxu0 0.0
        %3240 = vmatprep.subr.mxu0 0.0
        %3241 = vmatpush1.msra.mxu0 0.0
        %3242 = vmatprep.subr.mxu0 0.0
        %3243 = vmatpush1.msra.mxu0 0.0
        %3244 = vmatprep.subr.mxu0 0.0
        %3245 = vmatpush1.msra.mxu0 0.0
        %3246 = vmatprep.subr.mxu0 0.0
        %3247 = vmatpush1.msra.mxu0 0.0
        %3248 = vmatprep.subr.mxu0 0.0
        %3249 = vmatpush1.msra.mxu0 0.0
        %3250 = vmatprep.subr.mxu0 0.0
        %3251 = vmatpush1.msra.mxu0 0.0
        %3252 = vmatprep.subr.mxu0 0.0
        %3253 = vmatpush1.msra.mxu0 0.0
        %3254 = vmatprep.subr.mxu0 0.0
        %3255 = vmatpush1.msra.mxu0 0.0
        %3256 = vmatprep.subr.mxu0 0.0
        %3257 = vmatpush1.msra.mxu0 0.0
        %3258 = vmatprep.subr.mxu0 0.0
        %3259 = vmatpush1.msra.mxu0 0.0
        %3260 = vmatprep.subr.mxu0 0.0
        %3261 = vmatpush1.msra.mxu0 0.0
        %3262 = vmatprep.subr.mxu0 0.0
        %3263 = vmatpush1.msra.mxu0 0.0
        %3264 = vmatprep.subr.mxu0 0.0
        %3265 = vmatpush1.msra.mxu0 0.0
        %3266 = vmatprep.subr.mxu0 0.0
        %3267 = vmatpush1.msra.mxu0 0.0
        %3268 = vmatprep.subr.mxu0 0.0
        %3269 = vmatpush1.msra.mxu0 0.0
        %3270 = vmatprep.subr.mxu0 0.0
        %3271 = vmatpush1.msra.mxu0 0.0
        %3272 = vmatprep.subr.mxu0 0.0
        %3273 = vmatpush1.msra.mxu0 0.0
        %3274 = vmatprep.subr.mxu0 0.0
        %3275 = vmatpush1.msra.mxu0 0.0
        %3276 = vmatprep.subr.mxu0 0.0
        %3277 = vmatpush1.msra.mxu0 0.0
        %3278 = vmatprep.subr.mxu0 0.0
        %3279 = vmatpush1.msra.mxu0 0.0
        %3280 = vmatprep.subr.mxu0 0.0
        %3281 = vmatpush1.msra.mxu0 0.0
        %3282 = vmatprep.subr.mxu0 0.0
        %3283 = vmatpush1.msra.mxu0 0.0
        %3284 = vmatprep.mubr.f32.mxu0 0.0
        %3285 = vmatmul.mubr.f32.gmra.mrb[0].mxu0 %v3209
        %v3286 = vpop.f32.mrb[0].mxu0
        %v3287 = vadd.f32 0.0, %v3286
        %v3288 = vpop.f32.mrb[0].mxu0
        %3289 = vmatprep.mubr.f32.mxu0 0.0
        %3290 = vmatmul.mubr.f32.gmra.mrb[0].mxu0 %v3212
        %v3291 = vpop.f32.mrb[0].mxu0
        %v3292 = vadd.f32 0.0, %v3291
        %v3293 = vpop.f32.mrb[0].mxu0
        %3294 = vmatprep.mubr.f32.mxu0 0.0
        %3295 = vmatmul.mubr.f32.gmra.mrb[0].mxu0 %v3215
        %v3296 = vpop.f32.mrb[0].mxu0
        %v3297 = vadd.f32 0.0, %v3296
        %v3298 = vpop.f32.mrb[0].mxu0
        %3299 = vmatprep.mubr.f32.mxu0 0.0
        %3300 = vmatmul.mubr.f32.gmra.mrb[0].mxu0 %v3218
        %v3301 = vpop.f32.mrb[0].mxu0
        %v3302 = vadd.f32 0.0, %v3301
        %v3303 = vpop.f32.mrb[0].mxu0
        %3304 = vdwg.mxu0
        %v3306 = vsel %vm1017, %v2920, 0
        %v3309 = vsel %vm1017, %v2925, 0
        %v3312 = vsel %vm1017, %v2930, 0
        %v3315 = vsel %vm1017, %v2935, 0
        %3317 = vmatprep.subr.mxu0 0.0
        %3318 = vmatpush1.msra.mxu0 %v2498
        %3319 = vmatprep.subr.mxu0 0.0
        %3320 = vmatpush1.msra.mxu0 0.0
        %3321 = vmatprep.subr.mxu0 0.0
        %3322 = vmatpush1.msra.mxu0 0.0
        %3323 = vmatprep.subr.mxu0 0.0
        %3324 = vmatpush1.msra.mxu0 0.0
        %3325 = vmatprep.subr.mxu0 0.0
        %3326 = vmatpush1.msra.mxu0 0.0
        %3327 = vmatprep.subr.mxu0 0.0
        %3328 = vmatpush1.msra.mxu0 0.0
        %3329 = vmatprep.subr.mxu0 0.0
        %3330 = vmatpush1.msra.mxu0 0.0
        %3331 = vmatprep.subr.mxu0 0.0
        %3332 = vmatpush1.msra.mxu0 0.0
        %3333 = vmatprep.subr.mxu0 0.0
        %3334 = vmatpush1.msra.mxu0 0.0
        %3335 = vmatprep.subr.mxu0 0.0
        %3336 = vmatpush1.msra.mxu0 0.0
        %3337 = vmatprep.subr.mxu0 0.0
        %3338 = vmatpush1.msra.mxu0 0.0
        %3339 = vmatprep.subr.mxu0 0.0
        %3340 = vmatpush1.msra.mxu0 0.0
        %3341 = vmatprep.subr.mxu0 0.0
        %3342 = vmatpush1.msra.mxu0 0.0
        %3343 = vmatprep.subr.mxu0 0.0
        %3344 = vmatpush1.msra.mxu0 0.0
        %3345 = vmatprep.subr.mxu0 0.0
        %3346 = vmatpush1.msra.mxu0 0.0
        %3347 = vmatprep.subr.mxu0 0.0
        %3348 = vmatpush1.msra.mxu0 0.0
        %3349 = vmatprep.subr.mxu0 0.0
        %3350 = vmatpush1.msra.mxu0 0.0
        %3351 = vmatprep.subr.mxu0 0.0
        %3352 = vmatpush1.msra.mxu0 0.0
        %3353 = vmatprep.subr.mxu0 0.0
        %3354 = vmatpush1.msra.mxu0 0.0
        %3355 = vmatprep.subr.mxu0 0.0
        %3356 = vmatpush1.msra.mxu0 0.0
        %3357 = vmatprep.subr.mxu0 0.0
        %3358 = vmatpush1.msra.mxu0 0.0
        %3359 = vmatprep.subr.mxu0 0.0
        %3360 = vmatpush1.msra.mxu0 0.0
        %3361 = vmatprep.subr.mxu0 0.0
        %3362 = vmatpush1.msra.mxu0 0.0
        %3363 = vmatprep.subr.mxu0 0.0
        %3364 = vmatpush1.msra.mxu0 0.0
        %3365 = vmatprep.subr.mxu0 0.0
        %3366 = vmatpush1.msra.mxu0 0.0
        %3367 = vmatprep.subr.mxu0 0.0
        %3368 = vmatpush1.msra.mxu0 0.0
        %3369 = vmatprep.subr.mxu0 0.0
        %3370 = vmatpush1.msra.mxu0 0.0
        %3371 = vmatprep.subr.mxu0 0.0
        %3372 = vmatpush1.msra.mxu0 0.0
        %3373 = vmatprep.subr.mxu0 0.0
        %3374 = vmatpush1.msra.mxu0 0.0
        %3375 = vmatprep.subr.mxu0 0.0
        %3376 = vmatpush1.msra.mxu0 0.0
        %3377 = vmatprep.subr.mxu0 0.0
        %3378 = vmatpush1.msra.mxu0 0.0
        %3379 = vmatprep.subr.mxu0 0.0
        %3380 = vmatpush1.msra.mxu0 0.0
        %3381 = vmatprep.mubr.f32.mxu0 0.0
        %3382 = vmatmul.mubr.f32.gmra.mrb[0].mxu0 %v3306
        %v3383 = vpop.f32.mrb[0].mxu0
        %v3384 = vadd.f32 %v3287, %v3383
        %v3385 = vpop.f32.mrb[0].mxu0
        %3386 = vmatprep.mubr.f32.mxu0 0.0
        %3387 = vmatmul.mubr.f32.gmra.mrb[0].mxu0 %v3309
        %v3388 = vpop.f32.mrb[0].mxu0
        %v3389 = vadd.f32 %v3292, %v3388
        %v3390 = vpop.f32.mrb[0].mxu0
        %3391 = vmatprep.mubr.f32.mxu0 0.0
        %3392 = vmatmul.mubr.f32.gmra.mrb[0].mxu0 %v3312
        %v3393 = vpop.f32.mrb[0].mxu0
        %v3394 = vadd.f32 %v3297, %v3393
        %v3395 = vpop.f32.mrb[0].mxu0
        %3396 = vmatprep.mubr.f32.mxu0 0.0
        %3397 = vmatmul.mubr.f32.gmra.mrb[0].mxu0 %v3315
        %v3398 = vpop.f32.mrb[0].mxu0
        %v3399 = vadd.f32 %v3302, %v3398
        %v3400 = vpop.f32.mrb[0].mxu0
        %3401 = vdwg.mxu0
        %3402 = vrot.lane.b32.xlu0 %v2654, 112
        %v3403 = vpop.permute.xlu0 %3402
        %3404 = vrot.lane.b32.xlu0 %v2659, 112
        %v3405 = vpop.permute.xlu0 %3404
        %3406 = vrot.lane.b32.xlu0 %v2664, 112
        %v3407 = vpop.permute.xlu0 %3406
        %3408 = vrot.lane.b32.xlu0 %v2669, 112
        %v3409 = vpop.permute.xlu0 %3408
        %3410 = vrot.lane.b32.xlu0 %v2654, 80
        %v3411 = vpop.permute.xlu0 %3410
        %3412 = vrot.lane.b32.xlu0 %v2659, 80
        %v3413 = vpop.permute.xlu0 %3412
        %3414 = vrot.lane.b32.xlu0 %v2664, 80
        %v3415 = vpop.permute.xlu0 %3414
        %3416 = vrot.lane.b32.xlu0 %v2669, 80
        %v3417 = vpop.permute.xlu0 %3416
        %v3418 = vsel %vm1017, %v3403, 0
        %v3420 = vsel %vm1017, %v3405, 0
        %v3422 = vsel %vm1017, %v3407, 0
        %v3424 = vsel %vm1017, %v3409, 0
        %v3426 = vsel %vm1017, %v3411, 0
        %v3428 = vsel %vm1017, %v3413, 0
        %v3430 = vsel %vm1017, %v3415, 0
        %v3432 = vsel %vm1017, %v3417, 0
        %3434 = vmatprep.subr.mxu0 0.0
        %3435 = vmatpush1.xpose.msra.mxu0 %v3426
        %3436 = vmatprep.subr.mxu0 0.0
        %3437 = vmatpush1.xpose.msra.mxu0 %v3428
        %3438 = vmatprep.subr.mxu0 0.0
        %3439 = vmatpush1.xpose.msra.mxu0 %v3430
        %3440 = vmatprep.subr.mxu0 0.0
        %3441 = vmatpush1.xpose.msra.mxu0 %v3432
        %3442 = vmatprep.subr.mxu0 0.0
        %3443 = vmatpush1.xpose.msra.mxu0 0.0
        %3444 = vmatprep.subr.mxu0 0.0
        %3445 = vmatpush1.xpose.msra.mxu0 0.0
        %3446 = vmatprep.subr.mxu0 0.0
        %3447 = vmatpush1.xpose.msra.mxu0 0.0
        %3448 = vmatprep.subr.mxu0 0.0
        %3449 = vmatpush1.xpose.msra.mxu0 0.0
        %3450 = vmatprep.subr.mxu0 0.0
        %3451 = vmatpush1.xpose.msra.mxu0 0.0
        %3452 = vmatprep.subr.mxu0 0.0
        %3453 = vmatpush1.xpose.msra.mxu0 0.0
        %3454 = vmatprep.subr.mxu0 0.0
        %3455 = vmatpush1.xpose.msra.mxu0 0.0
        %3456 = vmatprep.subr.mxu0 0.0
        %3457 = vmatpush1.xpose.msra.mxu0 0.0
        %3458 = vmatprep.subr.mxu0 0.0
        %3459 = vmatpush1.xpose.msra.mxu0 0.0
        %3460 = vmatprep.subr.mxu0 0.0
        %3461 = vmatpush1.xpose.msra.mxu0 0.0
        %3462 = vmatprep.subr.mxu0 0.0
        %3463 = vmatpush1.xpose.msra.mxu0 0.0
        %3464 = vmatprep.subr.mxu0 0.0
        %3465 = vmatpush1.xpose.msra.mxu0 0.0
        %3466 = vmatprep.subr.mxu0 0.0
        %3467 = vmatpush1.xpose.msra.mxu0 0.0
        %3468 = vmatprep.subr.mxu0 0.0
        %3469 = vmatpush1.xpose.msra.mxu0 0.0
        %3470 = vmatprep.subr.mxu0 0.0
        %3471 = vmatpush1.xpose.msra.mxu0 0.0
        %3472 = vmatprep.subr.mxu0 0.0
        %3473 = vmatpush1.xpose.msra.mxu0 0.0
        %3474 = vmatprep.subr.mxu0 0.0
        %3475 = vmatpush1.xpose.msra.mxu0 0.0
        %3476 = vmatprep.subr.mxu0 0.0
        %3477 = vmatpush1.xpose.msra.mxu0 0.0
        %3478 = vmatprep.subr.mxu0 0.0
        %3479 = vmatpush1.xpose.msra.mxu0 0.0
        %3480 = vmatprep.subr.mxu0 0.0
        %3481 = vmatpush1.xpose.msra.mxu0 0.0
        %3482 = vmatprep.subr.mxu0 0.0
        %3483 = vmatpush1.xpose.msra.mxu0 0.0
        %3484 = vmatprep.subr.mxu0 0.0
        %3485 = vmatpush1.xpose.msra.mxu0 0.0
        %3486 = vmatprep.subr.mxu0 0.0
        %3487 = vmatpush1.xpose.msra.mxu0 0.0
        %3488 = vmatprep.subr.mxu0 0.0
        %3489 = vmatpush1.xpose.msra.mxu0 0.0
        %3490 = vmatprep.subr.mxu0 0.0
        %3491 = vmatpush1.xpose.msra.mxu0 0.0
        %3492 = vmatprep.subr.mxu0 0.0
        %3493 = vmatpush1.xpose.msra.mxu0 0.0
        %3494 = vmatprep.subr.mxu0 0.0
        %3495 = vmatpush1.xpose.msra.mxu0 0.0
        %3496 = vmatprep.subr.mxu0 0.0
        %3497 = vmatpush1.xpose.msra.mxu0 0.0
        %3498 = vmatprep.mubr.f32.mxu0 0.0
        %3499 = vmatmul.mubr.f32.gmra.mrb[0].mxu0 %v3418
        %v3500 = vpop.f32.mrb[0].mxu0
        %v3501 = vadd.f32 %v819, %v3500
        %v3502 = vpop.f32.mrb[0].mxu0
        %3503 = vmatprep.mubr.f32.mxu0 0.0
        %3504 = vmatmul.mubr.f32.gmra.mrb[0].mxu0 %v3420
        %v3505 = vpop.f32.mrb[0].mxu0
        %v3506 = vadd.f32 %v820, %v3505
        %v3507 = vpop.f32.mrb[0].mxu0
        %3508 = vmatprep.mubr.f32.mxu0 0.0
        %3509 = vmatmul.mubr.f32.gmra.mrb[0].mxu0 %v3422
        %v3510 = vpop.f32.mrb[0].mxu0
        %v3511 = vadd.f32 %v821, %v3510
        %v3512 = vpop.f32.mrb[0].mxu0
        %3513 = vmatprep.mubr.f32.mxu0 0.0
        %3514 = vmatmul.mubr.f32.gmra.mrb[0].mxu0 %v3424
        %v3515 = vpop.f32.mrb[0].mxu0
        %v3516 = vadd.f32 %v822, %v3515
        %v3517 = vpop.f32.mrb[0].mxu0
        %3518 = vdwg.mxu0
        %v3519 = vsel %vm834, %v3501, -inf
        %3520 = vmax.xlane.f32.xlu0 %v3519
        %v3521 = vpop.xlane.xlu0 %3520
        %v3522 = vsel %vm834, %v3506, -inf
        %3523 = vmax.xlane.f32.xlu0 %v3522
        %v3524 = vpop.xlane.xlu0 %3523
        %v3525 = vsel %vm834, %v3511, -inf
        %3526 = vmax.xlane.f32.xlu0 %v3525
        %v3527 = vpop.xlane.xlu0 %3526
        %v3528 = vsel %vm834, %v3516, -inf
        %3529 = vmax.xlane.f32.xlu0 %v3528
        %v3530 = vpop.xlane.xlu0 %3529
        %v3531 = vsub.f32 %v3501, %v3521
        %v3532 = vsub.f32 %v3506, %v3524
        %v3533 = vsub.f32 %v3511, %v3527
        %v3534 = vsub.f32 %v3516, %v3530
        %v3535 = vmul.f32 %v3531, 1.442695
        %v3536 = vpow.pop %v3535
        %v3537 = vmul.f32 %v3532, 1.442695
        %v3538 = vpow.pop %v3537
        %v3539 = vmul.f32 %v3533, 1.442695
        %v3540 = vpow.pop %v3539
        %v3541 = vmul.f32 %v3534, 1.442695
        %v3542 = vpow.pop %v3541
        %v3543 = vsel %vm834, %v3536, 0.0
        %3544 = vadd.xlane.f32.xlu0 %v3543
        %v3545 = vpop.xlane.xlu0 %3544
        %v3546 = vsel %vm834, %v3538, 0.0
        %3547 = vadd.xlane.f32.xlu0 %v3546
        %v3548 = vpop.xlane.xlu0 %3547
        %v3549 = vsel %vm834, %v3540, 0.0
        %3550 = vadd.xlane.f32.xlu0 %v3549
        %v3551 = vpop.xlane.xlu0 %3550
        %v3552 = vsel %vm834, %v3542, 0.0
        %3553 = vadd.xlane.f32.xlu0 %v3552
        %v3554 = vpop.xlane.xlu0 %3553
        %v3555 = vrcp.pop %v3545
        %v3556 = vrcp.pop %v3548
        %v3557 = vrcp.pop %v3551
        %v3558 = vrcp.pop %v3554
        %v3559 = vmul.f32 %v3536, %v3555
        %v3560 = vmul.f32 %v3538, %v3556
        %v3561 = vmul.f32 %v3540, %v3557
        %v3562 = vmul.f32 %v3542, %v3558
        %3563 = vrot.lane.b32.xlu0 %v2654, 48
        %v3564 = vpop.permute.xlu0 %3563
        %3565 = vrot.lane.b32.xlu0 %v2659, 48
        %v3566 = vpop.permute.xlu0 %3565
        %3567 = vrot.lane.b32.xlu0 %v2664, 48
        %v3568 = vpop.permute.xlu0 %3567
        %3569 = vrot.lane.b32.xlu0 %v2669, 48
        %v3570 = vpop.permute.xlu0 %3569
        %v3576 = vsel %vm834, %v3559, 0
        %v3579 = vsel %vm834, %v3560, 0
        %v3582 = vsel %vm834, %v3561, 0
        %v3585 = vsel %vm834, %v3562, 0
        %3587 = vmatprep.subr.mxu0 0.0
        %3588 = vmatpush1.msra.mxu0 %v3564
        %3589 = vmatprep.subr.mxu0 0.0
        %3590 = vmatpush1.msra.mxu0 %v3566
        %3591 = vmatprep.subr.mxu0 0.0
        %3592 = vmatpush1.msra.mxu0 %v3568
        %3593 = vmatprep.subr.mxu0 0.0
        %3594 = vmatpush1.msra.mxu0 %v3570
        %3595 = vmatprep.subr.mxu0 0.0
        %3596 = vmatpush1.msra.mxu0 0.0
        %3597 = vmatprep.subr.mxu0 0.0
        %3598 = vmatpush1.msra.mxu0 0.0
        %3599 = vmatprep.subr.mxu0 0.0
        %3600 = vmatpush1.msra.mxu0 0.0
        %3601 = vmatprep.subr.mxu0 0.0
        %3602 = vmatpush1.msra.mxu0 0.0
        %3603 = vmatprep.subr.mxu0 0.0
        %3604 = vmatpush1.msra.mxu0 0.0
        %3605 = vmatprep.subr.mxu0 0.0
        %3606 = vmatpush1.msra.mxu0 0.0
        %3607 = vmatprep.subr.mxu0 0.0
        %3608 = vmatpush1.msra.mxu0 0.0
        %3609 = vmatprep.subr.mxu0 0.0
        %3610 = vmatpush1.msra.mxu0 0.0
        %3611 = vmatprep.subr.mxu0 0.0
        %3612 = vmatpush1.msra.mxu0 0.0
        %3613 = vmatprep.subr.mxu0 0.0
        %3614 = vmatpush1.msra.mxu0 0.0
        %3615 = vmatprep.subr.mxu0 0.0
        %3616 = vmatpush1.msra.mxu0 0.0
        %3617 = vmatprep.subr.mxu0 0.0
        %3618 = vmatpush1.msra.mxu0 0.0
        %3619 = vmatprep.subr.mxu0 0.0
        %3620 = vmatpush1.msra.mxu0 0.0
        %3621 = vmatprep.subr.mxu0 0.0
        %3622 = vmatpush1.msra.mxu0 0.0
        %3623 = vmatprep.subr.mxu0 0.0
        %3624 = vmatpush1.msra.mxu0 0.0
        %3625 = vmatprep.subr.mxu0 0.0
        %3626 = vmatpush1.msra.mxu0 0.0
        %3627 = vmatprep.subr.mxu0 0.0
        %3628 = vmatpush1.msra.mxu0 0.0
        %3629 = vmatprep.subr.mxu0 0.0
        %3630 = vmatpush1.msra.mxu0 0.0
        %3631 = vmatprep.subr.mxu0 0.0
        %3632 = vmatpush1.msra.mxu0 0.0
        %3633 = vmatprep.subr.mxu0 0.0
        %3634 = vmatpush1.msra.mxu0 0.0
        %3635 = vmatprep.subr.mxu0 0.0
        %3636 = vmatpush1.msra.mxu0 0.0
        %3637 = vmatprep.subr.mxu0 0.0
        %3638 = vmatpush1.msra.mxu0 0.0
        %3639 = vmatprep.subr.mxu0 0.0
        %3640 = vmatpush1.msra.mxu0 0.0
        %3641 = vmatprep.subr.mxu0 0.0
        %3642 = vmatpush1.msra.mxu0 0.0
        %3643 = vmatprep.subr.mxu0 0.0
        %3644 = vmatpush1.msra.mxu0 0.0
        %3645 = vmatprep.subr.mxu0 0.0
        %3646 = vmatpush1.msra.mxu0 0.0
        %3647 = vmatprep.subr.mxu0 0.0
        %3648 = vmatpush1.msra.mxu0 0.0
        %3649 = vmatprep.subr.mxu0 0.0
        %3650 = vmatpush1.msra.mxu0 0.0
        %3651 = vmatprep.mubr.f32.mxu0 0.0
        %3652 = vmatmul.mubr.f32.gmra.mrb[0].mxu0 %v3576
        %v3653 = vpop.f32.mrb[0].mxu0
        %v3654 = vadd.f32 0.0, %v3653
        %v3655 = vpop.f32.mrb[0].mxu0
        %3656 = vmatprep.mubr.f32.mxu0 0.0
        %3657 = vmatmul.mubr.f32.gmra.mrb[0].mxu0 %v3579
        %v3658 = vpop.f32.mrb[0].mxu0
        %v3659 = vadd.f32 0.0, %v3658
        %v3660 = vpop.f32.mrb[0].mxu0
        %3661 = vmatprep.mubr.f32.mxu0 0.0
        %3662 = vmatmul.mubr.f32.gmra.mrb[0].mxu0 %v3582
        %v3663 = vpop.f32.mrb[0].mxu0
        %v3664 = vadd.f32 0.0, %v3663
        %v3665 = vpop.f32.mrb[0].mxu0
        %3666 = vmatprep.mubr.f32.mxu0 0.0
        %3667 = vmatmul.mubr.f32.gmra.mrb[0].mxu0 %v3585
        %v3668 = vpop.f32.mrb[0].mxu0
        %v3669 = vadd.f32 0.0, %v3668
        %v3670 = vpop.f32.mrb[0].mxu0
        %3671 = vdwg.mxu0
        %v3673 = vsel %vm1017, %v3654, 0
        %v3676 = vsel %vm1017, %v3659, 0
        %v3679 = vsel %vm1017, %v3664, 0
        %v3682 = vsel %vm1017, %v3669, 0
        %3684 = vmatprep.subr.mxu0 0.0
        %3685 = vmatpush1.msra.mxu0 %v2500
        %3686 = vmatprep.subr.mxu0 0.0
        %3687 = vmatpush1.msra.mxu0 0.0
        %3688 = vmatprep.subr.mxu0 0.0
        %3689 = vmatpush1.msra.mxu0 0.0
        %3690 = vmatprep.subr.mxu0 0.0
        %3691 = vmatpush1.msra.mxu0 0.0
        %3692 = vmatprep.subr.mxu0 0.0
        %3693 = vmatpush1.msra.mxu0 0.0
        %3694 = vmatprep.subr.mxu0 0.0
        %3695 = vmatpush1.msra.mxu0 0.0
        %3696 = vmatprep.subr.mxu0 0.0
        %3697 = vmatpush1.msra.mxu0 0.0
        %3698 = vmatprep.subr.mxu0 0.0
        %3699 = vmatpush1.msra.mxu0 0.0
        %3700 = vmatprep.subr.mxu0 0.0
        %3701 = vmatpush1.msra.mxu0 0.0
        %3702 = vmatprep.subr.mxu0 0.0
        %3703 = vmatpush1.msra.mxu0 0.0
        %3704 = vmatprep.subr.mxu0 0.0
        %3705 = vmatpush1.msra.mxu0 0.0
        %3706 = vmatprep.subr.mxu0 0.0
        %3707 = vmatpush1.msra.mxu0 0.0
        %3708 = vmatprep.subr.mxu0 0.0
        %3709 = vmatpush1.msra.mxu0 0.0
        %3710 = vmatprep.subr.mxu0 0.0
        %3711 = vmatpush1.msra.mxu0 0.0
        %3712 = vmatprep.subr.mxu0 0.0
        %3713 = vmatpush1.msra.mxu0 0.0
        %3714 = vmatprep.subr.mxu0 0.0
        %3715 = vmatpush1.msra.mxu0 0.0
        %3716 = vmatprep.subr.mxu0 0.0
        %3717 = vmatpush1.msra.mxu0 0.0
        %3718 = vmatprep.subr.mxu0 0.0
        %3719 = vmatpush1.msra.mxu0 0.0
        %3720 = vmatprep.subr.mxu0 0.0
        %3721 = vmatpush1.msra.mxu0 0.0
        %3722 = vmatprep.subr.mxu0 0.0
        %3723 = vmatpush1.msra.mxu0 0.0
        %3724 = vmatprep.subr.mxu0 0.0
        %3725 = vmatpush1.msra.mxu0 0.0
        %3726 = vmatprep.subr.mxu0 0.0
        %3727 = vmatpush1.msra.mxu0 0.0
        %3728 = vmatprep.subr.mxu0 0.0
        %3729 = vmatpush1.msra.mxu0 0.0
        %3730 = vmatprep.subr.mxu0 0.0
        %3731 = vmatpush1.msra.mxu0 0.0
        %3732 = vmatprep.subr.mxu0 0.0
        %3733 = vmatpush1.msra.mxu0 0.0
        %3734 = vmatprep.subr.mxu0 0.0
        %3735 = vmatpush1.msra.mxu0 0.0
        %3736 = vmatprep.subr.mxu0 0.0
        %3737 = vmatpush1.msra.mxu0 0.0
        %3738 = vmatprep.subr.mxu0 0.0
        %3739 = vmatpush1.msra.mxu0 0.0
        %3740 = vmatprep.subr.mxu0 0.0
        %3741 = vmatpush1.msra.mxu0 0.0
        %3742 = vmatprep.subr.mxu0 0.0
        %3743 = vmatpush1.msra.mxu0 0.0
        %3744 = vmatprep.subr.mxu0 0.0
        %3745 = vmatpush1.msra.mxu0 0.0
        %3746 = vmatprep.subr.mxu0 0.0
        %3747 = vmatpush1.msra.mxu0 0.0
        %3748 = vmatprep.mubr.f32.mxu0 0.0
        %3749 = vmatmul.mubr.f32.gmra.mrb[0].mxu0 %v3673
        %v3750 = vpop.f32.mrb[0].mxu0
        %v3751 = vadd.f32 0.0, %v3750
        %v3752 = vpop.f32.mrb[0].mxu0
        %3753 = vmatprep.mubr.f32.mxu0 0.0
        %3754 = vmatmul.mubr.f32.gmra.mrb[0].mxu0 %v3676
        %v3755 = vpop.f32.mrb[0].mxu0
        %v3756 = vadd.f32 0.0, %v3755
        %v3757 = vpop.f32.mrb[0].mxu0
        %3758 = vmatprep.mubr.f32.mxu0 0.0
        %3759 = vmatmul.mubr.f32.gmra.mrb[0].mxu0 %v3679
        %v3760 = vpop.f32.mrb[0].mxu0
        %v3761 = vadd.f32 0.0, %v3760
        %v3762 = vpop.f32.mrb[0].mxu0
        %3763 = vmatprep.mubr.f32.mxu0 0.0
        %3764 = vmatmul.mubr.f32.gmra.mrb[0].mxu0 %v3682
        %v3765 = vpop.f32.mrb[0].mxu0
        %v3766 = vadd.f32 0.0, %v3765
        %v3767 = vpop.f32.mrb[0].mxu0
        %3768 = vdwg.mxu0
        %v3769 = vadd.f32 %v3384, %v3751
        %v3770 = vadd.f32 %v3389, %v3756
        %v3771 = vadd.f32 %v3394, %v3761
        %v3772 = vadd.f32 %v3399, %v3766
        %3773 = vrot.lane.b32.xlu0 %v2654, 104
        %v3774 = vpop.permute.xlu0 %3773
        %3775 = vrot.lane.b32.xlu0 %v2659, 104
        %v3776 = vpop.permute.xlu0 %3775
        %3777 = vrot.lane.b32.xlu0 %v2664, 104
        %v3778 = vpop.permute.xlu0 %3777
        %3779 = vrot.lane.b32.xlu0 %v2669, 104
        %v3780 = vpop.permute.xlu0 %3779
        %3781 = vrot.lane.b32.xlu0 %v2654, 72
        %v3782 = vpop.permute.xlu0 %3781
        %3783 = vrot.lane.b32.xlu0 %v2659, 72
        %v3784 = vpop.permute.xlu0 %3783
        %3785 = vrot.lane.b32.xlu0 %v2664, 72
        %v3786 = vpop.permute.xlu0 %3785
        %3787 = vrot.lane.b32.xlu0 %v2669, 72
        %v3788 = vpop.permute.xlu0 %3787
        %v3789 = vsel %vm1017, %v3774, 0
        %v3791 = vsel %vm1017, %v3776, 0
        %v3793 = vsel %vm1017, %v3778, 0
        %v3795 = vsel %vm1017, %v3780, 0
        %v3797 = vsel %vm1017, %v3782, 0
        %v3799 = vsel %vm1017, %v3784, 0
        %v3801 = vsel %vm1017, %v3786, 0
        %v3803 = vsel %vm1017, %v3788, 0
        %3805 = vmatprep.subr.mxu0 0.0
        %3806 = vmatpush1.xpose.msra.mxu0 %v3797
        %3807 = vmatprep.subr.mxu0 0.0
        %3808 = vmatpush1.xpose.msra.mxu0 %v3799
        %3809 = vmatprep.subr.mxu0 0.0
        %3810 = vmatpush1.xpose.msra.mxu0 %v3801
        %3811 = vmatprep.subr.mxu0 0.0
        %3812 = vmatpush1.xpose.msra.mxu0 %v3803
        %3813 = vmatprep.subr.mxu0 0.0
        %3814 = vmatpush1.xpose.msra.mxu0 0.0
        %3815 = vmatprep.subr.mxu0 0.0
        %3816 = vmatpush1.xpose.msra.mxu0 0.0
        %3817 = vmatprep.subr.mxu0 0.0
        %3818 = vmatpush1.xpose.msra.mxu0 0.0
        %3819 = vmatprep.subr.mxu0 0.0
        %3820 = vmatpush1.xpose.msra.mxu0 0.0
        %3821 = vmatprep.subr.mxu0 0.0
        %3822 = vmatpush1.xpose.msra.mxu0 0.0
        %3823 = vmatprep.subr.mxu0 0.0
        %3824 = vmatpush1.xpose.msra.mxu0 0.0
        %3825 = vmatprep.subr.mxu0 0.0
        %3826 = vmatpush1.xpose.msra.mxu0 0.0
        %3827 = vmatprep.subr.mxu0 0.0
        %3828 = vmatpush1.xpose.msra.mxu0 0.0
        %3829 = vmatprep.subr.mxu0 0.0
        %3830 = vmatpush1.xpose.msra.mxu0 0.0
        %3831 = vmatprep.subr.mxu0 0.0
        %3832 = vmatpush1.xpose.msra.mxu0 0.0
        %3833 = vmatprep.subr.mxu0 0.0
        %3834 = vmatpush1.xpose.msra.mxu0 0.0
        %3835 = vmatprep.subr.mxu0 0.0
        %3836 = vmatpush1.xpose.msra.mxu0 0.0
        %3837 = vmatprep.subr.mxu0 0.0
        %3838 = vmatpush1.xpose.msra.mxu0 0.0
        %3839 = vmatprep.subr.mxu0 0.0
        %3840 = vmatpush1.xpose.msra.mxu0 0.0
        %3841 = vmatprep.subr.mxu0 0.0
        %3842 = vmatpush1.xpose.msra.mxu0 0.0
        %3843 = vmatprep.subr.mxu0 0.0
        %3844 = vmatpush1.xpose.msra.mxu0 0.0
        %3845 = vmatprep.subr.mxu0 0.0
        %3846 = vmatpush1.xpose.msra.mxu0 0.0
        %3847 = vmatprep.subr.mxu0 0.0
        %3848 = vmatpush1.xpose.msra.mxu0 0.0
        %3849 = vmatprep.subr.mxu0 0.0
        %3850 = vmatpush1.xpose.msra.mxu0 0.0
        %3851 = vmatprep.subr.mxu0 0.0
        %3852 = vmatpush1.xpose.msra.mxu0 0.0
        %3853 = vmatprep.subr.mxu0 0.0
        %3854 = vmatpush1.xpose.msra.mxu0 0.0
        %3855 = vmatprep.subr.mxu0 0.0
        %3856 = vmatpush1.xpose.msra.mxu0 0.0
        %3857 = vmatprep.subr.mxu0 0.0
        %3858 = vmatpush1.xpose.msra.mxu0 0.0
        %3859 = vmatprep.subr.mxu0 0.0
        %3860 = vmatpush1.xpose.msra.mxu0 0.0
        %3861 = vmatprep.subr.mxu0 0.0
        %3862 = vmatpush1.xpose.msra.mxu0 0.0
        %3863 = vmatprep.subr.mxu0 0.0
        %3864 = vmatpush1.xpose.msra.mxu0 0.0
        %3865 = vmatprep.subr.mxu0 0.0
        %3866 = vmatpush1.xpose.msra.mxu0 0.0
        %3867 = vmatprep.subr.mxu0 0.0
        %3868 = vmatpush1.xpose.msra.mxu0 0.0
        %3869 = vmatprep.mubr.f32.mxu0 0.0
        %3870 = vmatmul.mubr.f32.gmra.mrb[0].mxu0 %v3789
        %v3871 = vpop.f32.mrb[0].mxu0
        %v3872 = vadd.f32 %v819, %v3871
        %v3873 = vpop.f32.mrb[0].mxu0
        %3874 = vmatprep.mubr.f32.mxu0 0.0
        %3875 = vmatmul.mubr.f32.gmra.mrb[0].mxu0 %v3791
        %v3876 = vpop.f32.mrb[0].mxu0
        %v3877 = vadd.f32 %v820, %v3876
        %v3878 = vpop.f32.mrb[0].mxu0
        %3879 = vmatprep.mubr.f32.mxu0 0.0
        %3880 = vmatmul.mubr.f32.gmra.mrb[0].mxu0 %v3793
        %v3881 = vpop.f32.mrb[0].mxu0
        %v3882 = vadd.f32 %v821, %v3881
        %v3883 = vpop.f32.mrb[0].mxu0
        %3884 = vmatprep.mubr.f32.mxu0 0.0
        %3885 = vmatmul.mubr.f32.gmra.mrb[0].mxu0 %v3795
        %v3886 = vpop.f32.mrb[0].mxu0
        %v3887 = vadd.f32 %v822, %v3886
        %v3888 = vpop.f32.mrb[0].mxu0
        %3889 = vdwg.mxu0
        %v3890 = vsel %vm834, %v3872, -inf
        %3891 = vmax.xlane.f32.xlu0 %v3890
        %v3892 = vpop.xlane.xlu0 %3891
        %v3893 = vsel %vm834, %v3877, -inf
        %3894 = vmax.xlane.f32.xlu0 %v3893
        %v3895 = vpop.xlane.xlu0 %3894
        %v3896 = vsel %vm834, %v3882, -inf
        %3897 = vmax.xlane.f32.xlu0 %v3896
        %v3898 = vpop.xlane.xlu0 %3897
        %v3899 = vsel %vm834, %v3887, -inf
        %3900 = vmax.xlane.f32.xlu0 %v3899
        %v3901 = vpop.xlane.xlu0 %3900
        %v3902 = vsub.f32 %v3872, %v3892
        %v3903 = vsub.f32 %v3877, %v3895
        %v3904 = vsub.f32 %v3882, %v3898
        %v3905 = vsub.f32 %v3887, %v3901
        %v3906 = vmul.f32 %v3902, 1.442695
        %v3907 = vpow.pop %v3906
        %v3908 = vmul.f32 %v3903, 1.442695
        %v3909 = vpow.pop %v3908
        %v3910 = vmul.f32 %v3904, 1.442695
        %v3911 = vpow.pop %v3910
        %v3912 = vmul.f32 %v3905, 1.442695
        %v3913 = vpow.pop %v3912
        %v3914 = vsel %vm834, %v3907, 0.0
        %3915 = vadd.xlane.f32.xlu0 %v3914
        %v3916 = vpop.xlane.xlu0 %3915
        %v3917 = vsel %vm834, %v3909, 0.0
        %3918 = vadd.xlane.f32.xlu0 %v3917
        %v3919 = vpop.xlane.xlu0 %3918
        %v3920 = vsel %vm834, %v3911, 0.0
        %3921 = vadd.xlane.f32.xlu0 %v3920
        %v3922 = vpop.xlane.xlu0 %3921
        %v3923 = vsel %vm834, %v3913, 0.0
        %3924 = vadd.xlane.f32.xlu0 %v3923
        %v3925 = vpop.xlane.xlu0 %3924
        %v3926 = vrcp.pop %v3916
        %v3927 = vrcp.pop %v3919
        %v3928 = vrcp.pop %v3922
        %v3929 = vrcp.pop %v3925
        %v3930 = vmul.f32 %v3907, %v3926
        %v3931 = vmul.f32 %v3909, %v3927
        %v3932 = vmul.f32 %v3911, %v3928
        %v3933 = vmul.f32 %v3913, %v3929
        %3934 = vrot.lane.b32.xlu0 %v2654, 40
        %v3935 = vpop.permute.xlu0 %3934
        %3936 = vrot.lane.b32.xlu0 %v2659, 40
        %v3937 = vpop.permute.xlu0 %3936
        %3938 = vrot.lane.b32.xlu0 %v2664, 40
        %v3939 = vpop.permute.xlu0 %3938
        %3940 = vrot.lane.b32.xlu0 %v2669, 40
        %v3941 = vpop.permute.xlu0 %3940
        %v3947 = vsel %vm834, %v3930, 0
        %v3950 = vsel %vm834, %v3931, 0
        %v3953 = vsel %vm834, %v3932, 0
        %v3956 = vsel %vm834, %v3933, 0
        %3958 = vmatprep.subr.mxu0 0.0
        %3959 = vmatpush1.msra.mxu0 %v3935
        %3960 = vmatprep.subr.mxu0 0.0
        %3961 = vmatpush1.msra.mxu0 %v3937
        %3962 = vmatprep.subr.mxu0 0.0
        %3963 = vmatpush1.msra.mxu0 %v3939
        %3964 = vmatprep.subr.mxu0 0.0
        %3965 = vmatpush1.msra.mxu0 %v3941
        %3966 = vmatprep.subr.mxu0 0.0
        %3967 = vmatpush1.msra.mxu0 0.0
        %3968 = vmatprep.subr.mxu0 0.0
        %3969 = vmatpush1.msra.mxu0 0.0
        %3970 = vmatprep.subr.mxu0 0.0
        %3971 = vmatpush1.msra.mxu0 0.0
        %3972 = vmatprep.subr.mxu0 0.0
        %3973 = vmatpush1.msra.mxu0 0.0
        %3974 = vmatprep.subr.mxu0 0.0
        %3975 = vmatpush1.msra.mxu0 0.0
        %3976 = vmatprep.subr.mxu0 0.0
        %3977 = vmatpush1.msra.mxu0 0.0
        %3978 = vmatprep.subr.mxu0 0.0
        %3979 = vmatpush1.msra.mxu0 0.0
        %3980 = vmatprep.subr.mxu0 0.0
        %3981 = vmatpush1.msra.mxu0 0.0
        %3982 = vmatprep.subr.mxu0 0.0
        %3983 = vmatpush1.msra.mxu0 0.0
        %3984 = vmatprep.subr.mxu0 0.0
        %3985 = vmatpush1.msra.mxu0 0.0
        %3986 = vmatprep.subr.mxu0 0.0
        %3987 = vmatpush1.msra.mxu0 0.0
        %3988 = vmatprep.subr.mxu0 0.0
        %3989 = vmatpush1.msra.mxu0 0.0
        %3990 = vmatprep.subr.mxu0 0.0
        %3991 = vmatpush1.msra.mxu0 0.0
        %3992 = vmatprep.subr.mxu0 0.0
        %3993 = vmatpush1.msra.mxu0 0.0
        %3994 = vmatprep.subr.mxu0 0.0
        %3995 = vmatpush1.msra.mxu0 0.0
        %3996 = vmatprep.subr.mxu0 0.0
        %3997 = vmatpush1.msra.mxu0 0.0
        %3998 = vmatprep.subr.mxu0 0.0
        %3999 = vmatpush1.msra.mxu0 0.0
        %4000 = vmatprep.subr.mxu0 0.0
        %4001 = vmatpush1.msra.mxu0 0.0
        %4002 = vmatprep.subr.mxu0 0.0
        %4003 = vmatpush1.msra.mxu0 0.0
        %4004 = vmatprep.subr.mxu0 0.0
        %4005 = vmatpush1.msra.mxu0 0.0
        %4006 = vmatprep.subr.mxu0 0.0
        %4007 = vmatpush1.msra.mxu0 0.0
        %4008 = vmatprep.subr.mxu0 0.0
        %4009 = vmatpush1.msra.mxu0 0.0
        %4010 = vmatprep.subr.mxu0 0.0
        %4011 = vmatpush1.msra.mxu0 0.0
        %4012 = vmatprep.subr.mxu0 0.0
        %4013 = vmatpush1.msra.mxu0 0.0
        %4014 = vmatprep.subr.mxu0 0.0
        %4015 = vmatpush1.msra.mxu0 0.0
        %4016 = vmatprep.subr.mxu0 0.0
        %4017 = vmatpush1.msra.mxu0 0.0
        %4018 = vmatprep.subr.mxu0 0.0
        %4019 = vmatpush1.msra.mxu0 0.0
        %4020 = vmatprep.subr.mxu0 0.0
        %4021 = vmatpush1.msra.mxu0 0.0
        %4022 = vmatprep.mubr.f32.mxu0 0.0
        %4023 = vmatmul.mubr.f32.gmra.mrb[0].mxu0 %v3947
        %v4024 = vpop.f32.mrb[0].mxu0
        %v4025 = vadd.f32 0.0, %v4024
        %v4026 = vpop.f32.mrb[0].mxu0
        %4027 = vmatprep.mubr.f32.mxu0 0.0
        %4028 = vmatmul.mubr.f32.gmra.mrb[0].mxu0 %v3950
        %v4029 = vpop.f32.mrb[0].mxu0
        %v4030 = vadd.f32 0.0, %v4029
        %v4031 = vpop.f32.mrb[0].mxu0
        %4032 = vmatprep.mubr.f32.mxu0 0.0
        %4033 = vmatmul.mubr.f32.gmra.mrb[0].mxu0 %v3953
        %v4034 = vpop.f32.mrb[0].mxu0
        %v4035 = vadd.f32 0.0, %v4034
        %v4036 = vpop.f32.mrb[0].mxu0
        %4037 = vmatprep.mubr.f32.mxu0 0.0
        %4038 = vmatmul.mubr.f32.gmra.mrb[0].mxu0 %v3956
        %v4039 = vpop.f32.mrb[0].mxu0
        %v4040 = vadd.f32 0.0, %v4039
        %v4041 = vpop.f32.mrb[0].mxu0
        %4042 = vdwg.mxu0
        %v4044 = vsel %vm1017, %v4025, 0
        %v4047 = vsel %vm1017, %v4030, 0
        %v4050 = vsel %vm1017, %v4035, 0
        %v4053 = vsel %vm1017, %v4040, 0
        %4055 = vmatprep.subr.mxu0 0.0
        %4056 = vmatpush1.msra.mxu0 %v2501
        %4057 = vmatprep.subr.mxu0 0.0
        %4058 = vmatpush1.msra.mxu0 0.0
        %4059 = vmatprep.subr.mxu0 0.0
        %4060 = vmatpush1.msra.mxu0 0.0
        %4061 = vmatprep.subr.mxu0 0.0
        %4062 = vmatpush1.msra.mxu0 0.0
        %4063 = vmatprep.subr.mxu0 0.0
        %4064 = vmatpush1.msra.mxu0 0.0
        %4065 = vmatprep.subr.mxu0 0.0
        %4066 = vmatpush1.msra.mxu0 0.0
        %4067 = vmatprep.subr.mxu0 0.0
        %4068 = vmatpush1.msra.mxu0 0.0
        %4069 = vmatprep.subr.mxu0 0.0
        %4070 = vmatpush1.msra.mxu0 0.0
        %4071 = vmatprep.subr.mxu0 0.0
        %4072 = vmatpush1.msra.mxu0 0.0
        %4073 = vmatprep.subr.mxu0 0.0
        %4074 = vmatpush1.msra.mxu0 0.0
        %4075 = vmatprep.subr.mxu0 0.0
        %4076 = vmatpush1.msra.mxu0 0.0
        %4077 = vmatprep.subr.mxu0 0.0
        %4078 = vmatpush1.msra.mxu0 0.0
        %4079 = vmatprep.subr.mxu0 0.0
        %4080 = vmatpush1.msra.mxu0 0.0
        %4081 = vmatprep.subr.mxu0 0.0
        %4082 = vmatpush1.msra.mxu0 0.0
        %4083 = vmatprep.subr.mxu0 0.0
        %4084 = vmatpush1.msra.mxu0 0.0
        %4085 = vmatprep.subr.mxu0 0.0
        %4086 = vmatpush1.msra.mxu0 0.0
        %4087 = vmatprep.subr.mxu0 0.0
        %4088 = vmatpush1.msra.mxu0 0.0
        %4089 = vmatprep.subr.mxu0 0.0
        %4090 = vmatpush1.msra.mxu0 0.0
        %4091 = vmatprep.subr.mxu0 0.0
        %4092 = vmatpush1.msra.mxu0 0.0
        %4093 = vmatprep.subr.mxu0 0.0
        %4094 = vmatpush1.msra.mxu0 0.0
        %4095 = vmatprep.subr.mxu0 0.0
        %4096 = vmatpush1.msra.mxu0 0.0
        %4097 = vmatprep.subr.mxu0 0.0
        %4098 = vmatpush1.msra.mxu0 0.0
        %4099 = vmatprep.subr.mxu0 0.0
        %4100 = vmatpush1.msra.mxu0 0.0
        %4101 = vmatprep.subr.mxu0 0.0
        %4102 = vmatpush1.msra.mxu0 0.0
        %4103 = vmatprep.subr.mxu0 0.0
        %4104 = vmatpush1.msra.mxu0 0.0
        %4105 = vmatprep.subr.mxu0 0.0
        %4106 = vmatpush1.msra.mxu0 0.0
        %4107 = vmatprep.subr.mxu0 0.0
        %4108 = vmatpush1.msra.mxu0 0.0
        %4109 = vmatprep.subr.mxu0 0.0
        %4110 = vmatpush1.msra.mxu0 0.0
        %4111 = vmatprep.subr.mxu0 0.0
        %4112 = vmatpush1.msra.mxu0 0.0
        %4113 = vmatprep.subr.mxu0 0.0
        %4114 = vmatpush1.msra.mxu0 0.0
        %4115 = vmatprep.subr.mxu0 0.0
        %4116 = vmatpush1.msra.mxu0 0.0
        %4117 = vmatprep.subr.mxu0 0.0
        %4118 = vmatpush1.msra.mxu0 0.0
        %4119 = vmatprep.mubr.f32.mxu0 0.0
        %4120 = vmatmul.mubr.f32.gmra.mrb[0].mxu0 %v4044
        %v4121 = vpop.f32.mrb[0].mxu0
        %v4122 = vadd.f32 0.0, %v4121
        %v4123 = vpop.f32.mrb[0].mxu0
        %4124 = vmatprep.mubr.f32.mxu0 0.0
        %4125 = vmatmul.mubr.f32.gmra.mrb[0].mxu0 %v4047
        %v4126 = vpop.f32.mrb[0].mxu0
        %v4127 = vadd.f32 0.0, %v4126
        %v4128 = vpop.f32.mrb[0].mxu0
        %4129 = vmatprep.mubr.f32.mxu0 0.0
        %4130 = vmatmul.mubr.f32.gmra.mrb[0].mxu0 %v4050
        %v4131 = vpop.f32.mrb[0].mxu0
        %v4132 = vadd.f32 0.0, %v4131
        %v4133 = vpop.f32.mrb[0].mxu0
        %4134 = vmatprep.mubr.f32.mxu0 0.0
        %4135 = vmatmul.mubr.f32.gmra.mrb[0].mxu0 %v4053
        %v4136 = vpop.f32.mrb[0].mxu0
        %v4137 = vadd.f32 0.0, %v4136
        %v4138 = vpop.f32.mrb[0].mxu0
        %4139 = vdwg.mxu0
        %v4140 = vadd.f32 %v3769, %v4122
        %v4141 = vadd.f32 %v3770, %v4127
        %v4142 = vadd.f32 %v3771, %v4132
        %v4143 = vadd.f32 %v3772, %v4137
        %v4145 = vlaneseq
        %v4146 = vshrl.u32 %v4145, 7
        %v4147 = vsub.s32 0, %v4146
        %v4148 = vrot.slane %v2502, %v4147
        %v4150 = vadd.f32 %v4140, %v4148
        %v4151 = vadd.f32 %v4141, %v4148
        %v4152 = vadd.f32 %v4142, %v4148
        %v4153 = vadd.f32 %v4143, %v4148
        %v4154 = vadd.f32 %v4150, %v2488
        %v4155 = vadd.f32 %v4151, %v2489
        %v4156 = vadd.f32 %v4152, %v2490
        %v4157 = vadd.f32 %v4153, %v2491
        %v4158 = vld [vmem:[#allocation10] sm:$0x1]
        %v4159 = vld [vmem:[#allocation11] sm:$0x1]
        %v4160 = vld [vmem:[#allocation13] sm:$0xff]
        %v4161 = vld [vmem:[#allocation13 + $0x8] sm:$0xff]
        %v4162 = vld [vmem:[#allocation13 + $0x10] sm:$0xff]
        %v4163 = vld [vmem:[#allocation13 + $0x18] sm:$0xff]
        %v4164 = vld [vmem:[#allocation14] sm:$0x1]
        %v4165 = vld [vmem:[%s17] sm:$0xff]
        %v4166 = vld [vmem:[%s17 + $0x8] sm:$0xff]
        %v4167 = vld [vmem:[%s17 + $0x10] sm:$0xff]
        %v4168 = vld [vmem:[%s17 + $0x18] sm:$0xff]
        %v4169 = vld [vmem:[%s17 + $0x20] sm:$0xff]
        %v4170 = vld [vmem:[%s17 + $0x28] sm:$0xff]
        %v4171 = vld [vmem:[%s17 + $0x30] sm:$0xff]
        %v4172 = vld [vmem:[%s17 + $0x38] sm:$0xff]
        %v4173 = vld [vmem:[#allocation16] sm:$0x1]
        %v4174 = vsel %vm834, %v4154, 0.0
        %4175 = vadd.xlane.f32.xlu0 %v4174
        %v4176 = vpop.xlane.xlu0 %4175
        %v4177 = vsel %vm834, %v4155, 0.0
        %4178 = vadd.xlane.f32.xlu0 %v4177
        %v4179 = vpop.xlane.xlu0 %4178
        %v4180 = vsel %vm834, %v4156, 0.0
        %4181 = vadd.xlane.f32.xlu0 %v4180
        %v4182 = vpop.xlane.xlu0 %4181
        %v4183 = vsel %vm834, %v4157, 0.0
        %4184 = vadd.xlane.f32.xlu0 %v4183
        %v4185 = vpop.xlane.xlu0 %4184
        %v4186 = vmul.f32 %v4176, %v847
        %v4187 = vmul.f32 %v4179, %v847
        %v4188 = vmul.f32 %v4182, %v847
        %v4189 = vmul.f32 %v4185, %v847
        %v4190 = vsub.f32 %v4154, %v4186
        %v4191 = vsub.f32 %v4155, %v4187
        %v4192 = vsub.f32 %v4156, %v4188
        %v4193 = vsub.f32 %v4157, %v4189
        %v4194 = vmul.f32 %v4190, %v4190
        %v4195 = vmul.f32 %v4191, %v4191
        %v4196 = vmul.f32 %v4192, %v4192
        %v4197 = vmul.f32 %v4193, %v4193
        %v4198 = vsel %vm834, %v4194, 0.0
        %4199 = vadd.xlane.f32.xlu0 %v4198
        %v4200 = vpop.xlane.xlu0 %4199
        %v4201 = vsel %vm834, %v4195, 0.0
        %4202 = vadd.xlane.f32.xlu0 %v4201
        %v4203 = vpop.xlane.xlu0 %4202
        %v4204 = vsel %vm834, %v4196, 0.0
        %4205 = vadd.xlane.f32.xlu0 %v4204
        %v4206 = vpop.xlane.xlu0 %4205
        %v4207 = vsel %vm834, %v4197, 0.0
        %4208 = vadd.xlane.f32.xlu0 %v4207
        %v4209 = vpop.xlane.xlu0 %4208
        %v4210 = vmul.f32 %v4200, %v847
        %v4211 = vmul.f32 %v4203, %v847
        %v4212 = vmul.f32 %v4206, %v847
        %v4213 = vmul.f32 %v4209, %v847
        %v4214 = vadd.f32 %v4210, 1e-05
        %v4215 = vadd.f32 %v4211, 1e-05
        %v4216 = vadd.f32 %v4212, 1e-05
        %v4217 = vadd.f32 %v4213, 1e-05
        %v4218 = vrsqrt.pop %v4214
        %v4219 = vrsqrt.pop %v4215
        %v4220 = vrsqrt.pop %v4216
        %v4221 = vrsqrt.pop %v4217
        %v4222 = vmul.f32 %v4190, %v4218
        %v4223 = vmul.f32 %v4191, %v4219
        %v4224 = vmul.f32 %v4192, %v4220
        %v4225 = vmul.f32 %v4193, %v4221
        %v4227 = vlaneseq
        %v4228 = vshrl.u32 %v4227, 7
        %v4229 = vsub.s32 0, %v4228
        %v4230 = vrot.slane %v4158, %v4229
        %v4232 = vmul.f32 %v4222, %v4230
        %v4233 = vmul.f32 %v4223, %v4230
        %v4234 = vmul.f32 %v4224, %v4230
        %v4235 = vmul.f32 %v4225, %v4230
        %v4237 = vlaneseq
        %v4238 = vshrl.u32 %v4237, 7
        %v4239 = vsub.s32 0, %v4238
        %v4240 = vrot.slane %v4159, %v4239
        %v4242 = vadd.f32 %v4232, %v4240
        %v4243 = vadd.f32 %v4233, %v4240
        %v4244 = vadd.f32 %v4234, %v4240
        %v4245 = vadd.f32 %v4235, %v4240
        %v4247 = vlaneseq
        %v4248 = vshrl.u32 %v4247, 7
        %v4249 = vsub.s32 0, %v4248
        %v4250 = vrot.slane %v4164, %v4249
        %v4253 = vsel %vm834, %v4242, 0
        %v4256 = vsel %vm834, %v4243, 0
        %v4259 = vsel %vm834, %v4244, 0
        %v4262 = vsel %vm834, %v4245, 0
        %4264 = vmatprep.subr.mxu0 0.0
        %4265 = vmatpush1.msra.mxu0 %v4160
        %4266 = vmatprep.subr.mxu0 0.0
        %4267 = vmatpush1.msra.mxu0 %v4161
        %4268 = vmatprep.subr.mxu0 0.0
        %4269 = vmatpush1.msra.mxu0 %v4162
        %4270 = vmatprep.subr.mxu0 0.0
        %4271 = vmatpush1.msra.mxu0 %v4163
        %4272 = vmatprep.subr.mxu0 0.0
        %4273 = vmatpush1.msra.mxu0 0.0
        %4274 = vmatprep.subr.mxu0 0.0
        %4275 = vmatpush1.msra.mxu0 0.0
        %4276 = vmatprep.subr.mxu0 0.0
        %4277 = vmatpush1.msra.mxu0 0.0
        %4278 = vmatprep.subr.mxu0 0.0
        %4279 = vmatpush1.msra.mxu0 0.0
        %4280 = vmatprep.subr.mxu0 0.0
        %4281 = vmatpush1.msra.mxu0 0.0
        %4282 = vmatprep.subr.mxu0 0.0
        %4283 = vmatpush1.msra.mxu0 0.0
        %4284 = vmatprep.subr.mxu0 0.0
        %4285 = vmatpush1.msra.mxu0 0.0
        %4286 = vmatprep.subr.mxu0 0.0
        %4287 = vmatpush1.msra.mxu0 0.0
        %4288 = vmatprep.subr.mxu0 0.0
        %4289 = vmatpush1.msra.mxu0 0.0
        %4290 = vmatprep.subr.mxu0 0.0
        %4291 = vmatpush1.msra.mxu0 0.0
        %4292 = vmatprep.subr.mxu0 0.0
        %4293 = vmatpush1.msra.mxu0 0.0
        %4294 = vmatprep.subr.mxu0 0.0
        %4295 = vmatpush1.msra.mxu0 0.0
        %4296 = vmatprep.subr.mxu0 0.0
        %4297 = vmatpush1.msra.mxu0 0.0
        %4298 = vmatprep.subr.mxu0 0.0
        %4299 = vmatpush1.msra.mxu0 0.0
        %4300 = vmatprep.subr.mxu0 0.0
        %4301 = vmatpush1.msra.mxu0 0.0
        %4302 = vmatprep.subr.mxu0 0.0
        %4303 = vmatpush1.msra.mxu0 0.0
        %4304 = vmatprep.subr.mxu0 0.0
        %4305 = vmatpush1.msra.mxu0 0.0
        %4306 = vmatprep.subr.mxu0 0.0
        %4307 = vmatpush1.msra.mxu0 0.0
        %4308 = vmatprep.subr.mxu0 0.0
        %4309 = vmatpush1.msra.mxu0 0.0
        %4310 = vmatprep.subr.mxu0 0.0
        %4311 = vmatpush1.msra.mxu0 0.0
        %4312 = vmatprep.subr.mxu0 0.0
        %4313 = vmatpush1.msra.mxu0 0.0
        %4314 = vmatprep.subr.mxu0 0.0
        %4315 = vmatpush1.msra.mxu0 0.0
        %4316 = vmatprep.subr.mxu0 0.0
        %4317 = vmatpush1.msra.mxu0 0.0
        %4318 = vmatprep.subr.mxu0 0.0
        %4319 = vmatpush1.msra.mxu0 0.0
        %4320 = vmatprep.subr.mxu0 0.0
        %4321 = vmatpush1.msra.mxu0 0.0
        %4322 = vmatprep.subr.mxu0 0.0
        %4323 = vmatpush1.msra.mxu0 0.0
        %4324 = vmatprep.subr.mxu0 0.0
        %4325 = vmatpush1.msra.mxu0 0.0
        %4326 = vmatprep.subr.mxu0 0.0
        %4327 = vmatpush1.msra.mxu0 0.0
        %4328 = vmatprep.mubr.f32.mxu0 0.0
        %4329 = vmatmul.mubr.f32.gmra.mrb[0].mxu0 %v4253
        %v4330 = vpop.f32.mrb[0].mxu0
        %v4331 = vadd.f32 %v4250, %v4330
        %v4332 = vpop.f32.mrb[0].mxu0
        %4333 = vmatprep.mubr.f32.mxu0 0.0
        %4334 = vmatmul.mubr.f32.gmra.mrb[0].mxu0 %v4256
        %v4335 = vpop.f32.mrb[0].mxu0
        %v4336 = vadd.f32 %v4250, %v4335
        %v4337 = vpop.f32.mrb[0].mxu0
        %4338 = vmatprep.mubr.f32.mxu0 0.0
        %4339 = vmatmul.mubr.f32.gmra.mrb[0].mxu0 %v4259
        %v4340 = vpop.f32.mrb[0].mxu0
        %v4341 = vadd.f32 %v4250, %v4340
        %v4342 = vpop.f32.mrb[0].mxu0
        %4343 = vmatprep.mubr.f32.mxu0 0.0
        %4344 = vmatmul.mubr.f32.gmra.mrb[0].mxu0 %v4262
        %v4345 = vpop.f32.mrb[0].mxu0
        %v4346 = vadd.f32 %v4250, %v4345
        %v4347 = vpop.f32.mrb[0].mxu0
        %4348 = vdwg.mxu0
        %v4349 = vmul.f32 %v4331, 0.5
        %v4350 = vmul.f32 %v4336, 0.5
        %v4351 = vmul.f32 %v4341, 0.5
        %v4352 = vmul.f32 %v4346, 0.5
        %v4353 = vmul.f32 %v4331, 0.70710677
        %v4354 = vmul.f32 %v4336, 0.70710677
        %v4355 = vmul.f32 %v4341, 0.70710677
        %v4356 = vmul.f32 %v4346, 0.70710677
        %v4357 = verf.f32.pop %v4353
        %v4358 = verf.f32.pop %v4354
        %v4359 = verf.f32.pop %v4355
        %v4360 = verf.f32.pop %v4356
        %v4361 = vadd.f32 %v4357, 1.0
        %v4362 = vadd.f32 %v4358, 1.0
        %v4363 = vadd.f32 %v4359, 1.0
        %v4364 = vadd.f32 %v4360, 1.0
        %v4365 = vmul.f32 %v4349, %v4361
        %v4366 = vmul.f32 %v4350, %v4362
        %v4367 = vmul.f32 %v4351, %v4363
        %v4368 = vmul.f32 %v4352, %v4364
        %v4370 = vlaneseq
        %v4371 = vshrl.u32 %v4370, 7
        %v4372 = vsub.s32 0, %v4371
        %v4373 = vrot.slane %v4173, %v4372
        %vm4375 = vcmask 523264
        %v4377 = vsel %vm4375, %v4365, 0
        %v4380 = vsel %vm4375, %v4366, 0
        %v4383 = vsel %vm4375, %v4367, 0
        %v4386 = vsel %vm4375, %v4368, 0
        %4388 = vmatprep.subr.mxu0 0.0
        %4389 = vmatpush1.msra.mxu0 %v4165
        %4390 = vmatprep.subr.mxu0 0.0
        %4391 = vmatpush1.msra.mxu0 %v4166
        %4392 = vmatprep.subr.mxu0 0.0
        %4393 = vmatpush1.msra.mxu0 %v4167
        %4394 = vmatprep.subr.mxu0 0.0
        %4395 = vmatpush1.msra.mxu0 %v4168
        %4396 = vmatprep.subr.mxu0 0.0
        %4397 = vmatpush1.msra.mxu0 %v4169
        %4398 = vmatprep.subr.mxu0 0.0
        %4399 = vmatpush1.msra.mxu0 %v4170
        %4400 = vmatprep.subr.mxu0 0.0
        %4401 = vmatpush1.msra.mxu0 %v4171
        %4402 = vmatprep.subr.mxu0 0.0
        %4403 = vmatpush1.msra.mxu0 %v4172
        %4404 = vmatprep.subr.mxu0 0.0
        %4405 = vmatpush1.msra.mxu0 0.0
        %4406 = vmatprep.subr.mxu0 0.0
        %4407 = vmatpush1.msra.mxu0 0.0
        %4408 = vmatprep.subr.mxu0 0.0
        %4409 = vmatpush1.msra.mxu0 0.0
        %4410 = vmatprep.subr.mxu0 0.0
        %4411 = vmatpush1.msra.mxu0 0.0
        %4412 = vmatprep.subr.mxu0 0.0
        %4413 = vmatpush1.msra.mxu0 0.0
        %4414 = vmatprep.subr.mxu0 0.0
        %4415 = vmatpush1.msra.mxu0 0.0
        %4416 = vmatprep.subr.mxu0 0.0
        %4417 = vmatpush1.msra.mxu0 0.0
        %4418 = vmatprep.subr.mxu0 0.0
        %4419 = vmatpush1.msra.mxu0 0.0
        %4420 = vmatprep.subr.mxu0 0.0
        %4421 = vmatpush1.msra.mxu0 0.0
        %4422 = vmatprep.subr.mxu0 0.0
        %4423 = vmatpush1.msra.mxu0 0.0
        %4424 = vmatprep.subr.mxu0 0.0
        %4425 = vmatpush1.msra.mxu0 0.0
        %4426 = vmatprep.subr.mxu0 0.0
        %4427 = vmatpush1.msra.mxu0 0.0
        %4428 = vmatprep.subr.mxu0 0.0
        %4429 = vmatpush1.msra.mxu0 0.0
        %4430 = vmatprep.subr.mxu0 0.0
        %4431 = vmatpush1.msra.mxu0 0.0
        %4432 = vmatprep.subr.mxu0 0.0
        %4433 = vmatpush1.msra.mxu0 0.0
        %4434 = vmatprep.subr.mxu0 0.0
        %4435 = vmatpush1.msra.mxu0 0.0
        %4436 = vmatprep.subr.mxu0 0.0
        %4437 = vmatpush1.msra.mxu0 0.0
        %4438 = vmatprep.subr.mxu0 0.0
        %4439 = vmatpush1.msra.mxu0 0.0
        %4440 = vmatprep.subr.mxu0 0.0
        %4441 = vmatpush1.msra.mxu0 0.0
        %4442 = vmatprep.subr.mxu0 0.0
        %4443 = vmatpush1.msra.mxu0 0.0
        %4444 = vmatprep.subr.mxu0 0.0
        %4445 = vmatpush1.msra.mxu0 0.0
        %4446 = vmatprep.subr.mxu0 0.0
        %4447 = vmatpush1.msra.mxu0 0.0
        %4448 = vmatprep.subr.mxu0 0.0
        %4449 = vmatpush1.msra.mxu0 0.0
        %4450 = vmatprep.subr.mxu0 0.0
        %4451 = vmatpush1.msra.mxu0 0.0
        %4452 = vmatprep.mubr.f32.mxu0 0.0
        %4453 = vmatmul.mubr.f32.gmra.mrb[0].mxu0 %v4377
        %v4454 = vpop.f32.mrb[0].mxu0
        %v4455 = vadd.f32 %v4373, %v4454
        %v4456 = vpop.f32.mrb[0].mxu0
        %4457 = vmatprep.mubr.f32.mxu0 0.0
        %4458 = vmatmul.mubr.f32.gmra.mrb[0].mxu0 %v4380
        %v4459 = vpop.f32.mrb[0].mxu0
        %v4460 = vadd.f32 %v4373, %v4459
        %v4461 = vpop.f32.mrb[0].mxu0
        %4462 = vmatprep.mubr.f32.mxu0 0.0
        %4463 = vmatmul.mubr.f32.gmra.mrb[0].mxu0 %v4383
        %v4464 = vpop.f32.mrb[0].mxu0
        %v4465 = vadd.f32 %v4373, %v4464
        %v4466 = vpop.f32.mrb[0].mxu0
        %4467 = vmatprep.mubr.f32.mxu0 0.0
        %4468 = vmatmul.mubr.f32.gmra.mrb[0].mxu0 %v4386
        %v4469 = vpop.f32.mrb[0].mxu0
        %v4470 = vadd.f32 %v4373, %v4469
        %v4471 = vpop.f32.mrb[0].mxu0
        %4472 = vdwg.mxu0
        %v4473 = vadd.f32 %v4455, %v4154
        %v4474 = vadd.f32 %v4460, %v4155
        %v4475 = vadd.f32 %v4465, %v4156
        %v4476 = vadd.f32 %v4470, %v4157
        %s4477 = scalar_lea.vmem [#allocation2], 1
        %v4478 = vld [vmem:[%s4477] sm:$0x1]
        %s4479 = scalar_lea.vmem [#allocation5], 1
        %v4480 = vld [vmem:[%s4479] sm:$0x1]
        %s4481 = scalar_lea.vmem %s5, 32
        %v4482 = vld [vmem:[%s4481] sm:$0xff]
        %v4483 = vld [vmem:[%s4481 + $0x8] sm:$0xff]
        %v4484 = vld [vmem:[%s4481 + $0x10] sm:$0xff]
        %v4485 = vld [vmem:[%s4481 + $0x18] sm:$0xff]
        %s4486 = scalar_lea.vmem %s6, 32
        %v4487 = vld [vmem:[%s4486] sm:$0xff]
        %v4488 = vld [vmem:[%s4486 + $0x8] sm:$0xff]
        %v4489 = vld [vmem:[%s4486 + $0x10] sm:$0xff]
        %v4490 = vld [vmem:[%s4486 + $0x18] sm:$0xff]
        %s4491 = scalar_lea.vmem [#allocation7], 1
        %v4492 = vld [vmem:[%s4491] sm:$0x1]
        %v4493 = vsel %vm834, %v4473, 0.0
        %4494 = vadd.xlane.f32.xlu0 %v4493
        %v4495 = vpop.xlane.xlu0 %4494
        %v4496 = vsel %vm834, %v4474, 0.0
        %4497 = vadd.xlane.f32.xlu0 %v4496
        %v4498 = vpop.xlane.xlu0 %4497
        %v4499 = vsel %vm834, %v4475, 0.0
        %4500 = vadd.xlane.f32.xlu0 %v4499
        %v4501 = vpop.xlane.xlu0 %4500
        %v4502 = vsel %vm834, %v4476, 0.0
        %4503 = vadd.xlane.f32.xlu0 %v4502
        %v4504 = vpop.xlane.xlu0 %4503
        %v4505 = vmul.f32 %v4495, %v847
        %v4506 = vmul.f32 %v4498, %v847
        %v4507 = vmul.f32 %v4501, %v847
        %v4508 = vmul.f32 %v4504, %v847
        %v4509 = vsub.f32 %v4473, %v4505
        %v4510 = vsub.f32 %v4474, %v4506
        %v4511 = vsub.f32 %v4475, %v4507
        %v4512 = vsub.f32 %v4476, %v4508
        %v4513 = vmul.f32 %v4509, %v4509
        %v4514 = vmul.f32 %v4510, %v4510
        %v4515 = vmul.f32 %v4511, %v4511
        %v4516 = vmul.f32 %v4512, %v4512
        %v4517 = vsel %vm834, %v4513, 0.0
        %4518 = vadd.xlane.f32.xlu0 %v4517
        %v4519 = vpop.xlane.xlu0 %4518
        %v4520 = vsel %vm834, %v4514, 0.0
        %4521 = vadd.xlane.f32.xlu0 %v4520
        %v4522 = vpop.xlane.xlu0 %4521
        %v4523 = vsel %vm834, %v4515, 0.0
        %4524 = vadd.xlane.f32.xlu0 %v4523
        %v4525 = vpop.xlane.xlu0 %4524
        %v4526 = vsel %vm834, %v4516, 0.0
        %4527 = vadd.xlane.f32.xlu0 %v4526
        %v4528 = vpop.xlane.xlu0 %4527
        %v4529 = vmul.f32 %v4519, %v847
        %v4530 = vmul.f32 %v4522, %v847
        %v4531 = vmul.f32 %v4525, %v847
        %v4532 = vmul.f32 %v4528, %v847
        %v4533 = vadd.f32 %v4529, 1e-05
        %v4534 = vadd.f32 %v4530, 1e-05
        %v4535 = vadd.f32 %v4531, 1e-05
        %v4536 = vadd.f32 %v4532, 1e-05
        %v4537 = vrsqrt.pop %v4533
        %v4538 = vrsqrt.pop %v4534
        %v4539 = vrsqrt.pop %v4535
        %v4540 = vrsqrt.pop %v4536
        %v4541 = vmul.f32 %v4509, %v4537
        %v4542 = vmul.f32 %v4510, %v4538
        %v4543 = vmul.f32 %v4511, %v4539
        %v4544 = vmul.f32 %v4512, %v4540
        %v4546 = vlaneseq
        %v4547 = vshrl.u32 %v4546, 7
        %v4548 = vsub.s32 0, %v4547
        %v4549 = vrot.slane %v4478, %v4548
        %v4551 = vmul.f32 %v4541, %v4549
        %v4552 = vmul.f32 %v4542, %v4549
        %v4553 = vmul.f32 %v4543, %v4549
        %v4554 = vmul.f32 %v4544, %v4549
        %v4556 = vlaneseq
        %v4557 = vshrl.u32 %v4556, 7
        %v4558 = vsub.s32 0, %v4557
        %v4559 = vrot.slane %v4480, %v4558
        %v4561 = vadd.f32 %v4551, %v4559
        %v4562 = vadd.f32 %v4552, %v4559
        %v4563 = vadd.f32 %v4553, %v4559
        %v4564 = vadd.f32 %v4554, %v4559
        %v4566 = vsel %vm834, %v4561, 0
        %v4569 = vsel %vm834, %v4562, 0
        %v4572 = vsel %vm834, %v4563, 0
        %v4575 = vsel %vm834, %v4564, 0
        %4577 = vmatprep.subr.mxu0 0.0
        %4578 = vmatpush1.msra.mxu0 %v4482
        %4579 = vmatprep.subr.mxu0 0.0
        %4580 = vmatpush1.msra.mxu0 %v4483
        %4581 = vmatprep.subr.mxu0 0.0
        %4582 = vmatpush1.msra.mxu0 %v4484
        %4583 = vmatprep.subr.mxu0 0.0
        %4584 = vmatpush1.msra.mxu0 %v4485
        %4585 = vmatprep.subr.mxu0 0.0
        %4586 = vmatpush1.msra.mxu0 0.0
        %4587 = vmatprep.subr.mxu0 0.0
        %4588 = vmatpush1.msra.mxu0 0.0
        %4589 = vmatprep.subr.mxu0 0.0
        %4590 = vmatpush1.msra.mxu0 0.0
        %4591 = vmatprep.subr.mxu0 0.0
        %4592 = vmatpush1.msra.mxu0 0.0
        %4593 = vmatprep.subr.mxu0 0.0
        %4594 = vmatpush1.msra.mxu0 0.0
        %4595 = vmatprep.subr.mxu0 0.0
        %4596 = vmatpush1.msra.mxu0 0.0
        %4597 = vmatprep.subr.mxu0 0.0
        %4598 = vmatpush1.msra.mxu0 0.0
        %4599 = vmatprep.subr.mxu0 0.0
        %4600 = vmatpush1.msra.mxu0 0.0
        %4601 = vmatprep.subr.mxu0 0.0
        %4602 = vmatpush1.msra.mxu0 0.0
        %4603 = vmatprep.subr.mxu0 0.0
        %4604 = vmatpush1.msra.mxu0 0.0
        %4605 = vmatprep.subr.mxu0 0.0
        %4606 = vmatpush1.msra.mxu0 0.0
        %4607 = vmatprep.subr.mxu0 0.0
        %4608 = vmatpush1.msra.mxu0 0.0
        %4609 = vmatprep.subr.mxu0 0.0
        %4610 = vmatpush1.msra.mxu0 0.0
        %4611 = vmatprep.subr.mxu0 0.0
        %4612 = vmatpush1.msra.mxu0 0.0
        %4613 = vmatprep.subr.mxu0 0.0
        %4614 = vmatpush1.msra.mxu0 0.0
        %4615 = vmatprep.subr.mxu0 0.0
        %4616 = vmatpush1.msra.mxu0 0.0
        %4617 = vmatprep.subr.mxu0 0.0
        %4618 = vmatpush1.msra.mxu0 0.0
        %4619 = vmatprep.subr.mxu0 0.0
        %4620 = vmatpush1.msra.mxu0 0.0
        %4621 = vmatprep.subr.mxu0 0.0
        %4622 = vmatpush1.msra.mxu0 0.0
        %4623 = vmatprep.subr.mxu0 0.0
        %4624 = vmatpush1.msra.mxu0 0.0
        %4625 = vmatprep.subr.mxu0 0.0
        %4626 = vmatpush1.msra.mxu0 0.0
        %4627 = vmatprep.subr.mxu0 0.0
        %4628 = vmatpush1.msra.mxu0 0.0
        %4629 = vmatprep.subr.mxu0 0.0
        %4630 = vmatpush1.msra.mxu0 0.0
        %4631 = vmatprep.subr.mxu0 0.0
        %4632 = vmatpush1.msra.mxu0 0.0
        %4633 = vmatprep.subr.mxu0 0.0
        %4634 = vmatpush1.msra.mxu0 0.0
        %4635 = vmatprep.subr.mxu0 0.0
        %4636 = vmatpush1.msra.mxu0 0.0
        %4637 = vmatprep.subr.mxu0 0.0
        %4638 = vmatpush1.msra.mxu0 0.0
        %4639 = vmatprep.subr.mxu0 0.0
        %4640 = vmatpush1.msra.mxu0 0.0
        %4641 = vmatprep.mubr.f32.mxu0 0.0
        %4642 = vmatmul.mubr.f32.gmra.mrb[0].mxu0 %v4566
        %v4643 = vpop.f32.mrb[0].mxu0
        %v4644 = vadd.f32 0.0, %v4643
        %v4645 = vpop.f32.mrb[0].mxu0
        %4646 = vmatprep.mubr.f32.mxu0 0.0
        %4647 = vmatmul.mubr.f32.gmra.mrb[0].mxu0 %v4569
        %v4648 = vpop.f32.mrb[0].mxu0
        %v4649 = vadd.f32 0.0, %v4648
        %v4650 = vpop.f32.mrb[0].mxu0
        %4651 = vmatprep.mubr.f32.mxu0 0.0
        %4652 = vmatmul.mubr.f32.gmra.mrb[0].mxu0 %v4572
        %v4653 = vpop.f32.mrb[0].mxu0
        %v4654 = vadd.f32 0.0, %v4653
        %v4655 = vpop.f32.mrb[0].mxu0
        %4656 = vmatprep.mubr.f32.mxu0 0.0
        %4657 = vmatmul.mubr.f32.gmra.mrb[0].mxu0 %v4575
        %v4658 = vpop.f32.mrb[0].mxu0
        %v4659 = vadd.f32 0.0, %v4658
        %v4660 = vpop.f32.mrb[0].mxu0
        %4661 = vdwg.mxu0
        %4666 = vrot.lane.b32.xlu0 %v4644, 96
        %v4667 = vpop.permute.xlu0 %4666
        %4668 = vrot.lane.b32.xlu0 %v4649, 96
        %v4669 = vpop.permute.xlu0 %4668
        %4670 = vrot.lane.b32.xlu0 %v4654, 96
        %v4671 = vpop.permute.xlu0 %4670
        %4672 = vrot.lane.b32.xlu0 %v4659, 96
        %v4673 = vpop.permute.xlu0 %4672
        %v4674 = vsel %vm1017, %v4644, 0
        %v4676 = vsel %vm1017, %v4649, 0
        %v4678 = vsel %vm1017, %v4654, 0
        %v4680 = vsel %vm1017, %v4659, 0
        %v4682 = vsel %vm1017, %v4667, 0
        %v4684 = vsel %vm1017, %v4669, 0
        %v4686 = vsel %vm1017, %v4671, 0
        %v4688 = vsel %vm1017, %v4673, 0
        %4690 = vmatprep.subr.mxu0 0.0
        %4691 = vmatpush1.xpose.msra.mxu0 %v4682
        %4692 = vmatprep.subr.mxu0 0.0
        %4693 = vmatpush1.xpose.msra.mxu0 %v4684
        %4694 = vmatprep.subr.mxu0 0.0
        %4695 = vmatpush1.xpose.msra.mxu0 %v4686
        %4696 = vmatprep.subr.mxu0 0.0
        %4697 = vmatpush1.xpose.msra.mxu0 %v4688
        %4698 = vmatprep.subr.mxu0 0.0
        %4699 = vmatpush1.xpose.msra.mxu0 0.0
        %4700 = vmatprep.subr.mxu0 0.0
        %4701 = vmatpush1.xpose.msra.mxu0 0.0
        %4702 = vmatprep.subr.mxu0 0.0
        %4703 = vmatpush1.xpose.msra.mxu0 0.0
        %4704 = vmatprep.subr.mxu0 0.0
        %4705 = vmatpush1.xpose.msra.mxu0 0.0
        %4706 = vmatprep.subr.mxu0 0.0
        %4707 = vmatpush1.xpose.msra.mxu0 0.0
        %4708 = vmatprep.subr.mxu0 0.0
        %4709 = vmatpush1.xpose.msra.mxu0 0.0
        %4710 = vmatprep.subr.mxu0 0.0
        %4711 = vmatpush1.xpose.msra.mxu0 0.0
        %4712 = vmatprep.subr.mxu0 0.0
        %4713 = vmatpush1.xpose.msra.mxu0 0.0
        %4714 = vmatprep.subr.mxu0 0.0
        %4715 = vmatpush1.xpose.msra.mxu0 0.0
        %4716 = vmatprep.subr.mxu0 0.0
        %4717 = vmatpush1.xpose.msra.mxu0 0.0
        %4718 = vmatprep.subr.mxu0 0.0
        %4719 = vmatpush1.xpose.msra.mxu0 0.0
        %4720 = vmatprep.subr.mxu0 0.0
        %4721 = vmatpush1.xpose.msra.mxu0 0.0
        %4722 = vmatprep.subr.mxu0 0.0
        %4723 = vmatpush1.xpose.msra.mxu0 0.0
        %4724 = vmatprep.subr.mxu0 0.0
        %4725 = vmatpush1.xpose.msra.mxu0 0.0
        %4726 = vmatprep.subr.mxu0 0.0
        %4727 = vmatpush1.xpose.msra.mxu0 0.0
        %4728 = vmatprep.subr.mxu0 0.0
        %4729 = vmatpush1.xpose.msra.mxu0 0.0
        %4730 = vmatprep.subr.mxu0 0.0
        %4731 = vmatpush1.xpose.msra.mxu0 0.0
        %4732 = vmatprep.subr.mxu0 0.0
        %4733 = vmatpush1.xpose.msra.mxu0 0.0
        %4734 = vmatprep.subr.mxu0 0.0
        %4735 = vmatpush1.xpose.msra.mxu0 0.0
        %4736 = vmatprep.subr.mxu0 0.0
        %4737 = vmatpush1.xpose.msra.mxu0 0.0
        %4738 = vmatprep.subr.mxu0 0.0
        %4739 = vmatpush1.xpose.msra.mxu0 0.0
        %4740 = vmatprep.subr.mxu0 0.0
        %4741 = vmatpush1.xpose.msra.mxu0 0.0
        %4742 = vmatprep.subr.mxu0 0.0
        %4743 = vmatpush1.xpose.msra.mxu0 0.0
        %4744 = vmatprep.subr.mxu0 0.0
        %4745 = vmatpush1.xpose.msra.mxu0 0.0
        %4746 = vmatprep.subr.mxu0 0.0
        %4747 = vmatpush1.xpose.msra.mxu0 0.0
        %4748 = vmatprep.subr.mxu0 0.0
        %4749 = vmatpush1.xpose.msra.mxu0 0.0
        %4750 = vmatprep.subr.mxu0 0.0
        %4751 = vmatpush1.xpose.msra.mxu0 0.0
        %4752 = vmatprep.subr.mxu0 0.0
        %4753 = vmatpush1.xpose.msra.mxu0 0.0
        %4754 = vmatprep.mubr.f32.mxu0 0.0
        %4755 = vmatmul.mubr.f32.gmra.mrb[0].mxu0 %v4674
        %v4756 = vpop.f32.mrb[0].mxu0
        %v4757 = vadd.f32 %v815, %v4756
        %v4758 = vpop.f32.mrb[0].mxu0
        %4759 = vmatprep.mubr.f32.mxu0 0.0
        %4760 = vmatmul.mubr.f32.gmra.mrb[0].mxu0 %v4676
        %v4761 = vpop.f32.mrb[0].mxu0
        %v4762 = vadd.f32 %v816, %v4761
        %v4763 = vpop.f32.mrb[0].mxu0
        %4764 = vmatprep.mubr.f32.mxu0 0.0
        %4765 = vmatmul.mubr.f32.gmra.mrb[0].mxu0 %v4678
        %v4766 = vpop.f32.mrb[0].mxu0
        %v4767 = vadd.f32 %v817, %v4766
        %v4768 = vpop.f32.mrb[0].mxu0
        %4769 = vmatprep.mubr.f32.mxu0 0.0
        %4770 = vmatmul.mubr.f32.gmra.mrb[0].mxu0 %v4680
        %v4771 = vpop.f32.mrb[0].mxu0
        %v4772 = vadd.f32 %v818, %v4771
        %v4773 = vpop.f32.mrb[0].mxu0
        %4774 = vdwg.mxu0
        %v4775 = vsel %vm834, %v4757, -inf
        %4776 = vmax.xlane.f32.xlu0 %v4775
        %v4777 = vpop.xlane.xlu0 %4776
        %v4778 = vsel %vm834, %v4762, -inf
        %4779 = vmax.xlane.f32.xlu0 %v4778
        %v4780 = vpop.xlane.xlu0 %4779
        %v4781 = vsel %vm834, %v4767, -inf
        %4782 = vmax.xlane.f32.xlu0 %v4781
        %v4783 = vpop.xlane.xlu0 %4782
        %v4784 = vsel %vm834, %v4772, -inf
        %4785 = vmax.xlane.f32.xlu0 %v4784
        %v4786 = vpop.xlane.xlu0 %4785
        %v4787 = vsub.f32 %v4757, %v4777
        %v4788 = vsub.f32 %v4762, %v4780
        %v4789 = vsub.f32 %v4767, %v4783
        %v4790 = vsub.f32 %v4772, %v4786
        %v4791 = vmul.f32 %v4787, 1.442695
        %v4792 = vpow.pop %v4791
        %v4793 = vmul.f32 %v4788, 1.442695
        %v4794 = vpow.pop %v4793
        %v4795 = vmul.f32 %v4789, 1.442695
        %v4796 = vpow.pop %v4795
        %v4797 = vmul.f32 %v4790, 1.442695
        %v4798 = vpow.pop %v4797
        %v4799 = vsel %vm834, %v4792, 0.0
        %4800 = vadd.xlane.f32.xlu0 %v4799
        %v4801 = vpop.xlane.xlu0 %4800
        %v4802 = vsel %vm834, %v4794, 0.0
        %4803 = vadd.xlane.f32.xlu0 %v4802
        %v4804 = vpop.xlane.xlu0 %4803
        %v4805 = vsel %vm834, %v4796, 0.0
        %4806 = vadd.xlane.f32.xlu0 %v4805
        %v4807 = vpop.xlane.xlu0 %4806
        %v4808 = vsel %vm834, %v4798, 0.0
        %4809 = vadd.xlane.f32.xlu0 %v4808
        %v4810 = vpop.xlane.xlu0 %4809
        %v4811 = vrcp.pop %v4801
        %v4812 = vrcp.pop %v4804
        %v4813 = vrcp.pop %v4807
        %v4814 = vrcp.pop %v4810
        %v4815 = vmul.f32 %v4792, %v4811
        %v4816 = vmul.f32 %v4794, %v4812
        %v4817 = vmul.f32 %v4796, %v4813
        %v4818 = vmul.f32 %v4798, %v4814
        %4819 = vrot.lane.b32.xlu0 %v4644, 64
        %v4820 = vpop.permute.xlu0 %4819
        %4821 = vrot.lane.b32.xlu0 %v4649, 64
        %v4822 = vpop.permute.xlu0 %4821
        %4823 = vrot.lane.b32.xlu0 %v4654, 64
        %v4824 = vpop.permute.xlu0 %4823
        %4825 = vrot.lane.b32.xlu0 %v4659, 64
        %v4826 = vpop.permute.xlu0 %4825
        %v4832 = vsel %vm834, %v4815, 0
        %v4835 = vsel %vm834, %v4816, 0
        %v4838 = vsel %vm834, %v4817, 0
        %v4841 = vsel %vm834, %v4818, 0
        %4843 = vmatprep.subr.mxu0 0.0
        %4844 = vmatpush1.msra.mxu0 %v4820
        %4845 = vmatprep.subr.mxu0 0.0
        %4846 = vmatpush1.msra.mxu0 %v4822
        %4847 = vmatprep.subr.mxu0 0.0
        %4848 = vmatpush1.msra.mxu0 %v4824
        %4849 = vmatprep.subr.mxu0 0.0
        %4850 = vmatpush1.msra.mxu0 %v4826
        %4851 = vmatprep.subr.mxu0 0.0
        %4852 = vmatpush1.msra.mxu0 0.0
        %4853 = vmatprep.subr.mxu0 0.0
        %4854 = vmatpush1.msra.mxu0 0.0
        %4855 = vmatprep.subr.mxu0 0.0
        %4856 = vmatpush1.msra.mxu0 0.0
        %4857 = vmatprep.subr.mxu0 0.0
        %4858 = vmatpush1.msra.mxu0 0.0
        %4859 = vmatprep.subr.mxu0 0.0
        %4860 = vmatpush1.msra.mxu0 0.0
        %4861 = vmatprep.subr.mxu0 0.0
        %4862 = vmatpush1.msra.mxu0 0.0
        %4863 = vmatprep.subr.mxu0 0.0
        %4864 = vmatpush1.msra.mxu0 0.0
        %4865 = vmatprep.subr.mxu0 0.0
        %4866 = vmatpush1.msra.mxu0 0.0
        %4867 = vmatprep.subr.mxu0 0.0
        %4868 = vmatpush1.msra.mxu0 0.0
        %4869 = vmatprep.subr.mxu0 0.0
        %4870 = vmatpush1.msra.mxu0 0.0
        %4871 = vmatprep.subr.mxu0 0.0
        %4872 = vmatpush1.msra.mxu0 0.0
        %4873 = vmatprep.subr.mxu0 0.0
        %4874 = vmatpush1.msra.mxu0 0.0
        %4875 = vmatprep.subr.mxu0 0.0
        %4876 = vmatpush1.msra.mxu0 0.0
        %4877 = vmatprep.subr.mxu0 0.0
        %4878 = vmatpush1.msra.mxu0 0.0
        %4879 = vmatprep.subr.mxu0 0.0
        %4880 = vmatpush1.msra.mxu0 0.0
        %4881 = vmatprep.subr.mxu0 0.0
        %4882 = vmatpush1.msra.mxu0 0.0
        %4883 = vmatprep.subr.mxu0 0.0
        %4884 = vmatpush1.msra.mxu0 0.0
        %4885 = vmatprep.subr.mxu0 0.0
        %4886 = vmatpush1.msra.mxu0 0.0
        %4887 = vmatprep.subr.mxu0 0.0
        %4888 = vmatpush1.msra.mxu0 0.0
        %4889 = vmatprep.subr.mxu0 0.0
        %4890 = vmatpush1.msra.mxu0 0.0
        %4891 = vmatprep.subr.mxu0 0.0
        %4892 = vmatpush1.msra.mxu0 0.0
        %4893 = vmatprep.subr.mxu0 0.0
        %4894 = vmatpush1.msra.mxu0 0.0
        %4895 = vmatprep.subr.mxu0 0.0
        %4896 = vmatpush1.msra.mxu0 0.0
        %4897 = vmatprep.subr.mxu0 0.0
        %4898 = vmatpush1.msra.mxu0 0.0
        %4899 = vmatprep.subr.mxu0 0.0
        %4900 = vmatpush1.msra.mxu0 0.0
        %4901 = vmatprep.subr.mxu0 0.0
        %4902 = vmatpush1.msra.mxu0 0.0
        %4903 = vmatprep.subr.mxu0 0.0
        %4904 = vmatpush1.msra.mxu0 0.0
        %4905 = vmatprep.subr.mxu0 0.0
        %4906 = vmatpush1.msra.mxu0 0.0
        %4907 = vmatprep.mubr.f32.mxu0 0.0
        %4908 = vmatmul.mubr.f32.gmra.mrb[0].mxu0 %v4832
        %v4909 = vpop.f32.mrb[0].mxu0
        %v4910 = vadd.f32 0.0, %v4909
        %v4911 = vpop.f32.mrb[0].mxu0
        %4912 = vmatprep.mubr.f32.mxu0 0.0
        %4913 = vmatmul.mubr.f32.gmra.mrb[0].mxu0 %v4835
        %v4914 = vpop.f32.mrb[0].mxu0
        %v4915 = vadd.f32 0.0, %v4914
        %v4916 = vpop.f32.mrb[0].mxu0
        %4917 = vmatprep.mubr.f32.mxu0 0.0
        %4918 = vmatmul.mubr.f32.gmra.mrb[0].mxu0 %v4838
        %v4919 = vpop.f32.mrb[0].mxu0
        %v4920 = vadd.f32 0.0, %v4919
        %v4921 = vpop.f32.mrb[0].mxu0
        %4922 = vmatprep.mubr.f32.mxu0 0.0
        %4923 = vmatmul.mubr.f32.gmra.mrb[0].mxu0 %v4841
        %v4924 = vpop.f32.mrb[0].mxu0
        %v4925 = vadd.f32 0.0, %v4924
        %v4926 = vpop.f32.mrb[0].mxu0
        %4927 = vdwg.mxu0
        %4928 = vrot.lane.b32.xlu0 %v4644, 120
        %v4929 = vpop.permute.xlu0 %4928
        %4930 = vrot.lane.b32.xlu0 %v4649, 120
        %v4931 = vpop.permute.xlu0 %4930
        %4932 = vrot.lane.b32.xlu0 %v4654, 120
        %v4933 = vpop.permute.xlu0 %4932
        %4934 = vrot.lane.b32.xlu0 %v4659, 120
        %v4935 = vpop.permute.xlu0 %4934
        %4936 = vrot.lane.b32.xlu0 %v4644, 88
        %v4937 = vpop.permute.xlu0 %4936
        %4938 = vrot.lane.b32.xlu0 %v4649, 88
        %v4939 = vpop.permute.xlu0 %4938
        %4940 = vrot.lane.b32.xlu0 %v4654, 88
        %v4941 = vpop.permute.xlu0 %4940
        %4942 = vrot.lane.b32.xlu0 %v4659, 88
        %v4943 = vpop.permute.xlu0 %4942
        %v4944 = vsel %vm1017, %v4929, 0
        %v4946 = vsel %vm1017, %v4931, 0
        %v4948 = vsel %vm1017, %v4933, 0
        %v4950 = vsel %vm1017, %v4935, 0
        %v4952 = vsel %vm1017, %v4937, 0
        %v4954 = vsel %vm1017, %v4939, 0
        %v4956 = vsel %vm1017, %v4941, 0
        %v4958 = vsel %vm1017, %v4943, 0
        %4960 = vmatprep.subr.mxu0 0.0
        %4961 = vmatpush1.xpose.msra.mxu0 %v4952
        %4962 = vmatprep.subr.mxu0 0.0
        %4963 = vmatpush1.xpose.msra.mxu0 %v4954
        %4964 = vmatprep.subr.mxu0 0.0
        %4965 = vmatpush1.xpose.msra.mxu0 %v4956
        %4966 = vmatprep.subr.mxu0 0.0
        %4967 = vmatpush1.xpose.msra.mxu0 %v4958
        %4968 = vmatprep.subr.mxu0 0.0
        %4969 = vmatpush1.xpose.msra.mxu0 0.0
        %4970 = vmatprep.subr.mxu0 0.0
        %4971 = vmatpush1.xpose.msra.mxu0 0.0
        %4972 = vmatprep.subr.mxu0 0.0
        %4973 = vmatpush1.xpose.msra.mxu0 0.0
        %4974 = vmatprep.subr.mxu0 0.0
        %4975 = vmatpush1.xpose.msra.mxu0 0.0
        %4976 = vmatprep.subr.mxu0 0.0
        %4977 = vmatpush1.xpose.msra.mxu0 0.0
        %4978 = vmatprep.subr.mxu0 0.0
        %4979 = vmatpush1.xpose.msra.mxu0 0.0
        %4980 = vmatprep.subr.mxu0 0.0
        %4981 = vmatpush1.xpose.msra.mxu0 0.0
        %4982 = vmatprep.subr.mxu0 0.0
        %4983 = vmatpush1.xpose.msra.mxu0 0.0
        %4984 = vmatprep.subr.mxu0 0.0
        %4985 = vmatpush1.xpose.msra.mxu0 0.0
        %4986 = vmatprep.subr.mxu0 0.0
        %4987 = vmatpush1.xpose.msra.mxu0 0.0
        %4988 = vmatprep.subr.mxu0 0.0
        %4989 = vmatpush1.xpose.msra.mxu0 0.0
        %4990 = vmatprep.subr.mxu0 0.0
        %4991 = vmatpush1.xpose.msra.mxu0 0.0
        %4992 = vmatprep.subr.mxu0 0.0
        %4993 = vmatpush1.xpose.msra.mxu0 0.0
        %4994 = vmatprep.subr.mxu0 0.0
        %4995 = vmatpush1.xpose.msra.mxu0 0.0
        %4996 = vmatprep.subr.mxu0 0.0
        %4997 = vmatpush1.xpose.msra.mxu0 0.0
        %4998 = vmatprep.subr.mxu0 0.0
        %4999 = vmatpush1.xpose.msra.mxu0 0.0
        %5000 = vmatprep.subr.mxu0 0.0
        %5001 = vmatpush1.xpose.msra.mxu0 0.0
        %5002 = vmatprep.subr.mxu0 0.0
        %5003 = vmatpush1.xpose.msra.mxu0 0.0
        %5004 = vmatprep.subr.mxu0 0.0
        %5005 = vmatpush1.xpose.msra.mxu0 0.0
        %5006 = vmatprep.subr.mxu0 0.0
        %5007 = vmatpush1.xpose.msra.mxu0 0.0
        %5008 = vmatprep.subr.mxu0 0.0
        %5009 = vmatpush1.xpose.msra.mxu0 0.0
        %5010 = vmatprep.subr.mxu0 0.0
        %5011 = vmatpush1.xpose.msra.mxu0 0.0
        %5012 = vmatprep.subr.mxu0 0.0
        %5013 = vmatpush1.xpose.msra.mxu0 0.0
        %5014 = vmatprep.subr.mxu0 0.0
        %5015 = vmatpush1.xpose.msra.mxu0 0.0
        %5016 = vmatprep.subr.mxu0 0.0
        %5017 = vmatpush1.xpose.msra.mxu0 0.0
        %5018 = vmatprep.subr.mxu0 0.0
        %5019 = vmatpush1.xpose.msra.mxu0 0.0
        %5020 = vmatprep.subr.mxu0 0.0
        %5021 = vmatpush1.xpose.msra.mxu0 0.0
        %5022 = vmatprep.subr.mxu0 0.0
        %5023 = vmatpush1.xpose.msra.mxu0 0.0
        %5024 = vmatprep.mubr.f32.mxu0 0.0
        %5025 = vmatmul.mubr.f32.gmra.mrb[0].mxu0 %v4944
        %v5026 = vpop.f32.mrb[0].mxu0
        %v5027 = vadd.f32 %v815, %v5026
        %v5028 = vpop.f32.mrb[0].mxu0
        %5029 = vmatprep.mubr.f32.mxu0 0.0
        %5030 = vmatmul.mubr.f32.gmra.mrb[0].mxu0 %v4946
        %v5031 = vpop.f32.mrb[0].mxu0
        %v5032 = vadd.f32 %v816, %v5031
        %v5033 = vpop.f32.mrb[0].mxu0
        %5034 = vmatprep.mubr.f32.mxu0 0.0
        %5035 = vmatmul.mubr.f32.gmra.mrb[0].mxu0 %v4948
        %v5036 = vpop.f32.mrb[0].mxu0
        %v5037 = vadd.f32 %v817, %v5036
        %v5038 = vpop.f32.mrb[0].mxu0
        %5039 = vmatprep.mubr.f32.mxu0 0.0
        %5040 = vmatmul.mubr.f32.gmra.mrb[0].mxu0 %v4950
        %v5041 = vpop.f32.mrb[0].mxu0
        %v5042 = vadd.f32 %v818, %v5041
        %v5043 = vpop.f32.mrb[0].mxu0
        %5044 = vdwg.mxu0
        %v5045 = vsel %vm834, %v5027, -inf
        %5046 = vmax.xlane.f32.xlu0 %v5045
        %v5047 = vpop.xlane.xlu0 %5046
        %v5048 = vsel %vm834, %v5032, -inf
        %5049 = vmax.xlane.f32.xlu0 %v5048
        %v5050 = vpop.xlane.xlu0 %5049
        %v5051 = vsel %vm834, %v5037, -inf
        %5052 = vmax.xlane.f32.xlu0 %v5051
        %v5053 = vpop.xlane.xlu0 %5052
        %v5054 = vsel %vm834, %v5042, -inf
        %5055 = vmax.xlane.f32.xlu0 %v5054
        %v5056 = vpop.xlane.xlu0 %5055
        %v5057 = vsub.f32 %v5027, %v5047
        %v5058 = vsub.f32 %v5032, %v5050
        %v5059 = vsub.f32 %v5037, %v5053
        %v5060 = vsub.f32 %v5042, %v5056
        %v5061 = vmul.f32 %v5057, 1.442695
        %v5062 = vpow.pop %v5061
        %v5063 = vmul.f32 %v5058, 1.442695
        %v5064 = vpow.pop %v5063
        %v5065 = vmul.f32 %v5059, 1.442695
        %v5066 = vpow.pop %v5065
        %v5067 = vmul.f32 %v5060, 1.442695
        %v5068 = vpow.pop %v5067
        %v5069 = vsel %vm834, %v5062, 0.0
        %5070 = vadd.xlane.f32.xlu0 %v5069
        %v5071 = vpop.xlane.xlu0 %5070
        %v5072 = vsel %vm834, %v5064, 0.0
        %5073 = vadd.xlane.f32.xlu0 %v5072
        %v5074 = vpop.xlane.xlu0 %5073
        %v5075 = vsel %vm834, %v5066, 0.0
        %5076 = vadd.xlane.f32.xlu0 %v5075
        %v5077 = vpop.xlane.xlu0 %5076
        %v5078 = vsel %vm834, %v5068, 0.0
        %5079 = vadd.xlane.f32.xlu0 %v5078
        %v5080 = vpop.xlane.xlu0 %5079
        %v5081 = vrcp.pop %v5071
        %v5082 = vrcp.pop %v5074
        %v5083 = vrcp.pop %v5077
        %v5084 = vrcp.pop %v5080
        %v5085 = vmul.f32 %v5062, %v5081
        %v5086 = vmul.f32 %v5064, %v5082
        %v5087 = vmul.f32 %v5066, %v5083
        %v5088 = vmul.f32 %v5068, %v5084
        %5089 = vrot.lane.b32.xlu0 %v4644, 56
        %v5090 = vpop.permute.xlu0 %5089
        %5091 = vrot.lane.b32.xlu0 %v4649, 56
        %v5092 = vpop.permute.xlu0 %5091
        %5093 = vrot.lane.b32.xlu0 %v4654, 56
        %v5094 = vpop.permute.xlu0 %5093
        %5095 = vrot.lane.b32.xlu0 %v4659, 56
        %v5096 = vpop.permute.xlu0 %5095
        %v5102 = vsel %vm834, %v5085, 0
        %v5105 = vsel %vm834, %v5086, 0
        %v5108 = vsel %vm834, %v5087, 0
        %v5111 = vsel %vm834, %v5088, 0
        %5113 = vmatprep.subr.mxu0 0.0
        %5114 = vmatpush1.msra.mxu0 %v5090
        %5115 = vmatprep.subr.mxu0 0.0
        %5116 = vmatpush1.msra.mxu0 %v5092
        %5117 = vmatprep.subr.mxu0 0.0
        %5118 = vmatpush1.msra.mxu0 %v5094
        %5119 = vmatprep.subr.mxu0 0.0
        %5120 = vmatpush1.msra.mxu0 %v5096
        %5121 = vmatprep.subr.mxu0 0.0
        %5122 = vmatpush1.msra.mxu0 0.0
        %5123 = vmatprep.subr.mxu0 0.0
        %5124 = vmatpush1.msra.mxu0 0.0
        %5125 = vmatprep.subr.mxu0 0.0
        %5126 = vmatpush1.msra.mxu0 0.0
        %5127 = vmatprep.subr.mxu0 0.0
        %5128 = vmatpush1.msra.mxu0 0.0
        %5129 = vmatprep.subr.mxu0 0.0
        %5130 = vmatpush1.msra.mxu0 0.0
        %5131 = vmatprep.subr.mxu0 0.0
        %5132 = vmatpush1.msra.mxu0 0.0
        %5133 = vmatprep.subr.mxu0 0.0
        %5134 = vmatpush1.msra.mxu0 0.0
        %5135 = vmatprep.subr.mxu0 0.0
        %5136 = vmatpush1.msra.mxu0 0.0
        %5137 = vmatprep.subr.mxu0 0.0
        %5138 = vmatpush1.msra.mxu0 0.0
        %5139 = vmatprep.subr.mxu0 0.0
        %5140 = vmatpush1.msra.mxu0 0.0
        %5141 = vmatprep.subr.mxu0 0.0
        %5142 = vmatpush1.msra.mxu0 0.0
        %5143 = vmatprep.subr.mxu0 0.0
        %5144 = vmatpush1.msra.mxu0 0.0
        %5145 = vmatprep.subr.mxu0 0.0
        %5146 = vmatpush1.msra.mxu0 0.0
        %5147 = vmatprep.subr.mxu0 0.0
        %5148 = vmatpush1.msra.mxu0 0.0
        %5149 = vmatprep.subr.mxu0 0.0
        %5150 = vmatpush1.msra.mxu0 0.0
        %5151 = vmatprep.subr.mxu0 0.0
        %5152 = vmatpush1.msra.mxu0 0.0
        %5153 = vmatprep.subr.mxu0 0.0
        %5154 = vmatpush1.msra.mxu0 0.0
        %5155 = vmatprep.subr.mxu0 0.0
        %5156 = vmatpush1.msra.mxu0 0.0
        %5157 = vmatprep.subr.mxu0 0.0
        %5158 = vmatpush1.msra.mxu0 0.0
        %5159 = vmatprep.subr.mxu0 0.0
        %5160 = vmatpush1.msra.mxu0 0.0
        %5161 = vmatprep.subr.mxu0 0.0
        %5162 = vmatpush1.msra.mxu0 0.0
        %5163 = vmatprep.subr.mxu0 0.0
        %5164 = vmatpush1.msra.mxu0 0.0
        %5165 = vmatprep.subr.mxu0 0.0
        %5166 = vmatpush1.msra.mxu0 0.0
        %5167 = vmatprep.subr.mxu0 0.0
        %5168 = vmatpush1.msra.mxu0 0.0
        %5169 = vmatprep.subr.mxu0 0.0
        %5170 = vmatpush1.msra.mxu0 0.0
        %5171 = vmatprep.subr.mxu0 0.0
        %5172 = vmatpush1.msra.mxu0 0.0
        %5173 = vmatprep.subr.mxu0 0.0
        %5174 = vmatpush1.msra.mxu0 0.0
        %5175 = vmatprep.subr.mxu0 0.0
        %5176 = vmatpush1.msra.mxu0 0.0
        %5177 = vmatprep.mubr.f32.mxu0 0.0
        %5178 = vmatmul.mubr.f32.gmra.mrb[0].mxu0 %v5102
        %v5179 = vpop.f32.mrb[0].mxu0
        %v5180 = vadd.f32 0.0, %v5179
        %v5181 = vpop.f32.mrb[0].mxu0
        %5182 = vmatprep.mubr.f32.mxu0 0.0
        %5183 = vmatmul.mubr.f32.gmra.mrb[0].mxu0 %v5105
        %v5184 = vpop.f32.mrb[0].mxu0
        %v5185 = vadd.f32 0.0, %v5184
        %v5186 = vpop.f32.mrb[0].mxu0
        %5187 = vmatprep.mubr.f32.mxu0 0.0
        %5188 = vmatmul.mubr.f32.gmra.mrb[0].mxu0 %v5108
        %v5189 = vpop.f32.mrb[0].mxu0
        %v5190 = vadd.f32 0.0, %v5189
        %v5191 = vpop.f32.mrb[0].mxu0
        %5192 = vmatprep.mubr.f32.mxu0 0.0
        %5193 = vmatmul.mubr.f32.gmra.mrb[0].mxu0 %v5111
        %v5194 = vpop.f32.mrb[0].mxu0
        %v5195 = vadd.f32 0.0, %v5194
        %v5196 = vpop.f32.mrb[0].mxu0
        %5197 = vdwg.mxu0
        %v5199 = vsel %vm1017, %v5180, 0
        %v5202 = vsel %vm1017, %v5185, 0
        %v5205 = vsel %vm1017, %v5190, 0
        %v5208 = vsel %vm1017, %v5195, 0
        %5210 = vmatprep.subr.mxu0 0.0
        %5211 = vmatpush1.msra.mxu0 %v4488
        %5212 = vmatprep.subr.mxu0 0.0
        %5213 = vmatpush1.msra.mxu0 0.0
        %5214 = vmatprep.subr.mxu0 0.0
        %5215 = vmatpush1.msra.mxu0 0.0
        %5216 = vmatprep.subr.mxu0 0.0
        %5217 = vmatpush1.msra.mxu0 0.0
        %5218 = vmatprep.subr.mxu0 0.0
        %5219 = vmatpush1.msra.mxu0 0.0
        %5220 = vmatprep.subr.mxu0 0.0
        %5221 = vmatpush1.msra.mxu0 0.0
        %5222 = vmatprep.subr.mxu0 0.0
        %5223 = vmatpush1.msra.mxu0 0.0
        %5224 = vmatprep.subr.mxu0 0.0
        %5225 = vmatpush1.msra.mxu0 0.0
        %5226 = vmatprep.subr.mxu0 0.0
        %5227 = vmatpush1.msra.mxu0 0.0
        %5228 = vmatprep.subr.mxu0 0.0
        %5229 = vmatpush1.msra.mxu0 0.0
        %5230 = vmatprep.subr.mxu0 0.0
        %5231 = vmatpush1.msra.mxu0 0.0
        %5232 = vmatprep.subr.mxu0 0.0
        %5233 = vmatpush1.msra.mxu0 0.0
        %5234 = vmatprep.subr.mxu0 0.0
        %5235 = vmatpush1.msra.mxu0 0.0
        %5236 = vmatprep.subr.mxu0 0.0
        %5237 = vmatpush1.msra.mxu0 0.0
        %5238 = vmatprep.subr.mxu0 0.0
        %5239 = vmatpush1.msra.mxu0 0.0
        %5240 = vmatprep.subr.mxu0 0.0
        %5241 = vmatpush1.msra.mxu0 0.0
        %5242 = vmatprep.subr.mxu0 0.0
        %5243 = vmatpush1.msra.mxu0 0.0
        %5244 = vmatprep.subr.mxu0 0.0
        %5245 = vmatpush1.msra.mxu0 0.0
        %5246 = vmatprep.subr.mxu0 0.0
        %5247 = vmatpush1.msra.mxu0 0.0
        %5248 = vmatprep.subr.mxu0 0.0
        %5249 = vmatpush1.msra.mxu0 0.0
        %5250 = vmatprep.subr.mxu0 0.0
        %5251 = vmatpush1.msra.mxu0 0.0
        %5252 = vmatprep.subr.mxu0 0.0
        %5253 = vmatpush1.msra.mxu0 0.0
        %5254 = vmatprep.subr.mxu0 0.0
        %5255 = vmatpush1.msra.mxu0 0.0
        %5256 = vmatprep.subr.mxu0 0.0
        %5257 = vmatpush1.msra.mxu0 0.0
        %5258 = vmatprep.subr.mxu0 0.0
        %5259 = vmatpush1.msra.mxu0 0.0
        %5260 = vmatprep.subr.mxu0 0.0
        %5261 = vmatpush1.msra.mxu0 0.0
        %5262 = vmatprep.subr.mxu0 0.0
        %5263 = vmatpush1.msra.mxu0 0.0
        %5264 = vmatprep.subr.mxu0 0.0
        %5265 = vmatpush1.msra.mxu0 0.0
        %5266 = vmatprep.subr.mxu0 0.0
        %5267 = vmatpush1.msra.mxu0 0.0
        %5268 = vmatprep.subr.mxu0 0.0
        %5269 = vmatpush1.msra.mxu0 0.0
        %5270 = vmatprep.subr.mxu0 0.0
        %5271 = vmatpush1.msra.mxu0 0.0
        %5272 = vmatprep.subr.mxu0 0.0
        %5273 = vmatpush1.msra.mxu0 0.0
        %5274 = vmatprep.mubr.f32.mxu0 0.0
        %5275 = vmatmul.mubr.f32.gmra.mrb[0].mxu0 %v5199
        %v5276 = vpop.f32.mrb[0].mxu0
        %v5277 = vadd.f32 0.0, %v5276
        %v5278 = vpop.f32.mrb[0].mxu0
        %5279 = vmatprep.mubr.f32.mxu0 0.0
        %5280 = vmatmul.mubr.f32.gmra.mrb[0].mxu0 %v5202
        %v5281 = vpop.f32.mrb[0].mxu0
        %v5282 = vadd.f32 0.0, %v5281
        %v5283 = vpop.f32.mrb[0].mxu0
        %5284 = vmatprep.mubr.f32.mxu0 0.0
        %5285 = vmatmul.mubr.f32.gmra.mrb[0].mxu0 %v5205
        %v5286 = vpop.f32.mrb[0].mxu0
        %v5287 = vadd.f32 0.0, %v5286
        %v5288 = vpop.f32.mrb[0].mxu0
        %5289 = vmatprep.mubr.f32.mxu0 0.0
        %5290 = vmatmul.mubr.f32.gmra.mrb[0].mxu0 %v5208
        %v5291 = vpop.f32.mrb[0].mxu0
        %v5292 = vadd.f32 0.0, %v5291
        %v5293 = vpop.f32.mrb[0].mxu0
        %5294 = vdwg.mxu0
        %v5296 = vsel %vm1017, %v4910, 0
        %v5299 = vsel %vm1017, %v4915, 0
        %v5302 = vsel %vm1017, %v4920, 0
        %v5305 = vsel %vm1017, %v4925, 0
        %5307 = vmatprep.subr.mxu0 0.0
        %5308 = vmatpush1.msra.mxu0 %v4487
        %5309 = vmatprep.subr.mxu0 0.0
        %5310 = vmatpush1.msra.mxu0 0.0
        %5311 = vmatprep.subr.mxu0 0.0
        %5312 = vmatpush1.msra.mxu0 0.0
        %5313 = vmatprep.subr.mxu0 0.0
        %5314 = vmatpush1.msra.mxu0 0.0
        %5315 = vmatprep.subr.mxu0 0.0
        %5316 = vmatpush1.msra.mxu0 0.0
        %5317 = vmatprep.subr.mxu0 0.0
        %5318 = vmatpush1.msra.mxu0 0.0
        %5319 = vmatprep.subr.mxu0 0.0
        %5320 = vmatpush1.msra.mxu0 0.0
        %5321 = vmatprep.subr.mxu0 0.0
        %5322 = vmatpush1.msra.mxu0 0.0
        %5323 = vmatprep.subr.mxu0 0.0
        %5324 = vmatpush1.msra.mxu0 0.0
        %5325 = vmatprep.subr.mxu0 0.0
        %5326 = vmatpush1.msra.mxu0 0.0
        %5327 = vmatprep.subr.mxu0 0.0
        %5328 = vmatpush1.msra.mxu0 0.0
        %5329 = vmatprep.subr.mxu0 0.0
        %5330 = vmatpush1.msra.mxu0 0.0
        %5331 = vmatprep.subr.mxu0 0.0
        %5332 = vmatpush1.msra.mxu0 0.0
        %5333 = vmatprep.subr.mxu0 0.0
        %5334 = vmatpush1.msra.mxu0 0.0
        %5335 = vmatprep.subr.mxu0 0.0
        %5336 = vmatpush1.msra.mxu0 0.0
        %5337 = vmatprep.subr.mxu0 0.0
        %5338 = vmatpush1.msra.mxu0 0.0
        %5339 = vmatprep.subr.mxu0 0.0
        %5340 = vmatpush1.msra.mxu0 0.0
        %5341 = vmatprep.subr.mxu0 0.0
        %5342 = vmatpush1.msra.mxu0 0.0
        %5343 = vmatprep.subr.mxu0 0.0
        %5344 = vmatpush1.msra.mxu0 0.0
        %5345 = vmatprep.subr.mxu0 0.0
        %5346 = vmatpush1.msra.mxu0 0.0
        %5347 = vmatprep.subr.mxu0 0.0
        %5348 = vmatpush1.msra.mxu0 0.0
        %5349 = vmatprep.subr.mxu0 0.0
        %5350 = vmatpush1.msra.mxu0 0.0
        %5351 = vmatprep.subr.mxu0 0.0
        %5352 = vmatpush1.msra.mxu0 0.0
        %5353 = vmatprep.subr.mxu0 0.0
        %5354 = vmatpush1.msra.mxu0 0.0
        %5355 = vmatprep.subr.mxu0 0.0
        %5356 = vmatpush1.msra.mxu0 0.0
        %5357 = vmatprep.subr.mxu0 0.0
        %5358 = vmatpush1.msra.mxu0 0.0
        %5359 = vmatprep.subr.mxu0 0.0
        %5360 = vmatpush1.msra.mxu0 0.0
        %5361 = vmatprep.subr.mxu0 0.0
        %5362 = vmatpush1.msra.mxu0 0.0
        %5363 = vmatprep.subr.mxu0 0.0
        %5364 = vmatpush1.msra.mxu0 0.0
        %5365 = vmatprep.subr.mxu0 0.0
        %5366 = vmatpush1.msra.mxu0 0.0
        %5367 = vmatprep.subr.mxu0 0.0
        %5368 = vmatpush1.msra.mxu0 0.0
        %5369 = vmatprep.subr.mxu0 0.0
        %5370 = vmatpush1.msra.mxu0 0.0
        %5371 = vmatprep.mubr.f32.mxu0 0.0
        %5372 = vmatmul.mubr.f32.gmra.mrb[0].mxu0 %v5296
        %v5373 = vpop.f32.mrb[0].mxu0
        %v5374 = vadd.f32 %v5277, %v5373
        %v5375 = vpop.f32.mrb[0].mxu0
        %5376 = vmatprep.mubr.f32.mxu0 0.0
        %5377 = vmatmul.mubr.f32.gmra.mrb[0].mxu0 %v5299
        %v5378 = vpop.f32.mrb[0].mxu0
        %v5379 = vadd.f32 %v5282, %v5378
        %v5380 = vpop.f32.mrb[0].mxu0
        %5381 = vmatprep.mubr.f32.mxu0 0.0
        %5382 = vmatmul.mubr.f32.gmra.mrb[0].mxu0 %v5302
        %v5383 = vpop.f32.mrb[0].mxu0
        %v5384 = vadd.f32 %v5287, %v5383
        %v5385 = vpop.f32.mrb[0].mxu0
        %5386 = vmatprep.mubr.f32.mxu0 0.0
        %5387 = vmatmul.mubr.f32.gmra.mrb[0].mxu0 %v5305
        %v5388 = vpop.f32.mrb[0].mxu0
        %v5389 = vadd.f32 %v5292, %v5388
        %v5390 = vpop.f32.mrb[0].mxu0
        %5391 = vdwg.mxu0
        %5392 = vrot.lane.b32.xlu0 %v4644, 112
        %v5393 = vpop.permute.xlu0 %5392
        %5394 = vrot.lane.b32.xlu0 %v4649, 112
        %v5395 = vpop.permute.xlu0 %5394
        %5396 = vrot.lane.b32.xlu0 %v4654, 112
        %v5397 = vpop.permute.xlu0 %5396
        %5398 = vrot.lane.b32.xlu0 %v4659, 112
        %v5399 = vpop.permute.xlu0 %5398
        %5400 = vrot.lane.b32.xlu0 %v4644, 80
        %v5401 = vpop.permute.xlu0 %5400
        %5402 = vrot.lane.b32.xlu0 %v4649, 80
        %v5403 = vpop.permute.xlu0 %5402
        %5404 = vrot.lane.b32.xlu0 %v4654, 80
        %v5405 = vpop.permute.xlu0 %5404
        %5406 = vrot.lane.b32.xlu0 %v4659, 80
        %v5407 = vpop.permute.xlu0 %5406
        %v5408 = vsel %vm1017, %v5393, 0
        %v5410 = vsel %vm1017, %v5395, 0
        %v5412 = vsel %vm1017, %v5397, 0
        %v5414 = vsel %vm1017, %v5399, 0
        %v5416 = vsel %vm1017, %v5401, 0
        %v5418 = vsel %vm1017, %v5403, 0
        %v5420 = vsel %vm1017, %v5405, 0
        %v5422 = vsel %vm1017, %v5407, 0
        %5424 = vmatprep.subr.mxu0 0.0
        %5425 = vmatpush1.xpose.msra.mxu0 %v5416
        %5426 = vmatprep.subr.mxu0 0.0
        %5427 = vmatpush1.xpose.msra.mxu0 %v5418
        %5428 = vmatprep.subr.mxu0 0.0
        %5429 = vmatpush1.xpose.msra.mxu0 %v5420
        %5430 = vmatprep.subr.mxu0 0.0
        %5431 = vmatpush1.xpose.msra.mxu0 %v5422
        %5432 = vmatprep.subr.mxu0 0.0
        %5433 = vmatpush1.xpose.msra.mxu0 0.0
        %5434 = vmatprep.subr.mxu0 0.0
        %5435 = vmatpush1.xpose.msra.mxu0 0.0
        %5436 = vmatprep.subr.mxu0 0.0
        %5437 = vmatpush1.xpose.msra.mxu0 0.0
        %5438 = vmatprep.subr.mxu0 0.0
        %5439 = vmatpush1.xpose.msra.mxu0 0.0
        %5440 = vmatprep.subr.mxu0 0.0
        %5441 = vmatpush1.xpose.msra.mxu0 0.0
        %5442 = vmatprep.subr.mxu0 0.0
        %5443 = vmatpush1.xpose.msra.mxu0 0.0
        %5444 = vmatprep.subr.mxu0 0.0
        %5445 = vmatpush1.xpose.msra.mxu0 0.0
        %5446 = vmatprep.subr.mxu0 0.0
        %5447 = vmatpush1.xpose.msra.mxu0 0.0
        %5448 = vmatprep.subr.mxu0 0.0
        %5449 = vmatpush1.xpose.msra.mxu0 0.0
        %5450 = vmatprep.subr.mxu0 0.0
        %5451 = vmatpush1.xpose.msra.mxu0 0.0
        %5452 = vmatprep.subr.mxu0 0.0
        %5453 = vmatpush1.xpose.msra.mxu0 0.0
        %5454 = vmatprep.subr.mxu0 0.0
        %5455 = vmatpush1.xpose.msra.mxu0 0.0
        %5456 = vmatprep.subr.mxu0 0.0
        %5457 = vmatpush1.xpose.msra.mxu0 0.0
        %5458 = vmatprep.subr.mxu0 0.0
        %5459 = vmatpush1.xpose.msra.mxu0 0.0
        %5460 = vmatprep.subr.mxu0 0.0
        %5461 = vmatpush1.xpose.msra.mxu0 0.0
        %5462 = vmatprep.subr.mxu0 0.0
        %5463 = vmatpush1.xpose.msra.mxu0 0.0
        %5464 = vmatprep.subr.mxu0 0.0
        %5465 = vmatpush1.xpose.msra.mxu0 0.0
        %5466 = vmatprep.subr.mxu0 0.0
        %5467 = vmatpush1.xpose.msra.mxu0 0.0
        %5468 = vmatprep.subr.mxu0 0.0
        %5469 = vmatpush1.xpose.msra.mxu0 0.0
        %5470 = vmatprep.subr.mxu0 0.0
        %5471 = vmatpush1.xpose.msra.mxu0 0.0
        %5472 = vmatprep.subr.mxu0 0.0
        %5473 = vmatpush1.xpose.msra.mxu0 0.0
        %5474 = vmatprep.subr.mxu0 0.0
        %5475 = vmatpush1.xpose.msra.mxu0 0.0
        %5476 = vmatprep.subr.mxu0 0.0
        %5477 = vmatpush1.xpose.msra.mxu0 0.0
        %5478 = vmatprep.subr.mxu0 0.0
        %5479 = vmatpush1.xpose.msra.mxu0 0.0
        %5480 = vmatprep.subr.mxu0 0.0
        %5481 = vmatpush1.xpose.msra.mxu0 0.0
        %5482 = vmatprep.subr.mxu0 0.0
        %5483 = vmatpush1.xpose.msra.mxu0 0.0
        %5484 = vmatprep.subr.mxu0 0.0
        %5485 = vmatpush1.xpose.msra.mxu0 0.0
        %5486 = vmatprep.subr.mxu0 0.0
        %5487 = vmatpush1.xpose.msra.mxu0 0.0
        %5488 = vmatprep.mubr.f32.mxu0 0.0
        %5489 = vmatmul.mubr.f32.gmra.mrb[0].mxu0 %v5408
        %v5490 = vpop.f32.mrb[0].mxu0
        %v5491 = vadd.f32 %v815, %v5490
        %v5492 = vpop.f32.mrb[0].mxu0
        %5493 = vmatprep.mubr.f32.mxu0 0.0
        %5494 = vmatmul.mubr.f32.gmra.mrb[0].mxu0 %v5410
        %v5495 = vpop.f32.mrb[0].mxu0
        %v5496 = vadd.f32 %v816, %v5495
        %v5497 = vpop.f32.mrb[0].mxu0
        %5498 = vmatprep.mubr.f32.mxu0 0.0
        %5499 = vmatmul.mubr.f32.gmra.mrb[0].mxu0 %v5412
        %v5500 = vpop.f32.mrb[0].mxu0
        %v5501 = vadd.f32 %v817, %v5500
        %v5502 = vpop.f32.mrb[0].mxu0
        %5503 = vmatprep.mubr.f32.mxu0 0.0
        %5504 = vmatmul.mubr.f32.gmra.mrb[0].mxu0 %v5414
        %v5505 = vpop.f32.mrb[0].mxu0
        %v5506 = vadd.f32 %v818, %v5505
        %v5507 = vpop.f32.mrb[0].mxu0
        %5508 = vdwg.mxu0
        %v5509 = vsel %vm834, %v5491, -inf
        %5510 = vmax.xlane.f32.xlu0 %v5509
        %v5511 = vpop.xlane.xlu0 %5510
        %v5512 = vsel %vm834, %v5496, -inf
        %5513 = vmax.xlane.f32.xlu0 %v5512
        %v5514 = vpop.xlane.xlu0 %5513
        %v5515 = vsel %vm834, %v5501, -inf
        %5516 = vmax.xlane.f32.xlu0 %v5515
        %v5517 = vpop.xlane.xlu0 %5516
        %v5518 = vsel %vm834, %v5506, -inf
        %5519 = vmax.xlane.f32.xlu0 %v5518
        %v5520 = vpop.xlane.xlu0 %5519
        %v5521 = vsub.f32 %v5491, %v5511
        %v5522 = vsub.f32 %v5496, %v5514
        %v5523 = vsub.f32 %v5501, %v5517
        %v5524 = vsub.f32 %v5506, %v5520
        %v5525 = vmul.f32 %v5521, 1.442695
        %v5526 = vpow.pop %v5525
        %v5527 = vmul.f32 %v5522, 1.442695
        %v5528 = vpow.pop %v5527
        %v5529 = vmul.f32 %v5523, 1.442695
        %v5530 = vpow.pop %v5529
        %v5531 = vmul.f32 %v5524, 1.442695
        %v5532 = vpow.pop %v5531
        %v5533 = vsel %vm834, %v5526, 0.0
        %5534 = vadd.xlane.f32.xlu0 %v5533
        %v5535 = vpop.xlane.xlu0 %5534
        %v5536 = vsel %vm834, %v5528, 0.0
        %5537 = vadd.xlane.f32.xlu0 %v5536
        %v5538 = vpop.xlane.xlu0 %5537
        %v5539 = vsel %vm834, %v5530, 0.0
        %5540 = vadd.xlane.f32.xlu0 %v5539
        %v5541 = vpop.xlane.xlu0 %5540
        %v5542 = vsel %vm834, %v5532, 0.0
        %5543 = vadd.xlane.f32.xlu0 %v5542
        %v5544 = vpop.xlane.xlu0 %5543
        %v5545 = vrcp.pop %v5535
        %v5546 = vrcp.pop %v5538
        %v5547 = vrcp.pop %v5541
        %v5548 = vrcp.pop %v5544
        %v5549 = vmul.f32 %v5526, %v5545
        %v5550 = vmul.f32 %v5528, %v5546
        %v5551 = vmul.f32 %v5530, %v5547
        %v5552 = vmul.f32 %v5532, %v5548
        %5553 = vrot.lane.b32.xlu0 %v4644, 48
        %v5554 = vpop.permute.xlu0 %5553
        %5555 = vrot.lane.b32.xlu0 %v4649, 48
        %v5556 = vpop.permute.xlu0 %5555
        %5557 = vrot.lane.b32.xlu0 %v4654, 48
        %v5558 = vpop.permute.xlu0 %5557
        %5559 = vrot.lane.b32.xlu0 %v4659, 48
        %v5560 = vpop.permute.xlu0 %5559
        %v5566 = vsel %vm834, %v5549, 0
        %v5569 = vsel %vm834, %v5550, 0
        %v5572 = vsel %vm834, %v5551, 0
        %v5575 = vsel %vm834, %v5552, 0
        %5577 = vmatprep.subr.mxu0 0.0
        %5578 = vmatpush1.msra.mxu0 %v5554
        %5579 = vmatprep.subr.mxu0 0.0
        %5580 = vmatpush1.msra.mxu0 %v5556
        %5581 = vmatprep.subr.mxu0 0.0
        %5582 = vmatpush1.msra.mxu0 %v5558
        %5583 = vmatprep.subr.mxu0 0.0
        %5584 = vmatpush1.msra.mxu0 %v5560
        %5585 = vmatprep.subr.mxu0 0.0
        %5586 = vmatpush1.msra.mxu0 0.0
        %5587 = vmatprep.subr.mxu0 0.0
        %5588 = vmatpush1.msra.mxu0 0.0
        %5589 = vmatprep.subr.mxu0 0.0
        %5590 = vmatpush1.msra.mxu0 0.0
        %5591 = vmatprep.subr.mxu0 0.0
        %5592 = vmatpush1.msra.mxu0 0.0
        %5593 = vmatprep.subr.mxu0 0.0
        %5594 = vmatpush1.msra.mxu0 0.0
        %5595 = vmatprep.subr.mxu0 0.0
        %5596 = vmatpush1.msra.mxu0 0.0
        %5597 = vmatprep.subr.mxu0 0.0
        %5598 = vmatpush1.msra.mxu0 0.0
        %5599 = vmatprep.subr.mxu0 0.0
        %5600 = vmatpush1.msra.mxu0 0.0
        %5601 = vmatprep.subr.mxu0 0.0
        %5602 = vmatpush1.msra.mxu0 0.0
        %5603 = vmatprep.subr.mxu0 0.0
        %5604 = vmatpush1.msra.mxu0 0.0
        %5605 = vmatprep.subr.mxu0 0.0
        %5606 = vmatpush1.msra.mxu0 0.0
        %5607 = vmatprep.subr.mxu0 0.0
        %5608 = vmatpush1.msra.mxu0 0.0
        %5609 = vmatprep.subr.mxu0 0.0
        %5610 = vmatpush1.msra.mxu0 0.0
        %5611 = vmatprep.subr.mxu0 0.0
        %5612 = vmatpush1.msra.mxu0 0.0
        %5613 = vmatprep.subr.mxu0 0.0
        %5614 = vmatpush1.msra.mxu0 0.0
        %5615 = vmatprep.subr.mxu0 0.0
        %5616 = vmatpush1.msra.mxu0 0.0
        %5617 = vmatprep.subr.mxu0 0.0
        %5618 = vmatpush1.msra.mxu0 0.0
        %5619 = vmatprep.subr.mxu0 0.0
        %5620 = vmatpush1.msra.mxu0 0.0
        %5621 = vmatprep.subr.mxu0 0.0
        %5622 = vmatpush1.msra.mxu0 0.0
        %5623 = vmatprep.subr.mxu0 0.0
        %5624 = vmatpush1.msra.mxu0 0.0
        %5625 = vmatprep.subr.mxu0 0.0
        %5626 = vmatpush1.msra.mxu0 0.0
        %5627 = vmatprep.subr.mxu0 0.0
        %5628 = vmatpush1.msra.mxu0 0.0
        %5629 = vmatprep.subr.mxu0 0.0
        %5630 = vmatpush1.msra.mxu0 0.0
        %5631 = vmatprep.subr.mxu0 0.0
        %5632 = vmatpush1.msra.mxu0 0.0
        %5633 = vmatprep.subr.mxu0 0.0
        %5634 = vmatpush1.msra.mxu0 0.0
        %5635 = vmatprep.subr.mxu0 0.0
        %5636 = vmatpush1.msra.mxu0 0.0
        %5637 = vmatprep.subr.mxu0 0.0
        %5638 = vmatpush1.msra.mxu0 0.0
        %5639 = vmatprep.subr.mxu0 0.0
        %5640 = vmatpush1.msra.mxu0 0.0
        %5641 = vmatprep.mubr.f32.mxu0 0.0
        %5642 = vmatmul.mubr.f32.gmra.mrb[0].mxu0 %v5566
        %v5643 = vpop.f32.mrb[0].mxu0
        %v5644 = vadd.f32 0.0, %v5643
        %v5645 = vpop.f32.mrb[0].mxu0
        %5646 = vmatprep.mubr.f32.mxu0 0.0
        %5647 = vmatmul.mubr.f32.gmra.mrb[0].mxu0 %v5569
        %v5648 = vpop.f32.mrb[0].mxu0
        %v5649 = vadd.f32 0.0, %v5648
        %v5650 = vpop.f32.mrb[0].mxu0
        %5651 = vmatprep.mubr.f32.mxu0 0.0
        %5652 = vmatmul.mubr.f32.gmra.mrb[0].mxu0 %v5572
        %v5653 = vpop.f32.mrb[0].mxu0
        %v5654 = vadd.f32 0.0, %v5653
        %v5655 = vpop.f32.mrb[0].mxu0
        %5656 = vmatprep.mubr.f32.mxu0 0.0
        %5657 = vmatmul.mubr.f32.gmra.mrb[0].mxu0 %v5575
        %v5658 = vpop.f32.mrb[0].mxu0
        %v5659 = vadd.f32 0.0, %v5658
        %v5660 = vpop.f32.mrb[0].mxu0
        %5661 = vdwg.mxu0
        %v5663 = vsel %vm1017, %v5644, 0
        %v5666 = vsel %vm1017, %v5649, 0
        %v5669 = vsel %vm1017, %v5654, 0
        %v5672 = vsel %vm1017, %v5659, 0
        %5674 = vmatprep.subr.mxu0 0.0
        %5675 = vmatpush1.msra.mxu0 %v4489
        %5676 = vmatprep.subr.mxu0 0.0
        %5677 = vmatpush1.msra.mxu0 0.0
        %5678 = vmatprep.subr.mxu0 0.0
        %5679 = vmatpush1.msra.mxu0 0.0
        %5680 = vmatprep.subr.mxu0 0.0
        %5681 = vmatpush1.msra.mxu0 0.0
        %5682 = vmatprep.subr.mxu0 0.0
        %5683 = vmatpush1.msra.mxu0 0.0
        %5684 = vmatprep.subr.mxu0 0.0
        %5685 = vmatpush1.msra.mxu0 0.0
        %5686 = vmatprep.subr.mxu0 0.0
        %5687 = vmatpush1.msra.mxu0 0.0
        %5688 = vmatprep.subr.mxu0 0.0
        %5689 = vmatpush1.msra.mxu0 0.0
        %5690 = vmatprep.subr.mxu0 0.0
        %5691 = vmatpush1.msra.mxu0 0.0
        %5692 = vmatprep.subr.mxu0 0.0
        %5693 = vmatpush1.msra.mxu0 0.0
        %5694 = vmatprep.subr.mxu0 0.0
        %5695 = vmatpush1.msra.mxu0 0.0
        %5696 = vmatprep.subr.mxu0 0.0
        %5697 = vmatpush1.msra.mxu0 0.0
        %5698 = vmatprep.subr.mxu0 0.0
        %5699 = vmatpush1.msra.mxu0 0.0
        %5700 = vmatprep.subr.mxu0 0.0
        %5701 = vmatpush1.msra.mxu0 0.0
        %5702 = vmatprep.subr.mxu0 0.0
        %5703 = vmatpush1.msra.mxu0 0.0
        %5704 = vmatprep.subr.mxu0 0.0
        %5705 = vmatpush1.msra.mxu0 0.0
        %5706 = vmatprep.subr.mxu0 0.0
        %5707 = vmatpush1.msra.mxu0 0.0
        %5708 = vmatprep.subr.mxu0 0.0
        %5709 = vmatpush1.msra.mxu0 0.0
        %5710 = vmatprep.subr.mxu0 0.0
        %5711 = vmatpush1.msra.mxu0 0.0
        %5712 = vmatprep.subr.mxu0 0.0
        %5713 = vmatpush1.msra.mxu0 0.0
        %5714 = vmatprep.subr.mxu0 0.0
        %5715 = vmatpush1.msra.mxu0 0.0
        %5716 = vmatprep.subr.mxu0 0.0
        %5717 = vmatpush1.msra.mxu0 0.0
        %5718 = vmatprep.subr.mxu0 0.0
        %5719 = vmatpush1.msra.mxu0 0.0
        %5720 = vmatprep.subr.mxu0 0.0
        %5721 = vmatpush1.msra.mxu0 0.0
        %5722 = vmatprep.subr.mxu0 0.0
        %5723 = vmatpush1.msra.mxu0 0.0
        %5724 = vmatprep.subr.mxu0 0.0
        %5725 = vmatpush1.msra.mxu0 0.0
        %5726 = vmatprep.subr.mxu0 0.0
        %5727 = vmatpush1.msra.mxu0 0.0
        %5728 = vmatprep.subr.mxu0 0.0
        %5729 = vmatpush1.msra.mxu0 0.0
        %5730 = vmatprep.subr.mxu0 0.0
        %5731 = vmatpush1.msra.mxu0 0.0
        %5732 = vmatprep.subr.mxu0 0.0
        %5733 = vmatpush1.msra.mxu0 0.0
        %5734 = vmatprep.subr.mxu0 0.0
        %5735 = vmatpush1.msra.mxu0 0.0
        %5736 = vmatprep.subr.mxu0 0.0
        %5737 = vmatpush1.msra.mxu0 0.0
        %5738 = vmatprep.mubr.f32.mxu0 0.0
        %5739 = vmatmul.mubr.f32.gmra.mrb[0].mxu0 %v5663
        %v5740 = vpop.f32.mrb[0].mxu0
        %v5741 = vadd.f32 0.0, %v5740
        %v5742 = vpop.f32.mrb[0].mxu0
        %5743 = vmatprep.mubr.f32.mxu0 0.0
        %5744 = vmatmul.mubr.f32.gmra.mrb[0].mxu0 %v5666
        %v5745 = vpop.f32.mrb[0].mxu0
        %v5746 = vadd.f32 0.0, %v5745
        %v5747 = vpop.f32.mrb[0].mxu0
        %5748 = vmatprep.mubr.f32.mxu0 0.0
        %5749 = vmatmul.mubr.f32.gmra.mrb[0].mxu0 %v5669
        %v5750 = vpop.f32.mrb[0].mxu0
        %v5751 = vadd.f32 0.0, %v5750
        %v5752 = vpop.f32.mrb[0].mxu0
        %5753 = vmatprep.mubr.f32.mxu0 0.0
        %5754 = vmatmul.mubr.f32.gmra.mrb[0].mxu0 %v5672
        %v5755 = vpop.f32.mrb[0].mxu0
        %v5756 = vadd.f32 0.0, %v5755
        %v5757 = vpop.f32.mrb[0].mxu0
        %5758 = vdwg.mxu0
        %v5759 = vadd.f32 %v5374, %v5741
        %v5760 = vadd.f32 %v5379, %v5746
        %v5761 = vadd.f32 %v5384, %v5751
        %v5762 = vadd.f32 %v5389, %v5756
        %5763 = vrot.lane.b32.xlu0 %v4644, 104
        %v5764 = vpop.permute.xlu0 %5763
        %5765 = vrot.lane.b32.xlu0 %v4649, 104
        %v5766 = vpop.permute.xlu0 %5765
        %5767 = vrot.lane.b32.xlu0 %v4654, 104
        %v5768 = vpop.permute.xlu0 %5767
        %5769 = vrot.lane.b32.xlu0 %v4659, 104
        %v5770 = vpop.permute.xlu0 %5769
        %5771 = vrot.lane.b32.xlu0 %v4644, 72
        %v5772 = vpop.permute.xlu0 %5771
        %5773 = vrot.lane.b32.xlu0 %v4649, 72
        %v5774 = vpop.permute.xlu0 %5773
        %5775 = vrot.lane.b32.xlu0 %v4654, 72
        %v5776 = vpop.permute.xlu0 %5775
        %5777 = vrot.lane.b32.xlu0 %v4659, 72
        %v5778 = vpop.permute.xlu0 %5777
        %v5779 = vsel %vm1017, %v5764, 0
        %v5781 = vsel %vm1017, %v5766, 0
        %v5783 = vsel %vm1017, %v5768, 0
        %v5785 = vsel %vm1017, %v5770, 0
        %v5787 = vsel %vm1017, %v5772, 0
        %v5789 = vsel %vm1017, %v5774, 0
        %v5791 = vsel %vm1017, %v5776, 0
        %v5793 = vsel %vm1017, %v5778, 0
        %5795 = vmatprep.subr.mxu0 0.0
        %5796 = vmatpush1.xpose.msra.mxu0 %v5787
        %5797 = vmatprep.subr.mxu0 0.0
        %5798 = vmatpush1.xpose.msra.mxu0 %v5789
        %5799 = vmatprep.subr.mxu0 0.0
        %5800 = vmatpush1.xpose.msra.mxu0 %v5791
        %5801 = vmatprep.subr.mxu0 0.0
        %5802 = vmatpush1.xpose.msra.mxu0 %v5793
        %5803 = vmatprep.subr.mxu0 0.0
        %5804 = vmatpush1.xpose.msra.mxu0 0.0
        %5805 = vmatprep.subr.mxu0 0.0
        %5806 = vmatpush1.xpose.msra.mxu0 0.0
        %5807 = vmatprep.subr.mxu0 0.0
        %5808 = vmatpush1.xpose.msra.mxu0 0.0
        %5809 = vmatprep.subr.mxu0 0.0
        %5810 = vmatpush1.xpose.msra.mxu0 0.0
        %5811 = vmatprep.subr.mxu0 0.0
        %5812 = vmatpush1.xpose.msra.mxu0 0.0
        %5813 = vmatprep.subr.mxu0 0.0
        %5814 = vmatpush1.xpose.msra.mxu0 0.0
        %5815 = vmatprep.subr.mxu0 0.0
        %5816 = vmatpush1.xpose.msra.mxu0 0.0
        %5817 = vmatprep.subr.mxu0 0.0
        %5818 = vmatpush1.xpose.msra.mxu0 0.0
        %5819 = vmatprep.subr.mxu0 0.0
        %5820 = vmatpush1.xpose.msra.mxu0 0.0
        %5821 = vmatprep.subr.mxu0 0.0
        %5822 = vmatpush1.xpose.msra.mxu0 0.0
        %5823 = vmatprep.subr.mxu0 0.0
        %5824 = vmatpush1.xpose.msra.mxu0 0.0
        %5825 = vmatprep.subr.mxu0 0.0
        %5826 = vmatpush1.xpose.msra.mxu0 0.0
        %5827 = vmatprep.subr.mxu0 0.0
        %5828 = vmatpush1.xpose.msra.mxu0 0.0
        %5829 = vmatprep.subr.mxu0 0.0
        %5830 = vmatpush1.xpose.msra.mxu0 0.0
        %5831 = vmatprep.subr.mxu0 0.0
        %5832 = vmatpush1.xpose.msra.mxu0 0.0
        %5833 = vmatprep.subr.mxu0 0.0
        %5834 = vmatpush1.xpose.msra.mxu0 0.0
        %5835 = vmatprep.subr.mxu0 0.0
        %5836 = vmatpush1.xpose.msra.mxu0 0.0
        %5837 = vmatprep.subr.mxu0 0.0
        %5838 = vmatpush1.xpose.msra.mxu0 0.0
        %5839 = vmatprep.subr.mxu0 0.0
        %5840 = vmatpush1.xpose.msra.mxu0 0.0
        %5841 = vmatprep.subr.mxu0 0.0
        %5842 = vmatpush1.xpose.msra.mxu0 0.0
        %5843 = vmatprep.subr.mxu0 0.0
        %5844 = vmatpush1.xpose.msra.mxu0 0.0
        %5845 = vmatprep.subr.mxu0 0.0
        %5846 = vmatpush1.xpose.msra.mxu0 0.0
        %5847 = vmatprep.subr.mxu0 0.0
        %5848 = vmatpush1.xpose.msra.mxu0 0.0
        %5849 = vmatprep.subr.mxu0 0.0
        %5850 = vmatpush1.xpose.msra.mxu0 0.0
        %5851 = vmatprep.subr.mxu0 0.0
        %5852 = vmatpush1.xpose.msra.mxu0 0.0
        %5853 = vmatprep.subr.mxu0 0.0
        %5854 = vmatpush1.xpose.msra.mxu0 0.0
        %5855 = vmatprep.subr.mxu0 0.0
        %5856 = vmatpush1.xpose.msra.mxu0 0.0
        %5857 = vmatprep.subr.mxu0 0.0
        %5858 = vmatpush1.xpose.msra.mxu0 0.0
        %5859 = vmatprep.mubr.f32.mxu0 0.0
        %5860 = vmatmul.mubr.f32.gmra.mrb[0].mxu0 %v5779
        %v5861 = vpop.f32.mrb[0].mxu0
        %v5862 = vadd.f32 %v815, %v5861
        %v5863 = vpop.f32.mrb[0].mxu0
        %5864 = vmatprep.mubr.f32.mxu0 0.0
        %5865 = vmatmul.mubr.f32.gmra.mrb[0].mxu0 %v5781
        %v5866 = vpop.f32.mrb[0].mxu0
        %v5867 = vadd.f32 %v816, %v5866
        %v5868 = vpop.f32.mrb[0].mxu0
        %5869 = vmatprep.mubr.f32.mxu0 0.0
        %5870 = vmatmul.mubr.f32.gmra.mrb[0].mxu0 %v5783
        %v5871 = vpop.f32.mrb[0].mxu0
        %v5872 = vadd.f32 %v817, %v5871
        %v5873 = vpop.f32.mrb[0].mxu0
        %5874 = vmatprep.mubr.f32.mxu0 0.0
        %5875 = vmatmul.mubr.f32.gmra.mrb[0].mxu0 %v5785
        %v5876 = vpop.f32.mrb[0].mxu0
        %v5877 = vadd.f32 %v818, %v5876
        %v5878 = vpop.f32.mrb[0].mxu0
        %5879 = vdwg.mxu0
        %v5880 = vsel %vm834, %v5862, -inf
        %5881 = vmax.xlane.f32.xlu0 %v5880
        %v5882 = vpop.xlane.xlu0 %5881
        %v5883 = vsel %vm834, %v5867, -inf
        %5884 = vmax.xlane.f32.xlu0 %v5883
        %v5885 = vpop.xlane.xlu0 %5884
        %v5886 = vsel %vm834, %v5872, -inf
        %5887 = vmax.xlane.f32.xlu0 %v5886
        %v5888 = vpop.xlane.xlu0 %5887
        %v5889 = vsel %vm834, %v5877, -inf
        %5890 = vmax.xlane.f32.xlu0 %v5889
        %v5891 = vpop.xlane.xlu0 %5890
        %v5892 = vsub.f32 %v5862, %v5882
        %v5893 = vsub.f32 %v5867, %v5885
        %v5894 = vsub.f32 %v5872, %v5888
        %v5895 = vsub.f32 %v5877, %v5891
        %v5896 = vmul.f32 %v5892, 1.442695
        %v5897 = vpow.pop %v5896
        %v5898 = vmul.f32 %v5893, 1.442695
        %v5899 = vpow.pop %v5898
        %v5900 = vmul.f32 %v5894, 1.442695
        %v5901 = vpow.pop %v5900
        %v5902 = vmul.f32 %v5895, 1.442695
        %v5903 = vpow.pop %v5902
        %v5904 = vsel %vm834, %v5897, 0.0
        %5905 = vadd.xlane.f32.xlu0 %v5904
        %v5906 = vpop.xlane.xlu0 %5905
        %v5907 = vsel %vm834, %v5899, 0.0
        %5908 = vadd.xlane.f32.xlu0 %v5907
        %v5909 = vpop.xlane.xlu0 %5908
        %v5910 = vsel %vm834, %v5901, 0.0
        %5911 = vadd.xlane.f32.xlu0 %v5910
        %v5912 = vpop.xlane.xlu0 %5911
        %v5913 = vsel %vm834, %v5903, 0.0
        %5914 = vadd.xlane.f32.xlu0 %v5913
        %v5915 = vpop.xlane.xlu0 %5914
        %v5916 = vrcp.pop %v5906
        %v5917 = vrcp.pop %v5909
        %v5918 = vrcp.pop %v5912
        %v5919 = vrcp.pop %v5915
        %v5920 = vmul.f32 %v5897, %v5916
        %v5921 = vmul.f32 %v5899, %v5917
        %v5922 = vmul.f32 %v5901, %v5918
        %v5923 = vmul.f32 %v5903, %v5919
        %5924 = vrot.lane.b32.xlu0 %v4644, 40
        %v5925 = vpop.permute.xlu0 %5924
        %5926 = vrot.lane.b32.xlu0 %v4649, 40
        %v5927 = vpop.permute.xlu0 %5926
        %5928 = vrot.lane.b32.xlu0 %v4654, 40
        %v5929 = vpop.permute.xlu0 %5928
        %5930 = vrot.lane.b32.xlu0 %v4659, 40
        %v5931 = vpop.permute.xlu0 %5930
        %v5937 = vsel %vm834, %v5920, 0
        %v5940 = vsel %vm834, %v5921, 0
        %v5943 = vsel %vm834, %v5922, 0
        %v5946 = vsel %vm834, %v5923, 0
        %5948 = vmatprep.subr.mxu0 0.0
        %5949 = vmatpush1.msra.mxu0 %v5925
        %5950 = vmatprep.subr.mxu0 0.0
        %5951 = vmatpush1.msra.mxu0 %v5927
        %5952 = vmatprep.subr.mxu0 0.0
        %5953 = vmatpush1.msra.mxu0 %v5929
        %5954 = vmatprep.subr.mxu0 0.0
        %5955 = vmatpush1.msra.mxu0 %v5931
        %5956 = vmatprep.subr.mxu0 0.0
        %5957 = vmatpush1.msra.mxu0 0.0
        %5958 = vmatprep.subr.mxu0 0.0
        %5959 = vmatpush1.msra.mxu0 0.0
        %5960 = vmatprep.subr.mxu0 0.0
        %5961 = vmatpush1.msra.mxu0 0.0
        %5962 = vmatprep.subr.mxu0 0.0
        %5963 = vmatpush1.msra.mxu0 0.0
        %5964 = vmatprep.subr.mxu0 0.0
        %5965 = vmatpush1.msra.mxu0 0.0
        %5966 = vmatprep.subr.mxu0 0.0
        %5967 = vmatpush1.msra.mxu0 0.0
        %5968 = vmatprep.subr.mxu0 0.0
        %5969 = vmatpush1.msra.mxu0 0.0
        %5970 = vmatprep.subr.mxu0 0.0
        %5971 = vmatpush1.msra.mxu0 0.0
        %5972 = vmatprep.subr.mxu0 0.0
        %5973 = vmatpush1.msra.mxu0 0.0
        %5974 = vmatprep.subr.mxu0 0.0
        %5975 = vmatpush1.msra.mxu0 0.0
        %5976 = vmatprep.subr.mxu0 0.0
        %5977 = vmatpush1.msra.mxu0 0.0
        %5978 = vmatprep.subr.mxu0 0.0
        %5979 = vmatpush1.msra.mxu0 0.0
        %5980 = vmatprep.subr.mxu0 0.0
        %5981 = vmatpush1.msra.mxu0 0.0
        %5982 = vmatprep.subr.mxu0 0.0
        %5983 = vmatpush1.msra.mxu0 0.0
        %5984 = vmatprep.subr.mxu0 0.0
        %5985 = vmatpush1.msra.mxu0 0.0
        %5986 = vmatprep.subr.mxu0 0.0
        %5987 = vmatpush1.msra.mxu0 0.0
        %5988 = vmatprep.subr.mxu0 0.0
        %5989 = vmatpush1.msra.mxu0 0.0
        %5990 = vmatprep.subr.mxu0 0.0
        %5991 = vmatpush1.msra.mxu0 0.0
        %5992 = vmatprep.subr.mxu0 0.0
        %5993 = vmatpush1.msra.mxu0 0.0
        %5994 = vmatprep.subr.mxu0 0.0
        %5995 = vmatpush1.msra.mxu0 0.0
        %5996 = vmatprep.subr.mxu0 0.0
        %5997 = vmatpush1.msra.mxu0 0.0
        %5998 = vmatprep.subr.mxu0 0.0
        %5999 = vmatpush1.msra.mxu0 0.0
        %6000 = vmatprep.subr.mxu0 0.0
        %6001 = vmatpush1.msra.mxu0 0.0
        %6002 = vmatprep.subr.mxu0 0.0
        %6003 = vmatpush1.msra.mxu0 0.0
        %6004 = vmatprep.subr.mxu0 0.0
        %6005 = vmatpush1.msra.mxu0 0.0
        %6006 = vmatprep.subr.mxu0 0.0
        %6007 = vmatpush1.msra.mxu0 0.0
        %6008 = vmatprep.subr.mxu0 0.0
        %6009 = vmatpush1.msra.mxu0 0.0
        %6010 = vmatprep.subr.mxu0 0.0
        %6011 = vmatpush1.msra.mxu0 0.0
        %6012 = vmatprep.mubr.f32.mxu0 0.0
        %6013 = vmatmul.mubr.f32.gmra.mrb[0].mxu0 %v5937
        %v6014 = vpop.f32.mrb[0].mxu0
        %v6015 = vadd.f32 0.0, %v6014
        %v6016 = vpop.f32.mrb[0].mxu0
        %6017 = vmatprep.mubr.f32.mxu0 0.0
        %6018 = vmatmul.mubr.f32.gmra.mrb[0].mxu0 %v5940
        %v6019 = vpop.f32.mrb[0].mxu0
        %v6020 = vadd.f32 0.0, %v6019
        %v6021 = vpop.f32.mrb[0].mxu0
        %6022 = vmatprep.mubr.f32.mxu0 0.0
        %6023 = vmatmul.mubr.f32.gmra.mrb[0].mxu0 %v5943
        %v6024 = vpop.f32.mrb[0].mxu0
        %v6025 = vadd.f32 0.0, %v6024
        %v6026 = vpop.f32.mrb[0].mxu0
        %6027 = vmatprep.mubr.f32.mxu0 0.0
        %6028 = vmatmul.mubr.f32.gmra.mrb[0].mxu0 %v5946
        %v6029 = vpop.f32.mrb[0].mxu0
        %v6030 = vadd.f32 0.0, %v6029
        %v6031 = vpop.f32.mrb[0].mxu0
        %6032 = vdwg.mxu0
        %v6034 = vsel %vm1017, %v6015, 0
        %v6037 = vsel %vm1017, %v6020, 0
        %v6040 = vsel %vm1017, %v6025, 0
        %v6043 = vsel %vm1017, %v6030, 0
        %6045 = vmatprep.subr.mxu0 0.0
        %6046 = vmatpush1.msra.mxu0 %v4490
        %6047 = vmatprep.subr.mxu0 0.0
        %6048 = vmatpush1.msra.mxu0 0.0
        %6049 = vmatprep.subr.mxu0 0.0
        %6050 = vmatpush1.msra.mxu0 0.0
        %6051 = vmatprep.subr.mxu0 0.0
        %6052 = vmatpush1.msra.mxu0 0.0
        %6053 = vmatprep.subr.mxu0 0.0
        %6054 = vmatpush1.msra.mxu0 0.0
        %6055 = vmatprep.subr.mxu0 0.0
        %6056 = vmatpush1.msra.mxu0 0.0
        %6057 = vmatprep.subr.mxu0 0.0
        %6058 = vmatpush1.msra.mxu0 0.0
        %6059 = vmatprep.subr.mxu0 0.0
        %6060 = vmatpush1.msra.mxu0 0.0
        %6061 = vmatprep.subr.mxu0 0.0
        %6062 = vmatpush1.msra.mxu0 0.0
        %6063 = vmatprep.subr.mxu0 0.0
        %6064 = vmatpush1.msra.mxu0 0.0
        %6065 = vmatprep.subr.mxu0 0.0
        %6066 = vmatpush1.msra.mxu0 0.0
        %6067 = vmatprep.subr.mxu0 0.0
        %6068 = vmatpush1.msra.mxu0 0.0
        %6069 = vmatprep.subr.mxu0 0.0
        %6070 = vmatpush1.msra.mxu0 0.0
        %6071 = vmatprep.subr.mxu0 0.0
        %6072 = vmatpush1.msra.mxu0 0.0
        %6073 = vmatprep.subr.mxu0 0.0
        %6074 = vmatpush1.msra.mxu0 0.0
        %6075 = vmatprep.subr.mxu0 0.0
        %6076 = vmatpush1.msra.mxu0 0.0
        %6077 = vmatprep.subr.mxu0 0.0
        %6078 = vmatpush1.msra.mxu0 0.0
        %6079 = vmatprep.subr.mxu0 0.0
        %6080 = vmatpush1.msra.mxu0 0.0
        %6081 = vmatprep.subr.mxu0 0.0
        %6082 = vmatpush1.msra.mxu0 0.0
        %6083 = vmatprep.subr.mxu0 0.0
        %6084 = vmatpush1.msra.mxu0 0.0
        %6085 = vmatprep.subr.mxu0 0.0
        %6086 = vmatpush1.msra.mxu0 0.0
        %6087 = vmatprep.subr.mxu0 0.0
        %6088 = vmatpush1.msra.mxu0 0.0
        %6089 = vmatprep.subr.mxu0 0.0
        %6090 = vmatpush1.msra.mxu0 0.0
        %6091 = vmatprep.subr.mxu0 0.0
        %6092 = vmatpush1.msra.mxu0 0.0
        %6093 = vmatprep.subr.mxu0 0.0
        %6094 = vmatpush1.msra.mxu0 0.0
        %6095 = vmatprep.subr.mxu0 0.0
        %6096 = vmatpush1.msra.mxu0 0.0
        %6097 = vmatprep.subr.mxu0 0.0
        %6098 = vmatpush1.msra.mxu0 0.0
        %6099 = vmatprep.subr.mxu0 0.0
        %6100 = vmatpush1.msra.mxu0 0.0
        %6101 = vmatprep.subr.mxu0 0.0
        %6102 = vmatpush1.msra.mxu0 0.0
        %6103 = vmatprep.subr.mxu0 0.0
        %6104 = vmatpush1.msra.mxu0 0.0
        %6105 = vmatprep.subr.mxu0 0.0
        %6106 = vmatpush1.msra.mxu0 0.0
        %6107 = vmatprep.subr.mxu0 0.0
        %6108 = vmatpush1.msra.mxu0 0.0
        %6109 = vmatprep.mubr.f32.mxu0 0.0
        %6110 = vmatmul.mubr.f32.gmra.mrb[0].mxu0 %v6034
        %v6111 = vpop.f32.mrb[0].mxu0
        %v6112 = vadd.f32 0.0, %v6111
        %v6113 = vpop.f32.mrb[0].mxu0
        %6114 = vmatprep.mubr.f32.mxu0 0.0
        %6115 = vmatmul.mubr.f32.gmra.mrb[0].mxu0 %v6037
        %v6116 = vpop.f32.mrb[0].mxu0
        %v6117 = vadd.f32 0.0, %v6116
        %v6118 = vpop.f32.mrb[0].mxu0
        %6119 = vmatprep.mubr.f32.mxu0 0.0
        %6120 = vmatmul.mubr.f32.gmra.mrb[0].mxu0 %v6040
        %v6121 = vpop.f32.mrb[0].mxu0
        %v6122 = vadd.f32 0.0, %v6121
        %v6123 = vpop.f32.mrb[0].mxu0
        %6124 = vmatprep.mubr.f32.mxu0 0.0
        %6125 = vmatmul.mubr.f32.gmra.mrb[0].mxu0 %v6043
        %v6126 = vpop.f32.mrb[0].mxu0
        %v6127 = vadd.f32 0.0, %v6126
        %v6128 = vpop.f32.mrb[0].mxu0
        %6129 = vdwg.mxu0
        %v6130 = vadd.f32 %v5759, %v6112
        %v6131 = vadd.f32 %v5760, %v6117
        %v6132 = vadd.f32 %v5761, %v6122
        %v6133 = vadd.f32 %v5762, %v6127
        %v6135 = vlaneseq
        %v6136 = vshrl.u32 %v6135, 7
        %v6137 = vsub.s32 0, %v6136
        %v6138 = vrot.slane %v4492, %v6137
        %v6140 = vadd.f32 %v6130, %v6138
        %v6141 = vadd.f32 %v6131, %v6138
        %v6142 = vadd.f32 %v6132, %v6138
        %v6143 = vadd.f32 %v6133, %v6138
        %v6144 = vadd.f32 %v6140, %v4473
        %v6145 = vadd.f32 %v6141, %v4474
        %v6146 = vadd.f32 %v6142, %v4475
        %v6147 = vadd.f32 %v6143, %v4476
        %s6148 = scalar_lea.vmem %s8, 1
        %v6149 = vld [vmem:[%s6148] sm:$0x1]
        %s6150 = scalar_lea.vmem %s9, 1
        %v6151 = vld [vmem:[%s6150] sm:$0x1]
        %s6152 = scalar_lea.vmem %s10, 32
        %v6153 = vld [vmem:[%s6152] sm:$0xff]
        %v6154 = vld [vmem:[%s6152 + $0x8] sm:$0xff]
        %v6155 = vld [vmem:[%s6152 + $0x10] sm:$0xff]
        %v6156 = vld [vmem:[%s6152 + $0x18] sm:$0xff]
        %s6157 = scalar_lea.vmem [#allocation8], 32
        %v6158 = vld [vmem:[%s6157] sm:$0xff]
        %v6159 = vld [vmem:[%s6157 + $0x8] sm:$0xff]
        %v6160 = vld [vmem:[%s6157 + $0x10] sm:$0xff]
        %v6161 = vld [vmem:[%s6157 + $0x18] sm:$0xff]
        %s6162 = scalar_lea.vmem %s12, 1
        %v6163 = vld [vmem:[%s6162] sm:$0x1]
        %v6164 = vsel %vm834, %v6144, 0.0
        %6165 = vadd.xlane.f32.xlu0 %v6164
        %v6166 = vpop.xlane.xlu0 %6165
        %v6167 = vsel %vm834, %v6145, 0.0
        %6168 = vadd.xlane.f32.xlu0 %v6167
        %v6169 = vpop.xlane.xlu0 %6168
        %v6170 = vsel %vm834, %v6146, 0.0
        %6171 = vadd.xlane.f32.xlu0 %v6170
        %v6172 = vpop.xlane.xlu0 %6171
        %v6173 = vsel %vm834, %v6147, 0.0
        %6174 = vadd.xlane.f32.xlu0 %v6173
        %v6175 = vpop.xlane.xlu0 %6174
        %v6176 = vmul.f32 %v6166, %v847
        %v6177 = vmul.f32 %v6169, %v847
        %v6178 = vmul.f32 %v6172, %v847
        %v6179 = vmul.f32 %v6175, %v847
        %v6180 = vsub.f32 %v6144, %v6176
        %v6181 = vsub.f32 %v6145, %v6177
        %v6182 = vsub.f32 %v6146, %v6178
        %v6183 = vsub.f32 %v6147, %v6179
        %v6184 = vmul.f32 %v6180, %v6180
        %v6185 = vmul.f32 %v6181, %v6181
        %v6186 = vmul.f32 %v6182, %v6182
        %v6187 = vmul.f32 %v6183, %v6183
        %v6188 = vsel %vm834, %v6184, 0.0
        %6189 = vadd.xlane.f32.xlu0 %v6188
        %v6190 = vpop.xlane.xlu0 %6189
        %v6191 = vsel %vm834, %v6185, 0.0
        %6192 = vadd.xlane.f32.xlu0 %v6191
        %v6193 = vpop.xlane.xlu0 %6192
        %v6194 = vsel %vm834, %v6186, 0.0
        %6195 = vadd.xlane.f32.xlu0 %v6194
        %v6196 = vpop.xlane.xlu0 %6195
        %v6197 = vsel %vm834, %v6187, 0.0
        %6198 = vadd.xlane.f32.xlu0 %v6197
        %v6199 = vpop.xlane.xlu0 %6198
        %v6200 = vmul.f32 %v6190, %v847
        %v6201 = vmul.f32 %v6193, %v847
        %v6202 = vmul.f32 %v6196, %v847
        %v6203 = vmul.f32 %v6199, %v847
        %v6204 = vadd.f32 %v6200, 1e-05
        %v6205 = vadd.f32 %v6201, 1e-05
        %v6206 = vadd.f32 %v6202, 1e-05
        %v6207 = vadd.f32 %v6203, 1e-05
        %v6208 = vrsqrt.pop %v6204
        %v6209 = vrsqrt.pop %v6205
        %v6210 = vrsqrt.pop %v6206
        %v6211 = vrsqrt.pop %v6207
        %v6212 = vmul.f32 %v6180, %v6208
        %v6213 = vmul.f32 %v6181, %v6209
        %v6214 = vmul.f32 %v6182, %v6210
        %v6215 = vmul.f32 %v6183, %v6211
        %v6217 = vlaneseq
        %v6218 = vshrl.u32 %v6217, 7
        %v6219 = vsub.s32 0, %v6218
        %v6220 = vrot.slane %v6149, %v6219
        %v6222 = vmul.f32 %v6212, %v6220
        %v6223 = vmul.f32 %v6213, %v6220
        %v6224 = vmul.f32 %v6214, %v6220
        %v6225 = vmul.f32 %v6215, %v6220
        %v6227 = vlaneseq
        %v6228 = vshrl.u32 %v6227, 7
        %v6229 = vsub.s32 0, %v6228
        %v6230 = vrot.slane %v6151, %v6229
        %v6232 = vadd.f32 %v6222, %v6230
        %v6233 = vadd.f32 %v6223, %v6230
        %v6234 = vadd.f32 %v6224, %v6230
        %v6235 = vadd.f32 %v6225, %v6230
        %v6237 = vsel %vm834, %v6232, 0
        %v6240 = vsel %vm834, %v6233, 0
        %v6243 = vsel %vm834, %v6234, 0
        %v6246 = vsel %vm834, %v6235, 0
        %6248 = vmatprep.subr.mxu0 0.0
        %6249 = vmatpush1.msra.mxu0 %v6153
        %6250 = vmatprep.subr.mxu0 0.0
        %6251 = vmatpush1.msra.mxu0 %v6154
        %6252 = vmatprep.subr.mxu0 0.0
        %6253 = vmatpush1.msra.mxu0 %v6155
        %6254 = vmatprep.subr.mxu0 0.0
        %6255 = vmatpush1.msra.mxu0 %v6156
        %6256 = vmatprep.subr.mxu0 0.0
        %6257 = vmatpush1.msra.mxu0 0.0
        %6258 = vmatprep.subr.mxu0 0.0
        %6259 = vmatpush1.msra.mxu0 0.0
        %6260 = vmatprep.subr.mxu0 0.0
        %6261 = vmatpush1.msra.mxu0 0.0
        %6262 = vmatprep.subr.mxu0 0.0
        %6263 = vmatpush1.msra.mxu0 0.0
        %6264 = vmatprep.subr.mxu0 0.0
        %6265 = vmatpush1.msra.mxu0 0.0
        %6266 = vmatprep.subr.mxu0 0.0
        %6267 = vmatpush1.msra.mxu0 0.0
        %6268 = vmatprep.subr.mxu0 0.0
        %6269 = vmatpush1.msra.mxu0 0.0
        %6270 = vmatprep.subr.mxu0 0.0
        %6271 = vmatpush1.msra.mxu0 0.0
        %6272 = vmatprep.subr.mxu0 0.0
        %6273 = vmatpush1.msra.mxu0 0.0
        %6274 = vmatprep.subr.mxu0 0.0
        %6275 = vmatpush1.msra.mxu0 0.0
        %6276 = vmatprep.subr.mxu0 0.0
        %6277 = vmatpush1.msra.mxu0 0.0
        %6278 = vmatprep.subr.mxu0 0.0
        %6279 = vmatpush1.msra.mxu0 0.0
        %6280 = vmatprep.subr.mxu0 0.0
        %6281 = vmatpush1.msra.mxu0 0.0
        %6282 = vmatprep.subr.mxu0 0.0
        %6283 = vmatpush1.msra.mxu0 0.0
        %6284 = vmatprep.subr.mxu0 0.0
        %6285 = vmatpush1.msra.mxu0 0.0
        %6286 = vmatprep.subr.mxu0 0.0
        %6287 = vmatpush1.msra.mxu0 0.0
        %6288 = vmatprep.subr.mxu0 0.0
        %6289 = vmatpush1.msra.mxu0 0.0
        %6290 = vmatprep.subr.mxu0 0.0
        %6291 = vmatpush1.msra.mxu0 0.0
        %6292 = vmatprep.subr.mxu0 0.0
        %6293 = vmatpush1.msra.mxu0 0.0
        %6294 = vmatprep.subr.mxu0 0.0
        %6295 = vmatpush1.msra.mxu0 0.0
        %6296 = vmatprep.subr.mxu0 0.0
        %6297 = vmatpush1.msra.mxu0 0.0
        %6298 = vmatprep.subr.mxu0 0.0
        %6299 = vmatpush1.msra.mxu0 0.0
        %6300 = vmatprep.subr.mxu0 0.0
        %6301 = vmatpush1.msra.mxu0 0.0
        %6302 = vmatprep.subr.mxu0 0.0
        %6303 = vmatpush1.msra.mxu0 0.0
        %6304 = vmatprep.subr.mxu0 0.0
        %6305 = vmatpush1.msra.mxu0 0.0
        %6306 = vmatprep.subr.mxu0 0.0
        %6307 = vmatpush1.msra.mxu0 0.0
        %6308 = vmatprep.subr.mxu0 0.0
        %6309 = vmatpush1.msra.mxu0 0.0
        %6310 = vmatprep.subr.mxu0 0.0
        %6311 = vmatpush1.msra.mxu0 0.0
        %6312 = vmatprep.mubr.f32.mxu0 0.0
        %6313 = vmatmul.mubr.f32.gmra.mrb[0].mxu0 %v6237
        %v6314 = vpop.f32.mrb[0].mxu0
        %v6315 = vadd.f32 0.0, %v6314
        %v6316 = vpop.f32.mrb[0].mxu0
        %6317 = vmatprep.mubr.f32.mxu0 0.0
        %6318 = vmatmul.mubr.f32.gmra.mrb[0].mxu0 %v6240
        %v6319 = vpop.f32.mrb[0].mxu0
        %v6320 = vadd.f32 0.0, %v6319
        %v6321 = vpop.f32.mrb[0].mxu0
        %6322 = vmatprep.mubr.f32.mxu0 0.0
        %6323 = vmatmul.mubr.f32.gmra.mrb[0].mxu0 %v6243
        %v6324 = vpop.f32.mrb[0].mxu0
        %v6325 = vadd.f32 0.0, %v6324
        %v6326 = vpop.f32.mrb[0].mxu0
        %6327 = vmatprep.mubr.f32.mxu0 0.0
        %6328 = vmatmul.mubr.f32.gmra.mrb[0].mxu0 %v6246
        %v6329 = vpop.f32.mrb[0].mxu0
        %v6330 = vadd.f32 0.0, %v6329
        %v6331 = vpop.f32.mrb[0].mxu0
        %6332 = vdwg.mxu0
        %6337 = vrot.lane.b32.xlu0 %v6315, 96
        %v6338 = vpop.permute.xlu0 %6337
        %6339 = vrot.lane.b32.xlu0 %v6320, 96
        %v6340 = vpop.permute.xlu0 %6339
        %6341 = vrot.lane.b32.xlu0 %v6325, 96
        %v6342 = vpop.permute.xlu0 %6341
        %6343 = vrot.lane.b32.xlu0 %v6330, 96
        %v6344 = vpop.permute.xlu0 %6343
        %v6345 = vsel %vm1017, %v6315, 0
        %v6347 = vsel %vm1017, %v6320, 0
        %v6349 = vsel %vm1017, %v6325, 0
        %v6351 = vsel %vm1017, %v6330, 0
        %v6353 = vsel %vm1017, %v6338, 0
        %v6355 = vsel %vm1017, %v6340, 0
        %v6357 = vsel %vm1017, %v6342, 0
        %v6359 = vsel %vm1017, %v6344, 0
        %6361 = vmatprep.subr.mxu0 0.0
        %6362 = vmatpush1.xpose.msra.mxu0 %v6353
        %6363 = vmatprep.subr.mxu0 0.0
        %6364 = vmatpush1.xpose.msra.mxu0 %v6355
        %6365 = vmatprep.subr.mxu0 0.0
        %6366 = vmatpush1.xpose.msra.mxu0 %v6357
        %6367 = vmatprep.subr.mxu0 0.0
        %6368 = vmatpush1.xpose.msra.mxu0 %v6359
        %6369 = vmatprep.subr.mxu0 0.0
        %6370 = vmatpush1.xpose.msra.mxu0 0.0
        %6371 = vmatprep.subr.mxu0 0.0
        %6372 = vmatpush1.xpose.msra.mxu0 0.0
        %6373 = vmatprep.subr.mxu0 0.0
        %6374 = vmatpush1.xpose.msra.mxu0 0.0
        %6375 = vmatprep.subr.mxu0 0.0
        %6376 = vmatpush1.xpose.msra.mxu0 0.0
        %6377 = vmatprep.subr.mxu0 0.0
        %6378 = vmatpush1.xpose.msra.mxu0 0.0
        %6379 = vmatprep.subr.mxu0 0.0
        %6380 = vmatpush1.xpose.msra.mxu0 0.0
        %6381 = vmatprep.subr.mxu0 0.0
        %6382 = vmatpush1.xpose.msra.mxu0 0.0
        %6383 = vmatprep.subr.mxu0 0.0
        %6384 = vmatpush1.xpose.msra.mxu0 0.0
        %6385 = vmatprep.subr.mxu0 0.0
        %6386 = vmatpush1.xpose.msra.mxu0 0.0
        %6387 = vmatprep.subr.mxu0 0.0
        %6388 = vmatpush1.xpose.msra.mxu0 0.0
        %6389 = vmatprep.subr.mxu0 0.0
        %6390 = vmatpush1.xpose.msra.mxu0 0.0
        %6391 = vmatprep.subr.mxu0 0.0
        %6392 = vmatpush1.xpose.msra.mxu0 0.0
        %6393 = vmatprep.subr.mxu0 0.0
        %6394 = vmatpush1.xpose.msra.mxu0 0.0
        %6395 = vmatprep.subr.mxu0 0.0
        %6396 = vmatpush1.xpose.msra.mxu0 0.0
        %6397 = vmatprep.subr.mxu0 0.0
        %6398 = vmatpush1.xpose.msra.mxu0 0.0
        %6399 = vmatprep.subr.mxu0 0.0
        %6400 = vmatpush1.xpose.msra.mxu0 0.0
        %6401 = vmatprep.subr.mxu0 0.0
        %6402 = vmatpush1.xpose.msra.mxu0 0.0
        %6403 = vmatprep.subr.mxu0 0.0
        %6404 = vmatpush1.xpose.msra.mxu0 0.0
        %6405 = vmatprep.subr.mxu0 0.0
        %6406 = vmatpush1.xpose.msra.mxu0 0.0
        %6407 = vmatprep.subr.mxu0 0.0
        %6408 = vmatpush1.xpose.msra.mxu0 0.0
        %6409 = vmatprep.subr.mxu0 0.0
        %6410 = vmatpush1.xpose.msra.mxu0 0.0
        %6411 = vmatprep.subr.mxu0 0.0
        %6412 = vmatpush1.xpose.msra.mxu0 0.0
        %6413 = vmatprep.subr.mxu0 0.0
        %6414 = vmatpush1.xpose.msra.mxu0 0.0
        %6415 = vmatprep.subr.mxu0 0.0
        %6416 = vmatpush1.xpose.msra.mxu0 0.0
        %6417 = vmatprep.subr.mxu0 0.0
        %6418 = vmatpush1.xpose.msra.mxu0 0.0
        %6419 = vmatprep.subr.mxu0 0.0
        %6420 = vmatpush1.xpose.msra.mxu0 0.0
        %6421 = vmatprep.subr.mxu0 0.0
        %6422 = vmatpush1.xpose.msra.mxu0 0.0
        %6423 = vmatprep.subr.mxu0 0.0
        %6424 = vmatpush1.xpose.msra.mxu0 0.0
        %6425 = vmatprep.mubr.f32.mxu0 0.0
        %6426 = vmatmul.mubr.f32.gmra.mrb[0].mxu0 %v6345
        %v6427 = vpop.f32.mrb[0].mxu0
        %v6428 = vadd.f32 %v819, %v6427
        %v6429 = vpop.f32.mrb[0].mxu0
        %6430 = vmatprep.mubr.f32.mxu0 0.0
        %6431 = vmatmul.mubr.f32.gmra.mrb[0].mxu0 %v6347
        %v6432 = vpop.f32.mrb[0].mxu0
        %v6433 = vadd.f32 %v820, %v6432
        %v6434 = vpop.f32.mrb[0].mxu0
        %6435 = vmatprep.mubr.f32.mxu0 0.0
        %6436 = vmatmul.mubr.f32.gmra.mrb[0].mxu0 %v6349
        %v6437 = vpop.f32.mrb[0].mxu0
        %v6438 = vadd.f32 %v821, %v6437
        %v6439 = vpop.f32.mrb[0].mxu0
        %6440 = vmatprep.mubr.f32.mxu0 0.0
        %6441 = vmatmul.mubr.f32.gmra.mrb[0].mxu0 %v6351
        %v6442 = vpop.f32.mrb[0].mxu0
        %v6443 = vadd.f32 %v822, %v6442
        %v6444 = vpop.f32.mrb[0].mxu0
        %6445 = vdwg.mxu0
        %v6446 = vsel %vm834, %v6428, -inf
        %6447 = vmax.xlane.f32.xlu0 %v6446
        %v6448 = vpop.xlane.xlu0 %6447
        %v6449 = vsel %vm834, %v6433, -inf
        %6450 = vmax.xlane.f32.xlu0 %v6449
        %v6451 = vpop.xlane.xlu0 %6450
        %v6452 = vsel %vm834, %v6438, -inf
        %6453 = vmax.xlane.f32.xlu0 %v6452
        %v6454 = vpop.xlane.xlu0 %6453
        %v6455 = vsel %vm834, %v6443, -inf
        %6456 = vmax.xlane.f32.xlu0 %v6455
        %v6457 = vpop.xlane.xlu0 %6456
        %v6458 = vsub.f32 %v6428, %v6448
        %v6459 = vsub.f32 %v6433, %v6451
        %v6460 = vsub.f32 %v6438, %v6454
        %v6461 = vsub.f32 %v6443, %v6457
        %v6462 = vmul.f32 %v6458, 1.442695
        %v6463 = vpow.pop %v6462
        %v6464 = vmul.f32 %v6459, 1.442695
        %v6465 = vpow.pop %v6464
        %v6466 = vmul.f32 %v6460, 1.442695
        %v6467 = vpow.pop %v6466
        %v6468 = vmul.f32 %v6461, 1.442695
        %v6469 = vpow.pop %v6468
        %v6470 = vsel %vm834, %v6463, 0.0
        %6471 = vadd.xlane.f32.xlu0 %v6470
        %v6472 = vpop.xlane.xlu0 %6471
        %v6473 = vsel %vm834, %v6465, 0.0
        %6474 = vadd.xlane.f32.xlu0 %v6473
        %v6475 = vpop.xlane.xlu0 %6474
        %v6476 = vsel %vm834, %v6467, 0.0
        %6477 = vadd.xlane.f32.xlu0 %v6476
        %v6478 = vpop.xlane.xlu0 %6477
        %v6479 = vsel %vm834, %v6469, 0.0
        %6480 = vadd.xlane.f32.xlu0 %v6479
        %v6481 = vpop.xlane.xlu0 %6480
        %v6482 = vrcp.pop %v6472
        %v6483 = vrcp.pop %v6475
        %v6484 = vrcp.pop %v6478
        %v6485 = vrcp.pop %v6481
        %v6486 = vmul.f32 %v6463, %v6482
        %v6487 = vmul.f32 %v6465, %v6483
        %v6488 = vmul.f32 %v6467, %v6484
        %v6489 = vmul.f32 %v6469, %v6485
        %6490 = vrot.lane.b32.xlu0 %v6315, 64
        %v6491 = vpop.permute.xlu0 %6490
        %6492 = vrot.lane.b32.xlu0 %v6320, 64
        %v6493 = vpop.permute.xlu0 %6492
        %6494 = vrot.lane.b32.xlu0 %v6325, 64
        %v6495 = vpop.permute.xlu0 %6494
        %6496 = vrot.lane.b32.xlu0 %v6330, 64
        %v6497 = vpop.permute.xlu0 %6496
        %v6503 = vsel %vm834, %v6486, 0
        %v6506 = vsel %vm834, %v6487, 0
        %v6509 = vsel %vm834, %v6488, 0
        %v6512 = vsel %vm834, %v6489, 0
        %6514 = vmatprep.subr.mxu0 0.0
        %6515 = vmatpush1.msra.mxu0 %v6491
        %6516 = vmatprep.subr.mxu0 0.0
        %6517 = vmatpush1.msra.mxu0 %v6493
        %6518 = vmatprep.subr.mxu0 0.0
        %6519 = vmatpush1.msra.mxu0 %v6495
        %6520 = vmatprep.subr.mxu0 0.0
        %6521 = vmatpush1.msra.mxu0 %v6497
        %6522 = vmatprep.subr.mxu0 0.0
        %6523 = vmatpush1.msra.mxu0 0.0
        %6524 = vmatprep.subr.mxu0 0.0
        %6525 = vmatpush1.msra.mxu0 0.0
        %6526 = vmatprep.subr.mxu0 0.0
        %6527 = vmatpush1.msra.mxu0 0.0
        %6528 = vmatprep.subr.mxu0 0.0
        %6529 = vmatpush1.msra.mxu0 0.0
        %6530 = vmatprep.subr.mxu0 0.0
        %6531 = vmatpush1.msra.mxu0 0.0
        %6532 = vmatprep.subr.mxu0 0.0
        %6533 = vmatpush1.msra.mxu0 0.0
        %6534 = vmatprep.subr.mxu0 0.0
        %6535 = vmatpush1.msra.mxu0 0.0
        %6536 = vmatprep.subr.mxu0 0.0
        %6537 = vmatpush1.msra.mxu0 0.0
        %6538 = vmatprep.subr.mxu0 0.0
        %6539 = vmatpush1.msra.mxu0 0.0
        %6540 = vmatprep.subr.mxu0 0.0
        %6541 = vmatpush1.msra.mxu0 0.0
        %6542 = vmatprep.subr.mxu0 0.0
        %6543 = vmatpush1.msra.mxu0 0.0
        %6544 = vmatprep.subr.mxu0 0.0
        %6545 = vmatpush1.msra.mxu0 0.0
        %6546 = vmatprep.subr.mxu0 0.0
        %6547 = vmatpush1.msra.mxu0 0.0
        %6548 = vmatprep.subr.mxu0 0.0
        %6549 = vmatpush1.msra.mxu0 0.0
        %6550 = vmatprep.subr.mxu0 0.0
        %6551 = vmatpush1.msra.mxu0 0.0
        %6552 = vmatprep.subr.mxu0 0.0
        %6553 = vmatpush1.msra.mxu0 0.0
        %6554 = vmatprep.subr.mxu0 0.0
        %6555 = vmatpush1.msra.mxu0 0.0
        %6556 = vmatprep.subr.mxu0 0.0
        %6557 = vmatpush1.msra.mxu0 0.0
        %6558 = vmatprep.subr.mxu0 0.0
        %6559 = vmatpush1.msra.mxu0 0.0
        %6560 = vmatprep.subr.mxu0 0.0
        %6561 = vmatpush1.msra.mxu0 0.0
        %6562 = vmatprep.subr.mxu0 0.0
        %6563 = vmatpush1.msra.mxu0 0.0
        %6564 = vmatprep.subr.mxu0 0.0
        %6565 = vmatpush1.msra.mxu0 0.0
        %6566 = vmatprep.subr.mxu0 0.0
        %6567 = vmatpush1.msra.mxu0 0.0
        %6568 = vmatprep.subr.mxu0 0.0
        %6569 = vmatpush1.msra.mxu0 0.0
        %6570 = vmatprep.subr.mxu0 0.0
        %6571 = vmatpush1.msra.mxu0 0.0
        %6572 = vmatprep.subr.mxu0 0.0
        %6573 = vmatpush1.msra.mxu0 0.0
        %6574 = vmatprep.subr.mxu0 0.0
        %6575 = vmatpush1.msra.mxu0 0.0
        %6576 = vmatprep.subr.mxu0 0.0
        %6577 = vmatpush1.msra.mxu0 0.0
        %6578 = vmatprep.mubr.f32.mxu0 0.0
        %6579 = vmatmul.mubr.f32.gmra.mrb[0].mxu0 %v6503
        %v6580 = vpop.f32.mrb[0].mxu0
        %v6581 = vadd.f32 0.0, %v6580
        %v6582 = vpop.f32.mrb[0].mxu0
        %6583 = vmatprep.mubr.f32.mxu0 0.0
        %6584 = vmatmul.mubr.f32.gmra.mrb[0].mxu0 %v6506
        %v6585 = vpop.f32.mrb[0].mxu0
        %v6586 = vadd.f32 0.0, %v6585
        %v6587 = vpop.f32.mrb[0].mxu0
        %6588 = vmatprep.mubr.f32.mxu0 0.0
        %6589 = vmatmul.mubr.f32.gmra.mrb[0].mxu0 %v6509
        %v6590 = vpop.f32.mrb[0].mxu0
        %v6591 = vadd.f32 0.0, %v6590
        %v6592 = vpop.f32.mrb[0].mxu0
        %6593 = vmatprep.mubr.f32.mxu0 0.0
        %6594 = vmatmul.mubr.f32.gmra.mrb[0].mxu0 %v6512
        %v6595 = vpop.f32.mrb[0].mxu0
        %v6596 = vadd.f32 0.0, %v6595
        %v6597 = vpop.f32.mrb[0].mxu0
        %6598 = vdwg.mxu0
        %6599 = vrot.lane.b32.xlu0 %v6315, 120
        %v6600 = vpop.permute.xlu0 %6599
        %6601 = vrot.lane.b32.xlu0 %v6320, 120
        %v6602 = vpop.permute.xlu0 %6601
        %6603 = vrot.lane.b32.xlu0 %v6325, 120
        %v6604 = vpop.permute.xlu0 %6603
        %6605 = vrot.lane.b32.xlu0 %v6330, 120
        %v6606 = vpop.permute.xlu0 %6605
        %6607 = vrot.lane.b32.xlu0 %v6315, 88
        %v6608 = vpop.permute.xlu0 %6607
        %6609 = vrot.lane.b32.xlu0 %v6320, 88
        %v6610 = vpop.permute.xlu0 %6609
        %6611 = vrot.lane.b32.xlu0 %v6325, 88
        %v6612 = vpop.permute.xlu0 %6611
        %6613 = vrot.lane.b32.xlu0 %v6330, 88
        %v6614 = vpop.permute.xlu0 %6613
        %v6615 = vsel %vm1017, %v6600, 0
        %v6617 = vsel %vm1017, %v6602, 0
        %v6619 = vsel %vm1017, %v6604, 0
        %v6621 = vsel %vm1017, %v6606, 0
        %v6623 = vsel %vm1017, %v6608, 0
        %v6625 = vsel %vm1017, %v6610, 0
        %v6627 = vsel %vm1017, %v6612, 0
        %v6629 = vsel %vm1017, %v6614, 0
        %6631 = vmatprep.subr.mxu0 0.0
        %6632 = vmatpush1.xpose.msra.mxu0 %v6623
        %6633 = vmatprep.subr.mxu0 0.0
        %6634 = vmatpush1.xpose.msra.mxu0 %v6625
        %6635 = vmatprep.subr.mxu0 0.0
        %6636 = vmatpush1.xpose.msra.mxu0 %v6627
        %6637 = vmatprep.subr.mxu0 0.0
        %6638 = vmatpush1.xpose.msra.mxu0 %v6629
        %6639 = vmatprep.subr.mxu0 0.0
        %6640 = vmatpush1.xpose.msra.mxu0 0.0
        %6641 = vmatprep.subr.mxu0 0.0
        %6642 = vmatpush1.xpose.msra.mxu0 0.0
        %6643 = vmatprep.subr.mxu0 0.0
        %6644 = vmatpush1.xpose.msra.mxu0 0.0
        %6645 = vmatprep.subr.mxu0 0.0
        %6646 = vmatpush1.xpose.msra.mxu0 0.0
        %6647 = vmatprep.subr.mxu0 0.0
        %6648 = vmatpush1.xpose.msra.mxu0 0.0
        %6649 = vmatprep.subr.mxu0 0.0
        %6650 = vmatpush1.xpose.msra.mxu0 0.0
        %6651 = vmatprep.subr.mxu0 0.0
        %6652 = vmatpush1.xpose.msra.mxu0 0.0
        %6653 = vmatprep.subr.mxu0 0.0
        %6654 = vmatpush1.xpose.msra.mxu0 0.0
        %6655 = vmatprep.subr.mxu0 0.0
        %6656 = vmatpush1.xpose.msra.mxu0 0.0
        %6657 = vmatprep.subr.mxu0 0.0
        %6658 = vmatpush1.xpose.msra.mxu0 0.0
        %6659 = vmatprep.subr.mxu0 0.0
        %6660 = vmatpush1.xpose.msra.mxu0 0.0
        %6661 = vmatprep.subr.mxu0 0.0
        %6662 = vmatpush1.xpose.msra.mxu0 0.0
        %6663 = vmatprep.subr.mxu0 0.0
        %6664 = vmatpush1.xpose.msra.mxu0 0.0
        %6665 = vmatprep.subr.mxu0 0.0
        %6666 = vmatpush1.xpose.msra.mxu0 0.0
        %6667 = vmatprep.subr.mxu0 0.0
        %6668 = vmatpush1.xpose.msra.mxu0 0.0
        %6669 = vmatprep.subr.mxu0 0.0
        %6670 = vmatpush1.xpose.msra.mxu0 0.0
        %6671 = vmatprep.subr.mxu0 0.0
        %6672 = vmatpush1.xpose.msra.mxu0 0.0
        %6673 = vmatprep.subr.mxu0 0.0
        %6674 = vmatpush1.xpose.msra.mxu0 0.0
        %6675 = vmatprep.subr.mxu0 0.0
        %6676 = vmatpush1.xpose.msra.mxu0 0.0
        %6677 = vmatprep.subr.mxu0 0.0
        %6678 = vmatpush1.xpose.msra.mxu0 0.0
        %6679 = vmatprep.subr.mxu0 0.0
        %6680 = vmatpush1.xpose.msra.mxu0 0.0
        %6681 = vmatprep.subr.mxu0 0.0
        %6682 = vmatpush1.xpose.msra.mxu0 0.0
        %6683 = vmatprep.subr.mxu0 0.0
        %6684 = vmatpush1.xpose.msra.mxu0 0.0
        %6685 = vmatprep.subr.mxu0 0.0
        %6686 = vmatpush1.xpose.msra.mxu0 0.0
        %6687 = vmatprep.subr.mxu0 0.0
        %6688 = vmatpush1.xpose.msra.mxu0 0.0
        %6689 = vmatprep.subr.mxu0 0.0
        %6690 = vmatpush1.xpose.msra.mxu0 0.0
        %6691 = vmatprep.subr.mxu0 0.0
        %6692 = vmatpush1.xpose.msra.mxu0 0.0
        %6693 = vmatprep.subr.mxu0 0.0
        %6694 = vmatpush1.xpose.msra.mxu0 0.0
        %6695 = vmatprep.mubr.f32.mxu0 0.0
        %6696 = vmatmul.mubr.f32.gmra.mrb[0].mxu0 %v6615
        %v6697 = vpop.f32.mrb[0].mxu0
        %v6698 = vadd.f32 %v819, %v6697
        %v6699 = vpop.f32.mrb[0].mxu0
        %6700 = vmatprep.mubr.f32.mxu0 0.0
        %6701 = vmatmul.mubr.f32.gmra.mrb[0].mxu0 %v6617
        %v6702 = vpop.f32.mrb[0].mxu0
        %v6703 = vadd.f32 %v820, %v6702
        %v6704 = vpop.f32.mrb[0].mxu0
        %6705 = vmatprep.mubr.f32.mxu0 0.0
        %6706 = vmatmul.mubr.f32.gmra.mrb[0].mxu0 %v6619
        %v6707 = vpop.f32.mrb[0].mxu0
        %v6708 = vadd.f32 %v821, %v6707
        %v6709 = vpop.f32.mrb[0].mxu0
        %6710 = vmatprep.mubr.f32.mxu0 0.0
        %6711 = vmatmul.mubr.f32.gmra.mrb[0].mxu0 %v6621
        %v6712 = vpop.f32.mrb[0].mxu0
        %v6713 = vadd.f32 %v822, %v6712
        %v6714 = vpop.f32.mrb[0].mxu0
        %6715 = vdwg.mxu0
        %v6716 = vsel %vm834, %v6698, -inf
        %6717 = vmax.xlane.f32.xlu0 %v6716
        %v6718 = vpop.xlane.xlu0 %6717
        %v6719 = vsel %vm834, %v6703, -inf
        %6720 = vmax.xlane.f32.xlu0 %v6719
        %v6721 = vpop.xlane.xlu0 %6720
        %v6722 = vsel %vm834, %v6708, -inf
        %6723 = vmax.xlane.f32.xlu0 %v6722
        %v6724 = vpop.xlane.xlu0 %6723
        %v6725 = vsel %vm834, %v6713, -inf
        %6726 = vmax.xlane.f32.xlu0 %v6725
        %v6727 = vpop.xlane.xlu0 %6726
        %v6728 = vsub.f32 %v6698, %v6718
        %v6729 = vsub.f32 %v6703, %v6721
        %v6730 = vsub.f32 %v6708, %v6724
        %v6731 = vsub.f32 %v6713, %v6727
        %v6732 = vmul.f32 %v6728, 1.442695
        %v6733 = vpow.pop %v6732
        %v6734 = vmul.f32 %v6729, 1.442695
        %v6735 = vpow.pop %v6734
        %v6736 = vmul.f32 %v6730, 1.442695
        %v6737 = vpow.pop %v6736
        %v6738 = vmul.f32 %v6731, 1.442695
        %v6739 = vpow.pop %v6738
        %v6740 = vsel %vm834, %v6733, 0.0
        %6741 = vadd.xlane.f32.xlu0 %v6740
        %v6742 = vpop.xlane.xlu0 %6741
        %v6743 = vsel %vm834, %v6735, 0.0
        %6744 = vadd.xlane.f32.xlu0 %v6743
        %v6745 = vpop.xlane.xlu0 %6744
        %v6746 = vsel %vm834, %v6737, 0.0
        %6747 = vadd.xlane.f32.xlu0 %v6746
        %v6748 = vpop.xlane.xlu0 %6747
        %v6749 = vsel %vm834, %v6739, 0.0
        %6750 = vadd.xlane.f32.xlu0 %v6749
        %v6751 = vpop.xlane.xlu0 %6750
        %v6752 = vrcp.pop %v6742
        %v6753 = vrcp.pop %v6745
        %v6754 = vrcp.pop %v6748
        %v6755 = vrcp.pop %v6751
        %v6756 = vmul.f32 %v6733, %v6752
        %v6757 = vmul.f32 %v6735, %v6753
        %v6758 = vmul.f32 %v6737, %v6754
        %v6759 = vmul.f32 %v6739, %v6755
        %6760 = vrot.lane.b32.xlu0 %v6315, 56
        %v6761 = vpop.permute.xlu0 %6760
        %6762 = vrot.lane.b32.xlu0 %v6320, 56
        %v6763 = vpop.permute.xlu0 %6762
        %6764 = vrot.lane.b32.xlu0 %v6325, 56
        %v6765 = vpop.permute.xlu0 %6764
        %6766 = vrot.lane.b32.xlu0 %v6330, 56
        %v6767 = vpop.permute.xlu0 %6766
        %v6773 = vsel %vm834, %v6756, 0
        %v6776 = vsel %vm834, %v6757, 0
        %v6779 = vsel %vm834, %v6758, 0
        %v6782 = vsel %vm834, %v6759, 0
        %6784 = vmatprep.subr.mxu0 0.0
        %6785 = vmatpush1.msra.mxu0 %v6761
        %6786 = vmatprep.subr.mxu0 0.0
        %6787 = vmatpush1.msra.mxu0 %v6763
        %6788 = vmatprep.subr.mxu0 0.0
        %6789 = vmatpush1.msra.mxu0 %v6765
        %6790 = vmatprep.subr.mxu0 0.0
        %6791 = vmatpush1.msra.mxu0 %v6767
        %6792 = vmatprep.subr.mxu0 0.0
        %6793 = vmatpush1.msra.mxu0 0.0
        %6794 = vmatprep.subr.mxu0 0.0
        %6795 = vmatpush1.msra.mxu0 0.0
        %6796 = vmatprep.subr.mxu0 0.0
        %6797 = vmatpush1.msra.mxu0 0.0
        %6798 = vmatprep.subr.mxu0 0.0
        %6799 = vmatpush1.msra.mxu0 0.0
        %6800 = vmatprep.subr.mxu0 0.0
        %6801 = vmatpush1.msra.mxu0 0.0
        %6802 = vmatprep.subr.mxu0 0.0
        %6803 = vmatpush1.msra.mxu0 0.0
        %6804 = vmatprep.subr.mxu0 0.0
        %6805 = vmatpush1.msra.mxu0 0.0
        %6806 = vmatprep.subr.mxu0 0.0
        %6807 = vmatpush1.msra.mxu0 0.0
        %6808 = vmatprep.subr.mxu0 0.0
        %6809 = vmatpush1.msra.mxu0 0.0
        %6810 = vmatprep.subr.mxu0 0.0
        %6811 = vmatpush1.msra.mxu0 0.0
        %6812 = vmatprep.subr.mxu0 0.0
        %6813 = vmatpush1.msra.mxu0 0.0
        %6814 = vmatprep.subr.mxu0 0.0
        %6815 = vmatpush1.msra.mxu0 0.0
        %6816 = vmatprep.subr.mxu0 0.0
        %6817 = vmatpush1.msra.mxu0 0.0
        %6818 = vmatprep.subr.mxu0 0.0
        %6819 = vmatpush1.msra.mxu0 0.0
        %6820 = vmatprep.subr.mxu0 0.0
        %6821 = vmatpush1.msra.mxu0 0.0
        %6822 = vmatprep.subr.mxu0 0.0
        %6823 = vmatpush1.msra.mxu0 0.0
        %6824 = vmatprep.subr.mxu0 0.0
        %6825 = vmatpush1.msra.mxu0 0.0
        %6826 = vmatprep.subr.mxu0 0.0
        %6827 = vmatpush1.msra.mxu0 0.0
        %6828 = vmatprep.subr.mxu0 0.0
        %6829 = vmatpush1.msra.mxu0 0.0
        %6830 = vmatprep.subr.mxu0 0.0
        %6831 = vmatpush1.msra.mxu0 0.0
        %6832 = vmatprep.subr.mxu0 0.0
        %6833 = vmatpush1.msra.mxu0 0.0
        %6834 = vmatprep.subr.mxu0 0.0
        %6835 = vmatpush1.msra.mxu0 0.0
        %6836 = vmatprep.subr.mxu0 0.0
        %6837 = vmatpush1.msra.mxu0 0.0
        %6838 = vmatprep.subr.mxu0 0.0
        %6839 = vmatpush1.msra.mxu0 0.0
        %6840 = vmatprep.subr.mxu0 0.0
        %6841 = vmatpush1.msra.mxu0 0.0
        %6842 = vmatprep.subr.mxu0 0.0
        %6843 = vmatpush1.msra.mxu0 0.0
        %6844 = vmatprep.subr.mxu0 0.0
        %6845 = vmatpush1.msra.mxu0 0.0
        %6846 = vmatprep.subr.mxu0 0.0
        %6847 = vmatpush1.msra.mxu0 0.0
        %6848 = vmatprep.mubr.f32.mxu0 0.0
        %6849 = vmatmul.mubr.f32.gmra.mrb[0].mxu0 %v6773
        %v6850 = vpop.f32.mrb[0].mxu0
        %v6851 = vadd.f32 0.0, %v6850
        %v6852 = vpop.f32.mrb[0].mxu0
        %6853 = vmatprep.mubr.f32.mxu0 0.0
        %6854 = vmatmul.mubr.f32.gmra.mrb[0].mxu0 %v6776
        %v6855 = vpop.f32.mrb[0].mxu0
        %v6856 = vadd.f32 0.0, %v6855
        %v6857 = vpop.f32.mrb[0].mxu0
        %6858 = vmatprep.mubr.f32.mxu0 0.0
        %6859 = vmatmul.mubr.f32.gmra.mrb[0].mxu0 %v6779
        %v6860 = vpop.f32.mrb[0].mxu0
        %v6861 = vadd.f32 0.0, %v6860
        %v6862 = vpop.f32.mrb[0].mxu0
        %6863 = vmatprep.mubr.f32.mxu0 0.0
        %6864 = vmatmul.mubr.f32.gmra.mrb[0].mxu0 %v6782
        %v6865 = vpop.f32.mrb[0].mxu0
        %v6866 = vadd.f32 0.0, %v6865
        %v6867 = vpop.f32.mrb[0].mxu0
        %6868 = vdwg.mxu0
        %v6870 = vsel %vm1017, %v6851, 0
        %v6873 = vsel %vm1017, %v6856, 0
        %v6876 = vsel %vm1017, %v6861, 0
        %v6879 = vsel %vm1017, %v6866, 0
        %6881 = vmatprep.subr.mxu0 0.0
        %6882 = vmatpush1.msra.mxu0 %v6159
        %6883 = vmatprep.subr.mxu0 0.0
        %6884 = vmatpush1.msra.mxu0 0.0
        %6885 = vmatprep.subr.mxu0 0.0
        %6886 = vmatpush1.msra.mxu0 0.0
        %6887 = vmatprep.subr.mxu0 0.0
        %6888 = vmatpush1.msra.mxu0 0.0
        %6889 = vmatprep.subr.mxu0 0.0
        %6890 = vmatpush1.msra.mxu0 0.0
        %6891 = vmatprep.subr.mxu0 0.0
        %6892 = vmatpush1.msra.mxu0 0.0
        %6893 = vmatprep.subr.mxu0 0.0
        %6894 = vmatpush1.msra.mxu0 0.0
        %6895 = vmatprep.subr.mxu0 0.0
        %6896 = vmatpush1.msra.mxu0 0.0
        %6897 = vmatprep.subr.mxu0 0.0
        %6898 = vmatpush1.msra.mxu0 0.0
        %6899 = vmatprep.subr.mxu0 0.0
        %6900 = vmatpush1.msra.mxu0 0.0
        %6901 = vmatprep.subr.mxu0 0.0
        %6902 = vmatpush1.msra.mxu0 0.0
        %6903 = vmatprep.subr.mxu0 0.0
        %6904 = vmatpush1.msra.mxu0 0.0
        %6905 = vmatprep.subr.mxu0 0.0
        %6906 = vmatpush1.msra.mxu0 0.0
        %6907 = vmatprep.subr.mxu0 0.0
        %6908 = vmatpush1.msra.mxu0 0.0
        %6909 = vmatprep.subr.mxu0 0.0
        %6910 = vmatpush1.msra.mxu0 0.0
        %6911 = vmatprep.subr.mxu0 0.0
        %6912 = vmatpush1.msra.mxu0 0.0
        %6913 = vmatprep.subr.mxu0 0.0
        %6914 = vmatpush1.msra.mxu0 0.0
        %6915 = vmatprep.subr.mxu0 0.0
        %6916 = vmatpush1.msra.mxu0 0.0
        %6917 = vmatprep.subr.mxu0 0.0
        %6918 = vmatpush1.msra.mxu0 0.0
        %6919 = vmatprep.subr.mxu0 0.0
        %6920 = vmatpush1.msra.mxu0 0.0
        %6921 = vmatprep.subr.mxu0 0.0
        %6922 = vmatpush1.msra.mxu0 0.0
        %6923 = vmatprep.subr.mxu0 0.0
        %6924 = vmatpush1.msra.mxu0 0.0
        %6925 = vmatprep.subr.mxu0 0.0
        %6926 = vmatpush1.msra.mxu0 0.0
        %6927 = vmatprep.subr.mxu0 0.0
        %6928 = vmatpush1.msra.mxu0 0.0
        %6929 = vmatprep.subr.mxu0 0.0
        %6930 = vmatpush1.msra.mxu0 0.0
        %6931 = vmatprep.subr.mxu0 0.0
        %6932 = vmatpush1.msra.mxu0 0.0
        %6933 = vmatprep.subr.mxu0 0.0
        %6934 = vmatpush1.msra.mxu0 0.0
        %6935 = vmatprep.subr.mxu0 0.0
        %6936 = vmatpush1.msra.mxu0 0.0
        %6937 = vmatprep.subr.mxu0 0.0
        %6938 = vmatpush1.msra.mxu0 0.0
        %6939 = vmatprep.subr.mxu0 0.0
        %6940 = vmatpush1.msra.mxu0 0.0
        %6941 = vmatprep.subr.mxu0 0.0
        %6942 = vmatpush1.msra.mxu0 0.0
        %6943 = vmatprep.subr.mxu0 0.0
        %6944 = vmatpush1.msra.mxu0 0.0
        %6945 = vmatprep.mubr.f32.mxu0 0.0
        %6946 = vmatmul.mubr.f32.gmra.mrb[0].mxu0 %v6870
        %v6947 = vpop.f32.mrb[0].mxu0
        %v6948 = vadd.f32 0.0, %v6947
        %v6949 = vpop.f32.mrb[0].mxu0
        %6950 = vmatprep.mubr.f32.mxu0 0.0
        %6951 = vmatmul.mubr.f32.gmra.mrb[0].mxu0 %v6873
        %v6952 = vpop.f32.mrb[0].mxu0
        %v6953 = vadd.f32 0.0, %v6952
        %v6954 = vpop.f32.mrb[0].mxu0
        %6955 = vmatprep.mubr.f32.mxu0 0.0
        %6956 = vmatmul.mubr.f32.gmra.mrb[0].mxu0 %v6876
        %v6957 = vpop.f32.mrb[0].mxu0
        %v6958 = vadd.f32 0.0, %v6957
        %v6959 = vpop.f32.mrb[0].mxu0
        %6960 = vmatprep.mubr.f32.mxu0 0.0
        %6961 = vmatmul.mubr.f32.gmra.mrb[0].mxu0 %v6879
        %v6962 = vpop.f32.mrb[0].mxu0
        %v6963 = vadd.f32 0.0, %v6962
        %v6964 = vpop.f32.mrb[0].mxu0
        %6965 = vdwg.mxu0
        %v6967 = vsel %vm1017, %v6581, 0
        %v6970 = vsel %vm1017, %v6586, 0
        %v6973 = vsel %vm1017, %v6591, 0
        %v6976 = vsel %vm1017, %v6596, 0
        %6978 = vmatprep.subr.mxu0 0.0
        %6979 = vmatpush1.msra.mxu0 %v6158
        %6980 = vmatprep.subr.mxu0 0.0
        %6981 = vmatpush1.msra.mxu0 0.0
        %6982 = vmatprep.subr.mxu0 0.0
        %6983 = vmatpush1.msra.mxu0 0.0
        %6984 = vmatprep.subr.mxu0 0.0
        %6985 = vmatpush1.msra.mxu0 0.0
        %6986 = vmatprep.subr.mxu0 0.0
        %6987 = vmatpush1.msra.mxu0 0.0
        %6988 = vmatprep.subr.mxu0 0.0
        %6989 = vmatpush1.msra.mxu0 0.0
        %6990 = vmatprep.subr.mxu0 0.0
        %6991 = vmatpush1.msra.mxu0 0.0
        %6992 = vmatprep.subr.mxu0 0.0
        %6993 = vmatpush1.msra.mxu0 0.0
        %6994 = vmatprep.subr.mxu0 0.0
        %6995 = vmatpush1.msra.mxu0 0.0
        %6996 = vmatprep.subr.mxu0 0.0
        %6997 = vmatpush1.msra.mxu0 0.0
        %6998 = vmatprep.subr.mxu0 0.0
        %6999 = vmatpush1.msra.mxu0 0.0
        %7000 = vmatprep.subr.mxu0 0.0
        %7001 = vmatpush1.msra.mxu0 0.0
        %7002 = vmatprep.subr.mxu0 0.0
        %7003 = vmatpush1.msra.mxu0 0.0
        %7004 = vmatprep.subr.mxu0 0.0
        %7005 = vmatpush1.msra.mxu0 0.0
        %7006 = vmatprep.subr.mxu0 0.0
        %7007 = vmatpush1.msra.mxu0 0.0
        %7008 = vmatprep.subr.mxu0 0.0
        %7009 = vmatpush1.msra.mxu0 0.0
        %7010 = vmatprep.subr.mxu0 0.0
        %7011 = vmatpush1.msra.mxu0 0.0
        %7012 = vmatprep.subr.mxu0 0.0
        %7013 = vmatpush1.msra.mxu0 0.0
        %7014 = vmatprep.subr.mxu0 0.0
        %7015 = vmatpush1.msra.mxu0 0.0
        %7016 = vmatprep.subr.mxu0 0.0
        %7017 = vmatpush1.msra.mxu0 0.0
        %7018 = vmatprep.subr.mxu0 0.0
        %7019 = vmatpush1.msra.mxu0 0.0
        %7020 = vmatprep.subr.mxu0 0.0
        %7021 = vmatpush1.msra.mxu0 0.0
        %7022 = vmatprep.subr.mxu0 0.0
        %7023 = vmatpush1.msra.mxu0 0.0
        %7024 = vmatprep.subr.mxu0 0.0
        %7025 = vmatpush1.msra.mxu0 0.0
        %7026 = vmatprep.subr.mxu0 0.0
        %7027 = vmatpush1.msra.mxu0 0.0
        %7028 = vmatprep.subr.mxu0 0.0
        %7029 = vmatpush1.msra.mxu0 0.0
        %7030 = vmatprep.subr.mxu0 0.0
        %7031 = vmatpush1.msra.mxu0 0.0
        %7032 = vmatprep.subr.mxu0 0.0
        %7033 = vmatpush1.msra.mxu0 0.0
        %7034 = vmatprep.subr.mxu0 0.0
        %7035 = vmatpush1.msra.mxu0 0.0
        %7036 = vmatprep.subr.mxu0 0.0
        %7037 = vmatpush1.msra.mxu0 0.0
        %7038 = vmatprep.subr.mxu0 0.0
        %7039 = vmatpush1.msra.mxu0 0.0
        %7040 = vmatprep.subr.mxu0 0.0
        %7041 = vmatpush1.msra.mxu0 0.0
        %7042 = vmatprep.mubr.f32.mxu0 0.0
        %7043 = vmatmul.mubr.f32.gmra.mrb[0].mxu0 %v6967
        %v7044 = vpop.f32.mrb[0].mxu0
        %v7045 = vadd.f32 %v6948, %v7044
        %v7046 = vpop.f32.mrb[0].mxu0
        %7047 = vmatprep.mubr.f32.mxu0 0.0
        %7048 = vmatmul.mubr.f32.gmra.mrb[0].mxu0 %v6970
        %v7049 = vpop.f32.mrb[0].mxu0
        %v7050 = vadd.f32 %v6953, %v7049
        %v7051 = vpop.f32.mrb[0].mxu0
        %7052 = vmatprep.mubr.f32.mxu0 0.0
        %7053 = vmatmul.mubr.f32.gmra.mrb[0].mxu0 %v6973
        %v7054 = vpop.f32.mrb[0].mxu0
        %v7055 = vadd.f32 %v6958, %v7054
        %v7056 = vpop.f32.mrb[0].mxu0
        %7057 = vmatprep.mubr.f32.mxu0 0.0
        %7058 = vmatmul.mubr.f32.gmra.mrb[0].mxu0 %v6976
        %v7059 = vpop.f32.mrb[0].mxu0
        %v7060 = vadd.f32 %v6963, %v7059
        %v7061 = vpop.f32.mrb[0].mxu0
        %7062 = vdwg.mxu0
        %7063 = vrot.lane.b32.xlu0 %v6315, 112
        %v7064 = vpop.permute.xlu0 %7063
        %7065 = vrot.lane.b32.xlu0 %v6320, 112
        %v7066 = vpop.permute.xlu0 %7065
        %7067 = vrot.lane.b32.xlu0 %v6325, 112
        %v7068 = vpop.permute.xlu0 %7067
        %7069 = vrot.lane.b32.xlu0 %v6330, 112
        %v7070 = vpop.permute.xlu0 %7069
        %7071 = vrot.lane.b32.xlu0 %v6315, 80
        %v7072 = vpop.permute.xlu0 %7071
        %7073 = vrot.lane.b32.xlu0 %v6320, 80
        %v7074 = vpop.permute.xlu0 %7073
        %7075 = vrot.lane.b32.xlu0 %v6325, 80
        %v7076 = vpop.permute.xlu0 %7075
        %7077 = vrot.lane.b32.xlu0 %v6330, 80
        %v7078 = vpop.permute.xlu0 %7077
        %v7079 = vsel %vm1017, %v7064, 0
        %v7081 = vsel %vm1017, %v7066, 0
        %v7083 = vsel %vm1017, %v7068, 0
        %v7085 = vsel %vm1017, %v7070, 0
        %v7087 = vsel %vm1017, %v7072, 0
        %v7089 = vsel %vm1017, %v7074, 0
        %v7091 = vsel %vm1017, %v7076, 0
        %v7093 = vsel %vm1017, %v7078, 0
        %7095 = vmatprep.subr.mxu0 0.0
        %7096 = vmatpush1.xpose.msra.mxu0 %v7087
        %7097 = vmatprep.subr.mxu0 0.0
        %7098 = vmatpush1.xpose.msra.mxu0 %v7089
        %7099 = vmatprep.subr.mxu0 0.0
        %7100 = vmatpush1.xpose.msra.mxu0 %v7091
        %7101 = vmatprep.subr.mxu0 0.0
        %7102 = vmatpush1.xpose.msra.mxu0 %v7093
        %7103 = vmatprep.subr.mxu0 0.0
        %7104 = vmatpush1.xpose.msra.mxu0 0.0
        %7105 = vmatprep.subr.mxu0 0.0
        %7106 = vmatpush1.xpose.msra.mxu0 0.0
        %7107 = vmatprep.subr.mxu0 0.0
        %7108 = vmatpush1.xpose.msra.mxu0 0.0
        %7109 = vmatprep.subr.mxu0 0.0
        %7110 = vmatpush1.xpose.msra.mxu0 0.0
        %7111 = vmatprep.subr.mxu0 0.0
        %7112 = vmatpush1.xpose.msra.mxu0 0.0
        %7113 = vmatprep.subr.mxu0 0.0
        %7114 = vmatpush1.xpose.msra.mxu0 0.0
        %7115 = vmatprep.subr.mxu0 0.0
        %7116 = vmatpush1.xpose.msra.mxu0 0.0
        %7117 = vmatprep.subr.mxu0 0.0
        %7118 = vmatpush1.xpose.msra.mxu0 0.0
        %7119 = vmatprep.subr.mxu0 0.0
        %7120 = vmatpush1.xpose.msra.mxu0 0.0
        %7121 = vmatprep.subr.mxu0 0.0
        %7122 = vmatpush1.xpose.msra.mxu0 0.0
        %7123 = vmatprep.subr.mxu0 0.0
        %7124 = vmatpush1.xpose.msra.mxu0 0.0
        %7125 = vmatprep.subr.mxu0 0.0
        %7126 = vmatpush1.xpose.msra.mxu0 0.0
        %7127 = vmatprep.subr.mxu0 0.0
        %7128 = vmatpush1.xpose.msra.mxu0 0.0
        %7129 = vmatprep.subr.mxu0 0.0
        %7130 = vmatpush1.xpose.msra.mxu0 0.0
        %7131 = vmatprep.subr.mxu0 0.0
        %7132 = vmatpush1.xpose.msra.mxu0 0.0
        %7133 = vmatprep.subr.mxu0 0.0
        %7134 = vmatpush1.xpose.msra.mxu0 0.0
        %7135 = vmatprep.subr.mxu0 0.0
        %7136 = vmatpush1.xpose.msra.mxu0 0.0
        %7137 = vmatprep.subr.mxu0 0.0
        %7138 = vmatpush1.xpose.msra.mxu0 0.0
        %7139 = vmatprep.subr.mxu0 0.0
        %7140 = vmatpush1.xpose.msra.mxu0 0.0
        %7141 = vmatprep.subr.mxu0 0.0
        %7142 = vmatpush1.xpose.msra.mxu0 0.0
        %7143 = vmatprep.subr.mxu0 0.0
        %7144 = vmatpush1.xpose.msra.mxu0 0.0
        %7145 = vmatprep.subr.mxu0 0.0
        %7146 = vmatpush1.xpose.msra.mxu0 0.0
        %7147 = vmatprep.subr.mxu0 0.0
        %7148 = vmatpush1.xpose.msra.mxu0 0.0
        %7149 = vmatprep.subr.mxu0 0.0
        %7150 = vmatpush1.xpose.msra.mxu0 0.0
        %7151 = vmatprep.subr.mxu0 0.0
        %7152 = vmatpush1.xpose.msra.mxu0 0.0
        %7153 = vmatprep.subr.mxu0 0.0
        %7154 = vmatpush1.xpose.msra.mxu0 0.0
        %7155 = vmatprep.subr.mxu0 0.0
        %7156 = vmatpush1.xpose.msra.mxu0 0.0
        %7157 = vmatprep.subr.mxu0 0.0
        %7158 = vmatpush1.xpose.msra.mxu0 0.0
        %7159 = vmatprep.mubr.f32.mxu0 0.0
        %7160 = vmatmul.mubr.f32.gmra.mrb[0].mxu0 %v7079
        %v7161 = vpop.f32.mrb[0].mxu0
        %v7162 = vadd.f32 %v819, %v7161
        %v7163 = vpop.f32.mrb[0].mxu0
        %7164 = vmatprep.mubr.f32.mxu0 0.0
        %7165 = vmatmul.mubr.f32.gmra.mrb[0].mxu0 %v7081
        %v7166 = vpop.f32.mrb[0].mxu0
        %v7167 = vadd.f32 %v820, %v7166
        %v7168 = vpop.f32.mrb[0].mxu0
        %7169 = vmatprep.mubr.f32.mxu0 0.0
        %7170 = vmatmul.mubr.f32.gmra.mrb[0].mxu0 %v7083
        %v7171 = vpop.f32.mrb[0].mxu0
        %v7172 = vadd.f32 %v821, %v7171
        %v7173 = vpop.f32.mrb[0].mxu0
        %7174 = vmatprep.mubr.f32.mxu0 0.0
        %7175 = vmatmul.mubr.f32.gmra.mrb[0].mxu0 %v7085
        %v7176 = vpop.f32.mrb[0].mxu0
        %v7177 = vadd.f32 %v822, %v7176
        %v7178 = vpop.f32.mrb[0].mxu0
        %7179 = vdwg.mxu0
        %v7180 = vsel %vm834, %v7162, -inf
        %7181 = vmax.xlane.f32.xlu0 %v7180
        %v7182 = vpop.xlane.xlu0 %7181
        %v7183 = vsel %vm834, %v7167, -inf
        %7184 = vmax.xlane.f32.xlu0 %v7183
        %v7185 = vpop.xlane.xlu0 %7184
        %v7186 = vsel %vm834, %v7172, -inf
        %7187 = vmax.xlane.f32.xlu0 %v7186
        %v7188 = vpop.xlane.xlu0 %7187
        %v7189 = vsel %vm834, %v7177, -inf
        %7190 = vmax.xlane.f32.xlu0 %v7189
        %v7191 = vpop.xlane.xlu0 %7190
        %v7192 = vsub.f32 %v7162, %v7182
        %v7193 = vsub.f32 %v7167, %v7185
        %v7194 = vsub.f32 %v7172, %v7188
        %v7195 = vsub.f32 %v7177, %v7191
        %v7196 = vmul.f32 %v7192, 1.442695
        %v7197 = vpow.pop %v7196
        %v7198 = vmul.f32 %v7193, 1.442695
        %v7199 = vpow.pop %v7198
        %v7200 = vmul.f32 %v7194, 1.442695
        %v7201 = vpow.pop %v7200
        %v7202 = vmul.f32 %v7195, 1.442695
        %v7203 = vpow.pop %v7202
        %v7204 = vsel %vm834, %v7197, 0.0
        %7205 = vadd.xlane.f32.xlu0 %v7204
        %v7206 = vpop.xlane.xlu0 %7205
        %v7207 = vsel %vm834, %v7199, 0.0
        %7208 = vadd.xlane.f32.xlu0 %v7207
        %v7209 = vpop.xlane.xlu0 %7208
        %v7210 = vsel %vm834, %v7201, 0.0
        %7211 = vadd.xlane.f32.xlu0 %v7210
        %v7212 = vpop.xlane.xlu0 %7211
        %v7213 = vsel %vm834, %v7203, 0.0
        %7214 = vadd.xlane.f32.xlu0 %v7213
        %v7215 = vpop.xlane.xlu0 %7214
        %v7216 = vrcp.pop %v7206
        %v7217 = vrcp.pop %v7209
        %v7218 = vrcp.pop %v7212
        %v7219 = vrcp.pop %v7215
        %v7220 = vmul.f32 %v7197, %v7216
        %v7221 = vmul.f32 %v7199, %v7217
        %v7222 = vmul.f32 %v7201, %v7218
        %v7223 = vmul.f32 %v7203, %v7219
        %7224 = vrot.lane.b32.xlu0 %v6315, 48
        %v7225 = vpop.permute.xlu0 %7224
        %7226 = vrot.lane.b32.xlu0 %v6320, 48
        %v7227 = vpop.permute.xlu0 %7226
        %7228 = vrot.lane.b32.xlu0 %v6325, 48
        %v7229 = vpop.permute.xlu0 %7228
        %7230 = vrot.lane.b32.xlu0 %v6330, 48
        %v7231 = vpop.permute.xlu0 %7230
        %v7237 = vsel %vm834, %v7220, 0
        %v7240 = vsel %vm834, %v7221, 0
        %v7243 = vsel %vm834, %v7222, 0
        %v7246 = vsel %vm834, %v7223, 0
        %7248 = vmatprep.subr.mxu0 0.0
        %7249 = vmatpush1.msra.mxu0 %v7225
        %7250 = vmatprep.subr.mxu0 0.0
        %7251 = vmatpush1.msra.mxu0 %v7227
        %7252 = vmatprep.subr.mxu0 0.0
        %7253 = vmatpush1.msra.mxu0 %v7229
        %7254 = vmatprep.subr.mxu0 0.0
        %7255 = vmatpush1.msra.mxu0 %v7231
        %7256 = vmatprep.subr.mxu0 0.0
        %7257 = vmatpush1.msra.mxu0 0.0
        %7258 = vmatprep.subr.mxu0 0.0
        %7259 = vmatpush1.msra.mxu0 0.0
        %7260 = vmatprep.subr.mxu0 0.0
        %7261 = vmatpush1.msra.mxu0 0.0
        %7262 = vmatprep.subr.mxu0 0.0
        %7263 = vmatpush1.msra.mxu0 0.0
        %7264 = vmatprep.subr.mxu0 0.0
        %7265 = vmatpush1.msra.mxu0 0.0
        %7266 = vmatprep.subr.mxu0 0.0
        %7267 = vmatpush1.msra.mxu0 0.0
        %7268 = vmatprep.subr.mxu0 0.0
        %7269 = vmatpush1.msra.mxu0 0.0
        %7270 = vmatprep.subr.mxu0 0.0
        %7271 = vmatpush1.msra.mxu0 0.0
        %7272 = vmatprep.subr.mxu0 0.0
        %7273 = vmatpush1.msra.mxu0 0.0
        %7274 = vmatprep.subr.mxu0 0.0
        %7275 = vmatpush1.msra.mxu0 0.0
        %7276 = vmatprep.subr.mxu0 0.0
        %7277 = vmatpush1.msra.mxu0 0.0
        %7278 = vmatprep.subr.mxu0 0.0
        %7279 = vmatpush1.msra.mxu0 0.0
        %7280 = vmatprep.subr.mxu0 0.0
        %7281 = vmatpush1.msra.mxu0 0.0
        %7282 = vmatprep.subr.mxu0 0.0
        %7283 = vmatpush1.msra.mxu0 0.0
        %7284 = vmatprep.subr.mxu0 0.0
        %7285 = vmatpush1.msra.mxu0 0.0
        %7286 = vmatprep.subr.mxu0 0.0
        %7287 = vmatpush1.msra.mxu0 0.0
        %7288 = vmatprep.subr.mxu0 0.0
        %7289 = vmatpush1.msra.mxu0 0.0
        %7290 = vmatprep.subr.mxu0 0.0
        %7291 = vmatpush1.msra.mxu0 0.0
        %7292 = vmatprep.subr.mxu0 0.0
        %7293 = vmatpush1.msra.mxu0 0.0
        %7294 = vmatprep.subr.mxu0 0.0
        %7295 = vmatpush1.msra.mxu0 0.0
        %7296 = vmatprep.subr.mxu0 0.0
        %7297 = vmatpush1.msra.mxu0 0.0
        %7298 = vmatprep.subr.mxu0 0.0
        %7299 = vmatpush1.msra.mxu0 0.0
        %7300 = vmatprep.subr.mxu0 0.0
        %7301 = vmatpush1.msra.mxu0 0.0
        %7302 = vmatprep.subr.mxu0 0.0
        %7303 = vmatpush1.msra.mxu0 0.0
        %7304 = vmatprep.subr.mxu0 0.0
        %7305 = vmatpush1.msra.mxu0 0.0
        %7306 = vmatprep.subr.mxu0 0.0
        %7307 = vmatpush1.msra.mxu0 0.0
        %7308 = vmatprep.subr.mxu0 0.0
        %7309 = vmatpush1.msra.mxu0 0.0
        %7310 = vmatprep.subr.mxu0 0.0
        %7311 = vmatpush1.msra.mxu0 0.0
        %7312 = vmatprep.mubr.f32.mxu0 0.0
        %7313 = vmatmul.mubr.f32.gmra.mrb[0].mxu0 %v7237
        %v7314 = vpop.f32.mrb[0].mxu0
        %v7315 = vadd.f32 0.0, %v7314
        %v7316 = vpop.f32.mrb[0].mxu0
        %7317 = vmatprep.mubr.f32.mxu0 0.0
        %7318 = vmatmul.mubr.f32.gmra.mrb[0].mxu0 %v7240
        %v7319 = vpop.f32.mrb[0].mxu0
        %v7320 = vadd.f32 0.0, %v7319
        %v7321 = vpop.f32.mrb[0].mxu0
        %7322 = vmatprep.mubr.f32.mxu0 0.0
        %7323 = vmatmul.mubr.f32.gmra.mrb[0].mxu0 %v7243
        %v7324 = vpop.f32.mrb[0].mxu0
        %v7325 = vadd.f32 0.0, %v7324
        %v7326 = vpop.f32.mrb[0].mxu0
        %7327 = vmatprep.mubr.f32.mxu0 0.0
        %7328 = vmatmul.mubr.f32.gmra.mrb[0].mxu0 %v7246
        %v7329 = vpop.f32.mrb[0].mxu0
        %v7330 = vadd.f32 0.0, %v7329
        %v7331 = vpop.f32.mrb[0].mxu0
        %7332 = vdwg.mxu0
        %v7334 = vsel %vm1017, %v7315, 0
        %v7337 = vsel %vm1017, %v7320, 0
        %v7340 = vsel %vm1017, %v7325, 0
        %v7343 = vsel %vm1017, %v7330, 0
        %7345 = vmatprep.subr.mxu0 0.0
        %7346 = vmatpush1.msra.mxu0 %v6160
        %7347 = vmatprep.subr.mxu0 0.0
        %7348 = vmatpush1.msra.mxu0 0.0
        %7349 = vmatprep.subr.mxu0 0.0
        %7350 = vmatpush1.msra.mxu0 0.0
        %7351 = vmatprep.subr.mxu0 0.0
        %7352 = vmatpush1.msra.mxu0 0.0
        %7353 = vmatprep.subr.mxu0 0.0
        %7354 = vmatpush1.msra.mxu0 0.0
        %7355 = vmatprep.subr.mxu0 0.0
        %7356 = vmatpush1.msra.mxu0 0.0
        %7357 = vmatprep.subr.mxu0 0.0
        %7358 = vmatpush1.msra.mxu0 0.0
        %7359 = vmatprep.subr.mxu0 0.0
        %7360 = vmatpush1.msra.mxu0 0.0
        %7361 = vmatprep.subr.mxu0 0.0
        %7362 = vmatpush1.msra.mxu0 0.0
        %7363 = vmatprep.subr.mxu0 0.0
        %7364 = vmatpush1.msra.mxu0 0.0
        %7365 = vmatprep.subr.mxu0 0.0
        %7366 = vmatpush1.msra.mxu0 0.0
        %7367 = vmatprep.subr.mxu0 0.0
        %7368 = vmatpush1.msra.mxu0 0.0
        %7369 = vmatprep.subr.mxu0 0.0
        %7370 = vmatpush1.msra.mxu0 0.0
        %7371 = vmatprep.subr.mxu0 0.0
        %7372 = vmatpush1.msra.mxu0 0.0
        %7373 = vmatprep.subr.mxu0 0.0
        %7374 = vmatpush1.msra.mxu0 0.0
        %7375 = vmatprep.subr.mxu0 0.0
        %7376 = vmatpush1.msra.mxu0 0.0
        %7377 = vmatprep.subr.mxu0 0.0
        %7378 = vmatpush1.msra.mxu0 0.0
        %7379 = vmatprep.subr.mxu0 0.0
        %7380 = vmatpush1.msra.mxu0 0.0
        %7381 = vmatprep.subr.mxu0 0.0
        %7382 = vmatpush1.msra.mxu0 0.0
        %7383 = vmatprep.subr.mxu0 0.0
        %7384 = vmatpush1.msra.mxu0 0.0
        %7385 = vmatprep.subr.mxu0 0.0
        %7386 = vmatpush1.msra.mxu0 0.0
        %7387 = vmatprep.subr.mxu0 0.0
        %7388 = vmatpush1.msra.mxu0 0.0
        %7389 = vmatprep.subr.mxu0 0.0
        %7390 = vmatpush1.msra.mxu0 0.0
        %7391 = vmatprep.subr.mxu0 0.0
        %7392 = vmatpush1.msra.mxu0 0.0
        %7393 = vmatprep.subr.mxu0 0.0
        %7394 = vmatpush1.msra.mxu0 0.0
        %7395 = vmatprep.subr.mxu0 0.0
        %7396 = vmatpush1.msra.mxu0 0.0
        %7397 = vmatprep.subr.mxu0 0.0
        %7398 = vmatpush1.msra.mxu0 0.0
        %7399 = vmatprep.subr.mxu0 0.0
        %7400 = vmatpush1.msra.mxu0 0.0
        %7401 = vmatprep.subr.mxu0 0.0
        %7402 = vmatpush1.msra.mxu0 0.0
        %7403 = vmatprep.subr.mxu0 0.0
        %7404 = vmatpush1.msra.mxu0 0.0
        %7405 = vmatprep.subr.mxu0 0.0
        %7406 = vmatpush1.msra.mxu0 0.0
        %7407 = vmatprep.subr.mxu0 0.0
        %7408 = vmatpush1.msra.mxu0 0.0
        %7409 = vmatprep.mubr.f32.mxu0 0.0
        %7410 = vmatmul.mubr.f32.gmra.mrb[0].mxu0 %v7334
        %v7411 = vpop.f32.mrb[0].mxu0
        %v7412 = vadd.f32 0.0, %v7411
        %v7413 = vpop.f32.mrb[0].mxu0
        %7414 = vmatprep.mubr.f32.mxu0 0.0
        %7415 = vmatmul.mubr.f32.gmra.mrb[0].mxu0 %v7337
        %v7416 = vpop.f32.mrb[0].mxu0
        %v7417 = vadd.f32 0.0, %v7416
        %v7418 = vpop.f32.mrb[0].mxu0
        %7419 = vmatprep.mubr.f32.mxu0 0.0
        %7420 = vmatmul.mubr.f32.gmra.mrb[0].mxu0 %v7340
        %v7421 = vpop.f32.mrb[0].mxu0
        %v7422 = vadd.f32 0.0, %v7421
        %v7423 = vpop.f32.mrb[0].mxu0
        %7424 = vmatprep.mubr.f32.mxu0 0.0
        %7425 = vmatmul.mubr.f32.gmra.mrb[0].mxu0 %v7343
        %v7426 = vpop.f32.mrb[0].mxu0
        %v7427 = vadd.f32 0.0, %v7426
        %v7428 = vpop.f32.mrb[0].mxu0
        %7429 = vdwg.mxu0
        %v7430 = vadd.f32 %v7045, %v7412
        %v7431 = vadd.f32 %v7050, %v7417
        %v7432 = vadd.f32 %v7055, %v7422
        %v7433 = vadd.f32 %v7060, %v7427
        %7434 = vrot.lane.b32.xlu0 %v6315, 104
        %v7435 = vpop.permute.xlu0 %7434
        %7436 = vrot.lane.b32.xlu0 %v6320, 104
        %v7437 = vpop.permute.xlu0 %7436
        %7438 = vrot.lane.b32.xlu0 %v6325, 104
        %v7439 = vpop.permute.xlu0 %7438
        %7440 = vrot.lane.b32.xlu0 %v6330, 104
        %v7441 = vpop.permute.xlu0 %7440
        %7442 = vrot.lane.b32.xlu0 %v6315, 72
        %v7443 = vpop.permute.xlu0 %7442
        %7444 = vrot.lane.b32.xlu0 %v6320, 72
        %v7445 = vpop.permute.xlu0 %7444
        %7446 = vrot.lane.b32.xlu0 %v6325, 72
        %v7447 = vpop.permute.xlu0 %7446
        %7448 = vrot.lane.b32.xlu0 %v6330, 72
        %v7449 = vpop.permute.xlu0 %7448
        %v7450 = vsel %vm1017, %v7435, 0
        %v7452 = vsel %vm1017, %v7437, 0
        %v7454 = vsel %vm1017, %v7439, 0
        %v7456 = vsel %vm1017, %v7441, 0
        %v7458 = vsel %vm1017, %v7443, 0
        %v7460 = vsel %vm1017, %v7445, 0
        %v7462 = vsel %vm1017, %v7447, 0
        %v7464 = vsel %vm1017, %v7449, 0
        %7466 = vmatprep.subr.mxu0 0.0
        %7467 = vmatpush1.xpose.msra.mxu0 %v7458
        %7468 = vmatprep.subr.mxu0 0.0
        %7469 = vmatpush1.xpose.msra.mxu0 %v7460
        %7470 = vmatprep.subr.mxu0 0.0
        %7471 = vmatpush1.xpose.msra.mxu0 %v7462
        %7472 = vmatprep.subr.mxu0 0.0
        %7473 = vmatpush1.xpose.msra.mxu0 %v7464
        %7474 = vmatprep.subr.mxu0 0.0
        %7475 = vmatpush1.xpose.msra.mxu0 0.0
        %7476 = vmatprep.subr.mxu0 0.0
        %7477 = vmatpush1.xpose.msra.mxu0 0.0
        %7478 = vmatprep.subr.mxu0 0.0
        %7479 = vmatpush1.xpose.msra.mxu0 0.0
        %7480 = vmatprep.subr.mxu0 0.0
        %7481 = vmatpush1.xpose.msra.mxu0 0.0
        %7482 = vmatprep.subr.mxu0 0.0
        %7483 = vmatpush1.xpose.msra.mxu0 0.0
        %7484 = vmatprep.subr.mxu0 0.0
        %7485 = vmatpush1.xpose.msra.mxu0 0.0
        %7486 = vmatprep.subr.mxu0 0.0
        %7487 = vmatpush1.xpose.msra.mxu0 0.0
        %7488 = vmatprep.subr.mxu0 0.0
        %7489 = vmatpush1.xpose.msra.mxu0 0.0
        %7490 = vmatprep.subr.mxu0 0.0
        %7491 = vmatpush1.xpose.msra.mxu0 0.0
        %7492 = vmatprep.subr.mxu0 0.0
        %7493 = vmatpush1.xpose.msra.mxu0 0.0
        %7494 = vmatprep.subr.mxu0 0.0
        %7495 = vmatpush1.xpose.msra.mxu0 0.0
        %7496 = vmatprep.subr.mxu0 0.0
        %7497 = vmatpush1.xpose.msra.mxu0 0.0
        %7498 = vmatprep.subr.mxu0 0.0
        %7499 = vmatpush1.xpose.msra.mxu0 0.0
        %7500 = vmatprep.subr.mxu0 0.0
        %7501 = vmatpush1.xpose.msra.mxu0 0.0
        %7502 = vmatprep.subr.mxu0 0.0
        %7503 = vmatpush1.xpose.msra.mxu0 0.0
        %7504 = vmatprep.subr.mxu0 0.0
        %7505 = vmatpush1.xpose.msra.mxu0 0.0
        %7506 = vmatprep.subr.mxu0 0.0
        %7507 = vmatpush1.xpose.msra.mxu0 0.0
        %7508 = vmatprep.subr.mxu0 0.0
        %7509 = vmatpush1.xpose.msra.mxu0 0.0
        %7510 = vmatprep.subr.mxu0 0.0
        %7511 = vmatpush1.xpose.msra.mxu0 0.0
        %7512 = vmatprep.subr.mxu0 0.0
        %7513 = vmatpush1.xpose.msra.mxu0 0.0
        %7514 = vmatprep.subr.mxu0 0.0
        %7515 = vmatpush1.xpose.msra.mxu0 0.0
        %7516 = vmatprep.subr.mxu0 0.0
        %7517 = vmatpush1.xpose.msra.mxu0 0.0
        %7518 = vmatprep.subr.mxu0 0.0
        %7519 = vmatpush1.xpose.msra.mxu0 0.0
        %7520 = vmatprep.subr.mxu0 0.0
        %7521 = vmatpush1.xpose.msra.mxu0 0.0
        %7522 = vmatprep.subr.mxu0 0.0
        %7523 = vmatpush1.xpose.msra.mxu0 0.0
        %7524 = vmatprep.subr.mxu0 0.0
        %7525 = vmatpush1.xpose.msra.mxu0 0.0
        %7526 = vmatprep.subr.mxu0 0.0
        %7527 = vmatpush1.xpose.msra.mxu0 0.0
        %7528 = vmatprep.subr.mxu0 0.0
        %7529 = vmatpush1.xpose.msra.mxu0 0.0
        %7530 = vmatprep.mubr.f32.mxu0 0.0
        %7531 = vmatmul.mubr.f32.gmra.mrb[0].mxu0 %v7450
        %v7532 = vpop.f32.mrb[0].mxu0
        %v7533 = vadd.f32 %v819, %v7532
        %v7534 = vpop.f32.mrb[0].mxu0
        %7535 = vmatprep.mubr.f32.mxu0 0.0
        %7536 = vmatmul.mubr.f32.gmra.mrb[0].mxu0 %v7452
        %v7537 = vpop.f32.mrb[0].mxu0
        %v7538 = vadd.f32 %v820, %v7537
        %v7539 = vpop.f32.mrb[0].mxu0
        %7540 = vmatprep.mubr.f32.mxu0 0.0
        %7541 = vmatmul.mubr.f32.gmra.mrb[0].mxu0 %v7454
        %v7542 = vpop.f32.mrb[0].mxu0
        %v7543 = vadd.f32 %v821, %v7542
        %v7544 = vpop.f32.mrb[0].mxu0
        %7545 = vmatprep.mubr.f32.mxu0 0.0
        %7546 = vmatmul.mubr.f32.gmra.mrb[0].mxu0 %v7456
        %v7547 = vpop.f32.mrb[0].mxu0
        %v7548 = vadd.f32 %v822, %v7547
        %v7549 = vpop.f32.mrb[0].mxu0
        %7550 = vdwg.mxu0
        %v7551 = vsel %vm834, %v7533, -inf
        %7552 = vmax.xlane.f32.xlu0 %v7551
        %v7553 = vpop.xlane.xlu0 %7552
        %v7554 = vsel %vm834, %v7538, -inf
        %7555 = vmax.xlane.f32.xlu0 %v7554
        %v7556 = vpop.xlane.xlu0 %7555
        %v7557 = vsel %vm834, %v7543, -inf
        %7558 = vmax.xlane.f32.xlu0 %v7557
        %v7559 = vpop.xlane.xlu0 %7558
        %v7560 = vsel %vm834, %v7548, -inf
        %7561 = vmax.xlane.f32.xlu0 %v7560
        %v7562 = vpop.xlane.xlu0 %7561
        %v7563 = vsub.f32 %v7533, %v7553
        %v7564 = vsub.f32 %v7538, %v7556
        %v7565 = vsub.f32 %v7543, %v7559
        %v7566 = vsub.f32 %v7548, %v7562
        %v7567 = vmul.f32 %v7563, 1.442695
        %v7568 = vpow.pop %v7567
        %v7569 = vmul.f32 %v7564, 1.442695
        %v7570 = vpow.pop %v7569
        %v7571 = vmul.f32 %v7565, 1.442695
        %v7572 = vpow.pop %v7571
        %v7573 = vmul.f32 %v7566, 1.442695
        %v7574 = vpow.pop %v7573
        %v7575 = vsel %vm834, %v7568, 0.0
        %7576 = vadd.xlane.f32.xlu0 %v7575
        %v7577 = vpop.xlane.xlu0 %7576
        %v7578 = vsel %vm834, %v7570, 0.0
        %7579 = vadd.xlane.f32.xlu0 %v7578
        %v7580 = vpop.xlane.xlu0 %7579
        %v7581 = vsel %vm834, %v7572, 0.0
        %7582 = vadd.xlane.f32.xlu0 %v7581
        %v7583 = vpop.xlane.xlu0 %7582
        %v7584 = vsel %vm834, %v7574, 0.0
        %7585 = vadd.xlane.f32.xlu0 %v7584
        %v7586 = vpop.xlane.xlu0 %7585
        %v7587 = vrcp.pop %v7577
        %v7588 = vrcp.pop %v7580
        %v7589 = vrcp.pop %v7583
        %v7590 = vrcp.pop %v7586
        %v7591 = vmul.f32 %v7568, %v7587
        %v7592 = vmul.f32 %v7570, %v7588
        %v7593 = vmul.f32 %v7572, %v7589
        %v7594 = vmul.f32 %v7574, %v7590
        %7595 = vrot.lane.b32.xlu0 %v6315, 40
        %v7596 = vpop.permute.xlu0 %7595
        %7597 = vrot.lane.b32.xlu0 %v6320, 40
        %v7598 = vpop.permute.xlu0 %7597
        %7599 = vrot.lane.b32.xlu0 %v6325, 40
        %v7600 = vpop.permute.xlu0 %7599
        %7601 = vrot.lane.b32.xlu0 %v6330, 40
        %v7602 = vpop.permute.xlu0 %7601
        %v7608 = vsel %vm834, %v7591, 0
        %v7611 = vsel %vm834, %v7592, 0
        %v7614 = vsel %vm834, %v7593, 0
        %v7617 = vsel %vm834, %v7594, 0
        %7619 = vmatprep.subr.mxu0 0.0
        %7620 = vmatpush1.msra.mxu0 %v7596
        %7621 = vmatprep.subr.mxu0 0.0
        %7622 = vmatpush1.msra.mxu0 %v7598
        %7623 = vmatprep.subr.mxu0 0.0
        %7624 = vmatpush1.msra.mxu0 %v7600
        %7625 = vmatprep.subr.mxu0 0.0
        %7626 = vmatpush1.msra.mxu0 %v7602
        %7627 = vmatprep.subr.mxu0 0.0
        %7628 = vmatpush1.msra.mxu0 0.0
        %7629 = vmatprep.subr.mxu0 0.0
        %7630 = vmatpush1.msra.mxu0 0.0
        %7631 = vmatprep.subr.mxu0 0.0
        %7632 = vmatpush1.msra.mxu0 0.0
        %7633 = vmatprep.subr.mxu0 0.0
        %7634 = vmatpush1.msra.mxu0 0.0
        %7635 = vmatprep.subr.mxu0 0.0
        %7636 = vmatpush1.msra.mxu0 0.0
        %7637 = vmatprep.subr.mxu0 0.0
        %7638 = vmatpush1.msra.mxu0 0.0
        %7639 = vmatprep.subr.mxu0 0.0
        %7640 = vmatpush1.msra.mxu0 0.0
        %7641 = vmatprep.subr.mxu0 0.0
        %7642 = vmatpush1.msra.mxu0 0.0
        %7643 = vmatprep.subr.mxu0 0.0
        %7644 = vmatpush1.msra.mxu0 0.0
        %7645 = vmatprep.subr.mxu0 0.0
        %7646 = vmatpush1.msra.mxu0 0.0
        %7647 = vmatprep.subr.mxu0 0.0
        %7648 = vmatpush1.msra.mxu0 0.0
        %7649 = vmatprep.subr.mxu0 0.0
        %7650 = vmatpush1.msra.mxu0 0.0
        %7651 = vmatprep.subr.mxu0 0.0
        %7652 = vmatpush1.msra.mxu0 0.0
        %7653 = vmatprep.subr.mxu0 0.0
        %7654 = vmatpush1.msra.mxu0 0.0
        %7655 = vmatprep.subr.mxu0 0.0
        %7656 = vmatpush1.msra.mxu0 0.0
        %7657 = vmatprep.subr.mxu0 0.0
        %7658 = vmatpush1.msra.mxu0 0.0
        %7659 = vmatprep.subr.mxu0 0.0
        %7660 = vmatpush1.msra.mxu0 0.0
        %7661 = vmatprep.subr.mxu0 0.0
        %7662 = vmatpush1.msra.mxu0 0.0
        %7663 = vmatprep.subr.mxu0 0.0
        %7664 = vmatpush1.msra.mxu0 0.0
        %7665 = vmatprep.subr.mxu0 0.0
        %7666 = vmatpush1.msra.mxu0 0.0
        %7667 = vmatprep.subr.mxu0 0.0
        %7668 = vmatpush1.msra.mxu0 0.0
        %7669 = vmatprep.subr.mxu0 0.0
        %7670 = vmatpush1.msra.mxu0 0.0
        %7671 = vmatprep.subr.mxu0 0.0
        %7672 = vmatpush1.msra.mxu0 0.0
        %7673 = vmatprep.subr.mxu0 0.0
        %7674 = vmatpush1.msra.mxu0 0.0
        %7675 = vmatprep.subr.mxu0 0.0
        %7676 = vmatpush1.msra.mxu0 0.0
        %7677 = vmatprep.subr.mxu0 0.0
        %7678 = vmatpush1.msra.mxu0 0.0
        %7679 = vmatprep.subr.mxu0 0.0
        %7680 = vmatpush1.msra.mxu0 0.0
        %7681 = vmatprep.subr.mxu0 0.0
        %7682 = vmatpush1.msra.mxu0 0.0
        %7683 = vmatprep.mubr.f32.mxu0 0.0
        %7684 = vmatmul.mubr.f32.gmra.mrb[0].mxu0 %v7608
        %v7685 = vpop.f32.mrb[0].mxu0
        %v7686 = vadd.f32 0.0, %v7685
        %v7687 = vpop.f32.mrb[0].mxu0
        %7688 = vmatprep.mubr.f32.mxu0 0.0
        %7689 = vmatmul.mubr.f32.gmra.mrb[0].mxu0 %v7611
        %v7690 = vpop.f32.mrb[0].mxu0
        %v7691 = vadd.f32 0.0, %v7690
        %v7692 = vpop.f32.mrb[0].mxu0
        %7693 = vmatprep.mubr.f32.mxu0 0.0
        %7694 = vmatmul.mubr.f32.gmra.mrb[0].mxu0 %v7614
        %v7695 = vpop.f32.mrb[0].mxu0
        %v7696 = vadd.f32 0.0, %v7695
        %v7697 = vpop.f32.mrb[0].mxu0
        %7698 = vmatprep.mubr.f32.mxu0 0.0
        %7699 = vmatmul.mubr.f32.gmra.mrb[0].mxu0 %v7617
        %v7700 = vpop.f32.mrb[0].mxu0
        %v7701 = vadd.f32 0.0, %v7700
        %v7702 = vpop.f32.mrb[0].mxu0
        %7703 = vdwg.mxu0
        %v7705 = vsel %vm1017, %v7686, 0
        %v7708 = vsel %vm1017, %v7691, 0
        %v7711 = vsel %vm1017, %v7696, 0
        %v7714 = vsel %vm1017, %v7701, 0
        %7716 = vmatprep.subr.mxu0 0.0
        %7717 = vmatpush1.msra.mxu0 %v6161
        %7718 = vmatprep.subr.mxu0 0.0
        %7719 = vmatpush1.msra.mxu0 0.0
        %7720 = vmatprep.subr.mxu0 0.0
        %7721 = vmatpush1.msra.mxu0 0.0
        %7722 = vmatprep.subr.mxu0 0.0
        %7723 = vmatpush1.msra.mxu0 0.0
        %7724 = vmatprep.subr.mxu0 0.0
        %7725 = vmatpush1.msra.mxu0 0.0
        %7726 = vmatprep.subr.mxu0 0.0
        %7727 = vmatpush1.msra.mxu0 0.0
        %7728 = vmatprep.subr.mxu0 0.0
        %7729 = vmatpush1.msra.mxu0 0.0
        %7730 = vmatprep.subr.mxu0 0.0
        %7731 = vmatpush1.msra.mxu0 0.0
        %7732 = vmatprep.subr.mxu0 0.0
        %7733 = vmatpush1.msra.mxu0 0.0
        %7734 = vmatprep.subr.mxu0 0.0
        %7735 = vmatpush1.msra.mxu0 0.0
        %7736 = vmatprep.subr.mxu0 0.0
        %7737 = vmatpush1.msra.mxu0 0.0
        %7738 = vmatprep.subr.mxu0 0.0
        %7739 = vmatpush1.msra.mxu0 0.0
        %7740 = vmatprep.subr.mxu0 0.0
        %7741 = vmatpush1.msra.mxu0 0.0
        %7742 = vmatprep.subr.mxu0 0.0
        %7743 = vmatpush1.msra.mxu0 0.0
        %7744 = vmatprep.subr.mxu0 0.0
        %7745 = vmatpush1.msra.mxu0 0.0
        %7746 = vmatprep.subr.mxu0 0.0
        %7747 = vmatpush1.msra.mxu0 0.0
        %7748 = vmatprep.subr.mxu0 0.0
        %7749 = vmatpush1.msra.mxu0 0.0
        %7750 = vmatprep.subr.mxu0 0.0
        %7751 = vmatpush1.msra.mxu0 0.0
        %7752 = vmatprep.subr.mxu0 0.0
        %7753 = vmatpush1.msra.mxu0 0.0
        %7754 = vmatprep.subr.mxu0 0.0
        %7755 = vmatpush1.msra.mxu0 0.0
        %7756 = vmatprep.subr.mxu0 0.0
        %7757 = vmatpush1.msra.mxu0 0.0
        %7758 = vmatprep.subr.mxu0 0.0
        %7759 = vmatpush1.msra.mxu0 0.0
        %7760 = vmatprep.subr.mxu0 0.0
        %7761 = vmatpush1.msra.mxu0 0.0
        %7762 = vmatprep.subr.mxu0 0.0
        %7763 = vmatpush1.msra.mxu0 0.0
        %7764 = vmatprep.subr.mxu0 0.0
        %7765 = vmatpush1.msra.mxu0 0.0
        %7766 = vmatprep.subr.mxu0 0.0
        %7767 = vmatpush1.msra.mxu0 0.0
        %7768 = vmatprep.subr.mxu0 0.0
        %7769 = vmatpush1.msra.mxu0 0.0
        %7770 = vmatprep.subr.mxu0 0.0
        %7771 = vmatpush1.msra.mxu0 0.0
        %7772 = vmatprep.subr.mxu0 0.0
        %7773 = vmatpush1.msra.mxu0 0.0
        %7774 = vmatprep.subr.mxu0 0.0
        %7775 = vmatpush1.msra.mxu0 0.0
        %7776 = vmatprep.subr.mxu0 0.0
        %7777 = vmatpush1.msra.mxu0 0.0
        %7778 = vmatprep.subr.mxu0 0.0
        %7779 = vmatpush1.msra.mxu0 0.0
        %7780 = vmatprep.mubr.f32.mxu0 0.0
        %7781 = vmatmul.mubr.f32.gmra.mrb[0].mxu0 %v7705
        %v7782 = vpop.f32.mrb[0].mxu0
        %v7783 = vadd.f32 0.0, %v7782
        %v7784 = vpop.f32.mrb[0].mxu0
        %7785 = vmatprep.mubr.f32.mxu0 0.0
        %7786 = vmatmul.mubr.f32.gmra.mrb[0].mxu0 %v7708
        %v7787 = vpop.f32.mrb[0].mxu0
        %v7788 = vadd.f32 0.0, %v7787
        %v7789 = vpop.f32.mrb[0].mxu0
        %7790 = vmatprep.mubr.f32.mxu0 0.0
        %7791 = vmatmul.mubr.f32.gmra.mrb[0].mxu0 %v7711
        %v7792 = vpop.f32.mrb[0].mxu0
        %v7793 = vadd.f32 0.0, %v7792
        %v7794 = vpop.f32.mrb[0].mxu0
        %7795 = vmatprep.mubr.f32.mxu0 0.0
        %7796 = vmatmul.mubr.f32.gmra.mrb[0].mxu0 %v7714
        %v7797 = vpop.f32.mrb[0].mxu0
        %v7798 = vadd.f32 0.0, %v7797
        %v7799 = vpop.f32.mrb[0].mxu0
        %7800 = vdwg.mxu0
        %v7801 = vadd.f32 %v7430, %v7783
        %v7802 = vadd.f32 %v7431, %v7788
        %v7803 = vadd.f32 %v7432, %v7793
        %v7804 = vadd.f32 %v7433, %v7798
        %v7806 = vlaneseq
        %v7807 = vshrl.u32 %v7806, 7
        %v7808 = vsub.s32 0, %v7807
        %v7809 = vrot.slane %v6163, %v7808
        %v7811 = vadd.f32 %v7801, %v7809
        %v7812 = vadd.f32 %v7802, %v7809
        %v7813 = vadd.f32 %v7803, %v7809
        %v7814 = vadd.f32 %v7804, %v7809
        %v7815 = vadd.f32 %v7811, %v6144
        %v7816 = vadd.f32 %v7812, %v6145
        %v7817 = vadd.f32 %v7813, %v6146
        %v7818 = vadd.f32 %v7814, %v6147
        %s7819 = scalar_lea.vmem [#allocation10], 1
        %v7820 = vld [vmem:[%s7819] sm:$0x1]
        %s7821 = scalar_lea.vmem [#allocation11], 1
        %v7822 = vld [vmem:[%s7821] sm:$0x1]
        %s7823 = scalar_lea.vmem [#allocation13], 32
        %v7824 = vld [vmem:[%s7823] sm:$0xff]
        %v7825 = vld [vmem:[%s7823 + $0x8] sm:$0xff]
        %v7826 = vld [vmem:[%s7823 + $0x10] sm:$0xff]
        %v7827 = vld [vmem:[%s7823 + $0x18] sm:$0xff]
        %s7828 = scalar_lea.vmem [#allocation14], 1
        %v7829 = vld [vmem:[%s7828] sm:$0x1]
        %s7830 = scalar_lea.vmem %s17, 64
        %v7831 = vld [vmem:[%s7830] sm:$0xff]
        %v7832 = vld [vmem:[%s7830 + $0x8] sm:$0xff]
        %v7833 = vld [vmem:[%s7830 + $0x10] sm:$0xff]
        %v7834 = vld [vmem:[%s7830 + $0x18] sm:$0xff]
        %v7835 = vld [vmem:[%s7830 + $0x20] sm:$0xff]
        %v7836 = vld [vmem:[%s7830 + $0x28] sm:$0xff]
        %v7837 = vld [vmem:[%s7830 + $0x30] sm:$0xff]
        %v7838 = vld [vmem:[%s7830 + $0x38] sm:$0xff]
        %s7839 = scalar_lea.vmem [#allocation16], 1
        %v7840 = vld [vmem:[%s7839] sm:$0x1]
        %v7841 = vsel %vm834, %v7815, 0.0
        %7842 = vadd.xlane.f32.xlu0 %v7841
        %v7843 = vpop.xlane.xlu0 %7842
        %v7844 = vsel %vm834, %v7816, 0.0
        %7845 = vadd.xlane.f32.xlu0 %v7844
        %v7846 = vpop.xlane.xlu0 %7845
        %v7847 = vsel %vm834, %v7817, 0.0
        %7848 = vadd.xlane.f32.xlu0 %v7847
        %v7849 = vpop.xlane.xlu0 %7848
        %v7850 = vsel %vm834, %v7818, 0.0
        %7851 = vadd.xlane.f32.xlu0 %v7850
        %v7852 = vpop.xlane.xlu0 %7851
        %v7853 = vmul.f32 %v7843, %v847
        %v7854 = vmul.f32 %v7846, %v847
        %v7855 = vmul.f32 %v7849, %v847
        %v7856 = vmul.f32 %v7852, %v847
        %v7857 = vsub.f32 %v7815, %v7853
        %v7858 = vsub.f32 %v7816, %v7854
        %v7859 = vsub.f32 %v7817, %v7855
        %v7860 = vsub.f32 %v7818, %v7856
        %v7861 = vmul.f32 %v7857, %v7857
        %v7862 = vmul.f32 %v7858, %v7858
        %v7863 = vmul.f32 %v7859, %v7859
        %v7864 = vmul.f32 %v7860, %v7860
        %v7865 = vsel %vm834, %v7861, 0.0
        %7866 = vadd.xlane.f32.xlu0 %v7865
        %v7867 = vpop.xlane.xlu0 %7866
        %v7868 = vsel %vm834, %v7862, 0.0
        %7869 = vadd.xlane.f32.xlu0 %v7868
        %v7870 = vpop.xlane.xlu0 %7869
        %v7871 = vsel %vm834, %v7863, 0.0
        %7872 = vadd.xlane.f32.xlu0 %v7871
        %v7873 = vpop.xlane.xlu0 %7872
        %v7874 = vsel %vm834, %v7864, 0.0
        %7875 = vadd.xlane.f32.xlu0 %v7874
        %v7876 = vpop.xlane.xlu0 %7875
        %v7877 = vmul.f32 %v7867, %v847
        %v7878 = vmul.f32 %v7870, %v847
        %v7879 = vmul.f32 %v7873, %v847
        %v7880 = vmul.f32 %v7876, %v847
        %v7881 = vadd.f32 %v7877, 1e-05
        %v7882 = vadd.f32 %v7878, 1e-05
        %v7883 = vadd.f32 %v7879, 1e-05
        %v7884 = vadd.f32 %v7880, 1e-05
        %v7885 = vrsqrt.pop %v7881
        %v7886 = vrsqrt.pop %v7882
        %v7887 = vrsqrt.pop %v7883
        %v7888 = vrsqrt.pop %v7884
        %v7889 = vmul.f32 %v7857, %v7885
        %v7890 = vmul.f32 %v7858, %v7886
        %v7891 = vmul.f32 %v7859, %v7887
        %v7892 = vmul.f32 %v7860, %v7888
        %v7894 = vlaneseq
        %v7895 = vshrl.u32 %v7894, 7
        %v7896 = vsub.s32 0, %v7895
        %v7897 = vrot.slane %v7820, %v7896
        %v7899 = vmul.f32 %v7889, %v7897
        %v7900 = vmul.f32 %v7890, %v7897
        %v7901 = vmul.f32 %v7891, %v7897
        %v7902 = vmul.f32 %v7892, %v7897
        %v7904 = vlaneseq
        %v7905 = vshrl.u32 %v7904, 7
        %v7906 = vsub.s32 0, %v7905
        %v7907 = vrot.slane %v7822, %v7906
        %v7909 = vadd.f32 %v7899, %v7907
        %v7910 = vadd.f32 %v7900, %v7907
        %v7911 = vadd.f32 %v7901, %v7907
        %v7912 = vadd.f32 %v7902, %v7907
        %v7914 = vlaneseq
        %v7915 = vshrl.u32 %v7914, 7
        %v7916 = vsub.s32 0, %v7915
        %v7917 = vrot.slane %v7829, %v7916
        %v7920 = vsel %vm834, %v7909, 0
        %v7923 = vsel %vm834, %v7910, 0
        %v7926 = vsel %vm834, %v7911, 0
        %v7929 = vsel %vm834, %v7912, 0
        %7931 = vmatprep.subr.mxu0 0.0
        %7932 = vmatpush1.msra.mxu0 %v7824
        %7933 = vmatprep.subr.mxu0 0.0
        %7934 = vmatpush1.msra.mxu0 %v7825
        %7935 = vmatprep.subr.mxu0 0.0
        %7936 = vmatpush1.msra.mxu0 %v7826
        %7937 = vmatprep.subr.mxu0 0.0
        %7938 = vmatpush1.msra.mxu0 %v7827
        %7939 = vmatprep.subr.mxu0 0.0
        %7940 = vmatpush1.msra.mxu0 0.0
        %7941 = vmatprep.subr.mxu0 0.0
        %7942 = vmatpush1.msra.mxu0 0.0
        %7943 = vmatprep.subr.mxu0 0.0
        %7944 = vmatpush1.msra.mxu0 0.0
        %7945 = vmatprep.subr.mxu0 0.0
        %7946 = vmatpush1.msra.mxu0 0.0
        %7947 = vmatprep.subr.mxu0 0.0
        %7948 = vmatpush1.msra.mxu0 0.0
        %7949 = vmatprep.subr.mxu0 0.0
        %7950 = vmatpush1.msra.mxu0 0.0
        %7951 = vmatprep.subr.mxu0 0.0
        %7952 = vmatpush1.msra.mxu0 0.0
        %7953 = vmatprep.subr.mxu0 0.0
        %7954 = vmatpush1.msra.mxu0 0.0
        %7955 = vmatprep.subr.mxu0 0.0
        %7956 = vmatpush1.msra.mxu0 0.0
        %7957 = vmatprep.subr.mxu0 0.0
        %7958 = vmatpush1.msra.mxu0 0.0
        %7959 = vmatprep.subr.mxu0 0.0
        %7960 = vmatpush1.msra.mxu0 0.0
        %7961 = vmatprep.subr.mxu0 0.0
        %7962 = vmatpush1.msra.mxu0 0.0
        %7963 = vmatprep.subr.mxu0 0.0
        %7964 = vmatpush1.msra.mxu0 0.0
        %7965 = vmatprep.subr.mxu0 0.0
        %7966 = vmatpush1.msra.mxu0 0.0
        %7967 = vmatprep.subr.mxu0 0.0
        %7968 = vmatpush1.msra.mxu0 0.0
        %7969 = vmatprep.subr.mxu0 0.0
        %7970 = vmatpush1.msra.mxu0 0.0
        %7971 = vmatprep.subr.mxu0 0.0
        %7972 = vmatpush1.msra.mxu0 0.0
        %7973 = vmatprep.subr.mxu0 0.0
        %7974 = vmatpush1.msra.mxu0 0.0
        %7975 = vmatprep.subr.mxu0 0.0
        %7976 = vmatpush1.msra.mxu0 0.0
        %7977 = vmatprep.subr.mxu0 0.0
        %7978 = vmatpush1.msra.mxu0 0.0
        %7979 = vmatprep.subr.mxu0 0.0
        %7980 = vmatpush1.msra.mxu0 0.0
        %7981 = vmatprep.subr.mxu0 0.0
        %7982 = vmatpush1.msra.mxu0 0.0
        %7983 = vmatprep.subr.mxu0 0.0
        %7984 = vmatpush1.msra.mxu0 0.0
        %7985 = vmatprep.subr.mxu0 0.0
        %7986 = vmatpush1.msra.mxu0 0.0
        %7987 = vmatprep.subr.mxu0 0.0
        %7988 = vmatpush1.msra.mxu0 0.0
        %7989 = vmatprep.subr.mxu0 0.0
        %7990 = vmatpush1.msra.mxu0 0.0
        %7991 = vmatprep.subr.mxu0 0.0
        %7992 = vmatpush1.msra.mxu0 0.0
        %7993 = vmatprep.subr.mxu0 0.0
        %7994 = vmatpush1.msra.mxu0 0.0
        %7995 = vmatprep.mubr.f32.mxu0 0.0
        %7996 = vmatmul.mubr.f32.gmra.mrb[0].mxu0 %v7920
        %v7997 = vpop.f32.mrb[0].mxu0
        %v7998 = vadd.f32 %v7917, %v7997
        %v7999 = vpop.f32.mrb[0].mxu0
        %8000 = vmatprep.mubr.f32.mxu0 0.0
        %8001 = vmatmul.mubr.f32.gmra.mrb[0].mxu0 %v7923
        %v8002 = vpop.f32.mrb[0].mxu0
        %v8003 = vadd.f32 %v7917, %v8002
        %v8004 = vpop.f32.mrb[0].mxu0
        %8005 = vmatprep.mubr.f32.mxu0 0.0
        %8006 = vmatmul.mubr.f32.gmra.mrb[0].mxu0 %v7926
        %v8007 = vpop.f32.mrb[0].mxu0
        %v8008 = vadd.f32 %v7917, %v8007
        %v8009 = vpop.f32.mrb[0].mxu0
        %8010 = vmatprep.mubr.f32.mxu0 0.0
        %8011 = vmatmul.mubr.f32.gmra.mrb[0].mxu0 %v7929
        %v8012 = vpop.f32.mrb[0].mxu0
        %v8013 = vadd.f32 %v7917, %v8012
        %v8014 = vpop.f32.mrb[0].mxu0
        %8015 = vdwg.mxu0
        %v8016 = vmul.f32 %v7998, 0.5
        %v8017 = vmul.f32 %v8003, 0.5
        %v8018 = vmul.f32 %v8008, 0.5
        %v8019 = vmul.f32 %v8013, 0.5
        %v8020 = vmul.f32 %v7998, 0.70710677
        %v8021 = vmul.f32 %v8003, 0.70710677
        %v8022 = vmul.f32 %v8008, 0.70710677
        %v8023 = vmul.f32 %v8013, 0.70710677
        %v8024 = verf.f32.pop %v8020
        %v8025 = verf.f32.pop %v8021
        %v8026 = verf.f32.pop %v8022
        %v8027 = verf.f32.pop %v8023
        %v8028 = vadd.f32 %v8024, 1.0
        %v8029 = vadd.f32 %v8025, 1.0
        %v8030 = vadd.f32 %v8026, 1.0
        %v8031 = vadd.f32 %v8027, 1.0
        %v8032 = vmul.f32 %v8016, %v8028
        %v8033 = vmul.f32 %v8017, %v8029
        %v8034 = vmul.f32 %v8018, %v8030
        %v8035 = vmul.f32 %v8019, %v8031
        %v8037 = vlaneseq
        %v8038 = vshrl.u32 %v8037, 7
        %v8039 = vsub.s32 0, %v8038
        %v8040 = vrot.slane %v7840, %v8039
        %v8043 = vsel %vm4375, %v8032, 0
        %v8046 = vsel %vm4375, %v8033, 0
        %v8049 = vsel %vm4375, %v8034, 0
        %v8052 = vsel %vm4375, %v8035, 0
        %8054 = vmatprep.subr.mxu0 0.0
        %8055 = vmatpush1.msra.mxu0 %v7831
        %8056 = vmatprep.subr.mxu0 0.0
        %8057 = vmatpush1.msra.mxu0 %v7832
        %8058 = vmatprep.subr.mxu0 0.0
        %8059 = vmatpush1.msra.mxu0 %v7833
        %8060 = vmatprep.subr.mxu0 0.0
        %8061 = vmatpush1.msra.mxu0 %v7834
        %8062 = vmatprep.subr.mxu0 0.0
        %8063 = vmatpush1.msra.mxu0 %v7835
        %8064 = vmatprep.subr.mxu0 0.0
        %8065 = vmatpush1.msra.mxu0 %v7836
        %8066 = vmatprep.subr.mxu0 0.0
        %8067 = vmatpush1.msra.mxu0 %v7837
        %8068 = vmatprep.subr.mxu0 0.0
        %8069 = vmatpush1.msra.mxu0 %v7838
        %8070 = vmatprep.subr.mxu0 0.0
        %8071 = vmatpush1.msra.mxu0 0.0
        %8072 = vmatprep.subr.mxu0 0.0
        %8073 = vmatpush1.msra.mxu0 0.0
        %8074 = vmatprep.subr.mxu0 0.0
        %8075 = vmatpush1.msra.mxu0 0.0
        %8076 = vmatprep.subr.mxu0 0.0
        %8077 = vmatpush1.msra.mxu0 0.0
        %8078 = vmatprep.subr.mxu0 0.0
        %8079 = vmatpush1.msra.mxu0 0.0
        %8080 = vmatprep.subr.mxu0 0.0
        %8081 = vmatpush1.msra.mxu0 0.0
        %8082 = vmatprep.subr.mxu0 0.0
        %8083 = vmatpush1.msra.mxu0 0.0
        %8084 = vmatprep.subr.mxu0 0.0
        %8085 = vmatpush1.msra.mxu0 0.0
        %8086 = vmatprep.subr.mxu0 0.0
        %8087 = vmatpush1.msra.mxu0 0.0
        %8088 = vmatprep.subr.mxu0 0.0
        %8089 = vmatpush1.msra.mxu0 0.0
        %8090 = vmatprep.subr.mxu0 0.0
        %8091 = vmatpush1.msra.mxu0 0.0
        %8092 = vmatprep.subr.mxu0 0.0
        %8093 = vmatpush1.msra.mxu0 0.0
        %8094 = vmatprep.subr.mxu0 0.0
        %8095 = vmatpush1.msra.mxu0 0.0
        %8096 = vmatprep.subr.mxu0 0.0
        %8097 = vmatpush1.msra.mxu0 0.0
        %8098 = vmatprep.subr.mxu0 0.0
        %8099 = vmatpush1.msra.mxu0 0.0
        %8100 = vmatprep.subr.mxu0 0.0
        %8101 = vmatpush1.msra.mxu0 0.0
        %8102 = vmatprep.subr.mxu0 0.0
        %8103 = vmatpush1.msra.mxu0 0.0
        %8104 = vmatprep.subr.mxu0 0.0
        %8105 = vmatpush1.msra.mxu0 0.0
        %8106 = vmatprep.subr.mxu0 0.0
        %8107 = vmatpush1.msra.mxu0 0.0
        %8108 = vmatprep.subr.mxu0 0.0
        %8109 = vmatpush1.msra.mxu0 0.0
        %8110 = vmatprep.subr.mxu0 0.0
        %8111 = vmatpush1.msra.mxu0 0.0
        %8112 = vmatprep.subr.mxu0 0.0
        %8113 = vmatpush1.msra.mxu0 0.0
        %8114 = vmatprep.subr.mxu0 0.0
        %8115 = vmatpush1.msra.mxu0 0.0
        %8116 = vmatprep.subr.mxu0 0.0
        %8117 = vmatpush1.msra.mxu0 0.0
        %8118 = vmatprep.mubr.f32.mxu0 0.0
        %8119 = vmatmul.mubr.f32.gmra.mrb[0].mxu0 %v8043
        %v8120 = vpop.f32.mrb[0].mxu0
        %v8121 = vadd.f32 %v8040, %v8120
        %v8122 = vpop.f32.mrb[0].mxu0
        %8123 = vmatprep.mubr.f32.mxu0 0.0
        %8124 = vmatmul.mubr.f32.gmra.mrb[0].mxu0 %v8046
        %v8125 = vpop.f32.mrb[0].mxu0
        %v8126 = vadd.f32 %v8040, %v8125
        %v8127 = vpop.f32.mrb[0].mxu0
        %8128 = vmatprep.mubr.f32.mxu0 0.0
        %8129 = vmatmul.mubr.f32.gmra.mrb[0].mxu0 %v8049
        %v8130 = vpop.f32.mrb[0].mxu0
        %v8131 = vadd.f32 %v8040, %v8130
        %v8132 = vpop.f32.mrb[0].mxu0
        %8133 = vmatprep.mubr.f32.mxu0 0.0
        %8134 = vmatmul.mubr.f32.gmra.mrb[0].mxu0 %v8052
        %v8135 = vpop.f32.mrb[0].mxu0
        %v8136 = vadd.f32 %v8040, %v8135
        %v8137 = vpop.f32.mrb[0].mxu0
        %8138 = vdwg.mxu0
        %v8139 = vadd.f32 %v8121, %v7815
        %v8140 = vadd.f32 %v8126, %v7816
        %v8141 = vadd.f32 %v8131, %v7817
        %v8142 = vadd.f32 %v8136, %v7818
        %v8143 = vld [vmem:[#allocation17] sm:$0x1]
        %v8144 = vld [vmem:[#allocation19] sm:$0x1]
        %v8145 = vsel %vm834, %v8139, 0.0
        %8146 = vadd.xlane.f32.xlu0 %v8145
        %v8147 = vpop.xlane.xlu0 %8146
        %v8148 = vsel %vm834, %v8140, 0.0
        %8149 = vadd.xlane.f32.xlu0 %v8148
        %v8150 = vpop.xlane.xlu0 %8149
        %v8151 = vsel %vm834, %v8141, 0.0
        %8152 = vadd.xlane.f32.xlu0 %v8151
        %v8153 = vpop.xlane.xlu0 %8152
        %v8154 = vsel %vm834, %v8142, 0.0
        %8155 = vadd.xlane.f32.xlu0 %v8154
        %v8156 = vpop.xlane.xlu0 %8155
        %v8157 = vmul.f32 %v8147, %v847
        %v8158 = vmul.f32 %v8150, %v847
        %v8159 = vmul.f32 %v8153, %v847
        %v8160 = vmul.f32 %v8156, %v847
        %v8161 = vsub.f32 %v8139, %v8157
        %v8162 = vsub.f32 %v8140, %v8158
        %v8163 = vsub.f32 %v8141, %v8159
        %v8164 = vsub.f32 %v8142, %v8160
        %v8165 = vmul.f32 %v8161, %v8161
        %v8166 = vmul.f32 %v8162, %v8162
        %v8167 = vmul.f32 %v8163, %v8163
        %v8168 = vmul.f32 %v8164, %v8164
        %v8169 = vsel %vm834, %v8165, 0.0
        %8170 = vadd.xlane.f32.xlu0 %v8169
        %v8171 = vpop.xlane.xlu0 %8170
        %v8172 = vsel %vm834, %v8166, 0.0
        %8173 = vadd.xlane.f32.xlu0 %v8172
        %v8174 = vpop.xlane.xlu0 %8173
        %v8175 = vsel %vm834, %v8167, 0.0
        %8176 = vadd.xlane.f32.xlu0 %v8175
        %v8177 = vpop.xlane.xlu0 %8176
        %v8178 = vsel %vm834, %v8168, 0.0
        %8179 = vadd.xlane.f32.xlu0 %v8178
        %v8180 = vpop.xlane.xlu0 %8179
        %v8181 = vmul.f32 %v8171, %v847
        %v8182 = vmul.f32 %v8174, %v847
        %v8183 = vmul.f32 %v8177, %v847
        %v8184 = vmul.f32 %v8180, %v847
        %v8185 = vadd.f32 %v8181, 1e-05
        %v8186 = vadd.f32 %v8182, 1e-05
        %v8187 = vadd.f32 %v8183, 1e-05
        %v8188 = vadd.f32 %v8184, 1e-05
        %v8189 = vrsqrt.pop %v8185
        %v8190 = vrsqrt.pop %v8186
        %v8191 = vrsqrt.pop %v8187
        %v8192 = vrsqrt.pop %v8188
        %v8193 = vmul.f32 %v8161, %v8189
        %v8194 = vmul.f32 %v8162, %v8190
        %v8195 = vmul.f32 %v8163, %v8191
        %v8196 = vmul.f32 %v8164, %v8192
        %v8198 = vlaneseq
        %v8199 = vshrl.u32 %v8198, 7
        %v8200 = vsub.s32 0, %v8199
        %v8201 = vrot.slane %v8143, %v8200
        %v8203 = vmul.f32 %v8193, %v8201
        %v8204 = vmul.f32 %v8194, %v8201
        %v8205 = vmul.f32 %v8195, %v8201
        %v8206 = vmul.f32 %v8196, %v8201
        %v8208 = vlaneseq
        %v8209 = vshrl.u32 %v8208, 7
        %v8210 = vsub.s32 0, %v8209
        %v8211 = vrot.slane %v8144, %v8210
        %v8213 = vadd.f32 %v8203, %v8211
        %v8214 = vadd.f32 %v8204, %v8211
        %v8215 = vadd.f32 %v8205, %v8211
        %v8216 = vadd.f32 %v8206, %v8211
        %8217 = vst.msk [vmem:[%s805] sm:$0xff] %vm834, %v8213
        %8218 = vst.msk [vmem:[%s805 + $0x8] sm:$0xff] %vm834, %v8214
        %8219 = vst.msk [vmem:[%s805 + $0x10] sm:$0xff] %vm834, %v8215
        %8220 = vst.msk [vmem:[%s805 + $0x18] sm:$0xff] %vm834, %v8216
        %s8221 = sand.u32 %s495, 1
        %s8222 = scalar_lea.sflag [#allocation4], %s8221
        %s8223 = sand.u32 %s495, 1
        %s8224 = smul.addr %s8223, 32
        %s8225 = scalar_lea.vmem [#allocation20], %s8224
        // Predicated region
        $region149: #{factorized_transformer.1} parent=103 // pred_check
          %p8226 = pneg %p505
        $region150: #{factorized_transformer.1} parent=103 // pred_check_branch
          %8228 = sbr.rel (%p8226) target = $region152
        $region151: #{factorized_transformer.1} parent=103 // pred_region
          %s8230 = ssub.s32 512, 512
          %8231 = vsyncadd %s8222, %s8230
          %s8232 = smul.addr %s41, 4
          %s8233 = smul.addr %s8232, 128
          %s8234 = scalar_lea.hbm %s21, %s8233
          %s8235 = sshll.u32 %s8225, 4
          %s8236 = int_to_ptr.vmem [resolvable:$true] %s8235
          %8241 = dma.vmem_to_hbm [thread:$0]  %s8236, 512, %s8234, %s8222, 128, 128, 8
        $region152: #{factorized_transformer.1} parent=103 // pred_fallthru
          _
      $region104: #{factorized_transformer.1} parent=5 // pred_fallthru
        _
      %p8242 = scmp.le.s32.totalorder 2, %s36
      // Predicated region
      $region153: #{factorized_transformer.1} parent=5 // pred_check
        %p8243 = pneg %p8242
      $region154: #{factorized_transformer.1} parent=5 // pred_check_branch
        %8245 = sbr.rel (%p8243) target = $region156
      $region155: #{factorized_transformer.1} parent=5 // pred_region
        %s8246 = ssub.s32 %s36, 2
        // Predicated region
        $region157: #{factorized_transformer.1} parent=155 // pred_check
          %p8247 = pneg %p511
        $region158: #{factorized_transformer.1} parent=155 // pred_check_branch
          %8249 = sbr.rel (%p8247) target = $region160
        $region159: #{factorized_transformer.1} parent=155 // pred_region
          %s8250 = sand.u32 %s496, 1
          %s8251 = scalar_lea.sflag [#allocation4], %s8250
          %s8252 = sand.u32 %s496, 1
          %s8253 = smul.addr %s8252, 32
          %s8254 = scalar_lea.vmem [#allocation20], %s8253
          %8255 = dma.done %s8251, 512
        $region160: #{factorized_transformer.1} parent=155 // pred_fallthru
          _
      $region156: #{factorized_transformer.1} parent=5 // pred_fallthru
        _
    $region6: #{factorized_transformer.1} parent=1 // loop_footer
      %s40 = sadd.s32 1, %s36
    $region7: #{factorized_transformer.1} parent=1 // loop_footer_branch
      %35 = sbr.rel target = $region3
    $region8: #{factorized_transformer.1} parent=1 // loop_exit
      _
    %8256 = vsyncpa [#allocation3], 1
    %s8257 = scalar_lea.sflag [#allocation3], 1
    %8258 = vsyncpa %s8257, 1
    %8259 = vsyncpa [#allocation6], 1
    %8260 = vsyncpa [#allocation9], 1
    %8261 = vsyncpa [#allocation12], 1
    %8262 = vsyncpa [#allocation15], 1
    %8263 = vsyncpa [#allocation18], 1
    %8264 = vsyncpa [#allocation4], 1
    %s8265 = scalar_lea.sflag [#allocation4], 1
    %8266 = vsyncpa %s8265, 1

</llo_original>
